<compile_context>
chip_gen: v5e
topology: v5e:2x2
jax: 0.10.0
libtpu: 0.0.40
codegen_flags: <defaults>
</compile_context>

<pallas_src>
import math

import numpy as np

import jax
import jax.numpy as jnp
from jax import lax
from jax.experimental import pallas as pl
from jax.experimental.pallas import tpu as pltpu

NUM_CLASSES = 10
FREQPTS = 64
SEQ_LEN = NUM_CLASSES * FREQPTS            # 640
K = 5                                      # conv kernel size
NEG_SLOPE = 0.01                           # F.leaky_relu default
J = 40                                     # row blocks: activations are (J, TB, lanes)
FEAT = 32 * 160                            # 5120 FC input features
NFC_PAD = 128                              # FC output lanes padded 10 -> 128
VMEM_LIMIT = 48 * 1024 * 1024

_P = (16, 16, 8, 8)                        # phases packed per row for conv1..conv4


def _evens_then_odds(p):
    return tuple(range(0, p, 2)) + tuple(range(1, p, 2))


# Output-phase lane order per conv layer.  conv2/conv4 emit even phases in the
# lower lane half and odd phases in the upper half so the following
# max_pool1d(2) is a lane-half max (no gathers).
_OUT_ORDERS = (tuple(range(16)), _evens_then_odds(16),
               tuple(range(8)), _evens_then_odds(8))


def _leaky_relu(v):
    return jnp.where(v > 0, v, NEG_SLOPE * v)


def _round_up(n, m):
    return ((n + m - 1) // m) * m


# ----------------------------- Pallas kernel ---------------------------------
def _conv_layer(act, w_ref, b_ref):
    """Fused conv1d(k=5, pad=2) + bias + leaky_relu on packed polyphase rows.

    act   : (J, TB, Cin_packed)  j-major; lane = q*Ci + ci (q = phase).
    w_ref : (3, Cin_packed, Cout_packed) block weights for row shifts d=-1,0,+1.
    b_ref : (1, Cout_packed)
    returns (J, TB, Cout_packed)
    """
    Jl, TBl, C = act.shape
    w_m1, w_0, w_p1 = w_ref[0], w_ref[1], w_ref[2]
    cdt = w_0.dtype
    z = jnp.zeros((1, TBl, C), jnp.float32)
    a_dn = jnp.concatenate([z, act[:-1]], axis=0)      # row j -> act[j-1]
    a_up = jnp.concatenate([act[1:], z], axis=0)       # row j -> act[j+1]

    def mm(a, w):
        return jnp.dot(a.reshape(Jl * TBl, C).astype(cdt), w,
                       preferred_element_type=jnp.float32)

    y = mm(act, w_0) + mm(a_dn, w_m1) + mm(a_up, w_p1)
    y = _leaky_relu(y + b_ref[...])
    return y.reshape(Jl, TBl, -1)


def deepsense_kernel(x_ref, w1, b1, w2, b2, w3, b3, w4, b4, wfc, bfc, out_ref):
    a = x_ref[...]                                       # (J, TB, 16)   f32
    a = _conv_layer(a, w1, b1)                           # (J, TB, 256)  phases 0..15
    a = _conv_layer(a, w2, b2)                           # (J, TB, 256)  evens|odds
    a = jnp.maximum(a[:, :, :128], a[:, :, 128:])        # pool1 -> (J, TB, 128)
    a = _conv_layer(a, w3, b3)                           # (J, TB, 256)  phases 0..7
    a = _conv_layer(a, w4, b4)                           # (J, TB, 256)  evens|odds
    a = jnp.maximum(a[:, :, :128], a[:, :, 128:])        # pool2 -> (J, TB, 128)
    # TODO(synk): F.dropout(p=0.5, training=True) is stochastic; implemented as
    # identity (inference semantics) to keep the kernel deterministic.
    flat = jnp.concatenate([a[j] for j in range(J)], axis=-1)   # (TB, 5120)
    out_ref[...] = (jnp.dot(flat, wfc[...], preferred_element_type=jnp.float32)
                    + bfc[...])                          # (TB, 128), cols 10.. are 0


# ------------------------------ forward wrapper -------------------------------
def deepsense_forward(x, kernel_params, *, tile_b=32):
    """x: any shape with B*640 elements (matches torch's x.view(-1, 1, 640))."""
    (W1, B1, W2, B2, W3, B3, W4, B4, Wfc, Bfc) = kernel_params

    xs = x.reshape(-1, SEQ_LEN).astype(jnp.float32)
    B = xs.shape[0]
    TB = min(tile_b, _round_up(B, 8))
    Bp = _round_up(B, TB)
    if Bp != B:
        xs = jnp.pad(xs, ((0, Bp - B), (0, 0)))
    # j-major polyphase pack: x_pack[j, b, q] = signal[b, 16*j + q]
    x_pack = xs.reshape(Bp, J, 16).transpose(1, 0, 2)    # (J, Bp, 16)
    nsteps = Bp // TB

    out = pl.pallas_call(
        deepsense_kernel,
        out_shape=jax.ShapeDtypeStruct((Bp, NFC_PAD), jnp.float32),
        grid_spec=pltpu.PrefetchScalarGridSpec(
            num_scalar_prefetch=0,
            grid=(nsteps,),
            in_specs=[
                pl.BlockSpec((J, TB, 16), lambda i: (0, i, 0)),
                pl.BlockSpec(W1.shape, lambda i: (0, 0, 0)),
                pl.BlockSpec(B1.shape, lambda i: (0, 0)),
                pl.BlockSpec(W2.shape, lambda i: (0, 0, 0)),
                pl.BlockSpec(B2.shape, lambda i: (0, 0)),
                pl.BlockSpec(W3.shape, lambda i: (0, 0, 0)),
                pl.BlockSpec(B3.shape, lambda i: (0, 0)),
                pl.BlockSpec(W4.shape, lambda i: (0, 0, 0)),
                pl.BlockSpec(B4.shape, lambda i: (0, 0)),
                pl.BlockSpec(Wfc.shape, lambda i: (0, 0)),
                pl.BlockSpec(Bfc.shape, lambda i: (0, 0)),
            ],
            out_specs=pl.BlockSpec((TB, NFC_PAD), lambda i: (i, 0)),
        ),
        compiler_params=pltpu.CompilerParams(
            dimension_semantics=("parallel",),
            vmem_limit_bytes=VMEM_LIMIT,
        ),
    )(x_pack, W1, B1, W2, B2, W3, B3, W4, B4, Wfc, Bfc)

    return out[:B, :NUM_CLASSES]


# --------------------- host-side weight packing (one-time) --------------------
def _pack_conv(w, b, P, out_order, dtype):
    """torch conv weight (Co,Ci,5) -> (3, P*Ci, P*Co) block weights (d=-1,0,+1).

    Input lane layout : q*Ci + ci  (phase q natural order).
    Output lane layout: out_order.index(p)*Co + co.
    Output phase p, tap k reads input sample offset p+k-2 = P*d + q.
    """
    w = np.asarray(w, np.float32)
    b = np.asarray(b, np.float32)
    Co, Ci, Kk = w.shape
    W = np.zeros((3, P * Ci, P * Co), np.float32)
    for p in range(P):
        pos = out_order.index(p)
        for k in range(Kk):
            t = p + k - 2
            q, d = t % P, t // P                  # python floor-div / mod
            W[d + 1, q * Ci:(q + 1) * Ci, pos * Co:(pos + 1) * Co] += w[:, :, k].T
    bias = np.tile(b, P).reshape(1, P * Co)
    return jnp.asarray(W, dtype), jnp.asarray(bias, jnp.float32)


def _pack_fc(wfc, bfc):
    """torch Linear weight (10, 5120) -> (5120, 128) matching the kernel flatten.

    Kernel flat index = j*128 + e*32 + c  <->  torch feature = c*160 + 4*j + e.
    Output columns padded 10 -> 128 with zeros (lane-dense store).
    """
    wfc = np.asarray(wfc, np.float32)
    jj, ee, cc = np.meshgrid(np.arange(J), np.arange(4), np.arange(32),
                             indexing="ij")
    feat = (cc * 160 + 4 * jj + ee).reshape(-1)          # (5120,)
    W = np.zeros((FEAT, NFC_PAD), np.float32)
    W[:, :NUM_CLASSES] = wfc[:, feat].T
    bias = np.zeros((1, NFC_PAD), np.float32)
    bias[0, :NUM_CLASSES] = np.asarray(bfc, np.float32)
    return jnp.asarray(W), jnp.asarray(bias)


def to_kernel_layout(torch_params, matmul_dtype=jnp.float32):
    """matmul_dtype=jnp.bfloat16 recommended on v6e/v7x (conv matmul operands only;
    elementwise math and the FC stay f32)."""
    w1, b1, w2, b2, w3, b3, w4, b4, wfc, bfc = torch_params
    packed = []
    for (wt, bt), P, order in zip(((w1, b1), (w2, b2), (w3, b3), (w4, b4)),
                                  _P, _OUT_ORDERS):
        Wp, Bp_ = _pack_conv(wt, bt, P, order, matmul_dtype)
        packed.extend((Wp, Bp_))
    packed.extend(_pack_fc(wfc, bfc))
    return tuple(packed)


# ---------------- deterministic synthetic parameters (PyTorch layouts) --------
def init_params(key):
    ks = jax.random.split(key, 10)

    def conv_w(k, co, ci):
        return jax.random.normal(k, (co, ci, K), jnp.float32) / math.sqrt(ci * K)

    w1 = conv_w(ks[0], 16, 1)
    b1 = 0.1 * jax.random.normal(ks[1], (16,), jnp.float32)
    w2 = conv_w(ks[2], 16, 16)
    b2 = 0.1 * jax.random.normal(ks[3], (16,), jnp.float32)
    w3 = conv_w(ks[4], 32, 16)
    b3 = 0.1 * jax.random.normal(ks[5], (32,), jnp.float32)
    w4 = conv_w(ks[6], 32, 32)
    b4 = 0.1 * jax.random.normal(ks[7], (32,), jnp.float32)
    wfc = jax.random.normal(ks[8], (NUM_CLASSES, FEAT), jnp.float32) / math.sqrt(FEAT)
    bfc = 0.1 * jax.random.normal(ks[9], (NUM_CLASSES,), jnp.float32)
    return (w1, b1, w2, b2, w3, b3, w4, b4, wfc, bfc)


# ---------------- pure-JAX reference (for correctness check) -----------------
def reference_forward(x, torch_params):
    w1, b1, w2, b2, w3, b3, w4, b4, wfc, bfc = torch_params
    h = x.reshape(-1, 1, SEQ_LEN).astype(jnp.float32)
    B = h.shape[0]

    def conv(h, w, b):
        y = lax.conv_general_dilated(h, w, window_strides=(1,), padding=((2, 2),),
                                     dimension_numbers=("NCH", "OIH", "NCH"),
                                     precision=lax.Precision.HIGHEST)
        return y + b[None, :, None]

    def pool(h):
        Bc, C, L = h.shape
        return jnp.max(h.reshape(Bc, C, L // 2, 2), axis=-1)

    h = _leaky_relu(conv(h, w1, b1))
    h = pool(_leaky_relu(conv(h, w2, b2)))
    h = _leaky_relu(conv(h, w3, b3))
    h = pool(_leaky_relu(conv(h, w4, b4)))
    flat = h.reshape(B, FEAT)
    return jnp.dot(flat, wfc.T, precision=lax.Precision.HIGHEST) + bfc[None, :]


if __name__ == "__main__":
    key = jax.random.PRNGKey(0)
    kx, kp = jax.random.split(key)
    # (batch=2, classes=10, freqpts=64) -> view(-1, 1, 640)
    x = jax.random.normal(kx, (2, NUM_CLASSES, FREQPTS), jnp.float32)

    torch_params = init_params(kp)
    kernel_params = to_kernel_layout(torch_params)       # f32 matmul operands

    out = jax.jit(deepsense_forward)(x, kernel_params)
    out = jax.block_until_ready(out)

    ref = reference_forward(x, torch_params)
    assert out.shape == (2, NUM_CLASSES), out.shape
    # Tolerance accounts for the TPU MXU's default matmul precision (bf16-pass
    # accumulation in f32) vs. the HIGHEST-precision lax reference.
    if not jnp.allclose(out, ref, rtol=3e-2, atol=3e-2):
        raise AssertionError(
            f"Pallas/reference mismatch, max abs err = {float(jnp.max(jnp.abs(out - ref)))}")
    print("KERNEL_OK")
</pallas_src>

<mosaic_0001>
module attributes {stable_mosaic.version = 11 : i64} {
  func.func @deepsense_kernel(%arg0: i32, %arg1: memref<40x8x16xf32, #tpu.memory_space<vmem>>, %arg2: memref<3x16x256xf32, #tpu.memory_space<vmem>>, %arg3: memref<1x256xf32, #tpu.memory_space<vmem>>, %arg4: memref<3x256x256xf32, #tpu.memory_space<vmem>>, %arg5: memref<1x256xf32, #tpu.memory_space<vmem>>, %arg6: memref<3x128x256xf32, #tpu.memory_space<vmem>>, %arg7: memref<1x256xf32, #tpu.memory_space<vmem>>, %arg8: memref<3x256x256xf32, #tpu.memory_space<vmem>>, %arg9: memref<1x256xf32, #tpu.memory_space<vmem>>, %arg10: memref<5120x128xf32, #tpu.memory_space<vmem>>, %arg11: memref<1x128xf32, #tpu.memory_space<vmem>>, %arg12: memref<8x128xf32, #tpu.memory_space<vmem>>) attributes {dimension_semantics = [#tpu.dimension_semantics<parallel>], iteration_bounds = array<i64: 1>, scalar_prefetch = 0 : i64, scratch_operands = 0 : i64, tpu.core_type = #tpu.core_type<tc>, window_params = [{transform_indices = @transform_0, window_bounds = array<i64: 40, 8, 16>}, {pipeline_mode = #tpu.pipeline_mode<synchronous>, transform_indices = @transform_1, window_bounds = array<i64: 3, 16, 256>}, {pipeline_mode = #tpu.pipeline_mode<synchronous>, transform_indices = @transform_2, window_bounds = array<i64: 1, 256>}, {pipeline_mode = #tpu.pipeline_mode<synchronous>, transform_indices = @transform_3, window_bounds = array<i64: 3, 256, 256>}, {pipeline_mode = #tpu.pipeline_mode<synchronous>, transform_indices = @transform_4, window_bounds = array<i64: 1, 256>}, {pipeline_mode = #tpu.pipeline_mode<synchronous>, transform_indices = @transform_5, window_bounds = array<i64: 3, 128, 256>}, {pipeline_mode = #tpu.pipeline_mode<synchronous>, transform_indices = @transform_6, window_bounds = array<i64: 1, 256>}, {pipeline_mode = #tpu.pipeline_mode<synchronous>, transform_indices = @transform_7, window_bounds = array<i64: 3, 256, 256>}, {pipeline_mode = #tpu.pipeline_mode<synchronous>, transform_indices = @transform_8, window_bounds = array<i64: 1, 256>}, {pipeline_mode = #tpu.pipeline_mode<synchronous>, transform_indices = @transform_9, window_bounds = array<i64: 5120, 128>}, {pipeline_mode = #tpu.pipeline_mode<synchronous>, transform_indices = @transform_10, window_bounds = array<i64: 1, 128>}, {transform_indices = @transform_11, window_bounds = array<i64: 8, 128>}]} {
    %c0 = arith.constant 0 : index
    %c0_0 = arith.constant 0 : index
    %c0_1 = arith.constant 0 : index
    %0 = vector.load %arg1[%c0, %c0_0, %c0_1] : memref<40x8x16xf32, #tpu.memory_space<vmem>>, vector<40x8x16xf32>
    %c0_2 = arith.constant 0 : index
    %c0_3 = arith.constant 0 : index
    %c0_4 = arith.constant 0 : index
    %1 = vector.load %arg2[%c0_2, %c0_3, %c0_4] : memref<3x16x256xf32, #tpu.memory_space<vmem>>, vector<1x16x256xf32>
    %2 = vector.shape_cast %1 : vector<1x16x256xf32> to vector<16x256xf32>
    %c1 = arith.constant 1 : index
    %c0_5 = arith.constant 0 : index
    %c0_6 = arith.constant 0 : index
    %3 = vector.load %arg2[%c1, %c0_5, %c0_6] : memref<3x16x256xf32, #tpu.memory_space<vmem>>, vector<1x16x256xf32>
    %4 = vector.shape_cast %3 : vector<1x16x256xf32> to vector<16x256xf32>
    %c2 = arith.constant 2 : index
    %c0_7 = arith.constant 0 : index
    %c0_8 = arith.constant 0 : index
    %5 = vector.load %arg2[%c2, %c0_7, %c0_8] : memref<3x16x256xf32, #tpu.memory_space<vmem>>, vector<1x16x256xf32>
    %6 = vector.shape_cast %5 : vector<1x16x256xf32> to vector<16x256xf32>
    %cst = arith.constant 0.000000e+00 : f32
    %7 = vector.broadcast %cst : f32 to vector<1x8x16xf32>
    %8 = vector.extract_strided_slice %0 {offsets = [0, 0, 0], sizes = [39, 8, 16], strides = [1, 1, 1]} : vector<40x8x16xf32> to vector<39x8x16xf32>
    %9 = tpu.concatenate %7, %8 in 0 : vector<1x8x16xf32>, vector<39x8x16xf32> -> vector<40x8x16xf32>
    %10 = vector.extract_strided_slice %0 {offsets = [1, 0, 0], sizes = [39, 8, 16], strides = [1, 1, 1]} : vector<40x8x16xf32> to vector<39x8x16xf32>
    %11 = tpu.concatenate %10, %7 in 0 : vector<39x8x16xf32>, vector<1x8x16xf32> -> vector<40x8x16xf32>
    %12 = vector.shape_cast %0 : vector<40x8x16xf32> to vector<320x16xf32>
    %cst_9 = arith.constant dense<0.000000e+00> : vector<320x256xf32>
    %13 = tpu.matmul %12, %4, %cst_9 {dimension_numbers = #tpu.dot_dimension_numbers<[1], [0], [0], [1], [0, 0, 1, 1], [], []>} : vector<320x16xf32>, vector<16x256xf32>, vector<320x256xf32> -> vector<320x256xf32>
    %14 = vector.shape_cast %9 : vector<40x8x16xf32> to vector<320x16xf32>
    %cst_10 = arith.constant dense<0.000000e+00> : vector<320x256xf32>
    %15 = tpu.matmul %14, %2, %cst_10 {dimension_numbers = #tpu.dot_dimension_numbers<[1], [0], [0], [1], [0, 0, 1, 1], [], []>} : vector<320x16xf32>, vector<16x256xf32>, vector<320x256xf32> -> vector<320x256xf32>
    %16 = arith.addf %13, %15 : vector<320x256xf32>
    %17 = vector.shape_cast %11 : vector<40x8x16xf32> to vector<320x16xf32>
    %cst_11 = arith.constant dense<0.000000e+00> : vector<320x256xf32>
    %18 = tpu.matmul %17, %6, %cst_11 {dimension_numbers = #tpu.dot_dimension_numbers<[1], [0], [0], [1], [0, 0, 1, 1], [], []>} : vector<320x16xf32>, vector<16x256xf32>, vector<320x256xf32> -> vector<320x256xf32>
    %19 = arith.addf %16, %18 : vector<320x256xf32>
    %c0_12 = arith.constant 0 : index
    %c0_13 = arith.constant 0 : index
    %20 = vector.load %arg3[%c0_12, %c0_13] : memref<1x256xf32, #tpu.memory_space<vmem>>, vector<1x256xf32>
    %21 = vector.broadcast %20 : vector<1x256xf32> to vector<320x256xf32>
    %22 = arith.addf %19, %21 : vector<320x256xf32>
    %cst_14 = arith.constant 0.000000e+00 : f32
    %23 = vector.broadcast %cst_14 : f32 to vector<320x256xf32>
    %24 = arith.cmpf ogt, %22, %23 : vector<320x256xf32>
    %cst_15 = arith.constant 0.00999999977 : f32
    %25 = vector.broadcast %cst_15 : f32 to vector<320x256xf32>
    %26 = arith.mulf %25, %22 : vector<320x256xf32>
    %27 = arith.select %24, %22, %26 : vector<320x256xi1>, vector<320x256xf32>
    %28 = vector.shape_cast %27 : vector<320x256xf32> to vector<40x8x256xf32>
    %c0_16 = arith.constant 0 : index
    %c0_17 = arith.constant 0 : index
    %c0_18 = arith.constant 0 : index
    %29 = vector.load %arg4[%c0_16, %c0_17, %c0_18] : memref<3x256x256xf32, #tpu.memory_space<vmem>>, vector<1x256x256xf32>
    %30 = vector.shape_cast %29 : vector<1x256x256xf32> to vector<256x256xf32>
    %c1_19 = arith.constant 1 : index
    %c0_20 = arith.constant 0 : index
    %c0_21 = arith.constant 0 : index
    %31 = vector.load %arg4[%c1_19, %c0_20, %c0_21] : memref<3x256x256xf32, #tpu.memory_space<vmem>>, vector<1x256x256xf32>
    %32 = vector.shape_cast %31 : vector<1x256x256xf32> to vector<256x256xf32>
    %c2_22 = arith.constant 2 : index
    %c0_23 = arith.constant 0 : index
    %c0_24 = arith.constant 0 : index
    %33 = vector.load %arg4[%c2_22, %c0_23, %c0_24] : memref<3x256x256xf32, #tpu.memory_space<vmem>>, vector<1x256x256xf32>
    %34 = vector.shape_cast %33 : vector<1x256x256xf32> to vector<256x256xf32>
    %cst_25 = arith.constant 0.000000e+00 : f32
    %35 = vector.broadcast %cst_25 : f32 to vector<1x8x256xf32>
    %36 = vector.extract_strided_slice %28 {offsets = [0, 0, 0], sizes = [39, 8, 256], strides = [1, 1, 1]} : vector<40x8x256xf32> to vector<39x8x256xf32>
    %37 = tpu.concatenate %35, %36 in 0 : vector<1x8x256xf32>, vector<39x8x256xf32> -> vector<40x8x256xf32>
    %38 = vector.extract_strided_slice %28 {offsets = [1, 0, 0], sizes = [39, 8, 256], strides = [1, 1, 1]} : vector<40x8x256xf32> to vector<39x8x256xf32>
    %39 = tpu.concatenate %38, %35 in 0 : vector<39x8x256xf32>, vector<1x8x256xf32> -> vector<40x8x256xf32>
    %40 = vector.shape_cast %28 : vector<40x8x256xf32> to vector<320x256xf32>
    %cst_26 = arith.constant dense<0.000000e+00> : vector<320x256xf32>
    %41 = tpu.matmul %40, %32, %cst_26 {dimension_numbers = #tpu.dot_dimension_numbers<[1], [0], [0], [1], [0, 0, 1, 1], [], []>} : vector<320x256xf32>, vector<256x256xf32>, vector<320x256xf32> -> vector<320x256xf32>
    %42 = vector.shape_cast %37 : vector<40x8x256xf32> to vector<320x256xf32>
    %cst_27 = arith.constant dense<0.000000e+00> : vector<320x256xf32>
    %43 = tpu.matmul %42, %30, %cst_27 {dimension_numbers = #tpu.dot_dimension_numbers<[1], [0], [0], [1], [0, 0, 1, 1], [], []>} : vector<320x256xf32>, vector<256x256xf32>, vector<320x256xf32> -> vector<320x256xf32>
    %44 = arith.addf %41, %43 : vector<320x256xf32>
    %45 = vector.shape_cast %39 : vector<40x8x256xf32> to vector<320x256xf32>
    %cst_28 = arith.constant dense<0.000000e+00> : vector<320x256xf32>
    %46 = tpu.matmul %45, %34, %cst_28 {dimension_numbers = #tpu.dot_dimension_numbers<[1], [0], [0], [1], [0, 0, 1, 1], [], []>} : vector<320x256xf32>, vector<256x256xf32>, vector<320x256xf32> -> vector<320x256xf32>
    %47 = arith.addf %44, %46 : vector<320x256xf32>
    %c0_29 = arith.constant 0 : index
    %c0_30 = arith.constant 0 : index
    %48 = vector.load %arg5[%c0_29, %c0_30] : memref<1x256xf32, #tpu.memory_space<vmem>>, vector<1x256xf32>
    %49 = vector.broadcast %48 : vector<1x256xf32> to vector<320x256xf32>
    %50 = arith.addf %47, %49 : vector<320x256xf32>
    %cst_31 = arith.constant 0.000000e+00 : f32
    %51 = vector.broadcast %cst_31 : f32 to vector<320x256xf32>
    %52 = arith.cmpf ogt, %50, %51 : vector<320x256xf32>
    %cst_32 = arith.constant 0.00999999977 : f32
    %53 = vector.broadcast %cst_32 : f32 to vector<320x256xf32>
    %54 = arith.mulf %53, %50 : vector<320x256xf32>
    %55 = arith.select %52, %50, %54 : vector<320x256xi1>, vector<320x256xf32>
    %56 = vector.shape_cast %55 : vector<320x256xf32> to vector<40x8x256xf32>
    %57 = vector.extract_strided_slice %56 {offsets = [0, 0, 0], sizes = [40, 8, 128], strides = [1, 1, 1]} : vector<40x8x256xf32> to vector<40x8x128xf32>
    %58 = vector.extract_strided_slice %56 {offsets = [0, 0, 128], sizes = [40, 8, 128], strides = [1, 1, 1]} : vector<40x8x256xf32> to vector<40x8x128xf32>
    %59 = arith.maximumf %57, %58 : vector<40x8x128xf32>
    %c0_33 = arith.constant 0 : index
    %c0_34 = arith.constant 0 : index
    %c0_35 = arith.constant 0 : index
    %60 = vector.load %arg6[%c0_33, %c0_34, %c0_35] : memref<3x128x256xf32, #tpu.memory_space<vmem>>, vector<1x128x256xf32>
    %61 = vector.shape_cast %60 : vector<1x128x256xf32> to vector<128x256xf32>
    %c1_36 = arith.constant 1 : index
    %c0_37 = arith.constant 0 : index
    %c0_38 = arith.constant 0 : index
    %62 = vector.load %arg6[%c1_36, %c0_37, %c0_38] : memref<3x128x256xf32, #tpu.memory_space<vmem>>, vector<1x128x256xf32>
    %63 = vector.shape_cast %62 : vector<1x128x256xf32> to vector<128x256xf32>
    %c2_39 = arith.constant 2 : index
    %c0_40 = arith.constant 0 : index
    %c0_41 = arith.constant 0 : index
    %64 = vector.load %arg6[%c2_39, %c0_40, %c0_41] : memref<3x128x256xf32, #tpu.memory_space<vmem>>, vector<1x128x256xf32>
    %65 = vector.shape_cast %64 : vector<1x128x256xf32> to vector<128x256xf32>
    %cst_42 = arith.constant 0.000000e+00 : f32
    %66 = vector.broadcast %cst_42 : f32 to vector<1x8x128xf32>
    %67 = vector.extract_strided_slice %59 {offsets = [0, 0, 0], sizes = [39, 8, 128], strides = [1, 1, 1]} : vector<40x8x128xf32> to vector<39x8x128xf32>
    %68 = tpu.concatenate %66, %67 in 0 : vector<1x8x128xf32>, vector<39x8x128xf32> -> vector<40x8x128xf32>
    %69 = vector.extract_strided_slice %59 {offsets = [1, 0, 0], sizes = [39, 8, 128], strides = [1, 1, 1]} : vector<40x8x128xf32> to vector<39x8x128xf32>
    %70 = tpu.concatenate %69, %66 in 0 : vector<39x8x128xf32>, vector<1x8x128xf32> -> vector<40x8x128xf32>
    %71 = vector.shape_cast %59 : vector<40x8x128xf32> to vector<320x128xf32>
    %cst_43 = arith.constant dense<0.000000e+00> : vector<320x256xf32>
    %72 = tpu.matmul %71, %63, %cst_43 {dimension_numbers = #tpu.dot_dimension_numbers<[1], [0], [0], [1], [0, 0, 1, 1], [], []>} : vector<320x128xf32>, vector<128x256xf32>, vector<320x256xf32> -> vector<320x256xf32>
    %73 = vector.shape_cast %68 : vector<40x8x128xf32> to vector<320x128xf32>
    %cst_44 = arith.constant dense<0.000000e+00> : vector<320x256xf32>
    %74 = tpu.matmul %73, %61, %cst_44 {dimension_numbers = #tpu.dot_dimension_numbers<[1], [0], [0], [1], [0, 0, 1, 1], [], []>} : vector<320x128xf32>, vector<128x256xf32>, vector<320x256xf32> -> vector<320x256xf32>
    %75 = arith.addf %72, %74 : vector<320x256xf32>
    %76 = vector.shape_cast %70 : vector<40x8x128xf32> to vector<320x128xf32>
    %cst_45 = arith.constant dense<0.000000e+00> : vector<320x256xf32>
    %77 = tpu.matmul %76, %65, %cst_45 {dimension_numbers = #tpu.dot_dimension_numbers<[1], [0], [0], [1], [0, 0, 1, 1], [], []>} : vector<320x128xf32>, vector<128x256xf32>, vector<320x256xf32> -> vector<320x256xf32>
    %78 = arith.addf %75, %77 : vector<320x256xf32>
    %c0_46 = arith.constant 0 : index
    %c0_47 = arith.constant 0 : index
    %79 = vector.load %arg7[%c0_46, %c0_47] : memref<1x256xf32, #tpu.memory_space<vmem>>, vector<1x256xf32>
    %80 = vector.broadcast %79 : vector<1x256xf32> to vector<320x256xf32>
    %81 = arith.addf %78, %80 : vector<320x256xf32>
    %cst_48 = arith.constant 0.000000e+00 : f32
    %82 = vector.broadcast %cst_48 : f32 to vector<320x256xf32>
    %83 = arith.cmpf ogt, %81, %82 : vector<320x256xf32>
    %cst_49 = arith.constant 0.00999999977 : f32
    %84 = vector.broadcast %cst_49 : f32 to vector<320x256xf32>
    %85 = arith.mulf %84, %81 : vector<320x256xf32>
    %86 = arith.select %83, %81, %85 : vector<320x256xi1>, vector<320x256xf32>
    %87 = vector.shape_cast %86 : vector<320x256xf32> to vector<40x8x256xf32>
    %c0_50 = arith.constant 0 : index
    %c0_51 = arith.constant 0 : index
    %c0_52 = arith.constant 0 : index
    %88 = vector.load %arg8[%c0_50, %c0_51, %c0_52] : memref<3x256x256xf32, #tpu.memory_space<vmem>>, vector<1x256x256xf32>
    %89 = vector.shape_cast %88 : vector<1x256x256xf32> to vector<256x256xf32>
    %c1_53 = arith.constant 1 : index
    %c0_54 = arith.constant 0 : index
    %c0_55 = arith.constant 0 : index
    %90 = vector.load %arg8[%c1_53, %c0_54, %c0_55] : memref<3x256x256xf32, #tpu.memory_space<vmem>>, vector<1x256x256xf32>
    %91 = vector.shape_cast %90 : vector<1x256x256xf32> to vector<256x256xf32>
    %c2_56 = arith.constant 2 : index
    %c0_57 = arith.constant 0 : index
    %c0_58 = arith.constant 0 : index
    %92 = vector.load %arg8[%c2_56, %c0_57, %c0_58] : memref<3x256x256xf32, #tpu.memory_space<vmem>>, vector<1x256x256xf32>
    %93 = vector.shape_cast %92 : vector<1x256x256xf32> to vector<256x256xf32>
    %cst_59 = arith.constant 0.000000e+00 : f32
    %94 = vector.broadcast %cst_59 : f32 to vector<1x8x256xf32>
    %95 = vector.extract_strided_slice %87 {offsets = [0, 0, 0], sizes = [39, 8, 256], strides = [1, 1, 1]} : vector<40x8x256xf32> to vector<39x8x256xf32>
    %96 = tpu.concatenate %94, %95 in 0 : vector<1x8x256xf32>, vector<39x8x256xf32> -> vector<40x8x256xf32>
    %97 = vector.extract_strided_slice %87 {offsets = [1, 0, 0], sizes = [39, 8, 256], strides = [1, 1, 1]} : vector<40x8x256xf32> to vector<39x8x256xf32>
    %98 = tpu.concatenate %97, %94 in 0 : vector<39x8x256xf32>, vector<1x8x256xf32> -> vector<40x8x256xf32>
    %99 = vector.shape_cast %87 : vector<40x8x256xf32> to vector<320x256xf32>
    %cst_60 = arith.constant dense<0.000000e+00> : vector<320x256xf32>
    %100 = tpu.matmul %99, %91, %cst_60 {dimension_numbers = #tpu.dot_dimension_numbers<[1], [0], [0], [1], [0, 0, 1, 1], [], []>} : vector<320x256xf32>, vector<256x256xf32>, vector<320x256xf32> -> vector<320x256xf32>
    %101 = vector.shape_cast %96 : vector<40x8x256xf32> to vector<320x256xf32>
    %cst_61 = arith.constant dense<0.000000e+00> : vector<320x256xf32>
    %102 = tpu.matmul %101, %89, %cst_61 {dimension_numbers = #tpu.dot_dimension_numbers<[1], [0], [0], [1], [0, 0, 1, 1], [], []>} : vector<320x256xf32>, vector<256x256xf32>, vector<320x256xf32> -> vector<320x256xf32>
    %103 = arith.addf %100, %102 : vector<320x256xf32>
    %104 = vector.shape_cast %98 : vector<40x8x256xf32> to vector<320x256xf32>
    %cst_62 = arith.constant dense<0.000000e+00> : vector<320x256xf32>
    %105 = tpu.matmul %104, %93, %cst_62 {dimension_numbers = #tpu.dot_dimension_numbers<[1], [0], [0], [1], [0, 0, 1, 1], [], []>} : vector<320x256xf32>, vector<256x256xf32>, vector<320x256xf32> -> vector<320x256xf32>
    %106 = arith.addf %103, %105 : vector<320x256xf32>
    %c0_63 = arith.constant 0 : index
    %c0_64 = arith.constant 0 : index
    %107 = vector.load %arg9[%c0_63, %c0_64] : memref<1x256xf32, #tpu.memory_space<vmem>>, vector<1x256xf32>
    %108 = vector.broadcast %107 : vector<1x256xf32> to vector<320x256xf32>
    %109 = arith.addf %106, %108 : vector<320x256xf32>
    %cst_65 = arith.constant 0.000000e+00 : f32
    %110 = vector.broadcast %cst_65 : f32 to vector<320x256xf32>
    %111 = arith.cmpf ogt, %109, %110 : vector<320x256xf32>
    %cst_66 = arith.constant 0.00999999977 : f32
    %112 = vector.broadcast %cst_66 : f32 to vector<320x256xf32>
    %113 = arith.mulf %112, %109 : vector<320x256xf32>
    %114 = arith.select %111, %109, %113 : vector<320x256xi1>, vector<320x256xf32>
    %115 = vector.shape_cast %114 : vector<320x256xf32> to vector<40x8x256xf32>
    %116 = vector.extract_strided_slice %115 {offsets = [0, 0, 0], sizes = [40, 8, 128], strides = [1, 1, 1]} : vector<40x8x256xf32> to vector<40x8x128xf32>
    %117 = vector.extract_strided_slice %115 {offsets = [0, 0, 128], sizes = [40, 8, 128], strides = [1, 1, 1]} : vector<40x8x256xf32> to vector<40x8x128xf32>
    %118 = arith.maximumf %116, %117 : vector<40x8x128xf32>
    %119 = vector.extract_strided_slice %118 {offsets = [0, 0, 0], sizes = [1, 8, 128], strides = [1, 1, 1]} : vector<40x8x128xf32> to vector<1x8x128xf32>
    %120 = vector.shape_cast %119 : vector<1x8x128xf32> to vector<8x128xf32>
    %121 = vector.extract_strided_slice %118 {offsets = [1, 0, 0], sizes = [1, 8, 128], strides = [1, 1, 1]} : vector<40x8x128xf32> to vector<1x8x128xf32>
    %122 = vector.shape_cast %121 : vector<1x8x128xf32> to vector<8x128xf32>
    %123 = vector.extract_strided_slice %118 {offsets = [2, 0, 0], sizes = [1, 8, 128], strides = [1, 1, 1]} : vector<40x8x128xf32> to vector<1x8x128xf32>
    %124 = vector.shape_cast %123 : vector<1x8x128xf32> to vector<8x128xf32>
    %125 = vector.extract_strided_slice %118 {offsets = [3, 0, 0], sizes = [1, 8, 128], strides = [1, 1, 1]} : vector<40x8x128xf32> to vector<1x8x128xf32>
    %126 = vector.shape_cast %125 : vector<1x8x128xf32> to vector<8x128xf32>
    %127 = vector.extract_strided_slice %118 {offsets = [4, 0, 0], sizes = [1, 8, 128], strides = [1, 1, 1]} : vector<40x8x128xf32> to vector<1x8x128xf32>
    %128 = vector.shape_cast %127 : vector<1x8x128xf32> to vector<8x128xf32>
    %129 = vector.extract_strided_slice %118 {offsets = [5, 0, 0], sizes = [1, 8, 128], strides = [1, 1, 1]} : vector<40x8x128xf32> to vector<1x8x128xf32>
    %130 = vector.shape_cast %129 : vector<1x8x128xf32> to vector<8x128xf32>
    %131 = vector.extract_strided_slice %118 {offsets = [6, 0, 0], sizes = [1, 8, 128], strides = [1, 1, 1]} : vector<40x8x128xf32> to vector<1x8x128xf32>
    %132 = vector.shape_cast %131 : vector<1x8x128xf32> to vector<8x128xf32>
    %133 = vector.extract_strided_slice %118 {offsets = [7, 0, 0], sizes = [1, 8, 128], strides = [1, 1, 1]} : vector<40x8x128xf32> to vector<1x8x128xf32>
    %134 = vector.shape_cast %133 : vector<1x8x128xf32> to vector<8x128xf32>
    %135 = vector.extract_strided_slice %118 {offsets = [8, 0, 0], sizes = [1, 8, 128], strides = [1, 1, 1]} : vector<40x8x128xf32> to vector<1x8x128xf32>
    %136 = vector.shape_cast %135 : vector<1x8x128xf32> to vector<8x128xf32>
    %137 = vector.extract_strided_slice %118 {offsets = [9, 0, 0], sizes = [1, 8, 128], strides = [1, 1, 1]} : vector<40x8x128xf32> to vector<1x8x128xf32>
    %138 = vector.shape_cast %137 : vector<1x8x128xf32> to vector<8x128xf32>
    %139 = vector.extract_strided_slice %118 {offsets = [10, 0, 0], sizes = [1, 8, 128], strides = [1, 1, 1]} : vector<40x8x128xf32> to vector<1x8x128xf32>
    %140 = vector.shape_cast %139 : vector<1x8x128xf32> to vector<8x128xf32>
    %141 = vector.extract_strided_slice %118 {offsets = [11, 0, 0], sizes = [1, 8, 128], strides = [1, 1, 1]} : vector<40x8x128xf32> to vector<1x8x128xf32>
    %142 = vector.shape_cast %141 : vector<1x8x128xf32> to vector<8x128xf32>
    %143 = vector.extract_strided_slice %118 {offsets = [12, 0, 0], sizes = [1, 8, 128], strides = [1, 1, 1]} : vector<40x8x128xf32> to vector<1x8x128xf32>
    %144 = vector.shape_cast %143 : vector<1x8x128xf32> to vector<8x128xf32>
    %145 = vector.extract_strided_slice %118 {offsets = [13, 0, 0], sizes = [1, 8, 128], strides = [1, 1, 1]} : vector<40x8x128xf32> to vector<1x8x128xf32>
    %146 = vector.shape_cast %145 : vector<1x8x128xf32> to vector<8x128xf32>
    %147 = vector.extract_strided_slice %118 {offsets = [14, 0, 0], sizes = [1, 8, 128], strides = [1, 1, 1]} : vector<40x8x128xf32> to vector<1x8x128xf32>
    %148 = vector.shape_cast %147 : vector<1x8x128xf32> to vector<8x128xf32>
    %149 = vector.extract_strided_slice %118 {offsets = [15, 0, 0], sizes = [1, 8, 128], strides = [1, 1, 1]} : vector<40x8x128xf32> to vector<1x8x128xf32>
    %150 = vector.shape_cast %149 : vector<1x8x128xf32> to vector<8x128xf32>
    %151 = vector.extract_strided_slice %118 {offsets = [16, 0, 0], sizes = [1, 8, 128], strides = [1, 1, 1]} : vector<40x8x128xf32> to vector<1x8x128xf32>
    %152 = vector.shape_cast %151 : vector<1x8x128xf32> to vector<8x128xf32>
    %153 = vector.extract_strided_slice %118 {offsets = [17, 0, 0], sizes = [1, 8, 128], strides = [1, 1, 1]} : vector<40x8x128xf32> to vector<1x8x128xf32>
    %154 = vector.shape_cast %153 : vector<1x8x128xf32> to vector<8x128xf32>
    %155 = vector.extract_strided_slice %118 {offsets = [18, 0, 0], sizes = [1, 8, 128], strides = [1, 1, 1]} : vector<40x8x128xf32> to vector<1x8x128xf32>
    %156 = vector.shape_cast %155 : vector<1x8x128xf32> to vector<8x128xf32>
    %157 = vector.extract_strided_slice %118 {offsets = [19, 0, 0], sizes = [1, 8, 128], strides = [1, 1, 1]} : vector<40x8x128xf32> to vector<1x8x128xf32>
    %158 = vector.shape_cast %157 : vector<1x8x128xf32> to vector<8x128xf32>
    %159 = vector.extract_strided_slice %118 {offsets = [20, 0, 0], sizes = [1, 8, 128], strides = [1, 1, 1]} : vector<40x8x128xf32> to vector<1x8x128xf32>
    %160 = vector.shape_cast %159 : vector<1x8x128xf32> to vector<8x128xf32>
    %161 = vector.extract_strided_slice %118 {offsets = [21, 0, 0], sizes = [1, 8, 128], strides = [1, 1, 1]} : vector<40x8x128xf32> to vector<1x8x128xf32>
    %162 = vector.shape_cast %161 : vector<1x8x128xf32> to vector<8x128xf32>
    %163 = vector.extract_strided_slice %118 {offsets = [22, 0, 0], sizes = [1, 8, 128], strides = [1, 1, 1]} : vector<40x8x128xf32> to vector<1x8x128xf32>
    %164 = vector.shape_cast %163 : vector<1x8x128xf32> to vector<8x128xf32>
    %165 = vector.extract_strided_slice %118 {offsets = [23, 0, 0], sizes = [1, 8, 128], strides = [1, 1, 1]} : vector<40x8x128xf32> to vector<1x8x128xf32>
    %166 = vector.shape_cast %165 : vector<1x8x128xf32> to vector<8x128xf32>
    %167 = vector.extract_strided_slice %118 {offsets = [24, 0, 0], sizes = [1, 8, 128], strides = [1, 1, 1]} : vector<40x8x128xf32> to vector<1x8x128xf32>
    %168 = vector.shape_cast %167 : vector<1x8x128xf32> to vector<8x128xf32>
    %169 = vector.extract_strided_slice %118 {offsets = [25, 0, 0], sizes = [1, 8, 128], strides = [1, 1, 1]} : vector<40x8x128xf32> to vector<1x8x128xf32>
    %170 = vector.shape_cast %169 : vector<1x8x128xf32> to vector<8x128xf32>
    %171 = vector.extract_strided_slice %118 {offsets = [26, 0, 0], sizes = [1, 8, 128], strides = [1, 1, 1]} : vector<40x8x128xf32> to vector<1x8x128xf32>
    %172 = vector.shape_cast %171 : vector<1x8x128xf32> to vector<8x128xf32>
    %173 = vector.extract_strided_slice %118 {offsets = [27, 0, 0], sizes = [1, 8, 128], strides = [1, 1, 1]} : vector<40x8x128xf32> to vector<1x8x128xf32>
    %174 = vector.shape_cast %173 : vector<1x8x128xf32> to vector<8x128xf32>
    %175 = vector.extract_strided_slice %118 {offsets = [28, 0, 0], sizes = [1, 8, 128], strides = [1, 1, 1]} : vector<40x8x128xf32> to vector<1x8x128xf32>
    %176 = vector.shape_cast %175 : vector<1x8x128xf32> to vector<8x128xf32>
    %177 = vector.extract_strided_slice %118 {offsets = [29, 0, 0], sizes = [1, 8, 128], strides = [1, 1, 1]} : vector<40x8x128xf32> to vector<1x8x128xf32>
    %178 = vector.shape_cast %177 : vector<1x8x128xf32> to vector<8x128xf32>
    %179 = vector.extract_strided_slice %118 {offsets = [30, 0, 0], sizes = [1, 8, 128], strides = [1, 1, 1]} : vector<40x8x128xf32> to vector<1x8x128xf32>
    %180 = vector.shape_cast %179 : vector<1x8x128xf32> to vector<8x128xf32>
    %181 = vector.extract_strided_slice %118 {offsets = [31, 0, 0], sizes = [1, 8, 128], strides = [1, 1, 1]} : vector<40x8x128xf32> to vector<1x8x128xf32>
    %182 = vector.shape_cast %181 : vector<1x8x128xf32> to vector<8x128xf32>
    %183 = vector.extract_strided_slice %118 {offsets = [32, 0, 0], sizes = [1, 8, 128], strides = [1, 1, 1]} : vector<40x8x128xf32> to vector<1x8x128xf32>
    %184 = vector.shape_cast %183 : vector<1x8x128xf32> to vector<8x128xf32>
    %185 = vector.extract_strided_slice %118 {offsets = [33, 0, 0], sizes = [1, 8, 128], strides = [1, 1, 1]} : vector<40x8x128xf32> to vector<1x8x128xf32>
    %186 = vector.shape_cast %185 : vector<1x8x128xf32> to vector<8x128xf32>
    %187 = vector.extract_strided_slice %118 {offsets = [34, 0, 0], sizes = [1, 8, 128], strides = [1, 1, 1]} : vector<40x8x128xf32> to vector<1x8x128xf32>
    %188 = vector.shape_cast %187 : vector<1x8x128xf32> to vector<8x128xf32>
    %189 = vector.extract_strided_slice %118 {offsets = [35, 0, 0], sizes = [1, 8, 128], strides = [1, 1, 1]} : vector<40x8x128xf32> to vector<1x8x128xf32>
    %190 = vector.shape_cast %189 : vector<1x8x128xf32> to vector<8x128xf32>
    %191 = vector.extract_strided_slice %118 {offsets = [36, 0, 0], sizes = [1, 8, 128], strides = [1, 1, 1]} : vector<40x8x128xf32> to vector<1x8x128xf32>
    %192 = vector.shape_cast %191 : vector<1x8x128xf32> to vector<8x128xf32>
    %193 = vector.extract_strided_slice %118 {offsets = [37, 0, 0], sizes = [1, 8, 128], strides = [1, 1, 1]} : vector<40x8x128xf32> to vector<1x8x128xf32>
    %194 = vector.shape_cast %193 : vector<1x8x128xf32> to vector<8x128xf32>
    %195 = vector.extract_strided_slice %118 {offsets = [38, 0, 0], sizes = [1, 8, 128], strides = [1, 1, 1]} : vector<40x8x128xf32> to vector<1x8x128xf32>
    %196 = vector.shape_cast %195 : vector<1x8x128xf32> to vector<8x128xf32>
    %197 = vector.extract_strided_slice %118 {offsets = [39, 0, 0], sizes = [1, 8, 128], strides = [1, 1, 1]} : vector<40x8x128xf32> to vector<1x8x128xf32>
    %198 = vector.shape_cast %197 : vector<1x8x128xf32> to vector<8x128xf32>
    %199 = tpu.concatenate %120, %122, %124, %126, %128, %130, %132, %134, %136, %138, %140, %142, %144, %146, %148, %150 in 1 : vector<8x128xf32>, vector<8x128xf32>, vector<8x128xf32>, vector<8x128xf32>, vector<8x128xf32>, vector<8x128xf32>, vector<8x128xf32>, vector<8x128xf32>, vector<8x128xf32>, vector<8x128xf32>, vector<8x128xf32>, vector<8x128xf32>, vector<8x128xf32>, vector<8x128xf32>, vector<8x128xf32>, vector<8x128xf32> -> vector<8x2048xf32>
    %200 = tpu.concatenate %152, %154, %156, %158, %160, %162, %164, %166, %168, %170, %172, %174, %176, %178, %180, %182 in 1 : vector<8x128xf32>, vector<8x128xf32>, vector<8x128xf32>, vector<8x128xf32>, vector<8x128xf32>, vector<8x128xf32>, vector<8x128xf32>, vector<8x128xf32>, vector<8x128xf32>, vector<8x128xf32>, vector<8x128xf32>, vector<8x128xf32>, vector<8x128xf32>, vector<8x128xf32>, vector<8x128xf32>, vector<8x128xf32> -> vector<8x2048xf32>
    %201 = tpu.concatenate %184, %186, %188, %190, %192, %194, %196, %198 in 1 : vector<8x128xf32>, vector<8x128xf32>, vector<8x128xf32>, vector<8x128xf32>, vector<8x128xf32>, vector<8x128xf32>, vector<8x128xf32>, vector<8x128xf32> -> vector<8x1024xf32>
    %202 = tpu.concatenate %199, %200, %201 in 1 : vector<8x2048xf32>, vector<8x2048xf32>, vector<8x1024xf32> -> vector<8x5120xf32>
    %c0_67 = arith.constant 0 : index
    %c0_68 = arith.constant 0 : index
    %203 = vector.load %arg10[%c0_67, %c0_68] : memref<5120x128xf32, #tpu.memory_space<vmem>>, vector<5120x128xf32>
    %cst_69 = arith.constant dense<0.000000e+00> : vector<8x128xf32>
    %204 = tpu.matmul %202, %203, %cst_69 {dimension_numbers = #tpu.dot_dimension_numbers<[1], [0], [0], [1], [0, 0, 1, 1], [], []>} : vector<8x5120xf32>, vector<5120x128xf32>, vector<8x128xf32> -> vector<8x128xf32>
    %c0_70 = arith.constant 0 : index
    %c0_71 = arith.constant 0 : index
    %205 = vector.load %arg11[%c0_70, %c0_71] : memref<1x128xf32, #tpu.memory_space<vmem>>, vector<1x128xf32>
    %206 = vector.broadcast %205 : vector<1x128xf32> to vector<8x128xf32>
    %207 = arith.addf %204, %206 : vector<8x128xf32>
    %c0_72 = arith.constant 0 : index
    %c0_73 = arith.constant 0 : index
    %208 = vector.load %arg12[%c0_72, %c0_73] : memref<8x128xf32, #tpu.memory_space<vmem>>, vector<8x128xf32>
    tpu.vector_store %arg12[%c0_72, %c0_73], %207 {strides = array<i32>} : memref<8x128xf32, #tpu.memory_space<vmem>>, vector<8x128xf32>,
    return
  }
  func.func @transform_0(%arg0: i32) -> (i32, i32, i32) {
    %c0_i32 = arith.constant 0 : i32
    %c0_i32_0 = arith.constant 0 : i32
    %c0_i32_1 = arith.constant 0 : i32
    return %c0_i32, %arg0, %c0_i32_0 : i32, i32, i32
  }
  func.func @transform_1(%arg0: i32) -> (i32, i32, i32) {
    %c0_i32 = arith.constant 0 : i32
    %c0_i32_0 = arith.constant 0 : i32
    %c0_i32_1 = arith.constant 0 : i32
    %c0_i32_2 = arith.constant 0 : i32
    return %c0_i32, %c0_i32_0, %c0_i32_1 : i32, i32, i32
  }
  func.func @transform_2(%arg0: i32) -> (i32, i32) {
    %c0_i32 = arith.constant 0 : i32
    %c0_i32_0 = arith.constant 0 : i32
    %c0_i32_1 = arith.constant 0 : i32
    return %c0_i32, %c0_i32_0 : i32, i32
  }
  func.func @transform_3(%arg0: i32) -> (i32, i32, i32) {
    %c0_i32 = arith.constant 0 : i32
    %c0_i32_0 = arith.constant 0 : i32
    %c0_i32_1 = arith.constant 0 : i32
    %c0_i32_2 = arith.constant 0 : i32
    return %c0_i32, %c0_i32_0, %c0_i32_1 : i32, i32, i32
  }
  func.func @transform_4(%arg0: i32) -> (i32, i32) {
    %c0_i32 = arith.constant 0 : i32
    %c0_i32_0 = arith.constant 0 : i32
    %c0_i32_1 = arith.constant 0 : i32
    return %c0_i32, %c0_i32_0 : i32, i32
  }
  func.func @transform_5(%arg0: i32) -> (i32, i32, i32) {
    %c0_i32 = arith.constant 0 : i32
    %c0_i32_0 = arith.constant 0 : i32
    %c0_i32_1 = arith.constant 0 : i32
    %c0_i32_2 = arith.constant 0 : i32
    return %c0_i32, %c0_i32_0, %c0_i32_1 : i32, i32, i32
  }
  func.func @transform_6(%arg0: i32) -> (i32, i32) {
    %c0_i32 = arith.constant 0 : i32
    %c0_i32_0 = arith.constant 0 : i32
    %c0_i32_1 = arith.constant 0 : i32
    return %c0_i32, %c0_i32_0 : i32, i32
  }
  func.func @transform_7(%arg0: i32) -> (i32, i32, i32) {
    %c0_i32 = arith.constant 0 : i32
    %c0_i32_0 = arith.constant 0 : i32
    %c0_i32_1 = arith.constant 0 : i32
    %c0_i32_2 = arith.constant 0 : i32
    return %c0_i32, %c0_i32_0, %c0_i32_1 : i32, i32, i32
  }
  func.func @transform_8(%arg0: i32) -> (i32, i32) {
    %c0_i32 = arith.constant 0 : i32
    %c0_i32_0 = arith.constant 0 : i32
    %c0_i32_1 = arith.constant 0 : i32
    return %c0_i32, %c0_i32_0 : i32, i32
  }
  func.func @transform_9(%arg0: i32) -> (i32, i32) {
    %c0_i32 = arith.constant 0 : i32
    %c0_i32_0 = arith.constant 0 : i32
    %c0_i32_1 = arith.constant 0 : i32
    return %c0_i32, %c0_i32_0 : i32, i32
  }
  func.func @transform_10(%arg0: i32) -> (i32, i32) {
    %c0_i32 = arith.constant 0 : i32
    %c0_i32_0 = arith.constant 0 : i32
    %c0_i32_1 = arith.constant 0 : i32
    return %c0_i32, %c0_i32_0 : i32, i32
  }
  func.func @transform_11(%arg0: i32) -> (i32, i32) {
    %c0_i32 = arith.constant 0 : i32
    %c0_i32_0 = arith.constant 0 : i32
    return %arg0, %c0_i32 : i32, i32
  }
}

</mosaic_0001>

<llo_original>
// kernel: deepsense_forward.1
$region0: #{deepsense_forward.1}
  #allocation0 [shape = 'u32[]', space=smem, size = 0x4, offset = 0x4, fixed_abs, tag = 'smem constant byte address 0x4 - core index']
  #allocation1 [shape = 'u32[72,128]{1,0:T(1,128)}', space=vmem, size = 0x9000, scoped, tag = 'internal scratch']
  %s0 = inlined_call_operand.vmem [shape: f32[40,8,16], index: 0, kind: input, shape index: {}]
  %s1 = inlined_call_operand.hbm [shape: f32[3,16,256], index: 1, kind: input, shape index: {}]
  %s2 = inlined_call_operand.hbm [shape: f32[1,256], index: 2, kind: input, shape index: {}]
  %s3 = inlined_call_operand.hbm [shape: f32[3,256,256], index: 3, kind: input, shape index: {}]
  %s4 = inlined_call_operand.hbm [shape: f32[1,256], index: 4, kind: input, shape index: {}]
  %s5 = inlined_call_operand.hbm [shape: f32[3,128,256], index: 5, kind: input, shape index: {}]
  %s6 = inlined_call_operand.hbm [shape: f32[1,256], index: 6, kind: input, shape index: {}]
  %s7 = inlined_call_operand.hbm [shape: f32[3,256,256], index: 7, kind: input, shape index: {}]
  %s8 = inlined_call_operand.hbm [shape: f32[1,256], index: 8, kind: input, shape index: {}]
  %s9 = inlined_call_operand.hbm [shape: f32[5120,128], index: 9, kind: input, shape index: {}]
  %s10 = inlined_call_operand.hbm [shape: f32[1,128], index: 10, kind: input, shape index: {}]
  %s11 = inlined_call_operand.vmem [shape: f32[8,128], index: 11, kind: output, shape index: {}]
  %s12 = sld [smem:[#allocation0]]
  $region94: #{deepsense_forward.1} parent=0
    _
  %s14 = ssub.s32 1, %s12
  %s15 = scalar_select 0, %s14, %s12
  $region1: #{deepsense_forward.1} parent=0
    #allocation2 [shape = 'u8[49152]{0}', space=vmem, size = 0xc000, scoped, tag = 'input window, operand 1, single buffered']
    #allocation3 [shape = 's32[1]{0}', space=sflag, size = 0x4, scoped, tag = 'scoped memory for deepsense_forward.1']
    #allocation4 [shape = 'u8[1024]{0}', space=vmem, size = 0x400, scoped, tag = 'input window, operand 2, single buffered']
    #allocation5 [shape = 's32[1]{0}', space=sflag, size = 0x4, scoped, tag = 'scoped memory for deepsense_forward.1']
    #allocation6 [shape = 'u8[786432]{0}', space=vmem, size = 0xc0000, scoped, tag = 'input window, operand 3, single buffered']
    #allocation7 [shape = 'u8[1024]{0}', space=vmem, size = 0x400, scoped, tag = 'input window, operand 4, single buffered']
    #allocation8 [shape = 's32[1]{0}', space=sflag, size = 0x4, scoped, tag = 'scoped memory for deepsense_forward.1']
    #allocation9 [shape = 'u8[393216]{0}', space=vmem, size = 0x60000, scoped, tag = 'input window, operand 5, single buffered']
    #allocation10 [shape = 'u8[1024]{0}', space=vmem, size = 0x400, scoped, tag = 'input window, operand 6, single buffered']
    #allocation11 [shape = 's32[1]{0}', space=sflag, size = 0x4, scoped, tag = 'scoped memory for deepsense_forward.1']
    #allocation12 [shape = 'u8[786432]{0}', space=vmem, size = 0xc0000, scoped, tag = 'input window, operand 7, single buffered']
    #allocation13 [shape = 'u8[1024]{0}', space=vmem, size = 0x400, scoped, tag = 'input window, operand 8, single buffered']
    #allocation14 [shape = 's32[1]{0}', space=sflag, size = 0x4, scoped, tag = 'scoped memory for deepsense_forward.1']
    #allocation15 [shape = 'u8[2621440]{0}', space=vmem, size = 0x280000, scoped, tag = 'input window, operand 9, single buffered']
    #allocation16 [shape = 'u8[512]{0}', space=vmem, size = 0x400, scoped, tag = 'input window, operand 10, single buffered']
    #allocation17 [shape = 's32[1]{0}', space=sflag, size = 0x4, scoped, tag = 'scoped memory for deepsense_forward.1']
    %16 = vsyncpa [#allocation3], 0
    %17 = vsyncpa [#allocation5], 0
    %18 = vsyncpa [#allocation8], 0
    %19 = vsyncpa [#allocation11], 0
    %20 = vsyncpa [#allocation14], 0
    %21 = vsyncpa [#allocation17], 0
    // Predicated region
    $region2: #{deepsense_forward.1} parent=1 // pred_check
      _
    $region3: #{deepsense_forward.1} parent=1 // pred_check_branch
      %23 = sbr.rel (0) target = $region5
    $region4: #{deepsense_forward.1} parent=1 // pred_region
      _
    $region5: #{deepsense_forward.1} parent=1 // pred_fallthru
      _
    // Predicated region
    $region6: #{deepsense_forward.1} parent=1 // pred_check
      _
    $region7: #{deepsense_forward.1} parent=1 // pred_check_branch
      %25 = sbr.rel (0) target = $region9
    $region8: #{deepsense_forward.1} parent=1 // pred_region
      %27 = vsyncadd [#allocation3], 0
      %s28 = sshll.u32 %s1, 4
      %s29 = int_to_ptr.hbm [resolvable:$true] %s28
      %s30 = sshll.u32 [#allocation2], 4
      %s31 = int_to_ptr.vmem [resolvable:$true] %s30
      %36 = dma.hbm_to_vmem [thread:$0]  %s29, 1536, %s31, [#allocation3], 256, 256, 16
    $region9: #{deepsense_forward.1} parent=1 // pred_fallthru
      _
    // Predicated region
    $region10: #{deepsense_forward.1} parent=1 // pred_check
      _
    $region11: #{deepsense_forward.1} parent=1 // pred_check_branch
      %38 = sbr.rel (0) target = $region13
    $region12: #{deepsense_forward.1} parent=1 // pred_region
      %40 = vsyncadd [#allocation5], 0
      %s42 = sshll.u32 %s2, 4
      %s43 = int_to_ptr.hbm [resolvable:$true] %s42
      %s44 = sshll.u32 [#allocation4], 4
      %s45 = int_to_ptr.vmem [resolvable:$true] %s44
      %47 = dma.hbm_to_vmem [thread:$0]  %s43, 32, %s45, [#allocation5]
    $region13: #{deepsense_forward.1} parent=1 // pred_fallthru
      _
    // Predicated region
    $region14: #{deepsense_forward.1} parent=1 // pred_check
      _
    $region15: #{deepsense_forward.1} parent=1 // pred_check_branch
      %49 = sbr.rel (0) target = $region17
    $region16: #{deepsense_forward.1} parent=1 // pred_region
      %51 = vsyncadd [#allocation5], 0
      %s52 = sshll.u32 %s3, 4
      %s53 = int_to_ptr.hbm [resolvable:$true] %s52
      %s54 = sshll.u32 [#allocation6], 4
      %s55 = int_to_ptr.vmem [resolvable:$true] %s54
      %60 = dma.hbm_to_vmem [thread:$0]  %s53, 24576, %s55, [#allocation5], 256, 256, 16
    $region17: #{deepsense_forward.1} parent=1 // pred_fallthru
      _
    // Predicated region
    $region18: #{deepsense_forward.1} parent=1 // pred_check
      _
    $region19: #{deepsense_forward.1} parent=1 // pred_check_branch
      %62 = sbr.rel (0) target = $region21
    $region20: #{deepsense_forward.1} parent=1 // pred_region
      %64 = vsyncadd [#allocation8], 0
      %s66 = sshll.u32 %s4, 4
      %s67 = int_to_ptr.hbm [resolvable:$true] %s66
      %s68 = sshll.u32 [#allocation7], 4
      %s69 = int_to_ptr.vmem [resolvable:$true] %s68
      %71 = dma.hbm_to_vmem [thread:$0]  %s67, 32, %s69, [#allocation8]
    $region21: #{deepsense_forward.1} parent=1 // pred_fallthru
      _
    // Predicated region
    $region22: #{deepsense_forward.1} parent=1 // pred_check
      _
    $region23: #{deepsense_forward.1} parent=1 // pred_check_branch
      %73 = sbr.rel (0) target = $region25
    $region24: #{deepsense_forward.1} parent=1 // pred_region
      %75 = vsyncadd [#allocation8], 0
      %s76 = sshll.u32 %s5, 4
      %s77 = int_to_ptr.hbm [resolvable:$true] %s76
      %s78 = sshll.u32 [#allocation9], 4
      %s79 = int_to_ptr.vmem [resolvable:$true] %s78
      %84 = dma.hbm_to_vmem [thread:$0]  %s77, 12288, %s79, [#allocation8], 256, 256, 16
    $region25: #{deepsense_forward.1} parent=1 // pred_fallthru
      _
    // Predicated region
    $region26: #{deepsense_forward.1} parent=1 // pred_check
      _
    $region27: #{deepsense_forward.1} parent=1 // pred_check_branch
      %86 = sbr.rel (0) target = $region29
    $region28: #{deepsense_forward.1} parent=1 // pred_region
      %88 = vsyncadd [#allocation11], 0
      %s90 = sshll.u32 %s6, 4
      %s91 = int_to_ptr.hbm [resolvable:$true] %s90
      %s92 = sshll.u32 [#allocation10], 4
      %s93 = int_to_ptr.vmem [resolvable:$true] %s92
      %95 = dma.hbm_to_vmem [thread:$0]  %s91, 32, %s93, [#allocation11]
    $region29: #{deepsense_forward.1} parent=1 // pred_fallthru
      _
    // Predicated region
    $region30: #{deepsense_forward.1} parent=1 // pred_check
      _
    $region31: #{deepsense_forward.1} parent=1 // pred_check_branch
      %97 = sbr.rel (0) target = $region33
    $region32: #{deepsense_forward.1} parent=1 // pred_region
      %99 = vsyncadd [#allocation11], 0
      %s100 = sshll.u32 %s7, 4
      %s101 = int_to_ptr.hbm [resolvable:$true] %s100
      %s102 = sshll.u32 [#allocation12], 4
      %s103 = int_to_ptr.vmem [resolvable:$true] %s102
      %108 = dma.hbm_to_vmem [thread:$0]  %s101, 24576, %s103, [#allocation11], 256, 256, 16
    $region33: #{deepsense_forward.1} parent=1 // pred_fallthru
      _
    // Predicated region
    $region34: #{deepsense_forward.1} parent=1 // pred_check
      _
    $region35: #{deepsense_forward.1} parent=1 // pred_check_branch
      %110 = sbr.rel (0) target = $region37
    $region36: #{deepsense_forward.1} parent=1 // pred_region
      %112 = vsyncadd [#allocation14], 0
      %s114 = sshll.u32 %s8, 4
      %s115 = int_to_ptr.hbm [resolvable:$true] %s114
      %s116 = sshll.u32 [#allocation13], 4
      %s117 = int_to_ptr.vmem [resolvable:$true] %s116
      %119 = dma.hbm_to_vmem [thread:$0]  %s115, 32, %s117, [#allocation14]
    $region37: #{deepsense_forward.1} parent=1 // pred_fallthru
      _
    // Predicated region
    $region38: #{deepsense_forward.1} parent=1 // pred_check
      _
    $region39: #{deepsense_forward.1} parent=1 // pred_check_branch
      %121 = sbr.rel (0) target = $region41
    $region40: #{deepsense_forward.1} parent=1 // pred_region
      %123 = vsyncadd [#allocation14], 0
      %s124 = sshll.u32 %s9, 4
      %s125 = int_to_ptr.hbm [resolvable:$true] %s124
      %s126 = sshll.u32 [#allocation15], 4
      %s127 = int_to_ptr.vmem [resolvable:$true] %s126
      %132 = dma.hbm_to_vmem [thread:$0]  %s125, 81920, %s127, [#allocation14], 128, 128, 8
    $region41: #{deepsense_forward.1} parent=1 // pred_fallthru
      _
    // Predicated region
    $region42: #{deepsense_forward.1} parent=1 // pred_check
      _
    $region43: #{deepsense_forward.1} parent=1 // pred_check_branch
      %134 = sbr.rel (0) target = $region45
    $region44: #{deepsense_forward.1} parent=1 // pred_region
      %136 = vsyncadd [#allocation17], 0
      %s138 = sshll.u32 %s10, 4
      %s139 = int_to_ptr.hbm [resolvable:$true] %s138
      %s140 = sshll.u32 [#allocation16], 4
      %s141 = int_to_ptr.vmem [resolvable:$true] %s140
      %143 = dma.hbm_to_vmem [thread:$0]  %s139, 16, %s141, [#allocation17]
    $region45: #{deepsense_forward.1} parent=1 // pred_fallthru
      _
    // Predicated region
    $region46: #{deepsense_forward.1} parent=1 // pred_check
      _
    $region47: #{deepsense_forward.1} parent=1 // pred_check_branch
      %145 = sbr.rel (0) target = $region49
    $region48: #{deepsense_forward.1} parent=1 // pred_region
      %147 = dma.done [#allocation3], 1536
    $region49: #{deepsense_forward.1} parent=1 // pred_fallthru
      _
    // Predicated region
    $region50: #{deepsense_forward.1} parent=1 // pred_check
      _
    $region51: #{deepsense_forward.1} parent=1 // pred_check_branch
      %149 = sbr.rel (0) target = $region53
    $region52: #{deepsense_forward.1} parent=1 // pred_region
      %151 = dma.done [#allocation5], 32
    $region53: #{deepsense_forward.1} parent=1 // pred_fallthru
      _
    // Predicated region
    $region54: #{deepsense_forward.1} parent=1 // pred_check
      _
    $region55: #{deepsense_forward.1} parent=1 // pred_check_branch
      %153 = sbr.rel (0) target = $region57
    $region56: #{deepsense_forward.1} parent=1 // pred_region
      %155 = dma.done [#allocation5], 24576
    $region57: #{deepsense_forward.1} parent=1 // pred_fallthru
      _
    // Predicated region
    $region58: #{deepsense_forward.1} parent=1 // pred_check
      _
    $region59: #{deepsense_forward.1} parent=1 // pred_check_branch
      %157 = sbr.rel (0) target = $region61
    $region60: #{deepsense_forward.1} parent=1 // pred_region
      %159 = dma.done [#allocation8], 32
    $region61: #{deepsense_forward.1} parent=1 // pred_fallthru
      _
    // Predicated region
    $region62: #{deepsense_forward.1} parent=1 // pred_check
      _
    $region63: #{deepsense_forward.1} parent=1 // pred_check_branch
      %161 = sbr.rel (0) target = $region65
    $region64: #{deepsense_forward.1} parent=1 // pred_region
      %163 = dma.done [#allocation8], 12288
    $region65: #{deepsense_forward.1} parent=1 // pred_fallthru
      _
    // Predicated region
    $region66: #{deepsense_forward.1} parent=1 // pred_check
      _
    $region67: #{deepsense_forward.1} parent=1 // pred_check_branch
      %165 = sbr.rel (0) target = $region69
    $region68: #{deepsense_forward.1} parent=1 // pred_region
      %167 = dma.done [#allocation11], 32
    $region69: #{deepsense_forward.1} parent=1 // pred_fallthru
      _
    // Predicated region
    $region70: #{deepsense_forward.1} parent=1 // pred_check
      _
    $region71: #{deepsense_forward.1} parent=1 // pred_check_branch
      %169 = sbr.rel (0) target = $region73
    $region72: #{deepsense_forward.1} parent=1 // pred_region
      %171 = dma.done [#allocation11], 24576
    $region73: #{deepsense_forward.1} parent=1 // pred_fallthru
      _
    // Predicated region
    $region74: #{deepsense_forward.1} parent=1 // pred_check
      _
    $region75: #{deepsense_forward.1} parent=1 // pred_check_branch
      %173 = sbr.rel (0) target = $region77
    $region76: #{deepsense_forward.1} parent=1 // pred_region
      %175 = dma.done [#allocation14], 32
    $region77: #{deepsense_forward.1} parent=1 // pred_fallthru
      _
    // Predicated region
    $region78: #{deepsense_forward.1} parent=1 // pred_check
      _
    $region79: #{deepsense_forward.1} parent=1 // pred_check_branch
      %177 = sbr.rel (0) target = $region81
    $region80: #{deepsense_forward.1} parent=1 // pred_region
      %179 = dma.done [#allocation14], 81920
    $region81: #{deepsense_forward.1} parent=1 // pred_fallthru
      _
    // Predicated region
    $region82: #{deepsense_forward.1} parent=1 // pred_check
      _
    $region83: #{deepsense_forward.1} parent=1 // pred_check_branch
      %181 = sbr.rel (0) target = $region85
    $region84: #{deepsense_forward.1} parent=1 // pred_region
      %183 = dma.done [#allocation17], 16
    $region85: #{deepsense_forward.1} parent=1 // pred_fallthru
      _
    %v184 = vld [vmem:[%s0] sm:$0xff]
    %v185 = vld [vmem:[%s0 + $0x8] sm:$0xff]
    %v186 = vld [vmem:[%s0 + $0x10] sm:$0xff]
    %v187 = vld [vmem:[%s0 + $0x18] sm:$0xff]
    %v188 = vld [vmem:[%s0 + $0x20] sm:$0xff]
    %v189 = vld [vmem:[%s0 + $0x28] sm:$0xff]
    %v190 = vld [vmem:[%s0 + $0x30] sm:$0xff]
    %v191 = vld [vmem:[%s0 + $0x38] sm:$0xff]
    %v192 = vld [vmem:[%s0 + $0x40] sm:$0xff]
    %v193 = vld [vmem:[%s0 + $0x48] sm:$0xff]
    %v194 = vld [vmem:[%s0 + $0x50] sm:$0xff]
    %v195 = vld [vmem:[%s0 + $0x58] sm:$0xff]
    %v196 = vld [vmem:[%s0 + $0x60] sm:$0xff]
    %v197 = vld [vmem:[%s0 + $0x68] sm:$0xff]
    %v198 = vld [vmem:[%s0 + $0x70] sm:$0xff]
    %v199 = vld [vmem:[%s0 + $0x78] sm:$0xff]
    %v200 = vld [vmem:[%s0 + $0x80] sm:$0xff]
    %v201 = vld [vmem:[%s0 + $0x88] sm:$0xff]
    %v202 = vld [vmem:[%s0 + $0x90] sm:$0xff]
    %v203 = vld [vmem:[%s0 + $0x98] sm:$0xff]
    %v204 = vld [vmem:[%s0 + $0xa0] sm:$0xff]
    %v205 = vld [vmem:[%s0 + $0xa8] sm:$0xff]
    %v206 = vld [vmem:[%s0 + $0xb0] sm:$0xff]
    %v207 = vld [vmem:[%s0 + $0xb8] sm:$0xff]
    %v208 = vld [vmem:[%s0 + $0xc0] sm:$0xff]
    %v209 = vld [vmem:[%s0 + $0xc8] sm:$0xff]
    %v210 = vld [vmem:[%s0 + $0xd0] sm:$0xff]
    %v211 = vld [vmem:[%s0 + $0xd8] sm:$0xff]
    %v212 = vld [vmem:[%s0 + $0xe0] sm:$0xff]
    %v213 = vld [vmem:[%s0 + $0xe8] sm:$0xff]
    %v214 = vld [vmem:[%s0 + $0xf0] sm:$0xff]
    %v215 = vld [vmem:[%s0 + $0xf8] sm:$0xff]
    %v216 = vld [vmem:[%s0 + $0x100] sm:$0xff]
    %v217 = vld [vmem:[%s0 + $0x108] sm:$0xff]
    %v218 = vld [vmem:[%s0 + $0x110] sm:$0xff]
    %v219 = vld [vmem:[%s0 + $0x118] sm:$0xff]
    %v220 = vld [vmem:[%s0 + $0x120] sm:$0xff]
    %v221 = vld [vmem:[%s0 + $0x128] sm:$0xff]
    %v222 = vld [vmem:[%s0 + $0x130] sm:$0xff]
    %v223 = vld [vmem:[%s0 + $0x138] sm:$0xff]
    %v224 = vld [vmem:[#allocation2] sm:$0xff]
    %v225 = vld [vmem:[#allocation2 + $0x8] sm:$0xff]
    %v226 = vld [vmem:[#allocation2 + $0x10] sm:$0xff]
    %v227 = vld [vmem:[#allocation2 + $0x18] sm:$0xff]
    %s228 = scalar_lea.vmem [#allocation2], 32
    %v229 = vld [vmem:[%s228] sm:$0xff]
    %v230 = vld [vmem:[%s228 + $0x8] sm:$0xff]
    %v231 = vld [vmem:[%s228 + $0x10] sm:$0xff]
    %v232 = vld [vmem:[%s228 + $0x18] sm:$0xff]
    %s233 = scalar_lea.vmem [#allocation2], 64
    %v234 = vld [vmem:[%s233] sm:$0xff]
    %v235 = vld [vmem:[%s233 + $0x8] sm:$0xff]
    %v236 = vld [vmem:[%s233 + $0x10] sm:$0xff]
    %v237 = vld [vmem:[%s233 + $0x18] sm:$0xff]
    %vm238 = vcmask 130048
    %v240 = vsel %vm238, 0.0, 0
    %v243 = vsel %vm238, %v184, 0
    %v246 = vsel %vm238, %v185, 0
    %v249 = vsel %vm238, %v186, 0
    %v252 = vsel %vm238, %v187, 0
    %v255 = vsel %vm238, %v188, 0
    %v258 = vsel %vm238, %v189, 0
    %v261 = vsel %vm238, %v190, 0
    %v264 = vsel %vm238, %v191, 0
    %v267 = vsel %vm238, %v192, 0
    %v270 = vsel %vm238, %v193, 0
    %v273 = vsel %vm238, %v194, 0
    %v276 = vsel %vm238, %v195, 0
    %v279 = vsel %vm238, %v196, 0
    %v282 = vsel %vm238, %v197, 0
    %v285 = vsel %vm238, %v198, 0
    %v288 = vsel %vm238, %v199, 0
    %v291 = vsel %vm238, %v200, 0
    %v294 = vsel %vm238, %v201, 0
    %v297 = vsel %vm238, %v202, 0
    %v300 = vsel %vm238, %v203, 0
    %v303 = vsel %vm238, %v204, 0
    %v306 = vsel %vm238, %v205, 0
    %v309 = vsel %vm238, %v206, 0
    %v312 = vsel %vm238, %v207, 0
    %v315 = vsel %vm238, %v208, 0
    %v318 = vsel %vm238, %v209, 0
    %v321 = vsel %vm238, %v210, 0
    %v324 = vsel %vm238, %v211, 0
    %v327 = vsel %vm238, %v212, 0
    %v330 = vsel %vm238, %v213, 0
    %v333 = vsel %vm238, %v214, 0
    %v336 = vsel %vm238, %v215, 0
    %v339 = vsel %vm238, %v216, 0
    %v342 = vsel %vm238, %v217, 0
    %v345 = vsel %vm238, %v218, 0
    %v348 = vsel %vm238, %v219, 0
    %v351 = vsel %vm238, %v220, 0
    %v354 = vsel %vm238, %v221, 0
    %v357 = vsel %vm238, %v222, 0
    %359 = vmatpush.msra.mxu0 0.0
    %360 = vmatpush.msra.mxu0 0.0
    %361 = vmatpush.msra.mxu0 0.0
    %362 = vmatpush.msra.mxu0 0.0
    %363 = vmatpush.msra.mxu0 0.0
    %364 = vmatpush.msra.mxu0 0.0
    %365 = vmatpush.msra.mxu0 0.0
    %366 = vmatpush.msra.mxu0 0.0
    %367 = vmatpush.msra.mxu0 0.0
    %368 = vmatpush.msra.mxu0 0.0
    %369 = vmatpush.msra.mxu0 0.0
    %370 = vmatpush.msra.mxu0 0.0
    %371 = vmatpush.msra.mxu0 0.0
    %372 = vmatpush.msra.mxu0 0.0
    %373 = vmatpush.msra.mxu0 %v226
    %374 = vmatpush.msra.mxu0 %v224
    %375 = vmatmul.f32.gmra.mxu0 %v240
    %v376 = vpop.f32.mrf.mxu0
    %v377 = vadd.f32 0.0, %v376
    %378 = vmatmul.f32.gmra.mxu0 %v243
    %v379 = vpop.f32.mrf.mxu0
    %v380 = vadd.f32 0.0, %v379
    %381 = vmatmul.f32.gmra.mxu0 %v246
    %v382 = vpop.f32.mrf.mxu0
    %v383 = vadd.f32 0.0, %v382
    %384 = vmatmul.f32.gmra.mxu0 %v249
    %v385 = vpop.f32.mrf.mxu0
    %v386 = vadd.f32 0.0, %v385
    %387 = vmatmul.f32.gmra.mxu0 %v252
    %v388 = vpop.f32.mrf.mxu0
    %v389 = vadd.f32 0.0, %v388
    %390 = vmatmul.f32.gmra.mxu0 %v255
    %v391 = vpop.f32.mrf.mxu0
    %v392 = vadd.f32 0.0, %v391
    %393 = vmatmul.f32.gmra.mxu0 %v258
    %v394 = vpop.f32.mrf.mxu0
    %v395 = vadd.f32 0.0, %v394
    %396 = vmatmul.f32.gmra.mxu0 %v261
    %v397 = vpop.f32.mrf.mxu0
    %v398 = vadd.f32 0.0, %v397
    %399 = vmatmul.f32.gmra.mxu0 %v264
    %v400 = vpop.f32.mrf.mxu0
    %v401 = vadd.f32 0.0, %v400
    %402 = vmatmul.f32.gmra.mxu0 %v267
    %v403 = vpop.f32.mrf.mxu0
    %v404 = vadd.f32 0.0, %v403
    %405 = vmatmul.f32.gmra.mxu0 %v270
    %v406 = vpop.f32.mrf.mxu0
    %v407 = vadd.f32 0.0, %v406
    %408 = vmatmul.f32.gmra.mxu0 %v273
    %v409 = vpop.f32.mrf.mxu0
    %v410 = vadd.f32 0.0, %v409
    %411 = vmatmul.f32.gmra.mxu0 %v276
    %v412 = vpop.f32.mrf.mxu0
    %v413 = vadd.f32 0.0, %v412
    %414 = vmatmul.f32.gmra.mxu0 %v279
    %v415 = vpop.f32.mrf.mxu0
    %v416 = vadd.f32 0.0, %v415
    %417 = vmatmul.f32.gmra.mxu0 %v282
    %v418 = vpop.f32.mrf.mxu0
    %v419 = vadd.f32 0.0, %v418
    %420 = vmatmul.f32.gmra.mxu0 %v285
    %v421 = vpop.f32.mrf.mxu0
    %v422 = vadd.f32 0.0, %v421
    %423 = vmatmul.f32.gmra.mxu0 %v288
    %v424 = vpop.f32.mrf.mxu0
    %v425 = vadd.f32 0.0, %v424
    %426 = vmatmul.f32.gmra.mxu0 %v291
    %v427 = vpop.f32.mrf.mxu0
    %v428 = vadd.f32 0.0, %v427
    %429 = vmatmul.f32.gmra.mxu0 %v294
    %v430 = vpop.f32.mrf.mxu0
    %v431 = vadd.f32 0.0, %v430
    %432 = vmatmul.f32.gmra.mxu0 %v297
    %v433 = vpop.f32.mrf.mxu0
    %v434 = vadd.f32 0.0, %v433
    %435 = vmatmul.f32.gmra.mxu0 %v300
    %v436 = vpop.f32.mrf.mxu0
    %v437 = vadd.f32 0.0, %v436
    %438 = vmatmul.f32.gmra.mxu0 %v303
    %v439 = vpop.f32.mrf.mxu0
    %v440 = vadd.f32 0.0, %v439
    %441 = vmatmul.f32.gmra.mxu0 %v306
    %v442 = vpop.f32.mrf.mxu0
    %v443 = vadd.f32 0.0, %v442
    %444 = vmatmul.f32.gmra.mxu0 %v309
    %v445 = vpop.f32.mrf.mxu0
    %v446 = vadd.f32 0.0, %v445
    %447 = vmatmul.f32.gmra.mxu0 %v312
    %v448 = vpop.f32.mrf.mxu0
    %v449 = vadd.f32 0.0, %v448
    %450 = vmatmul.f32.gmra.mxu0 %v315
    %v451 = vpop.f32.mrf.mxu0
    %v452 = vadd.f32 0.0, %v451
    %453 = vmatmul.f32.gmra.mxu0 %v318
    %v454 = vpop.f32.mrf.mxu0
    %v455 = vadd.f32 0.0, %v454
    %456 = vmatmul.f32.gmra.mxu0 %v321
    %v457 = vpop.f32.mrf.mxu0
    %v458 = vadd.f32 0.0, %v457
    %459 = vmatmul.f32.gmra.mxu0 %v324
    %v460 = vpop.f32.mrf.mxu0
    %v461 = vadd.f32 0.0, %v460
    %462 = vmatmul.f32.gmra.mxu0 %v327
    %v463 = vpop.f32.mrf.mxu0
    %v464 = vadd.f32 0.0, %v463
    %465 = vmatmul.f32.gmra.mxu0 %v330
    %v466 = vpop.f32.mrf.mxu0
    %v467 = vadd.f32 0.0, %v466
    %468 = vmatmul.f32.gmra.mxu0 %v333
    %v469 = vpop.f32.mrf.mxu0
    %v470 = vadd.f32 0.0, %v469
    %471 = vmatmul.f32.gmra.mxu0 %v336
    %v472 = vpop.f32.mrf.mxu0
    %v473 = vadd.f32 0.0, %v472
    %474 = vmatmul.f32.gmra.mxu0 %v339
    %v475 = vpop.f32.mrf.mxu0
    %v476 = vadd.f32 0.0, %v475
    %477 = vmatmul.f32.gmra.mxu0 %v342
    %v478 = vpop.f32.mrf.mxu0
    %v479 = vadd.f32 0.0, %v478
    %480 = vmatmul.f32.gmra.mxu0 %v345
    %v481 = vpop.f32.mrf.mxu0
    %v482 = vadd.f32 0.0, %v481
    %483 = vmatmul.f32.gmra.mxu0 %v348
    %v484 = vpop.f32.mrf.mxu0
    %v485 = vadd.f32 0.0, %v484
    %486 = vmatmul.f32.gmra.mxu0 %v351
    %v487 = vpop.f32.mrf.mxu0
    %v488 = vadd.f32 0.0, %v487
    %489 = vmatmul.f32.gmra.mxu0 %v354
    %v490 = vpop.f32.mrf.mxu0
    %v491 = vadd.f32 0.0, %v490
    %492 = vmatmul.f32.gmra.mxu0 %v357
    %v493 = vpop.f32.mrf.mxu0
    %v494 = vadd.f32 0.0, %v493
    %495 = vdwg.mxu0
    %496 = vmatpush.msra.mxu0 0.0
    %497 = vmatpush.msra.mxu0 0.0
    %498 = vmatpush.msra.mxu0 0.0
    %499 = vmatpush.msra.mxu0 0.0
    %500 = vmatpush.msra.mxu0 0.0
    %501 = vmatpush.msra.mxu0 0.0
    %502 = vmatpush.msra.mxu0 0.0
    %503 = vmatpush.msra.mxu0 0.0
    %504 = vmatpush.msra.mxu0 0.0
    %505 = vmatpush.msra.mxu0 0.0
    %506 = vmatpush.msra.mxu0 0.0
    %507 = vmatpush.msra.mxu0 0.0
    %508 = vmatpush.msra.mxu0 0.0
    %509 = vmatpush.msra.mxu0 0.0
    %510 = vmatpush.msra.mxu0 %v227
    %511 = vmatpush.msra.mxu0 %v225
    %512 = vmatmul.f32.gmra.mxu0 %v240
    %v513 = vpop.f32.mrf.mxu0
    %v514 = vadd.f32 0.0, %v513
    %515 = vmatmul.f32.gmra.mxu0 %v243
    %v516 = vpop.f32.mrf.mxu0
    %v517 = vadd.f32 0.0, %v516
    %518 = vmatmul.f32.gmra.mxu0 %v246
    %v519 = vpop.f32.mrf.mxu0
    %v520 = vadd.f32 0.0, %v519
    %521 = vmatmul.f32.gmra.mxu0 %v249
    %v522 = vpop.f32.mrf.mxu0
    %v523 = vadd.f32 0.0, %v522
    %524 = vmatmul.f32.gmra.mxu0 %v252
    %v525 = vpop.f32.mrf.mxu0
    %v526 = vadd.f32 0.0, %v525
    %527 = vmatmul.f32.gmra.mxu0 %v255
    %v528 = vpop.f32.mrf.mxu0
    %v529 = vadd.f32 0.0, %v528
    %530 = vmatmul.f32.gmra.mxu0 %v258
    %v531 = vpop.f32.mrf.mxu0
    %v532 = vadd.f32 0.0, %v531
    %533 = vmatmul.f32.gmra.mxu0 %v261
    %v534 = vpop.f32.mrf.mxu0
    %v535 = vadd.f32 0.0, %v534
    %536 = vmatmul.f32.gmra.mxu0 %v264
    %v537 = vpop.f32.mrf.mxu0
    %v538 = vadd.f32 0.0, %v537
    %539 = vmatmul.f32.gmra.mxu0 %v267
    %v540 = vpop.f32.mrf.mxu0
    %v541 = vadd.f32 0.0, %v540
    %542 = vmatmul.f32.gmra.mxu0 %v270
    %v543 = vpop.f32.mrf.mxu0
    %v544 = vadd.f32 0.0, %v543
    %545 = vmatmul.f32.gmra.mxu0 %v273
    %v546 = vpop.f32.mrf.mxu0
    %v547 = vadd.f32 0.0, %v546
    %548 = vmatmul.f32.gmra.mxu0 %v276
    %v549 = vpop.f32.mrf.mxu0
    %v550 = vadd.f32 0.0, %v549
    %551 = vmatmul.f32.gmra.mxu0 %v279
    %v552 = vpop.f32.mrf.mxu0
    %v553 = vadd.f32 0.0, %v552
    %554 = vmatmul.f32.gmra.mxu0 %v282
    %v555 = vpop.f32.mrf.mxu0
    %v556 = vadd.f32 0.0, %v555
    %557 = vmatmul.f32.gmra.mxu0 %v285
    %v558 = vpop.f32.mrf.mxu0
    %v559 = vadd.f32 0.0, %v558
    %560 = vmatmul.f32.gmra.mxu0 %v288
    %v561 = vpop.f32.mrf.mxu0
    %v562 = vadd.f32 0.0, %v561
    %563 = vmatmul.f32.gmra.mxu0 %v291
    %v564 = vpop.f32.mrf.mxu0
    %v565 = vadd.f32 0.0, %v564
    %566 = vmatmul.f32.gmra.mxu0 %v294
    %v567 = vpop.f32.mrf.mxu0
    %v568 = vadd.f32 0.0, %v567
    %569 = vmatmul.f32.gmra.mxu0 %v297
    %v570 = vpop.f32.mrf.mxu0
    %v571 = vadd.f32 0.0, %v570
    %572 = vmatmul.f32.gmra.mxu0 %v300
    %v573 = vpop.f32.mrf.mxu0
    %v574 = vadd.f32 0.0, %v573
    %575 = vmatmul.f32.gmra.mxu0 %v303
    %v576 = vpop.f32.mrf.mxu0
    %v577 = vadd.f32 0.0, %v576
    %578 = vmatmul.f32.gmra.mxu0 %v306
    %v579 = vpop.f32.mrf.mxu0
    %v580 = vadd.f32 0.0, %v579
    %581 = vmatmul.f32.gmra.mxu0 %v309
    %v582 = vpop.f32.mrf.mxu0
    %v583 = vadd.f32 0.0, %v582
    %584 = vmatmul.f32.gmra.mxu0 %v312
    %v585 = vpop.f32.mrf.mxu0
    %v586 = vadd.f32 0.0, %v585
    %587 = vmatmul.f32.gmra.mxu0 %v315
    %v588 = vpop.f32.mrf.mxu0
    %v589 = vadd.f32 0.0, %v588
    %590 = vmatmul.f32.gmra.mxu0 %v318
    %v591 = vpop.f32.mrf.mxu0
    %v592 = vadd.f32 0.0, %v591
    %593 = vmatmul.f32.gmra.mxu0 %v321
    %v594 = vpop.f32.mrf.mxu0
    %v595 = vadd.f32 0.0, %v594
    %596 = vmatmul.f32.gmra.mxu0 %v324
    %v597 = vpop.f32.mrf.mxu0
    %v598 = vadd.f32 0.0, %v597
    %599 = vmatmul.f32.gmra.mxu0 %v327
    %v600 = vpop.f32.mrf.mxu0
    %v601 = vadd.f32 0.0, %v600
    %602 = vmatmul.f32.gmra.mxu0 %v330
    %v603 = vpop.f32.mrf.mxu0
    %v604 = vadd.f32 0.0, %v603
    %605 = vmatmul.f32.gmra.mxu0 %v333
    %v606 = vpop.f32.mrf.mxu0
    %v607 = vadd.f32 0.0, %v606
    %608 = vmatmul.f32.gmra.mxu0 %v336
    %v609 = vpop.f32.mrf.mxu0
    %v610 = vadd.f32 0.0, %v609
    %611 = vmatmul.f32.gmra.mxu0 %v339
    %v612 = vpop.f32.mrf.mxu0
    %v613 = vadd.f32 0.0, %v612
    %614 = vmatmul.f32.gmra.mxu0 %v342
    %v615 = vpop.f32.mrf.mxu0
    %v616 = vadd.f32 0.0, %v615
    %617 = vmatmul.f32.gmra.mxu0 %v345
    %v618 = vpop.f32.mrf.mxu0
    %v619 = vadd.f32 0.0, %v618
    %620 = vmatmul.f32.gmra.mxu0 %v348
    %v621 = vpop.f32.mrf.mxu0
    %v622 = vadd.f32 0.0, %v621
    %623 = vmatmul.f32.gmra.mxu0 %v351
    %v624 = vpop.f32.mrf.mxu0
    %v625 = vadd.f32 0.0, %v624
    %626 = vmatmul.f32.gmra.mxu0 %v354
    %v627 = vpop.f32.mrf.mxu0
    %v628 = vadd.f32 0.0, %v627
    %629 = vmatmul.f32.gmra.mxu0 %v357
    %v630 = vpop.f32.mrf.mxu0
    %v631 = vadd.f32 0.0, %v630
    %632 = vdwg.mxu0
    %v634 = vsel %vm238, %v223, 0
    %636 = vmatpush.msra.mxu0 0.0
    %637 = vmatpush.msra.mxu0 0.0
    %638 = vmatpush.msra.mxu0 0.0
    %639 = vmatpush.msra.mxu0 0.0
    %640 = vmatpush.msra.mxu0 0.0
    %641 = vmatpush.msra.mxu0 0.0
    %642 = vmatpush.msra.mxu0 0.0
    %643 = vmatpush.msra.mxu0 0.0
    %644 = vmatpush.msra.mxu0 0.0
    %645 = vmatpush.msra.mxu0 0.0
    %646 = vmatpush.msra.mxu0 0.0
    %647 = vmatpush.msra.mxu0 0.0
    %648 = vmatpush.msra.mxu0 0.0
    %649 = vmatpush.msra.mxu0 0.0
    %650 = vmatpush.msra.mxu0 %v231
    %651 = vmatpush.msra.mxu0 %v229
    %652 = vmatmul.f32.gmra.mxu0 %v243
    %v653 = vpop.f32.mrf.mxu0
    %v654 = vadd.f32 %v377, %v653
    %655 = vmatmul.f32.gmra.mxu0 %v246
    %v656 = vpop.f32.mrf.mxu0
    %v657 = vadd.f32 %v380, %v656
    %658 = vmatmul.f32.gmra.mxu0 %v249
    %v659 = vpop.f32.mrf.mxu0
    %v660 = vadd.f32 %v383, %v659
    %661 = vmatmul.f32.gmra.mxu0 %v252
    %v662 = vpop.f32.mrf.mxu0
    %v663 = vadd.f32 %v386, %v662
    %664 = vmatmul.f32.gmra.mxu0 %v255
    %v665 = vpop.f32.mrf.mxu0
    %v666 = vadd.f32 %v389, %v665
    %667 = vmatmul.f32.gmra.mxu0 %v258
    %v668 = vpop.f32.mrf.mxu0
    %v669 = vadd.f32 %v392, %v668
    %670 = vmatmul.f32.gmra.mxu0 %v261
    %v671 = vpop.f32.mrf.mxu0
    %v672 = vadd.f32 %v395, %v671
    %673 = vmatmul.f32.gmra.mxu0 %v264
    %v674 = vpop.f32.mrf.mxu0
    %v675 = vadd.f32 %v398, %v674
    %676 = vmatmul.f32.gmra.mxu0 %v267
    %v677 = vpop.f32.mrf.mxu0
    %v678 = vadd.f32 %v401, %v677
    %679 = vmatmul.f32.gmra.mxu0 %v270
    %v680 = vpop.f32.mrf.mxu0
    %v681 = vadd.f32 %v404, %v680
    %682 = vmatmul.f32.gmra.mxu0 %v273
    %v683 = vpop.f32.mrf.mxu0
    %v684 = vadd.f32 %v407, %v683
    %685 = vmatmul.f32.gmra.mxu0 %v276
    %v686 = vpop.f32.mrf.mxu0
    %v687 = vadd.f32 %v410, %v686
    %688 = vmatmul.f32.gmra.mxu0 %v279
    %v689 = vpop.f32.mrf.mxu0
    %v690 = vadd.f32 %v413, %v689
    %691 = vmatmul.f32.gmra.mxu0 %v282
    %v692 = vpop.f32.mrf.mxu0
    %v693 = vadd.f32 %v416, %v692
    %694 = vmatmul.f32.gmra.mxu0 %v285
    %v695 = vpop.f32.mrf.mxu0
    %v696 = vadd.f32 %v419, %v695
    %697 = vmatmul.f32.gmra.mxu0 %v288
    %v698 = vpop.f32.mrf.mxu0
    %v699 = vadd.f32 %v422, %v698
    %700 = vmatmul.f32.gmra.mxu0 %v291
    %v701 = vpop.f32.mrf.mxu0
    %v702 = vadd.f32 %v425, %v701
    %703 = vmatmul.f32.gmra.mxu0 %v294
    %v704 = vpop.f32.mrf.mxu0
    %v705 = vadd.f32 %v428, %v704
    %706 = vmatmul.f32.gmra.mxu0 %v297
    %v707 = vpop.f32.mrf.mxu0
    %v708 = vadd.f32 %v431, %v707
    %709 = vmatmul.f32.gmra.mxu0 %v300
    %v710 = vpop.f32.mrf.mxu0
    %v711 = vadd.f32 %v434, %v710
    %712 = vmatmul.f32.gmra.mxu0 %v303
    %v713 = vpop.f32.mrf.mxu0
    %v714 = vadd.f32 %v437, %v713
    %715 = vmatmul.f32.gmra.mxu0 %v306
    %v716 = vpop.f32.mrf.mxu0
    %v717 = vadd.f32 %v440, %v716
    %718 = vmatmul.f32.gmra.mxu0 %v309
    %v719 = vpop.f32.mrf.mxu0
    %v720 = vadd.f32 %v443, %v719
    %721 = vmatmul.f32.gmra.mxu0 %v312
    %v722 = vpop.f32.mrf.mxu0
    %v723 = vadd.f32 %v446, %v722
    %724 = vmatmul.f32.gmra.mxu0 %v315
    %v725 = vpop.f32.mrf.mxu0
    %v726 = vadd.f32 %v449, %v725
    %727 = vmatmul.f32.gmra.mxu0 %v318
    %v728 = vpop.f32.mrf.mxu0
    %v729 = vadd.f32 %v452, %v728
    %730 = vmatmul.f32.gmra.mxu0 %v321
    %v731 = vpop.f32.mrf.mxu0
    %v732 = vadd.f32 %v455, %v731
    %733 = vmatmul.f32.gmra.mxu0 %v324
    %v734 = vpop.f32.mrf.mxu0
    %v735 = vadd.f32 %v458, %v734
    %736 = vmatmul.f32.gmra.mxu0 %v327
    %v737 = vpop.f32.mrf.mxu0
    %v738 = vadd.f32 %v461, %v737
    %739 = vmatmul.f32.gmra.mxu0 %v330
    %v740 = vpop.f32.mrf.mxu0
    %v741 = vadd.f32 %v464, %v740
    %742 = vmatmul.f32.gmra.mxu0 %v333
    %v743 = vpop.f32.mrf.mxu0
    %v744 = vadd.f32 %v467, %v743
    %745 = vmatmul.f32.gmra.mxu0 %v336
    %v746 = vpop.f32.mrf.mxu0
    %v747 = vadd.f32 %v470, %v746
    %748 = vmatmul.f32.gmra.mxu0 %v339
    %v749 = vpop.f32.mrf.mxu0
    %v750 = vadd.f32 %v473, %v749
    %751 = vmatmul.f32.gmra.mxu0 %v342
    %v752 = vpop.f32.mrf.mxu0
    %v753 = vadd.f32 %v476, %v752
    %754 = vmatmul.f32.gmra.mxu0 %v345
    %v755 = vpop.f32.mrf.mxu0
    %v756 = vadd.f32 %v479, %v755
    %757 = vmatmul.f32.gmra.mxu0 %v348
    %v758 = vpop.f32.mrf.mxu0
    %v759 = vadd.f32 %v482, %v758
    %760 = vmatmul.f32.gmra.mxu0 %v351
    %v761 = vpop.f32.mrf.mxu0
    %v762 = vadd.f32 %v485, %v761
    %763 = vmatmul.f32.gmra.mxu0 %v354
    %v764 = vpop.f32.mrf.mxu0
    %v765 = vadd.f32 %v488, %v764
    %766 = vmatmul.f32.gmra.mxu0 %v357
    %v767 = vpop.f32.mrf.mxu0
    %v768 = vadd.f32 %v491, %v767
    %769 = vmatmul.f32.gmra.mxu0 %v634
    %v770 = vpop.f32.mrf.mxu0
    %v771 = vadd.f32 %v494, %v770
    %772 = vdwg.mxu0
    %773 = vmatpush.msra.mxu0 0.0
    %774 = vmatpush.msra.mxu0 0.0
    %775 = vmatpush.msra.mxu0 0.0
    %776 = vmatpush.msra.mxu0 0.0
    %777 = vmatpush.msra.mxu0 0.0
    %778 = vmatpush.msra.mxu0 0.0
    %779 = vmatpush.msra.mxu0 0.0
    %780 = vmatpush.msra.mxu0 0.0
    %781 = vmatpush.msra.mxu0 0.0
    %782 = vmatpush.msra.mxu0 0.0
    %783 = vmatpush.msra.mxu0 0.0
    %784 = vmatpush.msra.mxu0 0.0
    %785 = vmatpush.msra.mxu0 0.0
    %786 = vmatpush.msra.mxu0 0.0
    %787 = vmatpush.msra.mxu0 %v232
    %788 = vmatpush.msra.mxu0 %v230
    %789 = vmatmul.f32.gmra.mxu0 %v243
    %v790 = vpop.f32.mrf.mxu0
    %v791 = vadd.f32 %v514, %v790
    %792 = vmatmul.f32.gmra.mxu0 %v246
    %v793 = vpop.f32.mrf.mxu0
    %v794 = vadd.f32 %v517, %v793
    %795 = vmatmul.f32.gmra.mxu0 %v249
    %v796 = vpop.f32.mrf.mxu0
    %v797 = vadd.f32 %v520, %v796
    %798 = vmatmul.f32.gmra.mxu0 %v252
    %v799 = vpop.f32.mrf.mxu0
    %v800 = vadd.f32 %v523, %v799
    %801 = vmatmul.f32.gmra.mxu0 %v255
    %v802 = vpop.f32.mrf.mxu0
    %v803 = vadd.f32 %v526, %v802
    %804 = vmatmul.f32.gmra.mxu0 %v258
    %v805 = vpop.f32.mrf.mxu0
    %v806 = vadd.f32 %v529, %v805
    %807 = vmatmul.f32.gmra.mxu0 %v261
    %v808 = vpop.f32.mrf.mxu0
    %v809 = vadd.f32 %v532, %v808
    %810 = vmatmul.f32.gmra.mxu0 %v264
    %v811 = vpop.f32.mrf.mxu0
    %v812 = vadd.f32 %v535, %v811
    %813 = vmatmul.f32.gmra.mxu0 %v267
    %v814 = vpop.f32.mrf.mxu0
    %v815 = vadd.f32 %v538, %v814
    %816 = vmatmul.f32.gmra.mxu0 %v270
    %v817 = vpop.f32.mrf.mxu0
    %v818 = vadd.f32 %v541, %v817
    %819 = vmatmul.f32.gmra.mxu0 %v273
    %v820 = vpop.f32.mrf.mxu0
    %v821 = vadd.f32 %v544, %v820
    %822 = vmatmul.f32.gmra.mxu0 %v276
    %v823 = vpop.f32.mrf.mxu0
    %v824 = vadd.f32 %v547, %v823
    %825 = vmatmul.f32.gmra.mxu0 %v279
    %v826 = vpop.f32.mrf.mxu0
    %v827 = vadd.f32 %v550, %v826
    %828 = vmatmul.f32.gmra.mxu0 %v282
    %v829 = vpop.f32.mrf.mxu0
    %v830 = vadd.f32 %v553, %v829
    %831 = vmatmul.f32.gmra.mxu0 %v285
    %v832 = vpop.f32.mrf.mxu0
    %v833 = vadd.f32 %v556, %v832
    %834 = vmatmul.f32.gmra.mxu0 %v288
    %v835 = vpop.f32.mrf.mxu0
    %v836 = vadd.f32 %v559, %v835
    %837 = vmatmul.f32.gmra.mxu0 %v291
    %v838 = vpop.f32.mrf.mxu0
    %v839 = vadd.f32 %v562, %v838
    %840 = vmatmul.f32.gmra.mxu0 %v294
    %v841 = vpop.f32.mrf.mxu0
    %v842 = vadd.f32 %v565, %v841
    %843 = vmatmul.f32.gmra.mxu0 %v297
    %v844 = vpop.f32.mrf.mxu0
    %v845 = vadd.f32 %v568, %v844
    %846 = vmatmul.f32.gmra.mxu0 %v300
    %v847 = vpop.f32.mrf.mxu0
    %v848 = vadd.f32 %v571, %v847
    %849 = vmatmul.f32.gmra.mxu0 %v303
    %v850 = vpop.f32.mrf.mxu0
    %v851 = vadd.f32 %v574, %v850
    %852 = vmatmul.f32.gmra.mxu0 %v306
    %v853 = vpop.f32.mrf.mxu0
    %v854 = vadd.f32 %v577, %v853
    %855 = vmatmul.f32.gmra.mxu0 %v309
    %v856 = vpop.f32.mrf.mxu0
    %v857 = vadd.f32 %v580, %v856
    %858 = vmatmul.f32.gmra.mxu0 %v312
    %v859 = vpop.f32.mrf.mxu0
    %v860 = vadd.f32 %v583, %v859
    %861 = vmatmul.f32.gmra.mxu0 %v315
    %v862 = vpop.f32.mrf.mxu0
    %v863 = vadd.f32 %v586, %v862
    %864 = vmatmul.f32.gmra.mxu0 %v318
    %v865 = vpop.f32.mrf.mxu0
    %v866 = vadd.f32 %v589, %v865
    %867 = vmatmul.f32.gmra.mxu0 %v321
    %v868 = vpop.f32.mrf.mxu0
    %v869 = vadd.f32 %v592, %v868
    %870 = vmatmul.f32.gmra.mxu0 %v324
    %v871 = vpop.f32.mrf.mxu0
    %v872 = vadd.f32 %v595, %v871
    %873 = vmatmul.f32.gmra.mxu0 %v327
    %v874 = vpop.f32.mrf.mxu0
    %v875 = vadd.f32 %v598, %v874
    %876 = vmatmul.f32.gmra.mxu0 %v330
    %v877 = vpop.f32.mrf.mxu0
    %v878 = vadd.f32 %v601, %v877
    %879 = vmatmul.f32.gmra.mxu0 %v333
    %v880 = vpop.f32.mrf.mxu0
    %v881 = vadd.f32 %v604, %v880
    %882 = vmatmul.f32.gmra.mxu0 %v336
    %v883 = vpop.f32.mrf.mxu0
    %v884 = vadd.f32 %v607, %v883
    %885 = vmatmul.f32.gmra.mxu0 %v339
    %v886 = vpop.f32.mrf.mxu0
    %v887 = vadd.f32 %v610, %v886
    %888 = vmatmul.f32.gmra.mxu0 %v342
    %v889 = vpop.f32.mrf.mxu0
    %v890 = vadd.f32 %v613, %v889
    %891 = vmatmul.f32.gmra.mxu0 %v345
    %v892 = vpop.f32.mrf.mxu0
    %v893 = vadd.f32 %v616, %v892
    %894 = vmatmul.f32.gmra.mxu0 %v348
    %v895 = vpop.f32.mrf.mxu0
    %v896 = vadd.f32 %v619, %v895
    %897 = vmatmul.f32.gmra.mxu0 %v351
    %v898 = vpop.f32.mrf.mxu0
    %v899 = vadd.f32 %v622, %v898
    %900 = vmatmul.f32.gmra.mxu0 %v354
    %v901 = vpop.f32.mrf.mxu0
    %v902 = vadd.f32 %v625, %v901
    %903 = vmatmul.f32.gmra.mxu0 %v357
    %v904 = vpop.f32.mrf.mxu0
    %v905 = vadd.f32 %v628, %v904
    %906 = vmatmul.f32.gmra.mxu0 %v634
    %v907 = vpop.f32.mrf.mxu0
    %v908 = vadd.f32 %v631, %v907
    %909 = vdwg.mxu0
    %910 = vmatpush.msra.mxu0 0.0
    %911 = vmatpush.msra.mxu0 0.0
    %912 = vmatpush.msra.mxu0 0.0
    %913 = vmatpush.msra.mxu0 0.0
    %914 = vmatpush.msra.mxu0 0.0
    %915 = vmatpush.msra.mxu0 0.0
    %916 = vmatpush.msra.mxu0 0.0
    %917 = vmatpush.msra.mxu0 0.0
    %918 = vmatpush.msra.mxu0 0.0
    %919 = vmatpush.msra.mxu0 0.0
    %920 = vmatpush.msra.mxu0 0.0
    %921 = vmatpush.msra.mxu0 0.0
    %922 = vmatpush.msra.mxu0 0.0
    %923 = vmatpush.msra.mxu0 0.0
    %924 = vmatpush.msra.mxu0 %v236
    %925 = vmatpush.msra.mxu0 %v234
    %926 = vmatmul.f32.gmra.mxu0 %v246
    %v927 = vpop.f32.mrf.mxu0
    %v928 = vadd.f32 0.0, %v927
    %929 = vmatmul.f32.gmra.mxu0 %v249
    %v930 = vpop.f32.mrf.mxu0
    %v931 = vadd.f32 0.0, %v930
    %932 = vmatmul.f32.gmra.mxu0 %v252
    %v933 = vpop.f32.mrf.mxu0
    %v934 = vadd.f32 0.0, %v933
    %935 = vmatmul.f32.gmra.mxu0 %v255
    %v936 = vpop.f32.mrf.mxu0
    %v937 = vadd.f32 0.0, %v936
    %938 = vmatmul.f32.gmra.mxu0 %v258
    %v939 = vpop.f32.mrf.mxu0
    %v940 = vadd.f32 0.0, %v939
    %941 = vmatmul.f32.gmra.mxu0 %v261
    %v942 = vpop.f32.mrf.mxu0
    %v943 = vadd.f32 0.0, %v942
    %944 = vmatmul.f32.gmra.mxu0 %v264
    %v945 = vpop.f32.mrf.mxu0
    %v946 = vadd.f32 0.0, %v945
    %947 = vmatmul.f32.gmra.mxu0 %v267
    %v948 = vpop.f32.mrf.mxu0
    %v949 = vadd.f32 0.0, %v948
    %950 = vmatmul.f32.gmra.mxu0 %v270
    %v951 = vpop.f32.mrf.mxu0
    %v952 = vadd.f32 0.0, %v951
    %953 = vmatmul.f32.gmra.mxu0 %v273
    %v954 = vpop.f32.mrf.mxu0
    %v955 = vadd.f32 0.0, %v954
    %956 = vmatmul.f32.gmra.mxu0 %v276
    %v957 = vpop.f32.mrf.mxu0
    %v958 = vadd.f32 0.0, %v957
    %959 = vmatmul.f32.gmra.mxu0 %v279
    %v960 = vpop.f32.mrf.mxu0
    %v961 = vadd.f32 0.0, %v960
    %962 = vmatmul.f32.gmra.mxu0 %v282
    %v963 = vpop.f32.mrf.mxu0
    %v964 = vadd.f32 0.0, %v963
    %965 = vmatmul.f32.gmra.mxu0 %v285
    %v966 = vpop.f32.mrf.mxu0
    %v967 = vadd.f32 0.0, %v966
    %968 = vmatmul.f32.gmra.mxu0 %v288
    %v969 = vpop.f32.mrf.mxu0
    %v970 = vadd.f32 0.0, %v969
    %971 = vmatmul.f32.gmra.mxu0 %v291
    %v972 = vpop.f32.mrf.mxu0
    %v973 = vadd.f32 0.0, %v972
    %974 = vmatmul.f32.gmra.mxu0 %v294
    %v975 = vpop.f32.mrf.mxu0
    %v976 = vadd.f32 0.0, %v975
    %977 = vmatmul.f32.gmra.mxu0 %v297
    %v978 = vpop.f32.mrf.mxu0
    %v979 = vadd.f32 0.0, %v978
    %980 = vmatmul.f32.gmra.mxu0 %v300
    %v981 = vpop.f32.mrf.mxu0
    %v982 = vadd.f32 0.0, %v981
    %983 = vmatmul.f32.gmra.mxu0 %v303
    %v984 = vpop.f32.mrf.mxu0
    %v985 = vadd.f32 0.0, %v984
    %986 = vmatmul.f32.gmra.mxu0 %v306
    %v987 = vpop.f32.mrf.mxu0
    %v988 = vadd.f32 0.0, %v987
    %989 = vmatmul.f32.gmra.mxu0 %v309
    %v990 = vpop.f32.mrf.mxu0
    %v991 = vadd.f32 0.0, %v990
    %992 = vmatmul.f32.gmra.mxu0 %v312
    %v993 = vpop.f32.mrf.mxu0
    %v994 = vadd.f32 0.0, %v993
    %995 = vmatmul.f32.gmra.mxu0 %v315
    %v996 = vpop.f32.mrf.mxu0
    %v997 = vadd.f32 0.0, %v996
    %998 = vmatmul.f32.gmra.mxu0 %v318
    %v999 = vpop.f32.mrf.mxu0
    %v1000 = vadd.f32 0.0, %v999
    %1001 = vmatmul.f32.gmra.mxu0 %v321
    %v1002 = vpop.f32.mrf.mxu0
    %v1003 = vadd.f32 0.0, %v1002
    %1004 = vmatmul.f32.gmra.mxu0 %v324
    %v1005 = vpop.f32.mrf.mxu0
    %v1006 = vadd.f32 0.0, %v1005
    %1007 = vmatmul.f32.gmra.mxu0 %v327
    %v1008 = vpop.f32.mrf.mxu0
    %v1009 = vadd.f32 0.0, %v1008
    %1010 = vmatmul.f32.gmra.mxu0 %v330
    %v1011 = vpop.f32.mrf.mxu0
    %v1012 = vadd.f32 0.0, %v1011
    %1013 = vmatmul.f32.gmra.mxu0 %v333
    %v1014 = vpop.f32.mrf.mxu0
    %v1015 = vadd.f32 0.0, %v1014
    %1016 = vmatmul.f32.gmra.mxu0 %v336
    %v1017 = vpop.f32.mrf.mxu0
    %v1018 = vadd.f32 0.0, %v1017
    %1019 = vmatmul.f32.gmra.mxu0 %v339
    %v1020 = vpop.f32.mrf.mxu0
    %v1021 = vadd.f32 0.0, %v1020
    %1022 = vmatmul.f32.gmra.mxu0 %v342
    %v1023 = vpop.f32.mrf.mxu0
    %v1024 = vadd.f32 0.0, %v1023
    %1025 = vmatmul.f32.gmra.mxu0 %v345
    %v1026 = vpop.f32.mrf.mxu0
    %v1027 = vadd.f32 0.0, %v1026
    %1028 = vmatmul.f32.gmra.mxu0 %v348
    %v1029 = vpop.f32.mrf.mxu0
    %v1030 = vadd.f32 0.0, %v1029
    %1031 = vmatmul.f32.gmra.mxu0 %v351
    %v1032 = vpop.f32.mrf.mxu0
    %v1033 = vadd.f32 0.0, %v1032
    %1034 = vmatmul.f32.gmra.mxu0 %v354
    %v1035 = vpop.f32.mrf.mxu0
    %v1036 = vadd.f32 0.0, %v1035
    %1037 = vmatmul.f32.gmra.mxu0 %v357
    %v1038 = vpop.f32.mrf.mxu0
    %v1039 = vadd.f32 0.0, %v1038
    %1040 = vmatmul.f32.gmra.mxu0 %v634
    %v1041 = vpop.f32.mrf.mxu0
    %v1042 = vadd.f32 0.0, %v1041
    %1043 = vmatmul.f32.gmra.mxu0 %v240
    %v1044 = vpop.f32.mrf.mxu0
    %v1045 = vadd.f32 0.0, %v1044
    %1046 = vdwg.mxu0
    %1047 = vmatpush.msra.mxu0 0.0
    %1048 = vmatpush.msra.mxu0 0.0
    %1049 = vmatpush.msra.mxu0 0.0
    %1050 = vmatpush.msra.mxu0 0.0
    %1051 = vmatpush.msra.mxu0 0.0
    %1052 = vmatpush.msra.mxu0 0.0
    %1053 = vmatpush.msra.mxu0 0.0
    %1054 = vmatpush.msra.mxu0 0.0
    %1055 = vmatpush.msra.mxu0 0.0
    %1056 = vmatpush.msra.mxu0 0.0
    %1057 = vmatpush.msra.mxu0 0.0
    %1058 = vmatpush.msra.mxu0 0.0
    %1059 = vmatpush.msra.mxu0 0.0
    %1060 = vmatpush.msra.mxu0 0.0
    %1061 = vmatpush.msra.mxu0 %v237
    %1062 = vmatpush.msra.mxu0 %v235
    %1063 = vmatmul.f32.gmra.mxu0 %v246
    %v1064 = vpop.f32.mrf.mxu0
    %v1065 = vadd.f32 0.0, %v1064
    %1066 = vmatmul.f32.gmra.mxu0 %v249
    %v1067 = vpop.f32.mrf.mxu0
    %v1068 = vadd.f32 0.0, %v1067
    %1069 = vmatmul.f32.gmra.mxu0 %v252
    %v1070 = vpop.f32.mrf.mxu0
    %v1071 = vadd.f32 0.0, %v1070
    %1072 = vmatmul.f32.gmra.mxu0 %v255
    %v1073 = vpop.f32.mrf.mxu0
    %v1074 = vadd.f32 0.0, %v1073
    %1075 = vmatmul.f32.gmra.mxu0 %v258
    %v1076 = vpop.f32.mrf.mxu0
    %v1077 = vadd.f32 0.0, %v1076
    %1078 = vmatmul.f32.gmra.mxu0 %v261
    %v1079 = vpop.f32.mrf.mxu0
    %v1080 = vadd.f32 0.0, %v1079
    %1081 = vmatmul.f32.gmra.mxu0 %v264
    %v1082 = vpop.f32.mrf.mxu0
    %v1083 = vadd.f32 0.0, %v1082
    %1084 = vmatmul.f32.gmra.mxu0 %v267
    %v1085 = vpop.f32.mrf.mxu0
    %v1086 = vadd.f32 0.0, %v1085
    %1087 = vmatmul.f32.gmra.mxu0 %v270
    %v1088 = vpop.f32.mrf.mxu0
    %v1089 = vadd.f32 0.0, %v1088
    %1090 = vmatmul.f32.gmra.mxu0 %v273
    %v1091 = vpop.f32.mrf.mxu0
    %v1092 = vadd.f32 0.0, %v1091
    %1093 = vmatmul.f32.gmra.mxu0 %v276
    %v1094 = vpop.f32.mrf.mxu0
    %v1095 = vadd.f32 0.0, %v1094
    %1096 = vmatmul.f32.gmra.mxu0 %v279
    %v1097 = vpop.f32.mrf.mxu0
    %v1098 = vadd.f32 0.0, %v1097
    %1099 = vmatmul.f32.gmra.mxu0 %v282
    %v1100 = vpop.f32.mrf.mxu0
    %v1101 = vadd.f32 0.0, %v1100
    %1102 = vmatmul.f32.gmra.mxu0 %v285
    %v1103 = vpop.f32.mrf.mxu0
    %v1104 = vadd.f32 0.0, %v1103
    %1105 = vmatmul.f32.gmra.mxu0 %v288
    %v1106 = vpop.f32.mrf.mxu0
    %v1107 = vadd.f32 0.0, %v1106
    %1108 = vmatmul.f32.gmra.mxu0 %v291
    %v1109 = vpop.f32.mrf.mxu0
    %v1110 = vadd.f32 0.0, %v1109
    %1111 = vmatmul.f32.gmra.mxu0 %v294
    %v1112 = vpop.f32.mrf.mxu0
    %v1113 = vadd.f32 0.0, %v1112
    %1114 = vmatmul.f32.gmra.mxu0 %v297
    %v1115 = vpop.f32.mrf.mxu0
    %v1116 = vadd.f32 0.0, %v1115
    %1117 = vmatmul.f32.gmra.mxu0 %v300
    %v1118 = vpop.f32.mrf.mxu0
    %v1119 = vadd.f32 0.0, %v1118
    %1120 = vmatmul.f32.gmra.mxu0 %v303
    %v1121 = vpop.f32.mrf.mxu0
    %v1122 = vadd.f32 0.0, %v1121
    %1123 = vmatmul.f32.gmra.mxu0 %v306
    %v1124 = vpop.f32.mrf.mxu0
    %v1125 = vadd.f32 0.0, %v1124
    %1126 = vmatmul.f32.gmra.mxu0 %v309
    %v1127 = vpop.f32.mrf.mxu0
    %v1128 = vadd.f32 0.0, %v1127
    %1129 = vmatmul.f32.gmra.mxu0 %v312
    %v1130 = vpop.f32.mrf.mxu0
    %v1131 = vadd.f32 0.0, %v1130
    %1132 = vmatmul.f32.gmra.mxu0 %v315
    %v1133 = vpop.f32.mrf.mxu0
    %v1134 = vadd.f32 0.0, %v1133
    %1135 = vmatmul.f32.gmra.mxu0 %v318
    %v1136 = vpop.f32.mrf.mxu0
    %v1137 = vadd.f32 0.0, %v1136
    %1138 = vmatmul.f32.gmra.mxu0 %v321
    %v1139 = vpop.f32.mrf.mxu0
    %v1140 = vadd.f32 0.0, %v1139
    %1141 = vmatmul.f32.gmra.mxu0 %v324
    %v1142 = vpop.f32.mrf.mxu0
    %v1143 = vadd.f32 0.0, %v1142
    %1144 = vmatmul.f32.gmra.mxu0 %v327
    %v1145 = vpop.f32.mrf.mxu0
    %v1146 = vadd.f32 0.0, %v1145
    %1147 = vmatmul.f32.gmra.mxu0 %v330
    %v1148 = vpop.f32.mrf.mxu0
    %v1149 = vadd.f32 0.0, %v1148
    %1150 = vmatmul.f32.gmra.mxu0 %v333
    %v1151 = vpop.f32.mrf.mxu0
    %v1152 = vadd.f32 0.0, %v1151
    %1153 = vmatmul.f32.gmra.mxu0 %v336
    %v1154 = vpop.f32.mrf.mxu0
    %v1155 = vadd.f32 0.0, %v1154
    %1156 = vmatmul.f32.gmra.mxu0 %v339
    %v1157 = vpop.f32.mrf.mxu0
    %v1158 = vadd.f32 0.0, %v1157
    %1159 = vmatmul.f32.gmra.mxu0 %v342
    %v1160 = vpop.f32.mrf.mxu0
    %v1161 = vadd.f32 0.0, %v1160
    %1162 = vmatmul.f32.gmra.mxu0 %v345
    %v1163 = vpop.f32.mrf.mxu0
    %v1164 = vadd.f32 0.0, %v1163
    %1165 = vmatmul.f32.gmra.mxu0 %v348
    %v1166 = vpop.f32.mrf.mxu0
    %v1167 = vadd.f32 0.0, %v1166
    %1168 = vmatmul.f32.gmra.mxu0 %v351
    %v1169 = vpop.f32.mrf.mxu0
    %v1170 = vadd.f32 0.0, %v1169
    %1171 = vmatmul.f32.gmra.mxu0 %v354
    %v1172 = vpop.f32.mrf.mxu0
    %v1173 = vadd.f32 0.0, %v1172
    %1174 = vmatmul.f32.gmra.mxu0 %v357
    %v1175 = vpop.f32.mrf.mxu0
    %v1176 = vadd.f32 0.0, %v1175
    %1177 = vmatmul.f32.gmra.mxu0 %v634
    %v1178 = vpop.f32.mrf.mxu0
    %v1179 = vadd.f32 0.0, %v1178
    %1180 = vmatmul.f32.gmra.mxu0 %v240
    %v1181 = vpop.f32.mrf.mxu0
    %v1182 = vadd.f32 0.0, %v1181
    %1183 = vdwg.mxu0
    %v1184 = vadd.f32 %v654, %v928
    %v1185 = vadd.f32 %v791, %v1065
    %v1186 = vadd.f32 %v657, %v931
    %v1187 = vadd.f32 %v794, %v1068
    %v1188 = vadd.f32 %v660, %v934
    %v1189 = vadd.f32 %v797, %v1071
    %v1190 = vadd.f32 %v663, %v937
    %v1191 = vadd.f32 %v800, %v1074
    %v1192 = vadd.f32 %v666, %v940
    %v1193 = vadd.f32 %v803, %v1077
    %v1194 = vadd.f32 %v669, %v943
    %v1195 = vadd.f32 %v806, %v1080
    %v1196 = vadd.f32 %v672, %v946
    %v1197 = vadd.f32 %v809, %v1083
    %v1198 = vadd.f32 %v675, %v949
    %v1199 = vadd.f32 %v812, %v1086
    %v1200 = vadd.f32 %v678, %v952
    %v1201 = vadd.f32 %v815, %v1089
    %v1202 = vadd.f32 %v681, %v955
    %v1203 = vadd.f32 %v818, %v1092
    %v1204 = vadd.f32 %v684, %v958
    %v1205 = vadd.f32 %v821, %v1095
    %v1206 = vadd.f32 %v687, %v961
    %v1207 = vadd.f32 %v824, %v1098
    %v1208 = vadd.f32 %v690, %v964
    %v1209 = vadd.f32 %v827, %v1101
    %v1210 = vadd.f32 %v693, %v967
    %v1211 = vadd.f32 %v830, %v1104
    %v1212 = vadd.f32 %v696, %v970
    %v1213 = vadd.f32 %v833, %v1107
    %v1214 = vadd.f32 %v699, %v973
    %v1215 = vadd.f32 %v836, %v1110
    %v1216 = vadd.f32 %v702, %v976
    %v1217 = vadd.f32 %v839, %v1113
    %v1218 = vadd.f32 %v705, %v979
    %v1219 = vadd.f32 %v842, %v1116
    %v1220 = vadd.f32 %v708, %v982
    %v1221 = vadd.f32 %v845, %v1119
    %v1222 = vadd.f32 %v711, %v985
    %v1223 = vadd.f32 %v848, %v1122
    %v1224 = vadd.f32 %v714, %v988
    %v1225 = vadd.f32 %v851, %v1125
    %v1226 = vadd.f32 %v717, %v991
    %v1227 = vadd.f32 %v854, %v1128
    %v1228 = vadd.f32 %v720, %v994
    %v1229 = vadd.f32 %v857, %v1131
    %v1230 = vadd.f32 %v723, %v997
    %v1231 = vadd.f32 %v860, %v1134
    %v1232 = vadd.f32 %v726, %v1000
    %v1233 = vadd.f32 %v863, %v1137
    %v1234 = vadd.f32 %v729, %v1003
    %v1235 = vadd.f32 %v866, %v1140
    %v1236 = vadd.f32 %v732, %v1006
    %v1237 = vadd.f32 %v869, %v1143
    %v1238 = vadd.f32 %v735, %v1009
    %v1239 = vadd.f32 %v872, %v1146
    %v1240 = vadd.f32 %v738, %v1012
    %v1241 = vadd.f32 %v875, %v1149
    %v1242 = vadd.f32 %v741, %v1015
    %v1243 = vadd.f32 %v878, %v1152
    %v1244 = vadd.f32 %v744, %v1018
    %v1245 = vadd.f32 %v881, %v1155
    %v1246 = vadd.f32 %v747, %v1021
    %v1247 = vadd.f32 %v884, %v1158
    %v1248 = vadd.f32 %v750, %v1024
    %v1249 = vadd.f32 %v887, %v1161
    %v1250 = vadd.f32 %v753, %v1027
    %v1251 = vadd.f32 %v890, %v1164
    %v1252 = vadd.f32 %v756, %v1030
    %v1253 = vadd.f32 %v893, %v1167
    %v1254 = vadd.f32 %v759, %v1033
    %v1255 = vadd.f32 %v896, %v1170
    %v1256 = vadd.f32 %v762, %v1036
    %v1257 = vadd.f32 %v899, %v1173
    %v1258 = vadd.f32 %v765, %v1039
    %v1259 = vadd.f32 %v902, %v1176
    %v1260 = vadd.f32 %v768, %v1042
    %v1261 = vadd.f32 %v905, %v1179
    %v1262 = vadd.f32 %v771, %v1045
    %v1263 = vadd.f32 %v908, %v1182
    %v1264 = vld [vmem:[#allocation4] sm:$0x3]
    %v1266 = vperm.slane %v1264, 0
    %v1267 = vperm.slane %v1264, 1
    %v1270 = vadd.f32 %v1184, %v1266
    %v1271 = vadd.f32 %v1185, %v1267
    %v1272 = vadd.f32 %v1186, %v1266
    %v1273 = vadd.f32 %v1187, %v1267
    %v1274 = vadd.f32 %v1188, %v1266
    %v1275 = vadd.f32 %v1189, %v1267
    %v1276 = vadd.f32 %v1190, %v1266
    %v1277 = vadd.f32 %v1191, %v1267
    %v1278 = vadd.f32 %v1192, %v1266
    %v1279 = vadd.f32 %v1193, %v1267
    %v1280 = vadd.f32 %v1194, %v1266
    %v1281 = vadd.f32 %v1195, %v1267
    %v1282 = vadd.f32 %v1196, %v1266
    %v1283 = vadd.f32 %v1197, %v1267
    %v1284 = vadd.f32 %v1198, %v1266
    %v1285 = vadd.f32 %v1199, %v1267
    %v1286 = vadd.f32 %v1200, %v1266
    %v1287 = vadd.f32 %v1201, %v1267
    %v1288 = vadd.f32 %v1202, %v1266
    %v1289 = vadd.f32 %v1203, %v1267
    %v1290 = vadd.f32 %v1204, %v1266
    %v1291 = vadd.f32 %v1205, %v1267
    %v1292 = vadd.f32 %v1206, %v1266
    %v1293 = vadd.f32 %v1207, %v1267
    %v1294 = vadd.f32 %v1208, %v1266
    %v1295 = vadd.f32 %v1209, %v1267
    %v1296 = vadd.f32 %v1210, %v1266
    %v1297 = vadd.f32 %v1211, %v1267
    %v1298 = vadd.f32 %v1212, %v1266
    %v1299 = vadd.f32 %v1213, %v1267
    %v1300 = vadd.f32 %v1214, %v1266
    %v1301 = vadd.f32 %v1215, %v1267
    %v1302 = vadd.f32 %v1216, %v1266
    %v1303 = vadd.f32 %v1217, %v1267
    %v1304 = vadd.f32 %v1218, %v1266
    %v1305 = vadd.f32 %v1219, %v1267
    %v1306 = vadd.f32 %v1220, %v1266
    %v1307 = vadd.f32 %v1221, %v1267
    %v1308 = vadd.f32 %v1222, %v1266
    %v1309 = vadd.f32 %v1223, %v1267
    %v1310 = vadd.f32 %v1224, %v1266
    %v1311 = vadd.f32 %v1225, %v1267
    %v1312 = vadd.f32 %v1226, %v1266
    %v1313 = vadd.f32 %v1227, %v1267
    %v1314 = vadd.f32 %v1228, %v1266
    %v1315 = vadd.f32 %v1229, %v1267
    %v1316 = vadd.f32 %v1230, %v1266
    %v1317 = vadd.f32 %v1231, %v1267
    %v1318 = vadd.f32 %v1232, %v1266
    %v1319 = vadd.f32 %v1233, %v1267
    %v1320 = vadd.f32 %v1234, %v1266
    %v1321 = vadd.f32 %v1235, %v1267
    %v1322 = vadd.f32 %v1236, %v1266
    %v1323 = vadd.f32 %v1237, %v1267
    %v1324 = vadd.f32 %v1238, %v1266
    %v1325 = vadd.f32 %v1239, %v1267
    %v1326 = vadd.f32 %v1240, %v1266
    %v1327 = vadd.f32 %v1241, %v1267
    %v1328 = vadd.f32 %v1242, %v1266
    %v1329 = vadd.f32 %v1243, %v1267
    %v1330 = vadd.f32 %v1244, %v1266
    %v1331 = vadd.f32 %v1245, %v1267
    %v1332 = vadd.f32 %v1246, %v1266
    %v1333 = vadd.f32 %v1247, %v1267
    %v1334 = vadd.f32 %v1248, %v1266
    %v1335 = vadd.f32 %v1249, %v1267
    %v1336 = vadd.f32 %v1250, %v1266
    %v1337 = vadd.f32 %v1251, %v1267
    %v1338 = vadd.f32 %v1252, %v1266
    %v1339 = vadd.f32 %v1253, %v1267
    %v1340 = vadd.f32 %v1254, %v1266
    %v1341 = vadd.f32 %v1255, %v1267
    %v1342 = vadd.f32 %v1256, %v1266
    %v1343 = vadd.f32 %v1257, %v1267
    %v1344 = vadd.f32 %v1258, %v1266
    %v1345 = vadd.f32 %v1259, %v1267
    %v1346 = vadd.f32 %v1260, %v1266
    %v1347 = vadd.f32 %v1261, %v1267
    %v1348 = vadd.f32 %v1262, %v1266
    %v1349 = vadd.f32 %v1263, %v1267
    %vm1350 = vcmp.gt.f32.partialorder %v1270, 0.0
    %vm1351 = vcmp.gt.f32.partialorder %v1271, 0.0
    %vm1352 = vcmp.gt.f32.partialorder %v1272, 0.0
    %vm1353 = vcmp.gt.f32.partialorder %v1273, 0.0
    %vm1354 = vcmp.gt.f32.partialorder %v1274, 0.0
    %vm1355 = vcmp.gt.f32.partialorder %v1275, 0.0
    %vm1356 = vcmp.gt.f32.partialorder %v1276, 0.0
    %vm1357 = vcmp.gt.f32.partialorder %v1277, 0.0
    %vm1358 = vcmp.gt.f32.partialorder %v1278, 0.0
    %vm1359 = vcmp.gt.f32.partialorder %v1279, 0.0
    %vm1360 = vcmp.gt.f32.partialorder %v1280, 0.0
    %vm1361 = vcmp.gt.f32.partialorder %v1281, 0.0
    %vm1362 = vcmp.gt.f32.partialorder %v1282, 0.0
    %vm1363 = vcmp.gt.f32.partialorder %v1283, 0.0
    %vm1364 = vcmp.gt.f32.partialorder %v1284, 0.0
    %vm1365 = vcmp.gt.f32.partialorder %v1285, 0.0
    %vm1366 = vcmp.gt.f32.partialorder %v1286, 0.0
    %vm1367 = vcmp.gt.f32.partialorder %v1287, 0.0
    %vm1368 = vcmp.gt.f32.partialorder %v1288, 0.0
    %vm1369 = vcmp.gt.f32.partialorder %v1289, 0.0
    %vm1370 = vcmp.gt.f32.partialorder %v1290, 0.0
    %vm1371 = vcmp.gt.f32.partialorder %v1291, 0.0
    %vm1372 = vcmp.gt.f32.partialorder %v1292, 0.0
    %vm1373 = vcmp.gt.f32.partialorder %v1293, 0.0
    %vm1374 = vcmp.gt.f32.partialorder %v1294, 0.0
    %vm1375 = vcmp.gt.f32.partialorder %v1295, 0.0
    %vm1376 = vcmp.gt.f32.partialorder %v1296, 0.0
    %vm1377 = vcmp.gt.f32.partialorder %v1297, 0.0
    %vm1378 = vcmp.gt.f32.partialorder %v1298, 0.0
    %vm1379 = vcmp.gt.f32.partialorder %v1299, 0.0
    %vm1380 = vcmp.gt.f32.partialorder %v1300, 0.0
    %vm1381 = vcmp.gt.f32.partialorder %v1301, 0.0
    %vm1382 = vcmp.gt.f32.partialorder %v1302, 0.0
    %vm1383 = vcmp.gt.f32.partialorder %v1303, 0.0
    %vm1384 = vcmp.gt.f32.partialorder %v1304, 0.0
    %vm1385 = vcmp.gt.f32.partialorder %v1305, 0.0
    %vm1386 = vcmp.gt.f32.partialorder %v1306, 0.0
    %vm1387 = vcmp.gt.f32.partialorder %v1307, 0.0
    %vm1388 = vcmp.gt.f32.partialorder %v1308, 0.0
    %vm1389 = vcmp.gt.f32.partialorder %v1309, 0.0
    %vm1390 = vcmp.gt.f32.partialorder %v1310, 0.0
    %vm1391 = vcmp.gt.f32.partialorder %v1311, 0.0
    %vm1392 = vcmp.gt.f32.partialorder %v1312, 0.0
    %vm1393 = vcmp.gt.f32.partialorder %v1313, 0.0
    %vm1394 = vcmp.gt.f32.partialorder %v1314, 0.0
    %vm1395 = vcmp.gt.f32.partialorder %v1315, 0.0
    %vm1396 = vcmp.gt.f32.partialorder %v1316, 0.0
    %vm1397 = vcmp.gt.f32.partialorder %v1317, 0.0
    %vm1398 = vcmp.gt.f32.partialorder %v1318, 0.0
    %vm1399 = vcmp.gt.f32.partialorder %v1319, 0.0
    %vm1400 = vcmp.gt.f32.partialorder %v1320, 0.0
    %vm1401 = vcmp.gt.f32.partialorder %v1321, 0.0
    %vm1402 = vcmp.gt.f32.partialorder %v1322, 0.0
    %vm1403 = vcmp.gt.f32.partialorder %v1323, 0.0
    %vm1404 = vcmp.gt.f32.partialorder %v1324, 0.0
    %vm1405 = vcmp.gt.f32.partialorder %v1325, 0.0
    %vm1406 = vcmp.gt.f32.partialorder %v1326, 0.0
    %vm1407 = vcmp.gt.f32.partialorder %v1327, 0.0
    %vm1408 = vcmp.gt.f32.partialorder %v1328, 0.0
    %vm1409 = vcmp.gt.f32.partialorder %v1329, 0.0
    %vm1410 = vcmp.gt.f32.partialorder %v1330, 0.0
    %vm1411 = vcmp.gt.f32.partialorder %v1331, 0.0
    %vm1412 = vcmp.gt.f32.partialorder %v1332, 0.0
    %vm1413 = vcmp.gt.f32.partialorder %v1333, 0.0
    %vm1414 = vcmp.gt.f32.partialorder %v1334, 0.0
    %vm1415 = vcmp.gt.f32.partialorder %v1335, 0.0
    %vm1416 = vcmp.gt.f32.partialorder %v1336, 0.0
    %vm1417 = vcmp.gt.f32.partialorder %v1337, 0.0
    %vm1418 = vcmp.gt.f32.partialorder %v1338, 0.0
    %vm1419 = vcmp.gt.f32.partialorder %v1339, 0.0
    %vm1420 = vcmp.gt.f32.partialorder %v1340, 0.0
    %vm1421 = vcmp.gt.f32.partialorder %v1341, 0.0
    %vm1422 = vcmp.gt.f32.partialorder %v1342, 0.0
    %vm1423 = vcmp.gt.f32.partialorder %v1343, 0.0
    %vm1424 = vcmp.gt.f32.partialorder %v1344, 0.0
    %vm1425 = vcmp.gt.f32.partialorder %v1345, 0.0
    %vm1426 = vcmp.gt.f32.partialorder %v1346, 0.0
    %vm1427 = vcmp.gt.f32.partialorder %v1347, 0.0
    %vm1428 = vcmp.gt.f32.partialorder %v1348, 0.0
    %vm1429 = vcmp.gt.f32.partialorder %v1349, 0.0
    %v1430 = vmul.f32 %v1270, 0.01
    %v1431 = vmul.f32 %v1271, 0.01
    %v1432 = vmul.f32 %v1272, 0.01
    %v1433 = vmul.f32 %v1273, 0.01
    %v1434 = vmul.f32 %v1274, 0.01
    %v1435 = vmul.f32 %v1275, 0.01
    %v1436 = vmul.f32 %v1276, 0.01
    %v1437 = vmul.f32 %v1277, 0.01
    %v1438 = vmul.f32 %v1278, 0.01
    %v1439 = vmul.f32 %v1279, 0.01
    %v1440 = vmul.f32 %v1280, 0.01
    %v1441 = vmul.f32 %v1281, 0.01
    %v1442 = vmul.f32 %v1282, 0.01
    %v1443 = vmul.f32 %v1283, 0.01
    %v1444 = vmul.f32 %v1284, 0.01
    %v1445 = vmul.f32 %v1285, 0.01
    %v1446 = vmul.f32 %v1286, 0.01
    %v1447 = vmul.f32 %v1287, 0.01
    %v1448 = vmul.f32 %v1288, 0.01
    %v1449 = vmul.f32 %v1289, 0.01
    %v1450 = vmul.f32 %v1290, 0.01
    %v1451 = vmul.f32 %v1291, 0.01
    %v1452 = vmul.f32 %v1292, 0.01
    %v1453 = vmul.f32 %v1293, 0.01
    %v1454 = vmul.f32 %v1294, 0.01
    %v1455 = vmul.f32 %v1295, 0.01
    %v1456 = vmul.f32 %v1296, 0.01
    %v1457 = vmul.f32 %v1297, 0.01
    %v1458 = vmul.f32 %v1298, 0.01
    %v1459 = vmul.f32 %v1299, 0.01
    %v1460 = vmul.f32 %v1300, 0.01
    %v1461 = vmul.f32 %v1301, 0.01
    %v1462 = vmul.f32 %v1302, 0.01
    %v1463 = vmul.f32 %v1303, 0.01
    %v1464 = vmul.f32 %v1304, 0.01
    %v1465 = vmul.f32 %v1305, 0.01
    %v1466 = vmul.f32 %v1306, 0.01
    %v1467 = vmul.f32 %v1307, 0.01
    %v1468 = vmul.f32 %v1308, 0.01
    %v1469 = vmul.f32 %v1309, 0.01
    %v1470 = vmul.f32 %v1310, 0.01
    %v1471 = vmul.f32 %v1311, 0.01
    %v1472 = vmul.f32 %v1312, 0.01
    %v1473 = vmul.f32 %v1313, 0.01
    %v1474 = vmul.f32 %v1314, 0.01
    %v1475 = vmul.f32 %v1315, 0.01
    %v1476 = vmul.f32 %v1316, 0.01
    %v1477 = vmul.f32 %v1317, 0.01
    %v1478 = vmul.f32 %v1318, 0.01
    %v1479 = vmul.f32 %v1319, 0.01
    %v1480 = vmul.f32 %v1320, 0.01
    %v1481 = vmul.f32 %v1321, 0.01
    %v1482 = vmul.f32 %v1322, 0.01
    %v1483 = vmul.f32 %v1323, 0.01
    %v1484 = vmul.f32 %v1324, 0.01
    %v1485 = vmul.f32 %v1325, 0.01
    %v1486 = vmul.f32 %v1326, 0.01
    %v1487 = vmul.f32 %v1327, 0.01
    %v1488 = vmul.f32 %v1328, 0.01
    %v1489 = vmul.f32 %v1329, 0.01
    %v1490 = vmul.f32 %v1330, 0.01
    %v1491 = vmul.f32 %v1331, 0.01
    %v1492 = vmul.f32 %v1332, 0.01
    %v1493 = vmul.f32 %v1333, 0.01
    %v1494 = vmul.f32 %v1334, 0.01
    %v1495 = vmul.f32 %v1335, 0.01
    %v1496 = vmul.f32 %v1336, 0.01
    %v1497 = vmul.f32 %v1337, 0.01
    %v1498 = vmul.f32 %v1338, 0.01
    %v1499 = vmul.f32 %v1339, 0.01
    %v1500 = vmul.f32 %v1340, 0.01
    %v1501 = vmul.f32 %v1341, 0.01
    %v1502 = vmul.f32 %v1342, 0.01
    %v1503 = vmul.f32 %v1343, 0.01
    %v1504 = vmul.f32 %v1344, 0.01
    %v1505 = vmul.f32 %v1345, 0.01
    %v1506 = vmul.f32 %v1346, 0.01
    %v1507 = vmul.f32 %v1347, 0.01
    %v1508 = vmul.f32 %v1348, 0.01
    %v1509 = vmul.f32 %v1349, 0.01
    %v1510 = vsel %vm1350, %v1270, %v1430
    %v1511 = vsel %vm1351, %v1271, %v1431
    %v1512 = vsel %vm1352, %v1272, %v1432
    %v1513 = vsel %vm1353, %v1273, %v1433
    %v1514 = vsel %vm1354, %v1274, %v1434
    %v1515 = vsel %vm1355, %v1275, %v1435
    %v1516 = vsel %vm1356, %v1276, %v1436
    %v1517 = vsel %vm1357, %v1277, %v1437
    %v1518 = vsel %vm1358, %v1278, %v1438
    %v1519 = vsel %vm1359, %v1279, %v1439
    %v1520 = vsel %vm1360, %v1280, %v1440
    %v1521 = vsel %vm1361, %v1281, %v1441
    %v1522 = vsel %vm1362, %v1282, %v1442
    %v1523 = vsel %vm1363, %v1283, %v1443
    %v1524 = vsel %vm1364, %v1284, %v1444
    %v1525 = vsel %vm1365, %v1285, %v1445
    %v1526 = vsel %vm1366, %v1286, %v1446
    %v1527 = vsel %vm1367, %v1287, %v1447
    %v1528 = vsel %vm1368, %v1288, %v1448
    %v1529 = vsel %vm1369, %v1289, %v1449
    %v1530 = vsel %vm1370, %v1290, %v1450
    %v1531 = vsel %vm1371, %v1291, %v1451
    %v1532 = vsel %vm1372, %v1292, %v1452
    %v1533 = vsel %vm1373, %v1293, %v1453
    %v1534 = vsel %vm1374, %v1294, %v1454
    %v1535 = vsel %vm1375, %v1295, %v1455
    %v1536 = vsel %vm1376, %v1296, %v1456
    %v1537 = vsel %vm1377, %v1297, %v1457
    %v1538 = vsel %vm1378, %v1298, %v1458
    %v1539 = vsel %vm1379, %v1299, %v1459
    %v1540 = vsel %vm1380, %v1300, %v1460
    %v1541 = vsel %vm1381, %v1301, %v1461
    %v1542 = vsel %vm1382, %v1302, %v1462
    %v1543 = vsel %vm1383, %v1303, %v1463
    %v1544 = vsel %vm1384, %v1304, %v1464
    %v1545 = vsel %vm1385, %v1305, %v1465
    %v1546 = vsel %vm1386, %v1306, %v1466
    %v1547 = vsel %vm1387, %v1307, %v1467
    %v1548 = vsel %vm1388, %v1308, %v1468
    %v1549 = vsel %vm1389, %v1309, %v1469
    %v1550 = vsel %vm1390, %v1310, %v1470
    %v1551 = vsel %vm1391, %v1311, %v1471
    %v1552 = vsel %vm1392, %v1312, %v1472
    %v1553 = vsel %vm1393, %v1313, %v1473
    %v1554 = vsel %vm1394, %v1314, %v1474
    %v1555 = vsel %vm1395, %v1315, %v1475
    %v1556 = vsel %vm1396, %v1316, %v1476
    %v1557 = vsel %vm1397, %v1317, %v1477
    %v1558 = vsel %vm1398, %v1318, %v1478
    %v1559 = vsel %vm1399, %v1319, %v1479
    %v1560 = vsel %vm1400, %v1320, %v1480
    %v1561 = vsel %vm1401, %v1321, %v1481
    %v1562 = vsel %vm1402, %v1322, %v1482
    %v1563 = vsel %vm1403, %v1323, %v1483
    %v1564 = vsel %vm1404, %v1324, %v1484
    %v1565 = vsel %vm1405, %v1325, %v1485
    %v1566 = vsel %vm1406, %v1326, %v1486
    %v1567 = vsel %vm1407, %v1327, %v1487
    %v1568 = vsel %vm1408, %v1328, %v1488
    %v1569 = vsel %vm1409, %v1329, %v1489
    %v1570 = vsel %vm1410, %v1330, %v1490
    %v1571 = vsel %vm1411, %v1331, %v1491
    %v1572 = vsel %vm1412, %v1332, %v1492
    %v1573 = vsel %vm1413, %v1333, %v1493
    %v1574 = vsel %vm1414, %v1334, %v1494
    %v1575 = vsel %vm1415, %v1335, %v1495
    %v1576 = vsel %vm1416, %v1336, %v1496
    %v1577 = vsel %vm1417, %v1337, %v1497
    %v1578 = vsel %vm1418, %v1338, %v1498
    %v1579 = vsel %vm1419, %v1339, %v1499
    %v1580 = vsel %vm1420, %v1340, %v1500
    %v1581 = vsel %vm1421, %v1341, %v1501
    %v1582 = vsel %vm1422, %v1342, %v1502
    %v1583 = vsel %vm1423, %v1343, %v1503
    %v1584 = vsel %vm1424, %v1344, %v1504
    %v1585 = vsel %vm1425, %v1345, %v1505
    %v1586 = vsel %vm1426, %v1346, %v1506
    %v1587 = vsel %vm1427, %v1347, %v1507
    %v1588 = vsel %vm1428, %v1348, %v1508
    %v1589 = vsel %vm1429, %v1349, %v1509
    %v1590 = vld [vmem:[#allocation6] sm:$0xff]
    %v1591 = vld [vmem:[#allocation6 + $0x8] sm:$0xff]
    %v1592 = vld [vmem:[#allocation6 + $0x10] sm:$0xff]
    %v1593 = vld [vmem:[#allocation6 + $0x18] sm:$0xff]
    %v1594 = vld [vmem:[#allocation6 + $0x20] sm:$0xff]
    %v1595 = vld [vmem:[#allocation6 + $0x28] sm:$0xff]
    %v1596 = vld [vmem:[#allocation6 + $0x30] sm:$0xff]
    %v1597 = vld [vmem:[#allocation6 + $0x38] sm:$0xff]
    %v1598 = vld [vmem:[#allocation6 + $0x40] sm:$0xff]
    %v1599 = vld [vmem:[#allocation6 + $0x48] sm:$0xff]
    %v1600 = vld [vmem:[#allocation6 + $0x50] sm:$0xff]
    %v1601 = vld [vmem:[#allocation6 + $0x58] sm:$0xff]
    %v1602 = vld [vmem:[#allocation6 + $0x60] sm:$0xff]
    %v1603 = vld [vmem:[#allocation6 + $0x68] sm:$0xff]
    %v1604 = vld [vmem:[#allocation6 + $0x70] sm:$0xff]
    %v1605 = vld [vmem:[#allocation6 + $0x78] sm:$0xff]
    %v1606 = vld [vmem:[#allocation6 + $0x80] sm:$0xff]
    %v1607 = vld [vmem:[#allocation6 + $0x88] sm:$0xff]
    %v1608 = vld [vmem:[#allocation6 + $0x90] sm:$0xff]
    %v1609 = vld [vmem:[#allocation6 + $0x98] sm:$0xff]
    %v1610 = vld [vmem:[#allocation6 + $0xa0] sm:$0xff]
    %v1611 = vld [vmem:[#allocation6 + $0xa8] sm:$0xff]
    %v1612 = vld [vmem:[#allocation6 + $0xb0] sm:$0xff]
    %v1613 = vld [vmem:[#allocation6 + $0xb8] sm:$0xff]
    %v1614 = vld [vmem:[#allocation6 + $0xc0] sm:$0xff]
    %v1615 = vld [vmem:[#allocation6 + $0xc8] sm:$0xff]
    %v1616 = vld [vmem:[#allocation6 + $0xd0] sm:$0xff]
    %v1617 = vld [vmem:[#allocation6 + $0xd8] sm:$0xff]
    %v1618 = vld [vmem:[#allocation6 + $0xe0] sm:$0xff]
    %v1619 = vld [vmem:[#allocation6 + $0xe8] sm:$0xff]
    %v1620 = vld [vmem:[#allocation6 + $0xf0] sm:$0xff]
    %v1621 = vld [vmem:[#allocation6 + $0xf8] sm:$0xff]
    %v1622 = vld [vmem:[#allocation6 + $0x100] sm:$0xff]
    %v1623 = vld [vmem:[#allocation6 + $0x108] sm:$0xff]
    %v1624 = vld [vmem:[#allocation6 + $0x110] sm:$0xff]
    %v1625 = vld [vmem:[#allocation6 + $0x118] sm:$0xff]
    %v1626 = vld [vmem:[#allocation6 + $0x120] sm:$0xff]
    %v1627 = vld [vmem:[#allocation6 + $0x128] sm:$0xff]
    %v1628 = vld [vmem:[#allocation6 + $0x130] sm:$0xff]
    %v1629 = vld [vmem:[#allocation6 + $0x138] sm:$0xff]
    %v1630 = vld [vmem:[#allocation6 + $0x140] sm:$0xff]
    %v1631 = vld [vmem:[#allocation6 + $0x148] sm:$0xff]
    %v1632 = vld [vmem:[#allocation6 + $0x150] sm:$0xff]
    %v1633 = vld [vmem:[#allocation6 + $0x158] sm:$0xff]
    %v1634 = vld [vmem:[#allocation6 + $0x160] sm:$0xff]
    %v1635 = vld [vmem:[#allocation6 + $0x168] sm:$0xff]
    %v1636 = vld [vmem:[#allocation6 + $0x170] sm:$0xff]
    %v1637 = vld [vmem:[#allocation6 + $0x178] sm:$0xff]
    %v1638 = vld [vmem:[#allocation6 + $0x180] sm:$0xff]
    %v1639 = vld [vmem:[#allocation6 + $0x188] sm:$0xff]
    %v1640 = vld [vmem:[#allocation6 + $0x190] sm:$0xff]
    %v1641 = vld [vmem:[#allocation6 + $0x198] sm:$0xff]
    %v1642 = vld [vmem:[#allocation6 + $0x1a0] sm:$0xff]
    %v1643 = vld [vmem:[#allocation6 + $0x1a8] sm:$0xff]
    %v1644 = vld [vmem:[#allocation6 + $0x1b0] sm:$0xff]
    %v1645 = vld [vmem:[#allocation6 + $0x1b8] sm:$0xff]
    %v1646 = vld [vmem:[#allocation6 + $0x1c0] sm:$0xff]
    %v1647 = vld [vmem:[#allocation6 + $0x1c8] sm:$0xff]
    %v1648 = vld [vmem:[#allocation6 + $0x1d0] sm:$0xff]
    %v1649 = vld [vmem:[#allocation6 + $0x1d8] sm:$0xff]
    %v1650 = vld [vmem:[#allocation6 + $0x1e0] sm:$0xff]
    %v1651 = vld [vmem:[#allocation6 + $0x1e8] sm:$0xff]
    %v1652 = vld [vmem:[#allocation6 + $0x1f0] sm:$0xff]
    %v1653 = vld [vmem:[#allocation6 + $0x1f8] sm:$0xff]
    %s1654 = scalar_lea.vmem [#allocation6], 512
    %v1655 = vld [vmem:[%s1654] sm:$0xff]
    %v1656 = vld [vmem:[%s1654 + $0x8] sm:$0xff]
    %v1657 = vld [vmem:[%s1654 + $0x10] sm:$0xff]
    %v1658 = vld [vmem:[%s1654 + $0x18] sm:$0xff]
    %v1659 = vld [vmem:[%s1654 + $0x20] sm:$0xff]
    %v1660 = vld [vmem:[%s1654 + $0x28] sm:$0xff]
    %v1661 = vld [vmem:[%s1654 + $0x30] sm:$0xff]
    %v1662 = vld [vmem:[%s1654 + $0x38] sm:$0xff]
    %v1663 = vld [vmem:[%s1654 + $0x40] sm:$0xff]
    %v1664 = vld [vmem:[%s1654 + $0x48] sm:$0xff]
    %v1665 = vld [vmem:[%s1654 + $0x50] sm:$0xff]
    %v1666 = vld [vmem:[%s1654 + $0x58] sm:$0xff]
    %v1667 = vld [vmem:[%s1654 + $0x60] sm:$0xff]
    %v1668 = vld [vmem:[%s1654 + $0x68] sm:$0xff]
    %v1669 = vld [vmem:[%s1654 + $0x70] sm:$0xff]
    %v1670 = vld [vmem:[%s1654 + $0x78] sm:$0xff]
    %v1671 = vld [vmem:[%s1654 + $0x80] sm:$0xff]
    %v1672 = vld [vmem:[%s1654 + $0x88] sm:$0xff]
    %v1673 = vld [vmem:[%s1654 + $0x90] sm:$0xff]
    %v1674 = vld [vmem:[%s1654 + $0x98] sm:$0xff]
    %v1675 = vld [vmem:[%s1654 + $0xa0] sm:$0xff]
    %v1676 = vld [vmem:[%s1654 + $0xa8] sm:$0xff]
    %v1677 = vld [vmem:[%s1654 + $0xb0] sm:$0xff]
    %v1678 = vld [vmem:[%s1654 + $0xb8] sm:$0xff]
    %v1679 = vld [vmem:[%s1654 + $0xc0] sm:$0xff]
    %v1680 = vld [vmem:[%s1654 + $0xc8] sm:$0xff]
    %v1681 = vld [vmem:[%s1654 + $0xd0] sm:$0xff]
    %v1682 = vld [vmem:[%s1654 + $0xd8] sm:$0xff]
    %v1683 = vld [vmem:[%s1654 + $0xe0] sm:$0xff]
    %v1684 = vld [vmem:[%s1654 + $0xe8] sm:$0xff]
    %v1685 = vld [vmem:[%s1654 + $0xf0] sm:$0xff]
    %v1686 = vld [vmem:[%s1654 + $0xf8] sm:$0xff]
    %v1687 = vld [vmem:[%s1654 + $0x100] sm:$0xff]
    %v1688 = vld [vmem:[%s1654 + $0x108] sm:$0xff]
    %v1689 = vld [vmem:[%s1654 + $0x110] sm:$0xff]
    %v1690 = vld [vmem:[%s1654 + $0x118] sm:$0xff]
    %v1691 = vld [vmem:[%s1654 + $0x120] sm:$0xff]
    %v1692 = vld [vmem:[%s1654 + $0x128] sm:$0xff]
    %v1693 = vld [vmem:[%s1654 + $0x130] sm:$0xff]
    %v1694 = vld [vmem:[%s1654 + $0x138] sm:$0xff]
    %v1695 = vld [vmem:[%s1654 + $0x140] sm:$0xff]
    %v1696 = vld [vmem:[%s1654 + $0x148] sm:$0xff]
    %v1697 = vld [vmem:[%s1654 + $0x150] sm:$0xff]
    %v1698 = vld [vmem:[%s1654 + $0x158] sm:$0xff]
    %v1699 = vld [vmem:[%s1654 + $0x160] sm:$0xff]
    %v1700 = vld [vmem:[%s1654 + $0x168] sm:$0xff]
    %v1701 = vld [vmem:[%s1654 + $0x170] sm:$0xff]
    %v1702 = vld [vmem:[%s1654 + $0x178] sm:$0xff]
    %v1703 = vld [vmem:[%s1654 + $0x180] sm:$0xff]
    %v1704 = vld [vmem:[%s1654 + $0x188] sm:$0xff]
    %v1705 = vld [vmem:[%s1654 + $0x190] sm:$0xff]
    %v1706 = vld [vmem:[%s1654 + $0x198] sm:$0xff]
    %v1707 = vld [vmem:[%s1654 + $0x1a0] sm:$0xff]
    %v1708 = vld [vmem:[%s1654 + $0x1a8] sm:$0xff]
    %v1709 = vld [vmem:[%s1654 + $0x1b0] sm:$0xff]
    %v1710 = vld [vmem:[%s1654 + $0x1b8] sm:$0xff]
    %v1711 = vld [vmem:[%s1654 + $0x1c0] sm:$0xff]
    %v1712 = vld [vmem:[%s1654 + $0x1c8] sm:$0xff]
    %v1713 = vld [vmem:[%s1654 + $0x1d0] sm:$0xff]
    %v1714 = vld [vmem:[%s1654 + $0x1d8] sm:$0xff]
    %v1715 = vld [vmem:[%s1654 + $0x1e0] sm:$0xff]
    %v1716 = vld [vmem:[%s1654 + $0x1e8] sm:$0xff]
    %v1717 = vld [vmem:[%s1654 + $0x1f0] sm:$0xff]
    %v1718 = vld [vmem:[%s1654 + $0x1f8] sm:$0xff]
    %s1719 = scalar_lea.vmem [#allocation6], 1024
    %v1720 = vld [vmem:[%s1719] sm:$0xff]
    %v1721 = vld [vmem:[%s1719 + $0x8] sm:$0xff]
    %v1722 = vld [vmem:[%s1719 + $0x10] sm:$0xff]
    %v1723 = vld [vmem:[%s1719 + $0x18] sm:$0xff]
    %v1724 = vld [vmem:[%s1719 + $0x20] sm:$0xff]
    %v1725 = vld [vmem:[%s1719 + $0x28] sm:$0xff]
    %v1726 = vld [vmem:[%s1719 + $0x30] sm:$0xff]
    %v1727 = vld [vmem:[%s1719 + $0x38] sm:$0xff]
    %v1728 = vld [vmem:[%s1719 + $0x40] sm:$0xff]
    %v1729 = vld [vmem:[%s1719 + $0x48] sm:$0xff]
    %v1730 = vld [vmem:[%s1719 + $0x50] sm:$0xff]
    %v1731 = vld [vmem:[%s1719 + $0x58] sm:$0xff]
    %v1732 = vld [vmem:[%s1719 + $0x60] sm:$0xff]
    %v1733 = vld [vmem:[%s1719 + $0x68] sm:$0xff]
    %v1734 = vld [vmem:[%s1719 + $0x70] sm:$0xff]
    %v1735 = vld [vmem:[%s1719 + $0x78] sm:$0xff]
    %v1736 = vld [vmem:[%s1719 + $0x80] sm:$0xff]
    %v1737 = vld [vmem:[%s1719 + $0x88] sm:$0xff]
    %v1738 = vld [vmem:[%s1719 + $0x90] sm:$0xff]
    %v1739 = vld [vmem:[%s1719 + $0x98] sm:$0xff]
    %v1740 = vld [vmem:[%s1719 + $0xa0] sm:$0xff]
    %v1741 = vld [vmem:[%s1719 + $0xa8] sm:$0xff]
    %v1742 = vld [vmem:[%s1719 + $0xb0] sm:$0xff]
    %v1743 = vld [vmem:[%s1719 + $0xb8] sm:$0xff]
    %v1744 = vld [vmem:[%s1719 + $0xc0] sm:$0xff]
    %v1745 = vld [vmem:[%s1719 + $0xc8] sm:$0xff]
    %v1746 = vld [vmem:[%s1719 + $0xd0] sm:$0xff]
    %v1747 = vld [vmem:[%s1719 + $0xd8] sm:$0xff]
    %v1748 = vld [vmem:[%s1719 + $0xe0] sm:$0xff]
    %v1749 = vld [vmem:[%s1719 + $0xe8] sm:$0xff]
    %v1750 = vld [vmem:[%s1719 + $0xf0] sm:$0xff]
    %v1751 = vld [vmem:[%s1719 + $0xf8] sm:$0xff]
    %v1752 = vld [vmem:[%s1719 + $0x100] sm:$0xff]
    %v1753 = vld [vmem:[%s1719 + $0x108] sm:$0xff]
    %v1754 = vld [vmem:[%s1719 + $0x110] sm:$0xff]
    %v1755 = vld [vmem:[%s1719 + $0x118] sm:$0xff]
    %v1756 = vld [vmem:[%s1719 + $0x120] sm:$0xff]
    %v1757 = vld [vmem:[%s1719 + $0x128] sm:$0xff]
    %v1758 = vld [vmem:[%s1719 + $0x130] sm:$0xff]
    %v1759 = vld [vmem:[%s1719 + $0x138] sm:$0xff]
    %v1760 = vld [vmem:[%s1719 + $0x140] sm:$0xff]
    %v1761 = vld [vmem:[%s1719 + $0x148] sm:$0xff]
    %v1762 = vld [vmem:[%s1719 + $0x150] sm:$0xff]
    %v1763 = vld [vmem:[%s1719 + $0x158] sm:$0xff]
    %v1764 = vld [vmem:[%s1719 + $0x160] sm:$0xff]
    %v1765 = vld [vmem:[%s1719 + $0x168] sm:$0xff]
    %v1766 = vld [vmem:[%s1719 + $0x170] sm:$0xff]
    %v1767 = vld [vmem:[%s1719 + $0x178] sm:$0xff]
    %v1768 = vld [vmem:[%s1719 + $0x180] sm:$0xff]
    %v1769 = vld [vmem:[%s1719 + $0x188] sm:$0xff]
    %v1770 = vld [vmem:[%s1719 + $0x190] sm:$0xff]
    %v1771 = vld [vmem:[%s1719 + $0x198] sm:$0xff]
    %v1772 = vld [vmem:[%s1719 + $0x1a0] sm:$0xff]
    %v1773 = vld [vmem:[%s1719 + $0x1a8] sm:$0xff]
    %v1774 = vld [vmem:[%s1719 + $0x1b0] sm:$0xff]
    %v1775 = vld [vmem:[%s1719 + $0x1b8] sm:$0xff]
    %v1776 = vld [vmem:[%s1719 + $0x1c0] sm:$0xff]
    %v1777 = vld [vmem:[%s1719 + $0x1c8] sm:$0xff]
    %v1778 = vld [vmem:[%s1719 + $0x1d0] sm:$0xff]
    %v1779 = vld [vmem:[%s1719 + $0x1d8] sm:$0xff]
    %v1780 = vld [vmem:[%s1719 + $0x1e0] sm:$0xff]
    %v1781 = vld [vmem:[%s1719 + $0x1e8] sm:$0xff]
    %v1782 = vld [vmem:[%s1719 + $0x1f0] sm:$0xff]
    %v1783 = vld [vmem:[%s1719 + $0x1f8] sm:$0xff]
    %1784 = vmatpush.msra.mxu0 %v1620
    %1785 = vmatpush.msra.mxu0 %v1618
    %1786 = vmatpush.msra.mxu0 %v1616
    %1787 = vmatpush.msra.mxu0 %v1614
    %1788 = vmatpush.msra.mxu0 %v1612
    %1789 = vmatpush.msra.mxu0 %v1610
    %1790 = vmatpush.msra.mxu0 %v1608
    %1791 = vmatpush.msra.mxu0 %v1606
    %1792 = vmatpush.msra.mxu0 %v1604
    %1793 = vmatpush.msra.mxu0 %v1602
    %1794 = vmatpush.msra.mxu0 %v1600
    %1795 = vmatpush.msra.mxu0 %v1598
    %1796 = vmatpush.msra.mxu0 %v1596
    %1797 = vmatpush.msra.mxu0 %v1594
    %1798 = vmatpush.msra.mxu0 %v1592
    %1799 = vmatpush.msra.mxu0 %v1590
    %1800 = vmatmul.f32.gmra.mxu0 0.0
    %v1801 = vpop.f32.mrf.mxu0
    %v1802 = vadd.f32 0.0, %v1801
    %1803 = vmatmul.f32.gmra.mxu0 %v1510
    %v1804 = vpop.f32.mrf.mxu0
    %v1805 = vadd.f32 0.0, %v1804
    %1806 = vmatmul.f32.gmra.mxu0 %v1512
    %v1807 = vpop.f32.mrf.mxu0
    %v1808 = vadd.f32 0.0, %v1807
    %1809 = vmatmul.f32.gmra.mxu0 %v1514
    %v1810 = vpop.f32.mrf.mxu0
    %v1811 = vadd.f32 0.0, %v1810
    %1812 = vmatmul.f32.gmra.mxu0 %v1516
    %v1813 = vpop.f32.mrf.mxu0
    %v1814 = vadd.f32 0.0, %v1813
    %1815 = vmatmul.f32.gmra.mxu0 %v1518
    %v1816 = vpop.f32.mrf.mxu0
    %v1817 = vadd.f32 0.0, %v1816
    %1818 = vmatmul.f32.gmra.mxu0 %v1520
    %v1819 = vpop.f32.mrf.mxu0
    %v1820 = vadd.f32 0.0, %v1819
    %1821 = vmatmul.f32.gmra.mxu0 %v1522
    %v1822 = vpop.f32.mrf.mxu0
    %v1823 = vadd.f32 0.0, %v1822
    %1824 = vmatmul.f32.gmra.mxu0 %v1524
    %v1825 = vpop.f32.mrf.mxu0
    %v1826 = vadd.f32 0.0, %v1825
    %1827 = vmatmul.f32.gmra.mxu0 %v1526
    %v1828 = vpop.f32.mrf.mxu0
    %v1829 = vadd.f32 0.0, %v1828
    %1830 = vmatmul.f32.gmra.mxu0 %v1528
    %v1831 = vpop.f32.mrf.mxu0
    %v1832 = vadd.f32 0.0, %v1831
    %1833 = vmatmul.f32.gmra.mxu0 %v1530
    %v1834 = vpop.f32.mrf.mxu0
    %v1835 = vadd.f32 0.0, %v1834
    %1836 = vmatmul.f32.gmra.mxu0 %v1532
    %v1837 = vpop.f32.mrf.mxu0
    %v1838 = vadd.f32 0.0, %v1837
    %1839 = vmatmul.f32.gmra.mxu0 %v1534
    %v1840 = vpop.f32.mrf.mxu0
    %v1841 = vadd.f32 0.0, %v1840
    %1842 = vmatmul.f32.gmra.mxu0 %v1536
    %v1843 = vpop.f32.mrf.mxu0
    %v1844 = vadd.f32 0.0, %v1843
    %1845 = vmatmul.f32.gmra.mxu0 %v1538
    %v1846 = vpop.f32.mrf.mxu0
    %v1847 = vadd.f32 0.0, %v1846
    %1848 = vmatmul.f32.gmra.mxu0 %v1540
    %v1849 = vpop.f32.mrf.mxu0
    %v1850 = vadd.f32 0.0, %v1849
    %1851 = vmatmul.f32.gmra.mxu0 %v1542
    %v1852 = vpop.f32.mrf.mxu0
    %v1853 = vadd.f32 0.0, %v1852
    %1854 = vmatmul.f32.gmra.mxu0 %v1544
    %v1855 = vpop.f32.mrf.mxu0
    %v1856 = vadd.f32 0.0, %v1855
    %1857 = vmatmul.f32.gmra.mxu0 %v1546
    %v1858 = vpop.f32.mrf.mxu0
    %v1859 = vadd.f32 0.0, %v1858
    %1860 = vmatmul.f32.gmra.mxu0 %v1548
    %v1861 = vpop.f32.mrf.mxu0
    %v1862 = vadd.f32 0.0, %v1861
    %1863 = vmatmul.f32.gmra.mxu0 %v1550
    %v1864 = vpop.f32.mrf.mxu0
    %v1865 = vadd.f32 0.0, %v1864
    %1866 = vmatmul.f32.gmra.mxu0 %v1552
    %v1867 = vpop.f32.mrf.mxu0
    %v1868 = vadd.f32 0.0, %v1867
    %1869 = vmatmul.f32.gmra.mxu0 %v1554
    %v1870 = vpop.f32.mrf.mxu0
    %v1871 = vadd.f32 0.0, %v1870
    %1872 = vmatmul.f32.gmra.mxu0 %v1556
    %v1873 = vpop.f32.mrf.mxu0
    %v1874 = vadd.f32 0.0, %v1873
    %1875 = vmatmul.f32.gmra.mxu0 %v1558
    %v1876 = vpop.f32.mrf.mxu0
    %v1877 = vadd.f32 0.0, %v1876
    %1878 = vmatmul.f32.gmra.mxu0 %v1560
    %v1879 = vpop.f32.mrf.mxu0
    %v1880 = vadd.f32 0.0, %v1879
    %1881 = vmatmul.f32.gmra.mxu0 %v1562
    %v1882 = vpop.f32.mrf.mxu0
    %v1883 = vadd.f32 0.0, %v1882
    %1884 = vmatmul.f32.gmra.mxu0 %v1564
    %v1885 = vpop.f32.mrf.mxu0
    %v1886 = vadd.f32 0.0, %v1885
    %1887 = vmatmul.f32.gmra.mxu0 %v1566
    %v1888 = vpop.f32.mrf.mxu0
    %v1889 = vadd.f32 0.0, %v1888
    %1890 = vmatmul.f32.gmra.mxu0 %v1568
    %v1891 = vpop.f32.mrf.mxu0
    %v1892 = vadd.f32 0.0, %v1891
    %1893 = vmatmul.f32.gmra.mxu0 %v1570
    %v1894 = vpop.f32.mrf.mxu0
    %v1895 = vadd.f32 0.0, %v1894
    %1896 = vmatmul.f32.gmra.mxu0 %v1572
    %v1897 = vpop.f32.mrf.mxu0
    %v1898 = vadd.f32 0.0, %v1897
    %1899 = vmatmul.f32.gmra.mxu0 %v1574
    %v1900 = vpop.f32.mrf.mxu0
    %v1901 = vadd.f32 0.0, %v1900
    %1902 = vmatmul.f32.gmra.mxu0 %v1576
    %v1903 = vpop.f32.mrf.mxu0
    %v1904 = vadd.f32 0.0, %v1903
    %1905 = vmatmul.f32.gmra.mxu0 %v1578
    %v1906 = vpop.f32.mrf.mxu0
    %v1907 = vadd.f32 0.0, %v1906
    %1908 = vmatmul.f32.gmra.mxu0 %v1580
    %v1909 = vpop.f32.mrf.mxu0
    %v1910 = vadd.f32 0.0, %v1909
    %1911 = vmatmul.f32.gmra.mxu0 %v1582
    %v1912 = vpop.f32.mrf.mxu0
    %v1913 = vadd.f32 0.0, %v1912
    %1914 = vmatmul.f32.gmra.mxu0 %v1584
    %v1915 = vpop.f32.mrf.mxu0
    %v1916 = vadd.f32 0.0, %v1915
    %1917 = vmatmul.f32.gmra.mxu0 %v1586
    %v1918 = vpop.f32.mrf.mxu0
    %v1919 = vadd.f32 0.0, %v1918
    %1920 = vdwg.mxu0
    %1921 = vmatpush.msra.mxu0 %v1652
    %1922 = vmatpush.msra.mxu0 %v1650
    %1923 = vmatpush.msra.mxu0 %v1648
    %1924 = vmatpush.msra.mxu0 %v1646
    %1925 = vmatpush.msra.mxu0 %v1644
    %1926 = vmatpush.msra.mxu0 %v1642
    %1927 = vmatpush.msra.mxu0 %v1640
    %1928 = vmatpush.msra.mxu0 %v1638
    %1929 = vmatpush.msra.mxu0 %v1636
    %1930 = vmatpush.msra.mxu0 %v1634
    %1931 = vmatpush.msra.mxu0 %v1632
    %1932 = vmatpush.msra.mxu0 %v1630
    %1933 = vmatpush.msra.mxu0 %v1628
    %1934 = vmatpush.msra.mxu0 %v1626
    %1935 = vmatpush.msra.mxu0 %v1624
    %1936 = vmatpush.msra.mxu0 %v1622
    %1937 = vmatmul.f32.gmra.mxu0 0.0
    %v1938 = vpop.f32.mrf.mxu0
    %v1939 = vadd.f32 %v1802, %v1938
    %1940 = vmatmul.f32.gmra.mxu0 %v1511
    %v1941 = vpop.f32.mrf.mxu0
    %v1942 = vadd.f32 %v1805, %v1941
    %1943 = vmatmul.f32.gmra.mxu0 %v1513
    %v1944 = vpop.f32.mrf.mxu0
    %v1945 = vadd.f32 %v1808, %v1944
    %1946 = vmatmul.f32.gmra.mxu0 %v1515
    %v1947 = vpop.f32.mrf.mxu0
    %v1948 = vadd.f32 %v1811, %v1947
    %1949 = vmatmul.f32.gmra.mxu0 %v1517
    %v1950 = vpop.f32.mrf.mxu0
    %v1951 = vadd.f32 %v1814, %v1950
    %1952 = vmatmul.f32.gmra.mxu0 %v1519
    %v1953 = vpop.f32.mrf.mxu0
    %v1954 = vadd.f32 %v1817, %v1953
    %1955 = vmatmul.f32.gmra.mxu0 %v1521
    %v1956 = vpop.f32.mrf.mxu0
    %v1957 = vadd.f32 %v1820, %v1956
    %1958 = vmatmul.f32.gmra.mxu0 %v1523
    %v1959 = vpop.f32.mrf.mxu0
    %v1960 = vadd.f32 %v1823, %v1959
    %1961 = vmatmul.f32.gmra.mxu0 %v1525
    %v1962 = vpop.f32.mrf.mxu0
    %v1963 = vadd.f32 %v1826, %v1962
    %1964 = vmatmul.f32.gmra.mxu0 %v1527
    %v1965 = vpop.f32.mrf.mxu0
    %v1966 = vadd.f32 %v1829, %v1965
    %1967 = vmatmul.f32.gmra.mxu0 %v1529
    %v1968 = vpop.f32.mrf.mxu0
    %v1969 = vadd.f32 %v1832, %v1968
    %1970 = vmatmul.f32.gmra.mxu0 %v1531
    %v1971 = vpop.f32.mrf.mxu0
    %v1972 = vadd.f32 %v1835, %v1971
    %1973 = vmatmul.f32.gmra.mxu0 %v1533
    %v1974 = vpop.f32.mrf.mxu0
    %v1975 = vadd.f32 %v1838, %v1974
    %1976 = vmatmul.f32.gmra.mxu0 %v1535
    %v1977 = vpop.f32.mrf.mxu0
    %v1978 = vadd.f32 %v1841, %v1977
    %1979 = vmatmul.f32.gmra.mxu0 %v1537
    %v1980 = vpop.f32.mrf.mxu0
    %v1981 = vadd.f32 %v1844, %v1980
    %1982 = vmatmul.f32.gmra.mxu0 %v1539
    %v1983 = vpop.f32.mrf.mxu0
    %v1984 = vadd.f32 %v1847, %v1983
    %1985 = vmatmul.f32.gmra.mxu0 %v1541
    %v1986 = vpop.f32.mrf.mxu0
    %v1987 = vadd.f32 %v1850, %v1986
    %1988 = vmatmul.f32.gmra.mxu0 %v1543
    %v1989 = vpop.f32.mrf.mxu0
    %v1990 = vadd.f32 %v1853, %v1989
    %1991 = vmatmul.f32.gmra.mxu0 %v1545
    %v1992 = vpop.f32.mrf.mxu0
    %v1993 = vadd.f32 %v1856, %v1992
    %1994 = vmatmul.f32.gmra.mxu0 %v1547
    %v1995 = vpop.f32.mrf.mxu0
    %v1996 = vadd.f32 %v1859, %v1995
    %1997 = vmatmul.f32.gmra.mxu0 %v1549
    %v1998 = vpop.f32.mrf.mxu0
    %v1999 = vadd.f32 %v1862, %v1998
    %2000 = vmatmul.f32.gmra.mxu0 %v1551
    %v2001 = vpop.f32.mrf.mxu0
    %v2002 = vadd.f32 %v1865, %v2001
    %2003 = vmatmul.f32.gmra.mxu0 %v1553
    %v2004 = vpop.f32.mrf.mxu0
    %v2005 = vadd.f32 %v1868, %v2004
    %2006 = vmatmul.f32.gmra.mxu0 %v1555
    %v2007 = vpop.f32.mrf.mxu0
    %v2008 = vadd.f32 %v1871, %v2007
    %2009 = vmatmul.f32.gmra.mxu0 %v1557
    %v2010 = vpop.f32.mrf.mxu0
    %v2011 = vadd.f32 %v1874, %v2010
    %2012 = vmatmul.f32.gmra.mxu0 %v1559
    %v2013 = vpop.f32.mrf.mxu0
    %v2014 = vadd.f32 %v1877, %v2013
    %2015 = vmatmul.f32.gmra.mxu0 %v1561
    %v2016 = vpop.f32.mrf.mxu0
    %v2017 = vadd.f32 %v1880, %v2016
    %2018 = vmatmul.f32.gmra.mxu0 %v1563
    %v2019 = vpop.f32.mrf.mxu0
    %v2020 = vadd.f32 %v1883, %v2019
    %2021 = vmatmul.f32.gmra.mxu0 %v1565
    %v2022 = vpop.f32.mrf.mxu0
    %v2023 = vadd.f32 %v1886, %v2022
    %2024 = vmatmul.f32.gmra.mxu0 %v1567
    %v2025 = vpop.f32.mrf.mxu0
    %v2026 = vadd.f32 %v1889, %v2025
    %2027 = vmatmul.f32.gmra.mxu0 %v1569
    %v2028 = vpop.f32.mrf.mxu0
    %v2029 = vadd.f32 %v1892, %v2028
    %2030 = vmatmul.f32.gmra.mxu0 %v1571
    %v2031 = vpop.f32.mrf.mxu0
    %v2032 = vadd.f32 %v1895, %v2031
    %2033 = vmatmul.f32.gmra.mxu0 %v1573
    %v2034 = vpop.f32.mrf.mxu0
    %v2035 = vadd.f32 %v1898, %v2034
    %2036 = vmatmul.f32.gmra.mxu0 %v1575
    %v2037 = vpop.f32.mrf.mxu0
    %v2038 = vadd.f32 %v1901, %v2037
    %2039 = vmatmul.f32.gmra.mxu0 %v1577
    %v2040 = vpop.f32.mrf.mxu0
    %v2041 = vadd.f32 %v1904, %v2040
    %2042 = vmatmul.f32.gmra.mxu0 %v1579
    %v2043 = vpop.f32.mrf.mxu0
    %v2044 = vadd.f32 %v1907, %v2043
    %2045 = vmatmul.f32.gmra.mxu0 %v1581
    %v2046 = vpop.f32.mrf.mxu0
    %v2047 = vadd.f32 %v1910, %v2046
    %2048 = vmatmul.f32.gmra.mxu0 %v1583
    %v2049 = vpop.f32.mrf.mxu0
    %v2050 = vadd.f32 %v1913, %v2049
    %2051 = vmatmul.f32.gmra.mxu0 %v1585
    %v2052 = vpop.f32.mrf.mxu0
    %v2053 = vadd.f32 %v1916, %v2052
    %2054 = vmatmul.f32.gmra.mxu0 %v1587
    %v2055 = vpop.f32.mrf.mxu0
    %v2056 = vadd.f32 %v1919, %v2055
    %2057 = vdwg.mxu0
    %2058 = vmatpush.msra.mxu0 %v1621
    %2059 = vmatpush.msra.mxu0 %v1619
    %2060 = vmatpush.msra.mxu0 %v1617
    %2061 = vmatpush.msra.mxu0 %v1615
    %2062 = vmatpush.msra.mxu0 %v1613
    %2063 = vmatpush.msra.mxu0 %v1611
    %2064 = vmatpush.msra.mxu0 %v1609
    %2065 = vmatpush.msra.mxu0 %v1607
    %2066 = vmatpush.msra.mxu0 %v1605
    %2067 = vmatpush.msra.mxu0 %v1603
    %2068 = vmatpush.msra.mxu0 %v1601
    %2069 = vmatpush.msra.mxu0 %v1599
    %2070 = vmatpush.msra.mxu0 %v1597
    %2071 = vmatpush.msra.mxu0 %v1595
    %2072 = vmatpush.msra.mxu0 %v1593
    %2073 = vmatpush.msra.mxu0 %v1591
    %2074 = vmatmul.f32.gmra.mxu0 0.0
    %v2075 = vpop.f32.mrf.mxu0
    %v2076 = vadd.f32 0.0, %v2075
    %2077 = vmatmul.f32.gmra.mxu0 %v1510
    %v2078 = vpop.f32.mrf.mxu0
    %v2079 = vadd.f32 0.0, %v2078
    %2080 = vmatmul.f32.gmra.mxu0 %v1512
    %v2081 = vpop.f32.mrf.mxu0
    %v2082 = vadd.f32 0.0, %v2081
    %2083 = vmatmul.f32.gmra.mxu0 %v1514
    %v2084 = vpop.f32.mrf.mxu0
    %v2085 = vadd.f32 0.0, %v2084
    %2086 = vmatmul.f32.gmra.mxu0 %v1516
    %v2087 = vpop.f32.mrf.mxu0
    %v2088 = vadd.f32 0.0, %v2087
    %2089 = vmatmul.f32.gmra.mxu0 %v1518
    %v2090 = vpop.f32.mrf.mxu0
    %v2091 = vadd.f32 0.0, %v2090
    %2092 = vmatmul.f32.gmra.mxu0 %v1520
    %v2093 = vpop.f32.mrf.mxu0
    %v2094 = vadd.f32 0.0, %v2093
    %2095 = vmatmul.f32.gmra.mxu0 %v1522
    %v2096 = vpop.f32.mrf.mxu0
    %v2097 = vadd.f32 0.0, %v2096
    %2098 = vmatmul.f32.gmra.mxu0 %v1524
    %v2099 = vpop.f32.mrf.mxu0
    %v2100 = vadd.f32 0.0, %v2099
    %2101 = vmatmul.f32.gmra.mxu0 %v1526
    %v2102 = vpop.f32.mrf.mxu0
    %v2103 = vadd.f32 0.0, %v2102
    %2104 = vmatmul.f32.gmra.mxu0 %v1528
    %v2105 = vpop.f32.mrf.mxu0
    %v2106 = vadd.f32 0.0, %v2105
    %2107 = vmatmul.f32.gmra.mxu0 %v1530
    %v2108 = vpop.f32.mrf.mxu0
    %v2109 = vadd.f32 0.0, %v2108
    %2110 = vmatmul.f32.gmra.mxu0 %v1532
    %v2111 = vpop.f32.mrf.mxu0
    %v2112 = vadd.f32 0.0, %v2111
    %2113 = vmatmul.f32.gmra.mxu0 %v1534
    %v2114 = vpop.f32.mrf.mxu0
    %v2115 = vadd.f32 0.0, %v2114
    %2116 = vmatmul.f32.gmra.mxu0 %v1536
    %v2117 = vpop.f32.mrf.mxu0
    %v2118 = vadd.f32 0.0, %v2117
    %2119 = vmatmul.f32.gmra.mxu0 %v1538
    %v2120 = vpop.f32.mrf.mxu0
    %v2121 = vadd.f32 0.0, %v2120
    %2122 = vmatmul.f32.gmra.mxu0 %v1540
    %v2123 = vpop.f32.mrf.mxu0
    %v2124 = vadd.f32 0.0, %v2123
    %2125 = vmatmul.f32.gmra.mxu0 %v1542
    %v2126 = vpop.f32.mrf.mxu0
    %v2127 = vadd.f32 0.0, %v2126
    %2128 = vmatmul.f32.gmra.mxu0 %v1544
    %v2129 = vpop.f32.mrf.mxu0
    %v2130 = vadd.f32 0.0, %v2129
    %2131 = vmatmul.f32.gmra.mxu0 %v1546
    %v2132 = vpop.f32.mrf.mxu0
    %v2133 = vadd.f32 0.0, %v2132
    %2134 = vmatmul.f32.gmra.mxu0 %v1548
    %v2135 = vpop.f32.mrf.mxu0
    %v2136 = vadd.f32 0.0, %v2135
    %2137 = vmatmul.f32.gmra.mxu0 %v1550
    %v2138 = vpop.f32.mrf.mxu0
    %v2139 = vadd.f32 0.0, %v2138
    %2140 = vmatmul.f32.gmra.mxu0 %v1552
    %v2141 = vpop.f32.mrf.mxu0
    %v2142 = vadd.f32 0.0, %v2141
    %2143 = vmatmul.f32.gmra.mxu0 %v1554
    %v2144 = vpop.f32.mrf.mxu0
    %v2145 = vadd.f32 0.0, %v2144
    %2146 = vmatmul.f32.gmra.mxu0 %v1556
    %v2147 = vpop.f32.mrf.mxu0
    %v2148 = vadd.f32 0.0, %v2147
    %2149 = vmatmul.f32.gmra.mxu0 %v1558
    %v2150 = vpop.f32.mrf.mxu0
    %v2151 = vadd.f32 0.0, %v2150
    %2152 = vmatmul.f32.gmra.mxu0 %v1560
    %v2153 = vpop.f32.mrf.mxu0
    %v2154 = vadd.f32 0.0, %v2153
    %2155 = vmatmul.f32.gmra.mxu0 %v1562
    %v2156 = vpop.f32.mrf.mxu0
    %v2157 = vadd.f32 0.0, %v2156
    %2158 = vmatmul.f32.gmra.mxu0 %v1564
    %v2159 = vpop.f32.mrf.mxu0
    %v2160 = vadd.f32 0.0, %v2159
    %2161 = vmatmul.f32.gmra.mxu0 %v1566
    %v2162 = vpop.f32.mrf.mxu0
    %v2163 = vadd.f32 0.0, %v2162
    %2164 = vmatmul.f32.gmra.mxu0 %v1568
    %v2165 = vpop.f32.mrf.mxu0
    %v2166 = vadd.f32 0.0, %v2165
    %2167 = vmatmul.f32.gmra.mxu0 %v1570
    %v2168 = vpop.f32.mrf.mxu0
    %v2169 = vadd.f32 0.0, %v2168
    %2170 = vmatmul.f32.gmra.mxu0 %v1572
    %v2171 = vpop.f32.mrf.mxu0
    %v2172 = vadd.f32 0.0, %v2171
    %2173 = vmatmul.f32.gmra.mxu0 %v1574
    %v2174 = vpop.f32.mrf.mxu0
    %v2175 = vadd.f32 0.0, %v2174
    %2176 = vmatmul.f32.gmra.mxu0 %v1576
    %v2177 = vpop.f32.mrf.mxu0
    %v2178 = vadd.f32 0.0, %v2177
    %2179 = vmatmul.f32.gmra.mxu0 %v1578
    %v2180 = vpop.f32.mrf.mxu0
    %v2181 = vadd.f32 0.0, %v2180
    %2182 = vmatmul.f32.gmra.mxu0 %v1580
    %v2183 = vpop.f32.mrf.mxu0
    %v2184 = vadd.f32 0.0, %v2183
    %2185 = vmatmul.f32.gmra.mxu0 %v1582
    %v2186 = vpop.f32.mrf.mxu0
    %v2187 = vadd.f32 0.0, %v2186
    %2188 = vmatmul.f32.gmra.mxu0 %v1584
    %v2189 = vpop.f32.mrf.mxu0
    %v2190 = vadd.f32 0.0, %v2189
    %2191 = vmatmul.f32.gmra.mxu0 %v1586
    %v2192 = vpop.f32.mrf.mxu0
    %v2193 = vadd.f32 0.0, %v2192
    %2194 = vdwg.mxu0
    %2195 = vmatpush.msra.mxu0 %v1653
    %2196 = vmatpush.msra.mxu0 %v1651
    %2197 = vmatpush.msra.mxu0 %v1649
    %2198 = vmatpush.msra.mxu0 %v1647
    %2199 = vmatpush.msra.mxu0 %v1645
    %2200 = vmatpush.msra.mxu0 %v1643
    %2201 = vmatpush.msra.mxu0 %v1641
    %2202 = vmatpush.msra.mxu0 %v1639
    %2203 = vmatpush.msra.mxu0 %v1637
    %2204 = vmatpush.msra.mxu0 %v1635
    %2205 = vmatpush.msra.mxu0 %v1633
    %2206 = vmatpush.msra.mxu0 %v1631
    %2207 = vmatpush.msra.mxu0 %v1629
    %2208 = vmatpush.msra.mxu0 %v1627
    %2209 = vmatpush.msra.mxu0 %v1625
    %2210 = vmatpush.msra.mxu0 %v1623
    %2211 = vmatmul.f32.gmra.mxu0 0.0
    %v2212 = vpop.f32.mrf.mxu0
    %v2213 = vadd.f32 %v2076, %v2212
    %2214 = vmatmul.f32.gmra.mxu0 %v1511
    %v2215 = vpop.f32.mrf.mxu0
    %v2216 = vadd.f32 %v2079, %v2215
    %2217 = vmatmul.f32.gmra.mxu0 %v1513
    %v2218 = vpop.f32.mrf.mxu0
    %v2219 = vadd.f32 %v2082, %v2218
    %2220 = vmatmul.f32.gmra.mxu0 %v1515
    %v2221 = vpop.f32.mrf.mxu0
    %v2222 = vadd.f32 %v2085, %v2221
    %2223 = vmatmul.f32.gmra.mxu0 %v1517
    %v2224 = vpop.f32.mrf.mxu0
    %v2225 = vadd.f32 %v2088, %v2224
    %2226 = vmatmul.f32.gmra.mxu0 %v1519
    %v2227 = vpop.f32.mrf.mxu0
    %v2228 = vadd.f32 %v2091, %v2227
    %2229 = vmatmul.f32.gmra.mxu0 %v1521
    %v2230 = vpop.f32.mrf.mxu0
    %v2231 = vadd.f32 %v2094, %v2230
    %2232 = vmatmul.f32.gmra.mxu0 %v1523
    %v2233 = vpop.f32.mrf.mxu0
    %v2234 = vadd.f32 %v2097, %v2233
    %2235 = vmatmul.f32.gmra.mxu0 %v1525
    %v2236 = vpop.f32.mrf.mxu0
    %v2237 = vadd.f32 %v2100, %v2236
    %2238 = vmatmul.f32.gmra.mxu0 %v1527
    %v2239 = vpop.f32.mrf.mxu0
    %v2240 = vadd.f32 %v2103, %v2239
    %2241 = vmatmul.f32.gmra.mxu0 %v1529
    %v2242 = vpop.f32.mrf.mxu0
    %v2243 = vadd.f32 %v2106, %v2242
    %2244 = vmatmul.f32.gmra.mxu0 %v1531
    %v2245 = vpop.f32.mrf.mxu0
    %v2246 = vadd.f32 %v2109, %v2245
    %2247 = vmatmul.f32.gmra.mxu0 %v1533
    %v2248 = vpop.f32.mrf.mxu0
    %v2249 = vadd.f32 %v2112, %v2248
    %2250 = vmatmul.f32.gmra.mxu0 %v1535
    %v2251 = vpop.f32.mrf.mxu0
    %v2252 = vadd.f32 %v2115, %v2251
    %2253 = vmatmul.f32.gmra.mxu0 %v1537
    %v2254 = vpop.f32.mrf.mxu0
    %v2255 = vadd.f32 %v2118, %v2254
    %2256 = vmatmul.f32.gmra.mxu0 %v1539
    %v2257 = vpop.f32.mrf.mxu0
    %v2258 = vadd.f32 %v2121, %v2257
    %2259 = vmatmul.f32.gmra.mxu0 %v1541
    %v2260 = vpop.f32.mrf.mxu0
    %v2261 = vadd.f32 %v2124, %v2260
    %2262 = vmatmul.f32.gmra.mxu0 %v1543
    %v2263 = vpop.f32.mrf.mxu0
    %v2264 = vadd.f32 %v2127, %v2263
    %2265 = vmatmul.f32.gmra.mxu0 %v1545
    %v2266 = vpop.f32.mrf.mxu0
    %v2267 = vadd.f32 %v2130, %v2266
    %2268 = vmatmul.f32.gmra.mxu0 %v1547
    %v2269 = vpop.f32.mrf.mxu0
    %v2270 = vadd.f32 %v2133, %v2269
    %2271 = vmatmul.f32.gmra.mxu0 %v1549
    %v2272 = vpop.f32.mrf.mxu0
    %v2273 = vadd.f32 %v2136, %v2272
    %2274 = vmatmul.f32.gmra.mxu0 %v1551
    %v2275 = vpop.f32.mrf.mxu0
    %v2276 = vadd.f32 %v2139, %v2275
    %2277 = vmatmul.f32.gmra.mxu0 %v1553
    %v2278 = vpop.f32.mrf.mxu0
    %v2279 = vadd.f32 %v2142, %v2278
    %2280 = vmatmul.f32.gmra.mxu0 %v1555
    %v2281 = vpop.f32.mrf.mxu0
    %v2282 = vadd.f32 %v2145, %v2281
    %2283 = vmatmul.f32.gmra.mxu0 %v1557
    %v2284 = vpop.f32.mrf.mxu0
    %v2285 = vadd.f32 %v2148, %v2284
    %2286 = vmatmul.f32.gmra.mxu0 %v1559
    %v2287 = vpop.f32.mrf.mxu0
    %v2288 = vadd.f32 %v2151, %v2287
    %2289 = vmatmul.f32.gmra.mxu0 %v1561
    %v2290 = vpop.f32.mrf.mxu0
    %v2291 = vadd.f32 %v2154, %v2290
    %2292 = vmatmul.f32.gmra.mxu0 %v1563
    %v2293 = vpop.f32.mrf.mxu0
    %v2294 = vadd.f32 %v2157, %v2293
    %2295 = vmatmul.f32.gmra.mxu0 %v1565
    %v2296 = vpop.f32.mrf.mxu0
    %v2297 = vadd.f32 %v2160, %v2296
    %2298 = vmatmul.f32.gmra.mxu0 %v1567
    %v2299 = vpop.f32.mrf.mxu0
    %v2300 = vadd.f32 %v2163, %v2299
    %2301 = vmatmul.f32.gmra.mxu0 %v1569
    %v2302 = vpop.f32.mrf.mxu0
    %v2303 = vadd.f32 %v2166, %v2302
    %2304 = vmatmul.f32.gmra.mxu0 %v1571
    %v2305 = vpop.f32.mrf.mxu0
    %v2306 = vadd.f32 %v2169, %v2305
    %2307 = vmatmul.f32.gmra.mxu0 %v1573
    %v2308 = vpop.f32.mrf.mxu0
    %v2309 = vadd.f32 %v2172, %v2308
    %2310 = vmatmul.f32.gmra.mxu0 %v1575
    %v2311 = vpop.f32.mrf.mxu0
    %v2312 = vadd.f32 %v2175, %v2311
    %2313 = vmatmul.f32.gmra.mxu0 %v1577
    %v2314 = vpop.f32.mrf.mxu0
    %v2315 = vadd.f32 %v2178, %v2314
    %2316 = vmatmul.f32.gmra.mxu0 %v1579
    %v2317 = vpop.f32.mrf.mxu0
    %v2318 = vadd.f32 %v2181, %v2317
    %2319 = vmatmul.f32.gmra.mxu0 %v1581
    %v2320 = vpop.f32.mrf.mxu0
    %v2321 = vadd.f32 %v2184, %v2320
    %2322 = vmatmul.f32.gmra.mxu0 %v1583
    %v2323 = vpop.f32.mrf.mxu0
    %v2324 = vadd.f32 %v2187, %v2323
    %2325 = vmatmul.f32.gmra.mxu0 %v1585
    %v2326 = vpop.f32.mrf.mxu0
    %v2327 = vadd.f32 %v2190, %v2326
    %2328 = vmatmul.f32.gmra.mxu0 %v1587
    %v2329 = vpop.f32.mrf.mxu0
    %v2330 = vadd.f32 %v2193, %v2329
    %2331 = vdwg.mxu0
    %2332 = vmatpush.msra.mxu0 %v1685
    %2333 = vmatpush.msra.mxu0 %v1683
    %2334 = vmatpush.msra.mxu0 %v1681
    %2335 = vmatpush.msra.mxu0 %v1679
    %2336 = vmatpush.msra.mxu0 %v1677
    %2337 = vmatpush.msra.mxu0 %v1675
    %2338 = vmatpush.msra.mxu0 %v1673
    %2339 = vmatpush.msra.mxu0 %v1671
    %2340 = vmatpush.msra.mxu0 %v1669
    %2341 = vmatpush.msra.mxu0 %v1667
    %2342 = vmatpush.msra.mxu0 %v1665
    %2343 = vmatpush.msra.mxu0 %v1663
    %2344 = vmatpush.msra.mxu0 %v1661
    %2345 = vmatpush.msra.mxu0 %v1659
    %2346 = vmatpush.msra.mxu0 %v1657
    %2347 = vmatpush.msra.mxu0 %v1655
    %2348 = vmatmul.f32.gmra.mxu0 %v1510
    %v2349 = vpop.f32.mrf.mxu0
    %v2350 = vadd.f32 %v1939, %v2349
    %2351 = vmatmul.f32.gmra.mxu0 %v1512
    %v2352 = vpop.f32.mrf.mxu0
    %v2353 = vadd.f32 %v1942, %v2352
    %2354 = vmatmul.f32.gmra.mxu0 %v1514
    %v2355 = vpop.f32.mrf.mxu0
    %v2356 = vadd.f32 %v1945, %v2355
    %2357 = vmatmul.f32.gmra.mxu0 %v1516
    %v2358 = vpop.f32.mrf.mxu0
    %v2359 = vadd.f32 %v1948, %v2358
    %2360 = vmatmul.f32.gmra.mxu0 %v1518
    %v2361 = vpop.f32.mrf.mxu0
    %v2362 = vadd.f32 %v1951, %v2361
    %2363 = vmatmul.f32.gmra.mxu0 %v1520
    %v2364 = vpop.f32.mrf.mxu0
    %v2365 = vadd.f32 %v1954, %v2364
    %2366 = vmatmul.f32.gmra.mxu0 %v1522
    %v2367 = vpop.f32.mrf.mxu0
    %v2368 = vadd.f32 %v1957, %v2367
    %2369 = vmatmul.f32.gmra.mxu0 %v1524
    %v2370 = vpop.f32.mrf.mxu0
    %v2371 = vadd.f32 %v1960, %v2370
    %2372 = vmatmul.f32.gmra.mxu0 %v1526
    %v2373 = vpop.f32.mrf.mxu0
    %v2374 = vadd.f32 %v1963, %v2373
    %2375 = vmatmul.f32.gmra.mxu0 %v1528
    %v2376 = vpop.f32.mrf.mxu0
    %v2377 = vadd.f32 %v1966, %v2376
    %2378 = vmatmul.f32.gmra.mxu0 %v1530
    %v2379 = vpop.f32.mrf.mxu0
    %v2380 = vadd.f32 %v1969, %v2379
    %2381 = vmatmul.f32.gmra.mxu0 %v1532
    %v2382 = vpop.f32.mrf.mxu0
    %v2383 = vadd.f32 %v1972, %v2382
    %2384 = vmatmul.f32.gmra.mxu0 %v1534
    %v2385 = vpop.f32.mrf.mxu0
    %v2386 = vadd.f32 %v1975, %v2385
    %2387 = vmatmul.f32.gmra.mxu0 %v1536
    %v2388 = vpop.f32.mrf.mxu0
    %v2389 = vadd.f32 %v1978, %v2388
    %2390 = vmatmul.f32.gmra.mxu0 %v1538
    %v2391 = vpop.f32.mrf.mxu0
    %v2392 = vadd.f32 %v1981, %v2391
    %2393 = vmatmul.f32.gmra.mxu0 %v1540
    %v2394 = vpop.f32.mrf.mxu0
    %v2395 = vadd.f32 %v1984, %v2394
    %2396 = vmatmul.f32.gmra.mxu0 %v1542
    %v2397 = vpop.f32.mrf.mxu0
    %v2398 = vadd.f32 %v1987, %v2397
    %2399 = vmatmul.f32.gmra.mxu0 %v1544
    %v2400 = vpop.f32.mrf.mxu0
    %v2401 = vadd.f32 %v1990, %v2400
    %2402 = vmatmul.f32.gmra.mxu0 %v1546
    %v2403 = vpop.f32.mrf.mxu0
    %v2404 = vadd.f32 %v1993, %v2403
    %2405 = vmatmul.f32.gmra.mxu0 %v1548
    %v2406 = vpop.f32.mrf.mxu0
    %v2407 = vadd.f32 %v1996, %v2406
    %2408 = vmatmul.f32.gmra.mxu0 %v1550
    %v2409 = vpop.f32.mrf.mxu0
    %v2410 = vadd.f32 %v1999, %v2409
    %2411 = vmatmul.f32.gmra.mxu0 %v1552
    %v2412 = vpop.f32.mrf.mxu0
    %v2413 = vadd.f32 %v2002, %v2412
    %2414 = vmatmul.f32.gmra.mxu0 %v1554
    %v2415 = vpop.f32.mrf.mxu0
    %v2416 = vadd.f32 %v2005, %v2415
    %2417 = vmatmul.f32.gmra.mxu0 %v1556
    %v2418 = vpop.f32.mrf.mxu0
    %v2419 = vadd.f32 %v2008, %v2418
    %2420 = vmatmul.f32.gmra.mxu0 %v1558
    %v2421 = vpop.f32.mrf.mxu0
    %v2422 = vadd.f32 %v2011, %v2421
    %2423 = vmatmul.f32.gmra.mxu0 %v1560
    %v2424 = vpop.f32.mrf.mxu0
    %v2425 = vadd.f32 %v2014, %v2424
    %2426 = vmatmul.f32.gmra.mxu0 %v1562
    %v2427 = vpop.f32.mrf.mxu0
    %v2428 = vadd.f32 %v2017, %v2427
    %2429 = vmatmul.f32.gmra.mxu0 %v1564
    %v2430 = vpop.f32.mrf.mxu0
    %v2431 = vadd.f32 %v2020, %v2430
    %2432 = vmatmul.f32.gmra.mxu0 %v1566
    %v2433 = vpop.f32.mrf.mxu0
    %v2434 = vadd.f32 %v2023, %v2433
    %2435 = vmatmul.f32.gmra.mxu0 %v1568
    %v2436 = vpop.f32.mrf.mxu0
    %v2437 = vadd.f32 %v2026, %v2436
    %2438 = vmatmul.f32.gmra.mxu0 %v1570
    %v2439 = vpop.f32.mrf.mxu0
    %v2440 = vadd.f32 %v2029, %v2439
    %2441 = vmatmul.f32.gmra.mxu0 %v1572
    %v2442 = vpop.f32.mrf.mxu0
    %v2443 = vadd.f32 %v2032, %v2442
    %2444 = vmatmul.f32.gmra.mxu0 %v1574
    %v2445 = vpop.f32.mrf.mxu0
    %v2446 = vadd.f32 %v2035, %v2445
    %2447 = vmatmul.f32.gmra.mxu0 %v1576
    %v2448 = vpop.f32.mrf.mxu0
    %v2449 = vadd.f32 %v2038, %v2448
    %2450 = vmatmul.f32.gmra.mxu0 %v1578
    %v2451 = vpop.f32.mrf.mxu0
    %v2452 = vadd.f32 %v2041, %v2451
    %2453 = vmatmul.f32.gmra.mxu0 %v1580
    %v2454 = vpop.f32.mrf.mxu0
    %v2455 = vadd.f32 %v2044, %v2454
    %2456 = vmatmul.f32.gmra.mxu0 %v1582
    %v2457 = vpop.f32.mrf.mxu0
    %v2458 = vadd.f32 %v2047, %v2457
    %2459 = vmatmul.f32.gmra.mxu0 %v1584
    %v2460 = vpop.f32.mrf.mxu0
    %v2461 = vadd.f32 %v2050, %v2460
    %2462 = vmatmul.f32.gmra.mxu0 %v1586
    %v2463 = vpop.f32.mrf.mxu0
    %v2464 = vadd.f32 %v2053, %v2463
    %2465 = vmatmul.f32.gmra.mxu0 %v1588
    %v2466 = vpop.f32.mrf.mxu0
    %v2467 = vadd.f32 %v2056, %v2466
    %2468 = vdwg.mxu0
    %2469 = vmatpush.msra.mxu0 %v1717
    %2470 = vmatpush.msra.mxu0 %v1715
    %2471 = vmatpush.msra.mxu0 %v1713
    %2472 = vmatpush.msra.mxu0 %v1711
    %2473 = vmatpush.msra.mxu0 %v1709
    %2474 = vmatpush.msra.mxu0 %v1707
    %2475 = vmatpush.msra.mxu0 %v1705
    %2476 = vmatpush.msra.mxu0 %v1703
    %2477 = vmatpush.msra.mxu0 %v1701
    %2478 = vmatpush.msra.mxu0 %v1699
    %2479 = vmatpush.msra.mxu0 %v1697
    %2480 = vmatpush.msra.mxu0 %v1695
    %2481 = vmatpush.msra.mxu0 %v1693
    %2482 = vmatpush.msra.mxu0 %v1691
    %2483 = vmatpush.msra.mxu0 %v1689
    %2484 = vmatpush.msra.mxu0 %v1687
    %2485 = vmatmul.f32.gmra.mxu0 %v1511
    %v2486 = vpop.f32.mrf.mxu0
    %v2487 = vadd.f32 %v2350, %v2486
    %2488 = vmatmul.f32.gmra.mxu0 %v1513
    %v2489 = vpop.f32.mrf.mxu0
    %v2490 = vadd.f32 %v2353, %v2489
    %2491 = vmatmul.f32.gmra.mxu0 %v1515
    %v2492 = vpop.f32.mrf.mxu0
    %v2493 = vadd.f32 %v2356, %v2492
    %2494 = vmatmul.f32.gmra.mxu0 %v1517
    %v2495 = vpop.f32.mrf.mxu0
    %v2496 = vadd.f32 %v2359, %v2495
    %2497 = vmatmul.f32.gmra.mxu0 %v1519
    %v2498 = vpop.f32.mrf.mxu0
    %v2499 = vadd.f32 %v2362, %v2498
    %2500 = vmatmul.f32.gmra.mxu0 %v1521
    %v2501 = vpop.f32.mrf.mxu0
    %v2502 = vadd.f32 %v2365, %v2501
    %2503 = vmatmul.f32.gmra.mxu0 %v1523
    %v2504 = vpop.f32.mrf.mxu0
    %v2505 = vadd.f32 %v2368, %v2504
    %2506 = vmatmul.f32.gmra.mxu0 %v1525
    %v2507 = vpop.f32.mrf.mxu0
    %v2508 = vadd.f32 %v2371, %v2507
    %2509 = vmatmul.f32.gmra.mxu0 %v1527
    %v2510 = vpop.f32.mrf.mxu0
    %v2511 = vadd.f32 %v2374, %v2510
    %2512 = vmatmul.f32.gmra.mxu0 %v1529
    %v2513 = vpop.f32.mrf.mxu0
    %v2514 = vadd.f32 %v2377, %v2513
    %2515 = vmatmul.f32.gmra.mxu0 %v1531
    %v2516 = vpop.f32.mrf.mxu0
    %v2517 = vadd.f32 %v2380, %v2516
    %2518 = vmatmul.f32.gmra.mxu0 %v1533
    %v2519 = vpop.f32.mrf.mxu0
    %v2520 = vadd.f32 %v2383, %v2519
    %2521 = vmatmul.f32.gmra.mxu0 %v1535
    %v2522 = vpop.f32.mrf.mxu0
    %v2523 = vadd.f32 %v2386, %v2522
    %2524 = vmatmul.f32.gmra.mxu0 %v1537
    %v2525 = vpop.f32.mrf.mxu0
    %v2526 = vadd.f32 %v2389, %v2525
    %2527 = vmatmul.f32.gmra.mxu0 %v1539
    %v2528 = vpop.f32.mrf.mxu0
    %v2529 = vadd.f32 %v2392, %v2528
    %2530 = vmatmul.f32.gmra.mxu0 %v1541
    %v2531 = vpop.f32.mrf.mxu0
    %v2532 = vadd.f32 %v2395, %v2531
    %2533 = vmatmul.f32.gmra.mxu0 %v1543
    %v2534 = vpop.f32.mrf.mxu0
    %v2535 = vadd.f32 %v2398, %v2534
    %2536 = vmatmul.f32.gmra.mxu0 %v1545
    %v2537 = vpop.f32.mrf.mxu0
    %v2538 = vadd.f32 %v2401, %v2537
    %2539 = vmatmul.f32.gmra.mxu0 %v1547
    %v2540 = vpop.f32.mrf.mxu0
    %v2541 = vadd.f32 %v2404, %v2540
    %2542 = vmatmul.f32.gmra.mxu0 %v1549
    %v2543 = vpop.f32.mrf.mxu0
    %v2544 = vadd.f32 %v2407, %v2543
    %2545 = vmatmul.f32.gmra.mxu0 %v1551
    %v2546 = vpop.f32.mrf.mxu0
    %v2547 = vadd.f32 %v2410, %v2546
    %2548 = vmatmul.f32.gmra.mxu0 %v1553
    %v2549 = vpop.f32.mrf.mxu0
    %v2550 = vadd.f32 %v2413, %v2549
    %2551 = vmatmul.f32.gmra.mxu0 %v1555
    %v2552 = vpop.f32.mrf.mxu0
    %v2553 = vadd.f32 %v2416, %v2552
    %2554 = vmatmul.f32.gmra.mxu0 %v1557
    %v2555 = vpop.f32.mrf.mxu0
    %v2556 = vadd.f32 %v2419, %v2555
    %2557 = vmatmul.f32.gmra.mxu0 %v1559
    %v2558 = vpop.f32.mrf.mxu0
    %v2559 = vadd.f32 %v2422, %v2558
    %2560 = vmatmul.f32.gmra.mxu0 %v1561
    %v2561 = vpop.f32.mrf.mxu0
    %v2562 = vadd.f32 %v2425, %v2561
    %2563 = vmatmul.f32.gmra.mxu0 %v1563
    %v2564 = vpop.f32.mrf.mxu0
    %v2565 = vadd.f32 %v2428, %v2564
    %2566 = vmatmul.f32.gmra.mxu0 %v1565
    %v2567 = vpop.f32.mrf.mxu0
    %v2568 = vadd.f32 %v2431, %v2567
    %2569 = vmatmul.f32.gmra.mxu0 %v1567
    %v2570 = vpop.f32.mrf.mxu0
    %v2571 = vadd.f32 %v2434, %v2570
    %2572 = vmatmul.f32.gmra.mxu0 %v1569
    %v2573 = vpop.f32.mrf.mxu0
    %v2574 = vadd.f32 %v2437, %v2573
    %2575 = vmatmul.f32.gmra.mxu0 %v1571
    %v2576 = vpop.f32.mrf.mxu0
    %v2577 = vadd.f32 %v2440, %v2576
    %2578 = vmatmul.f32.gmra.mxu0 %v1573
    %v2579 = vpop.f32.mrf.mxu0
    %v2580 = vadd.f32 %v2443, %v2579
    %2581 = vmatmul.f32.gmra.mxu0 %v1575
    %v2582 = vpop.f32.mrf.mxu0
    %v2583 = vadd.f32 %v2446, %v2582
    %2584 = vmatmul.f32.gmra.mxu0 %v1577
    %v2585 = vpop.f32.mrf.mxu0
    %v2586 = vadd.f32 %v2449, %v2585
    %2587 = vmatmul.f32.gmra.mxu0 %v1579
    %v2588 = vpop.f32.mrf.mxu0
    %v2589 = vadd.f32 %v2452, %v2588
    %2590 = vmatmul.f32.gmra.mxu0 %v1581
    %v2591 = vpop.f32.mrf.mxu0
    %v2592 = vadd.f32 %v2455, %v2591
    %2593 = vmatmul.f32.gmra.mxu0 %v1583
    %v2594 = vpop.f32.mrf.mxu0
    %v2595 = vadd.f32 %v2458, %v2594
    %2596 = vmatmul.f32.gmra.mxu0 %v1585
    %v2597 = vpop.f32.mrf.mxu0
    %v2598 = vadd.f32 %v2461, %v2597
    %2599 = vmatmul.f32.gmra.mxu0 %v1587
    %v2600 = vpop.f32.mrf.mxu0
    %v2601 = vadd.f32 %v2464, %v2600
    %2602 = vmatmul.f32.gmra.mxu0 %v1589
    %v2603 = vpop.f32.mrf.mxu0
    %v2604 = vadd.f32 %v2467, %v2603
    %2605 = vdwg.mxu0
    %2606 = vmatpush.msra.mxu0 %v1686
    %2607 = vmatpush.msra.mxu0 %v1684
    %2608 = vmatpush.msra.mxu0 %v1682
    %2609 = vmatpush.msra.mxu0 %v1680
    %2610 = vmatpush.msra.mxu0 %v1678
    %2611 = vmatpush.msra.mxu0 %v1676
    %2612 = vmatpush.msra.mxu0 %v1674
    %2613 = vmatpush.msra.mxu0 %v1672
    %2614 = vmatpush.msra.mxu0 %v1670
    %2615 = vmatpush.msra.mxu0 %v1668
    %2616 = vmatpush.msra.mxu0 %v1666
    %2617 = vmatpush.msra.mxu0 %v1664
    %2618 = vmatpush.msra.mxu0 %v1662
    %2619 = vmatpush.msra.mxu0 %v1660
    %2620 = vmatpush.msra.mxu0 %v1658
    %2621 = vmatpush.msra.mxu0 %v1656
    %2622 = vmatmul.f32.gmra.mxu0 %v1510
    %v2623 = vpop.f32.mrf.mxu0
    %v2624 = vadd.f32 %v2213, %v2623
    %2625 = vmatmul.f32.gmra.mxu0 %v1512
    %v2626 = vpop.f32.mrf.mxu0
    %v2627 = vadd.f32 %v2216, %v2626
    %2628 = vmatmul.f32.gmra.mxu0 %v1514
    %v2629 = vpop.f32.mrf.mxu0
    %v2630 = vadd.f32 %v2219, %v2629
    %2631 = vmatmul.f32.gmra.mxu0 %v1516
    %v2632 = vpop.f32.mrf.mxu0
    %v2633 = vadd.f32 %v2222, %v2632
    %2634 = vmatmul.f32.gmra.mxu0 %v1518
    %v2635 = vpop.f32.mrf.mxu0
    %v2636 = vadd.f32 %v2225, %v2635
    %2637 = vmatmul.f32.gmra.mxu0 %v1520
    %v2638 = vpop.f32.mrf.mxu0
    %v2639 = vadd.f32 %v2228, %v2638
    %2640 = vmatmul.f32.gmra.mxu0 %v1522
    %v2641 = vpop.f32.mrf.mxu0
    %v2642 = vadd.f32 %v2231, %v2641
    %2643 = vmatmul.f32.gmra.mxu0 %v1524
    %v2644 = vpop.f32.mrf.mxu0
    %v2645 = vadd.f32 %v2234, %v2644
    %2646 = vmatmul.f32.gmra.mxu0 %v1526
    %v2647 = vpop.f32.mrf.mxu0
    %v2648 = vadd.f32 %v2237, %v2647
    %2649 = vmatmul.f32.gmra.mxu0 %v1528
    %v2650 = vpop.f32.mrf.mxu0
    %v2651 = vadd.f32 %v2240, %v2650
    %2652 = vmatmul.f32.gmra.mxu0 %v1530
    %v2653 = vpop.f32.mrf.mxu0
    %v2654 = vadd.f32 %v2243, %v2653
    %2655 = vmatmul.f32.gmra.mxu0 %v1532
    %v2656 = vpop.f32.mrf.mxu0
    %v2657 = vadd.f32 %v2246, %v2656
    %2658 = vmatmul.f32.gmra.mxu0 %v1534
    %v2659 = vpop.f32.mrf.mxu0
    %v2660 = vadd.f32 %v2249, %v2659
    %2661 = vmatmul.f32.gmra.mxu0 %v1536
    %v2662 = vpop.f32.mrf.mxu0
    %v2663 = vadd.f32 %v2252, %v2662
    %2664 = vmatmul.f32.gmra.mxu0 %v1538
    %v2665 = vpop.f32.mrf.mxu0
    %v2666 = vadd.f32 %v2255, %v2665
    %2667 = vmatmul.f32.gmra.mxu0 %v1540
    %v2668 = vpop.f32.mrf.mxu0
    %v2669 = vadd.f32 %v2258, %v2668
    %2670 = vmatmul.f32.gmra.mxu0 %v1542
    %v2671 = vpop.f32.mrf.mxu0
    %v2672 = vadd.f32 %v2261, %v2671
    %2673 = vmatmul.f32.gmra.mxu0 %v1544
    %v2674 = vpop.f32.mrf.mxu0
    %v2675 = vadd.f32 %v2264, %v2674
    %2676 = vmatmul.f32.gmra.mxu0 %v1546
    %v2677 = vpop.f32.mrf.mxu0
    %v2678 = vadd.f32 %v2267, %v2677
    %2679 = vmatmul.f32.gmra.mxu0 %v1548
    %v2680 = vpop.f32.mrf.mxu0
    %v2681 = vadd.f32 %v2270, %v2680
    %2682 = vmatmul.f32.gmra.mxu0 %v1550
    %v2683 = vpop.f32.mrf.mxu0
    %v2684 = vadd.f32 %v2273, %v2683
    %2685 = vmatmul.f32.gmra.mxu0 %v1552
    %v2686 = vpop.f32.mrf.mxu0
    %v2687 = vadd.f32 %v2276, %v2686
    %2688 = vmatmul.f32.gmra.mxu0 %v1554
    %v2689 = vpop.f32.mrf.mxu0
    %v2690 = vadd.f32 %v2279, %v2689
    %2691 = vmatmul.f32.gmra.mxu0 %v1556
    %v2692 = vpop.f32.mrf.mxu0
    %v2693 = vadd.f32 %v2282, %v2692
    %2694 = vmatmul.f32.gmra.mxu0 %v1558
    %v2695 = vpop.f32.mrf.mxu0
    %v2696 = vadd.f32 %v2285, %v2695
    %2697 = vmatmul.f32.gmra.mxu0 %v1560
    %v2698 = vpop.f32.mrf.mxu0
    %v2699 = vadd.f32 %v2288, %v2698
    %2700 = vmatmul.f32.gmra.mxu0 %v1562
    %v2701 = vpop.f32.mrf.mxu0
    %v2702 = vadd.f32 %v2291, %v2701
    %2703 = vmatmul.f32.gmra.mxu0 %v1564
    %v2704 = vpop.f32.mrf.mxu0
    %v2705 = vadd.f32 %v2294, %v2704
    %2706 = vmatmul.f32.gmra.mxu0 %v1566
    %v2707 = vpop.f32.mrf.mxu0
    %v2708 = vadd.f32 %v2297, %v2707
    %2709 = vmatmul.f32.gmra.mxu0 %v1568
    %v2710 = vpop.f32.mrf.mxu0
    %v2711 = vadd.f32 %v2300, %v2710
    %2712 = vmatmul.f32.gmra.mxu0 %v1570
    %v2713 = vpop.f32.mrf.mxu0
    %v2714 = vadd.f32 %v2303, %v2713
    %2715 = vmatmul.f32.gmra.mxu0 %v1572
    %v2716 = vpop.f32.mrf.mxu0
    %v2717 = vadd.f32 %v2306, %v2716
    %2718 = vmatmul.f32.gmra.mxu0 %v1574
    %v2719 = vpop.f32.mrf.mxu0
    %v2720 = vadd.f32 %v2309, %v2719
    %2721 = vmatmul.f32.gmra.mxu0 %v1576
    %v2722 = vpop.f32.mrf.mxu0
    %v2723 = vadd.f32 %v2312, %v2722
    %2724 = vmatmul.f32.gmra.mxu0 %v1578
    %v2725 = vpop.f32.mrf.mxu0
    %v2726 = vadd.f32 %v2315, %v2725
    %2727 = vmatmul.f32.gmra.mxu0 %v1580
    %v2728 = vpop.f32.mrf.mxu0
    %v2729 = vadd.f32 %v2318, %v2728
    %2730 = vmatmul.f32.gmra.mxu0 %v1582
    %v2731 = vpop.f32.mrf.mxu0
    %v2732 = vadd.f32 %v2321, %v2731
    %2733 = vmatmul.f32.gmra.mxu0 %v1584
    %v2734 = vpop.f32.mrf.mxu0
    %v2735 = vadd.f32 %v2324, %v2734
    %2736 = vmatmul.f32.gmra.mxu0 %v1586
    %v2737 = vpop.f32.mrf.mxu0
    %v2738 = vadd.f32 %v2327, %v2737
    %2739 = vmatmul.f32.gmra.mxu0 %v1588
    %v2740 = vpop.f32.mrf.mxu0
    %v2741 = vadd.f32 %v2330, %v2740
    %2742 = vdwg.mxu0
    %2743 = vmatpush.msra.mxu0 %v1718
    %2744 = vmatpush.msra.mxu0 %v1716
    %2745 = vmatpush.msra.mxu0 %v1714
    %2746 = vmatpush.msra.mxu0 %v1712
    %2747 = vmatpush.msra.mxu0 %v1710
    %2748 = vmatpush.msra.mxu0 %v1708
    %2749 = vmatpush.msra.mxu0 %v1706
    %2750 = vmatpush.msra.mxu0 %v1704
    %2751 = vmatpush.msra.mxu0 %v1702
    %2752 = vmatpush.msra.mxu0 %v1700
    %2753 = vmatpush.msra.mxu0 %v1698
    %2754 = vmatpush.msra.mxu0 %v1696
    %2755 = vmatpush.msra.mxu0 %v1694
    %2756 = vmatpush.msra.mxu0 %v1692
    %2757 = vmatpush.msra.mxu0 %v1690
    %2758 = vmatpush.msra.mxu0 %v1688
    %2759 = vmatmul.f32.gmra.mxu0 %v1511
    %v2760 = vpop.f32.mrf.mxu0
    %v2761 = vadd.f32 %v2624, %v2760
    %2762 = vmatmul.f32.gmra.mxu0 %v1513
    %v2763 = vpop.f32.mrf.mxu0
    %v2764 = vadd.f32 %v2627, %v2763
    %2765 = vmatmul.f32.gmra.mxu0 %v1515
    %v2766 = vpop.f32.mrf.mxu0
    %v2767 = vadd.f32 %v2630, %v2766
    %2768 = vmatmul.f32.gmra.mxu0 %v1517
    %v2769 = vpop.f32.mrf.mxu0
    %v2770 = vadd.f32 %v2633, %v2769
    %2771 = vmatmul.f32.gmra.mxu0 %v1519
    %v2772 = vpop.f32.mrf.mxu0
    %v2773 = vadd.f32 %v2636, %v2772
    %2774 = vmatmul.f32.gmra.mxu0 %v1521
    %v2775 = vpop.f32.mrf.mxu0
    %v2776 = vadd.f32 %v2639, %v2775
    %2777 = vmatmul.f32.gmra.mxu0 %v1523
    %v2778 = vpop.f32.mrf.mxu0
    %v2779 = vadd.f32 %v2642, %v2778
    %2780 = vmatmul.f32.gmra.mxu0 %v1525
    %v2781 = vpop.f32.mrf.mxu0
    %v2782 = vadd.f32 %v2645, %v2781
    %2783 = vmatmul.f32.gmra.mxu0 %v1527
    %v2784 = vpop.f32.mrf.mxu0
    %v2785 = vadd.f32 %v2648, %v2784
    %2786 = vmatmul.f32.gmra.mxu0 %v1529
    %v2787 = vpop.f32.mrf.mxu0
    %v2788 = vadd.f32 %v2651, %v2787
    %2789 = vmatmul.f32.gmra.mxu0 %v1531
    %v2790 = vpop.f32.mrf.mxu0
    %v2791 = vadd.f32 %v2654, %v2790
    %2792 = vmatmul.f32.gmra.mxu0 %v1533
    %v2793 = vpop.f32.mrf.mxu0
    %v2794 = vadd.f32 %v2657, %v2793
    %2795 = vmatmul.f32.gmra.mxu0 %v1535
    %v2796 = vpop.f32.mrf.mxu0
    %v2797 = vadd.f32 %v2660, %v2796
    %2798 = vmatmul.f32.gmra.mxu0 %v1537
    %v2799 = vpop.f32.mrf.mxu0
    %v2800 = vadd.f32 %v2663, %v2799
    %2801 = vmatmul.f32.gmra.mxu0 %v1539
    %v2802 = vpop.f32.mrf.mxu0
    %v2803 = vadd.f32 %v2666, %v2802
    %2804 = vmatmul.f32.gmra.mxu0 %v1541
    %v2805 = vpop.f32.mrf.mxu0
    %v2806 = vadd.f32 %v2669, %v2805
    %2807 = vmatmul.f32.gmra.mxu0 %v1543
    %v2808 = vpop.f32.mrf.mxu0
    %v2809 = vadd.f32 %v2672, %v2808
    %2810 = vmatmul.f32.gmra.mxu0 %v1545
    %v2811 = vpop.f32.mrf.mxu0
    %v2812 = vadd.f32 %v2675, %v2811
    %2813 = vmatmul.f32.gmra.mxu0 %v1547
    %v2814 = vpop.f32.mrf.mxu0
    %v2815 = vadd.f32 %v2678, %v2814
    %2816 = vmatmul.f32.gmra.mxu0 %v1549
    %v2817 = vpop.f32.mrf.mxu0
    %v2818 = vadd.f32 %v2681, %v2817
    %2819 = vmatmul.f32.gmra.mxu0 %v1551
    %v2820 = vpop.f32.mrf.mxu0
    %v2821 = vadd.f32 %v2684, %v2820
    %2822 = vmatmul.f32.gmra.mxu0 %v1553
    %v2823 = vpop.f32.mrf.mxu0
    %v2824 = vadd.f32 %v2687, %v2823
    %2825 = vmatmul.f32.gmra.mxu0 %v1555
    %v2826 = vpop.f32.mrf.mxu0
    %v2827 = vadd.f32 %v2690, %v2826
    %2828 = vmatmul.f32.gmra.mxu0 %v1557
    %v2829 = vpop.f32.mrf.mxu0
    %v2830 = vadd.f32 %v2693, %v2829
    %2831 = vmatmul.f32.gmra.mxu0 %v1559
    %v2832 = vpop.f32.mrf.mxu0
    %v2833 = vadd.f32 %v2696, %v2832
    %2834 = vmatmul.f32.gmra.mxu0 %v1561
    %v2835 = vpop.f32.mrf.mxu0
    %v2836 = vadd.f32 %v2699, %v2835
    %2837 = vmatmul.f32.gmra.mxu0 %v1563
    %v2838 = vpop.f32.mrf.mxu0
    %v2839 = vadd.f32 %v2702, %v2838
    %2840 = vmatmul.f32.gmra.mxu0 %v1565
    %v2841 = vpop.f32.mrf.mxu0
    %v2842 = vadd.f32 %v2705, %v2841
    %2843 = vmatmul.f32.gmra.mxu0 %v1567
    %v2844 = vpop.f32.mrf.mxu0
    %v2845 = vadd.f32 %v2708, %v2844
    %2846 = vmatmul.f32.gmra.mxu0 %v1569
    %v2847 = vpop.f32.mrf.mxu0
    %v2848 = vadd.f32 %v2711, %v2847
    %2849 = vmatmul.f32.gmra.mxu0 %v1571
    %v2850 = vpop.f32.mrf.mxu0
    %v2851 = vadd.f32 %v2714, %v2850
    %2852 = vmatmul.f32.gmra.mxu0 %v1573
    %v2853 = vpop.f32.mrf.mxu0
    %v2854 = vadd.f32 %v2717, %v2853
    %2855 = vmatmul.f32.gmra.mxu0 %v1575
    %v2856 = vpop.f32.mrf.mxu0
    %v2857 = vadd.f32 %v2720, %v2856
    %2858 = vmatmul.f32.gmra.mxu0 %v1577
    %v2859 = vpop.f32.mrf.mxu0
    %v2860 = vadd.f32 %v2723, %v2859
    %2861 = vmatmul.f32.gmra.mxu0 %v1579
    %v2862 = vpop.f32.mrf.mxu0
    %v2863 = vadd.f32 %v2726, %v2862
    %2864 = vmatmul.f32.gmra.mxu0 %v1581
    %v2865 = vpop.f32.mrf.mxu0
    %v2866 = vadd.f32 %v2729, %v2865
    %2867 = vmatmul.f32.gmra.mxu0 %v1583
    %v2868 = vpop.f32.mrf.mxu0
    %v2869 = vadd.f32 %v2732, %v2868
    %2870 = vmatmul.f32.gmra.mxu0 %v1585
    %v2871 = vpop.f32.mrf.mxu0
    %v2872 = vadd.f32 %v2735, %v2871
    %2873 = vmatmul.f32.gmra.mxu0 %v1587
    %v2874 = vpop.f32.mrf.mxu0
    %v2875 = vadd.f32 %v2738, %v2874
    %2876 = vmatmul.f32.gmra.mxu0 %v1589
    %v2877 = vpop.f32.mrf.mxu0
    %v2878 = vadd.f32 %v2741, %v2877
    %2879 = vdwg.mxu0
    %2880 = vmatpush.msra.mxu0 %v1750
    %2881 = vmatpush.msra.mxu0 %v1748
    %2882 = vmatpush.msra.mxu0 %v1746
    %2883 = vmatpush.msra.mxu0 %v1744
    %2884 = vmatpush.msra.mxu0 %v1742
    %2885 = vmatpush.msra.mxu0 %v1740
    %2886 = vmatpush.msra.mxu0 %v1738
    %2887 = vmatpush.msra.mxu0 %v1736
    %2888 = vmatpush.msra.mxu0 %v1734
    %2889 = vmatpush.msra.mxu0 %v1732
    %2890 = vmatpush.msra.mxu0 %v1730
    %2891 = vmatpush.msra.mxu0 %v1728
    %2892 = vmatpush.msra.mxu0 %v1726
    %2893 = vmatpush.msra.mxu0 %v1724
    %2894 = vmatpush.msra.mxu0 %v1722
    %2895 = vmatpush.msra.mxu0 %v1720
    %2896 = vmatmul.f32.gmra.mxu0 %v1512
    %v2897 = vpop.f32.mrf.mxu0
    %v2898 = vadd.f32 0.0, %v2897
    %2899 = vmatmul.f32.gmra.mxu0 %v1514
    %v2900 = vpop.f32.mrf.mxu0
    %v2901 = vadd.f32 0.0, %v2900
    %2902 = vmatmul.f32.gmra.mxu0 %v1516
    %v2903 = vpop.f32.mrf.mxu0
    %v2904 = vadd.f32 0.0, %v2903
    %2905 = vmatmul.f32.gmra.mxu0 %v1518
    %v2906 = vpop.f32.mrf.mxu0
    %v2907 = vadd.f32 0.0, %v2906
    %2908 = vmatmul.f32.gmra.mxu0 %v1520
    %v2909 = vpop.f32.mrf.mxu0
    %v2910 = vadd.f32 0.0, %v2909
    %2911 = vmatmul.f32.gmra.mxu0 %v1522
    %v2912 = vpop.f32.mrf.mxu0
    %v2913 = vadd.f32 0.0, %v2912
    %2914 = vmatmul.f32.gmra.mxu0 %v1524
    %v2915 = vpop.f32.mrf.mxu0
    %v2916 = vadd.f32 0.0, %v2915
    %2917 = vmatmul.f32.gmra.mxu0 %v1526
    %v2918 = vpop.f32.mrf.mxu0
    %v2919 = vadd.f32 0.0, %v2918
    %2920 = vmatmul.f32.gmra.mxu0 %v1528
    %v2921 = vpop.f32.mrf.mxu0
    %v2922 = vadd.f32 0.0, %v2921
    %2923 = vmatmul.f32.gmra.mxu0 %v1530
    %v2924 = vpop.f32.mrf.mxu0
    %v2925 = vadd.f32 0.0, %v2924
    %2926 = vmatmul.f32.gmra.mxu0 %v1532
    %v2927 = vpop.f32.mrf.mxu0
    %v2928 = vadd.f32 0.0, %v2927
    %2929 = vmatmul.f32.gmra.mxu0 %v1534
    %v2930 = vpop.f32.mrf.mxu0
    %v2931 = vadd.f32 0.0, %v2930
    %2932 = vmatmul.f32.gmra.mxu0 %v1536
    %v2933 = vpop.f32.mrf.mxu0
    %v2934 = vadd.f32 0.0, %v2933
    %2935 = vmatmul.f32.gmra.mxu0 %v1538
    %v2936 = vpop.f32.mrf.mxu0
    %v2937 = vadd.f32 0.0, %v2936
    %2938 = vmatmul.f32.gmra.mxu0 %v1540
    %v2939 = vpop.f32.mrf.mxu0
    %v2940 = vadd.f32 0.0, %v2939
    %2941 = vmatmul.f32.gmra.mxu0 %v1542
    %v2942 = vpop.f32.mrf.mxu0
    %v2943 = vadd.f32 0.0, %v2942
    %2944 = vmatmul.f32.gmra.mxu0 %v1544
    %v2945 = vpop.f32.mrf.mxu0
    %v2946 = vadd.f32 0.0, %v2945
    %2947 = vmatmul.f32.gmra.mxu0 %v1546
    %v2948 = vpop.f32.mrf.mxu0
    %v2949 = vadd.f32 0.0, %v2948
    %2950 = vmatmul.f32.gmra.mxu0 %v1548
    %v2951 = vpop.f32.mrf.mxu0
    %v2952 = vadd.f32 0.0, %v2951
    %2953 = vmatmul.f32.gmra.mxu0 %v1550
    %v2954 = vpop.f32.mrf.mxu0
    %v2955 = vadd.f32 0.0, %v2954
    %2956 = vmatmul.f32.gmra.mxu0 %v1552
    %v2957 = vpop.f32.mrf.mxu0
    %v2958 = vadd.f32 0.0, %v2957
    %2959 = vmatmul.f32.gmra.mxu0 %v1554
    %v2960 = vpop.f32.mrf.mxu0
    %v2961 = vadd.f32 0.0, %v2960
    %2962 = vmatmul.f32.gmra.mxu0 %v1556
    %v2963 = vpop.f32.mrf.mxu0
    %v2964 = vadd.f32 0.0, %v2963
    %2965 = vmatmul.f32.gmra.mxu0 %v1558
    %v2966 = vpop.f32.mrf.mxu0
    %v2967 = vadd.f32 0.0, %v2966
    %2968 = vmatmul.f32.gmra.mxu0 %v1560
    %v2969 = vpop.f32.mrf.mxu0
    %v2970 = vadd.f32 0.0, %v2969
    %2971 = vmatmul.f32.gmra.mxu0 %v1562
    %v2972 = vpop.f32.mrf.mxu0
    %v2973 = vadd.f32 0.0, %v2972
    %2974 = vmatmul.f32.gmra.mxu0 %v1564
    %v2975 = vpop.f32.mrf.mxu0
    %v2976 = vadd.f32 0.0, %v2975
    %2977 = vmatmul.f32.gmra.mxu0 %v1566
    %v2978 = vpop.f32.mrf.mxu0
    %v2979 = vadd.f32 0.0, %v2978
    %2980 = vmatmul.f32.gmra.mxu0 %v1568
    %v2981 = vpop.f32.mrf.mxu0
    %v2982 = vadd.f32 0.0, %v2981
    %2983 = vmatmul.f32.gmra.mxu0 %v1570
    %v2984 = vpop.f32.mrf.mxu0
    %v2985 = vadd.f32 0.0, %v2984
    %2986 = vmatmul.f32.gmra.mxu0 %v1572
    %v2987 = vpop.f32.mrf.mxu0
    %v2988 = vadd.f32 0.0, %v2987
    %2989 = vmatmul.f32.gmra.mxu0 %v1574
    %v2990 = vpop.f32.mrf.mxu0
    %v2991 = vadd.f32 0.0, %v2990
    %2992 = vmatmul.f32.gmra.mxu0 %v1576
    %v2993 = vpop.f32.mrf.mxu0
    %v2994 = vadd.f32 0.0, %v2993
    %2995 = vmatmul.f32.gmra.mxu0 %v1578
    %v2996 = vpop.f32.mrf.mxu0
    %v2997 = vadd.f32 0.0, %v2996
    %2998 = vmatmul.f32.gmra.mxu0 %v1580
    %v2999 = vpop.f32.mrf.mxu0
    %v3000 = vadd.f32 0.0, %v2999
    %3001 = vmatmul.f32.gmra.mxu0 %v1582
    %v3002 = vpop.f32.mrf.mxu0
    %v3003 = vadd.f32 0.0, %v3002
    %3004 = vmatmul.f32.gmra.mxu0 %v1584
    %v3005 = vpop.f32.mrf.mxu0
    %v3006 = vadd.f32 0.0, %v3005
    %3007 = vmatmul.f32.gmra.mxu0 %v1586
    %v3008 = vpop.f32.mrf.mxu0
    %v3009 = vadd.f32 0.0, %v3008
    %3010 = vmatmul.f32.gmra.mxu0 %v1588
    %v3011 = vpop.f32.mrf.mxu0
    %v3012 = vadd.f32 0.0, %v3011
    %3013 = vmatmul.f32.gmra.mxu0 0.0
    %v3014 = vpop.f32.mrf.mxu0
    %v3015 = vadd.f32 0.0, %v3014
    %3016 = vdwg.mxu0
    %3017 = vmatpush.msra.mxu0 %v1782
    %3018 = vmatpush.msra.mxu0 %v1780
    %3019 = vmatpush.msra.mxu0 %v1778
    %3020 = vmatpush.msra.mxu0 %v1776
    %3021 = vmatpush.msra.mxu0 %v1774
    %3022 = vmatpush.msra.mxu0 %v1772
    %3023 = vmatpush.msra.mxu0 %v1770
    %3024 = vmatpush.msra.mxu0 %v1768
    %3025 = vmatpush.msra.mxu0 %v1766
    %3026 = vmatpush.msra.mxu0 %v1764
    %3027 = vmatpush.msra.mxu0 %v1762
    %3028 = vmatpush.msra.mxu0 %v1760
    %3029 = vmatpush.msra.mxu0 %v1758
    %3030 = vmatpush.msra.mxu0 %v1756
    %3031 = vmatpush.msra.mxu0 %v1754
    %3032 = vmatpush.msra.mxu0 %v1752
    %3033 = vmatmul.f32.gmra.mxu0 %v1513
    %v3034 = vpop.f32.mrf.mxu0
    %v3035 = vadd.f32 %v2898, %v3034
    %3036 = vmatmul.f32.gmra.mxu0 %v1515
    %v3037 = vpop.f32.mrf.mxu0
    %v3038 = vadd.f32 %v2901, %v3037
    %3039 = vmatmul.f32.gmra.mxu0 %v1517
    %v3040 = vpop.f32.mrf.mxu0
    %v3041 = vadd.f32 %v2904, %v3040
    %3042 = vmatmul.f32.gmra.mxu0 %v1519
    %v3043 = vpop.f32.mrf.mxu0
    %v3044 = vadd.f32 %v2907, %v3043
    %3045 = vmatmul.f32.gmra.mxu0 %v1521
    %v3046 = vpop.f32.mrf.mxu0
    %v3047 = vadd.f32 %v2910, %v3046
    %3048 = vmatmul.f32.gmra.mxu0 %v1523
    %v3049 = vpop.f32.mrf.mxu0
    %v3050 = vadd.f32 %v2913, %v3049
    %3051 = vmatmul.f32.gmra.mxu0 %v1525
    %v3052 = vpop.f32.mrf.mxu0
    %v3053 = vadd.f32 %v2916, %v3052
    %3054 = vmatmul.f32.gmra.mxu0 %v1527
    %v3055 = vpop.f32.mrf.mxu0
    %v3056 = vadd.f32 %v2919, %v3055
    %3057 = vmatmul.f32.gmra.mxu0 %v1529
    %v3058 = vpop.f32.mrf.mxu0
    %v3059 = vadd.f32 %v2922, %v3058
    %3060 = vmatmul.f32.gmra.mxu0 %v1531
    %v3061 = vpop.f32.mrf.mxu0
    %v3062 = vadd.f32 %v2925, %v3061
    %3063 = vmatmul.f32.gmra.mxu0 %v1533
    %v3064 = vpop.f32.mrf.mxu0
    %v3065 = vadd.f32 %v2928, %v3064
    %3066 = vmatmul.f32.gmra.mxu0 %v1535
    %v3067 = vpop.f32.mrf.mxu0
    %v3068 = vadd.f32 %v2931, %v3067
    %3069 = vmatmul.f32.gmra.mxu0 %v1537
    %v3070 = vpop.f32.mrf.mxu0
    %v3071 = vadd.f32 %v2934, %v3070
    %3072 = vmatmul.f32.gmra.mxu0 %v1539
    %v3073 = vpop.f32.mrf.mxu0
    %v3074 = vadd.f32 %v2937, %v3073
    %3075 = vmatmul.f32.gmra.mxu0 %v1541
    %v3076 = vpop.f32.mrf.mxu0
    %v3077 = vadd.f32 %v2940, %v3076
    %3078 = vmatmul.f32.gmra.mxu0 %v1543
    %v3079 = vpop.f32.mrf.mxu0
    %v3080 = vadd.f32 %v2943, %v3079
    %3081 = vmatmul.f32.gmra.mxu0 %v1545
    %v3082 = vpop.f32.mrf.mxu0
    %v3083 = vadd.f32 %v2946, %v3082
    %3084 = vmatmul.f32.gmra.mxu0 %v1547
    %v3085 = vpop.f32.mrf.mxu0
    %v3086 = vadd.f32 %v2949, %v3085
    %3087 = vmatmul.f32.gmra.mxu0 %v1549
    %v3088 = vpop.f32.mrf.mxu0
    %v3089 = vadd.f32 %v2952, %v3088
    %3090 = vmatmul.f32.gmra.mxu0 %v1551
    %v3091 = vpop.f32.mrf.mxu0
    %v3092 = vadd.f32 %v2955, %v3091
    %3093 = vmatmul.f32.gmra.mxu0 %v1553
    %v3094 = vpop.f32.mrf.mxu0
    %v3095 = vadd.f32 %v2958, %v3094
    %3096 = vmatmul.f32.gmra.mxu0 %v1555
    %v3097 = vpop.f32.mrf.mxu0
    %v3098 = vadd.f32 %v2961, %v3097
    %3099 = vmatmul.f32.gmra.mxu0 %v1557
    %v3100 = vpop.f32.mrf.mxu0
    %v3101 = vadd.f32 %v2964, %v3100
    %3102 = vmatmul.f32.gmra.mxu0 %v1559
    %v3103 = vpop.f32.mrf.mxu0
    %v3104 = vadd.f32 %v2967, %v3103
    %3105 = vmatmul.f32.gmra.mxu0 %v1561
    %v3106 = vpop.f32.mrf.mxu0
    %v3107 = vadd.f32 %v2970, %v3106
    %3108 = vmatmul.f32.gmra.mxu0 %v1563
    %v3109 = vpop.f32.mrf.mxu0
    %v3110 = vadd.f32 %v2973, %v3109
    %3111 = vmatmul.f32.gmra.mxu0 %v1565
    %v3112 = vpop.f32.mrf.mxu0
    %v3113 = vadd.f32 %v2976, %v3112
    %3114 = vmatmul.f32.gmra.mxu0 %v1567
    %v3115 = vpop.f32.mrf.mxu0
    %v3116 = vadd.f32 %v2979, %v3115
    %3117 = vmatmul.f32.gmra.mxu0 %v1569
    %v3118 = vpop.f32.mrf.mxu0
    %v3119 = vadd.f32 %v2982, %v3118
    %3120 = vmatmul.f32.gmra.mxu0 %v1571
    %v3121 = vpop.f32.mrf.mxu0
    %v3122 = vadd.f32 %v2985, %v3121
    %3123 = vmatmul.f32.gmra.mxu0 %v1573
    %v3124 = vpop.f32.mrf.mxu0
    %v3125 = vadd.f32 %v2988, %v3124
    %3126 = vmatmul.f32.gmra.mxu0 %v1575
    %v3127 = vpop.f32.mrf.mxu0
    %v3128 = vadd.f32 %v2991, %v3127
    %3129 = vmatmul.f32.gmra.mxu0 %v1577
    %v3130 = vpop.f32.mrf.mxu0
    %v3131 = vadd.f32 %v2994, %v3130
    %3132 = vmatmul.f32.gmra.mxu0 %v1579
    %v3133 = vpop.f32.mrf.mxu0
    %v3134 = vadd.f32 %v2997, %v3133
    %3135 = vmatmul.f32.gmra.mxu0 %v1581
    %v3136 = vpop.f32.mrf.mxu0
    %v3137 = vadd.f32 %v3000, %v3136
    %3138 = vmatmul.f32.gmra.mxu0 %v1583
    %v3139 = vpop.f32.mrf.mxu0
    %v3140 = vadd.f32 %v3003, %v3139
    %3141 = vmatmul.f32.gmra.mxu0 %v1585
    %v3142 = vpop.f32.mrf.mxu0
    %v3143 = vadd.f32 %v3006, %v3142
    %3144 = vmatmul.f32.gmra.mxu0 %v1587
    %v3145 = vpop.f32.mrf.mxu0
    %v3146 = vadd.f32 %v3009, %v3145
    %3147 = vmatmul.f32.gmra.mxu0 %v1589
    %v3148 = vpop.f32.mrf.mxu0
    %v3149 = vadd.f32 %v3012, %v3148
    %3150 = vmatmul.f32.gmra.mxu0 0.0
    %v3151 = vpop.f32.mrf.mxu0
    %v3152 = vadd.f32 %v3015, %v3151
    %3153 = vdwg.mxu0
    %3154 = vmatpush.msra.mxu0 %v1751
    %3155 = vmatpush.msra.mxu0 %v1749
    %3156 = vmatpush.msra.mxu0 %v1747
    %3157 = vmatpush.msra.mxu0 %v1745
    %3158 = vmatpush.msra.mxu0 %v1743
    %3159 = vmatpush.msra.mxu0 %v1741
    %3160 = vmatpush.msra.mxu0 %v1739
    %3161 = vmatpush.msra.mxu0 %v1737
    %3162 = vmatpush.msra.mxu0 %v1735
    %3163 = vmatpush.msra.mxu0 %v1733
    %3164 = vmatpush.msra.mxu0 %v1731
    %3165 = vmatpush.msra.mxu0 %v1729
    %3166 = vmatpush.msra.mxu0 %v1727
    %3167 = vmatpush.msra.mxu0 %v1725
    %3168 = vmatpush.msra.mxu0 %v1723
    %3169 = vmatpush.msra.mxu0 %v1721
    %3170 = vmatmul.f32.gmra.mxu0 %v1512
    %v3171 = vpop.f32.mrf.mxu0
    %v3172 = vadd.f32 0.0, %v3171
    %3173 = vmatmul.f32.gmra.mxu0 %v1514
    %v3174 = vpop.f32.mrf.mxu0
    %v3175 = vadd.f32 0.0, %v3174
    %3176 = vmatmul.f32.gmra.mxu0 %v1516
    %v3177 = vpop.f32.mrf.mxu0
    %v3178 = vadd.f32 0.0, %v3177
    %3179 = vmatmul.f32.gmra.mxu0 %v1518
    %v3180 = vpop.f32.mrf.mxu0
    %v3181 = vadd.f32 0.0, %v3180
    %3182 = vmatmul.f32.gmra.mxu0 %v1520
    %v3183 = vpop.f32.mrf.mxu0
    %v3184 = vadd.f32 0.0, %v3183
    %3185 = vmatmul.f32.gmra.mxu0 %v1522
    %v3186 = vpop.f32.mrf.mxu0
    %v3187 = vadd.f32 0.0, %v3186
    %3188 = vmatmul.f32.gmra.mxu0 %v1524
    %v3189 = vpop.f32.mrf.mxu0
    %v3190 = vadd.f32 0.0, %v3189
    %3191 = vmatmul.f32.gmra.mxu0 %v1526
    %v3192 = vpop.f32.mrf.mxu0
    %v3193 = vadd.f32 0.0, %v3192
    %3194 = vmatmul.f32.gmra.mxu0 %v1528
    %v3195 = vpop.f32.mrf.mxu0
    %v3196 = vadd.f32 0.0, %v3195
    %3197 = vmatmul.f32.gmra.mxu0 %v1530
    %v3198 = vpop.f32.mrf.mxu0
    %v3199 = vadd.f32 0.0, %v3198
    %3200 = vmatmul.f32.gmra.mxu0 %v1532
    %v3201 = vpop.f32.mrf.mxu0
    %v3202 = vadd.f32 0.0, %v3201
    %3203 = vmatmul.f32.gmra.mxu0 %v1534
    %v3204 = vpop.f32.mrf.mxu0
    %v3205 = vadd.f32 0.0, %v3204
    %3206 = vmatmul.f32.gmra.mxu0 %v1536
    %v3207 = vpop.f32.mrf.mxu0
    %v3208 = vadd.f32 0.0, %v3207
    %3209 = vmatmul.f32.gmra.mxu0 %v1538
    %v3210 = vpop.f32.mrf.mxu0
    %v3211 = vadd.f32 0.0, %v3210
    %3212 = vmatmul.f32.gmra.mxu0 %v1540
    %v3213 = vpop.f32.mrf.mxu0
    %v3214 = vadd.f32 0.0, %v3213
    %3215 = vmatmul.f32.gmra.mxu0 %v1542
    %v3216 = vpop.f32.mrf.mxu0
    %v3217 = vadd.f32 0.0, %v3216
    %3218 = vmatmul.f32.gmra.mxu0 %v1544
    %v3219 = vpop.f32.mrf.mxu0
    %v3220 = vadd.f32 0.0, %v3219
    %3221 = vmatmul.f32.gmra.mxu0 %v1546
    %v3222 = vpop.f32.mrf.mxu0
    %v3223 = vadd.f32 0.0, %v3222
    %3224 = vmatmul.f32.gmra.mxu0 %v1548
    %v3225 = vpop.f32.mrf.mxu0
    %v3226 = vadd.f32 0.0, %v3225
    %3227 = vmatmul.f32.gmra.mxu0 %v1550
    %v3228 = vpop.f32.mrf.mxu0
    %v3229 = vadd.f32 0.0, %v3228
    %3230 = vmatmul.f32.gmra.mxu0 %v1552
    %v3231 = vpop.f32.mrf.mxu0
    %v3232 = vadd.f32 0.0, %v3231
    %3233 = vmatmul.f32.gmra.mxu0 %v1554
    %v3234 = vpop.f32.mrf.mxu0
    %v3235 = vadd.f32 0.0, %v3234
    %3236 = vmatmul.f32.gmra.mxu0 %v1556
    %v3237 = vpop.f32.mrf.mxu0
    %v3238 = vadd.f32 0.0, %v3237
    %3239 = vmatmul.f32.gmra.mxu0 %v1558
    %v3240 = vpop.f32.mrf.mxu0
    %v3241 = vadd.f32 0.0, %v3240
    %3242 = vmatmul.f32.gmra.mxu0 %v1560
    %v3243 = vpop.f32.mrf.mxu0
    %v3244 = vadd.f32 0.0, %v3243
    %3245 = vmatmul.f32.gmra.mxu0 %v1562
    %v3246 = vpop.f32.mrf.mxu0
    %v3247 = vadd.f32 0.0, %v3246
    %3248 = vmatmul.f32.gmra.mxu0 %v1564
    %v3249 = vpop.f32.mrf.mxu0
    %v3250 = vadd.f32 0.0, %v3249
    %3251 = vmatmul.f32.gmra.mxu0 %v1566
    %v3252 = vpop.f32.mrf.mxu0
    %v3253 = vadd.f32 0.0, %v3252
    %3254 = vmatmul.f32.gmra.mxu0 %v1568
    %v3255 = vpop.f32.mrf.mxu0
    %v3256 = vadd.f32 0.0, %v3255
    %3257 = vmatmul.f32.gmra.mxu0 %v1570
    %v3258 = vpop.f32.mrf.mxu0
    %v3259 = vadd.f32 0.0, %v3258
    %3260 = vmatmul.f32.gmra.mxu0 %v1572
    %v3261 = vpop.f32.mrf.mxu0
    %v3262 = vadd.f32 0.0, %v3261
    %3263 = vmatmul.f32.gmra.mxu0 %v1574
    %v3264 = vpop.f32.mrf.mxu0
    %v3265 = vadd.f32 0.0, %v3264
    %3266 = vmatmul.f32.gmra.mxu0 %v1576
    %v3267 = vpop.f32.mrf.mxu0
    %v3268 = vadd.f32 0.0, %v3267
    %3269 = vmatmul.f32.gmra.mxu0 %v1578
    %v3270 = vpop.f32.mrf.mxu0
    %v3271 = vadd.f32 0.0, %v3270
    %3272 = vmatmul.f32.gmra.mxu0 %v1580
    %v3273 = vpop.f32.mrf.mxu0
    %v3274 = vadd.f32 0.0, %v3273
    %3275 = vmatmul.f32.gmra.mxu0 %v1582
    %v3276 = vpop.f32.mrf.mxu0
    %v3277 = vadd.f32 0.0, %v3276
    %3278 = vmatmul.f32.gmra.mxu0 %v1584
    %v3279 = vpop.f32.mrf.mxu0
    %v3280 = vadd.f32 0.0, %v3279
    %3281 = vmatmul.f32.gmra.mxu0 %v1586
    %v3282 = vpop.f32.mrf.mxu0
    %v3283 = vadd.f32 0.0, %v3282
    %3284 = vmatmul.f32.gmra.mxu0 %v1588
    %v3285 = vpop.f32.mrf.mxu0
    %v3286 = vadd.f32 0.0, %v3285
    %3287 = vmatmul.f32.gmra.mxu0 0.0
    %v3288 = vpop.f32.mrf.mxu0
    %v3289 = vadd.f32 0.0, %v3288
    %3290 = vdwg.mxu0
    %3291 = vmatpush.msra.mxu0 %v1783
    %3292 = vmatpush.msra.mxu0 %v1781
    %3293 = vmatpush.msra.mxu0 %v1779
    %3294 = vmatpush.msra.mxu0 %v1777
    %3295 = vmatpush.msra.mxu0 %v1775
    %3296 = vmatpush.msra.mxu0 %v1773
    %3297 = vmatpush.msra.mxu0 %v1771
    %3298 = vmatpush.msra.mxu0 %v1769
    %3299 = vmatpush.msra.mxu0 %v1767
    %3300 = vmatpush.msra.mxu0 %v1765
    %3301 = vmatpush.msra.mxu0 %v1763
    %3302 = vmatpush.msra.mxu0 %v1761
    %3303 = vmatpush.msra.mxu0 %v1759
    %3304 = vmatpush.msra.mxu0 %v1757
    %3305 = vmatpush.msra.mxu0 %v1755
    %3306 = vmatpush.msra.mxu0 %v1753
    %3307 = vmatmul.f32.gmra.mxu0 %v1513
    %v3308 = vpop.f32.mrf.mxu0
    %v3309 = vadd.f32 %v3172, %v3308
    %3310 = vmatmul.f32.gmra.mxu0 %v1515
    %v3311 = vpop.f32.mrf.mxu0
    %v3312 = vadd.f32 %v3175, %v3311
    %3313 = vmatmul.f32.gmra.mxu0 %v1517
    %v3314 = vpop.f32.mrf.mxu0
    %v3315 = vadd.f32 %v3178, %v3314
    %3316 = vmatmul.f32.gmra.mxu0 %v1519
    %v3317 = vpop.f32.mrf.mxu0
    %v3318 = vadd.f32 %v3181, %v3317
    %3319 = vmatmul.f32.gmra.mxu0 %v1521
    %v3320 = vpop.f32.mrf.mxu0
    %v3321 = vadd.f32 %v3184, %v3320
    %3322 = vmatmul.f32.gmra.mxu0 %v1523
    %v3323 = vpop.f32.mrf.mxu0
    %v3324 = vadd.f32 %v3187, %v3323
    %3325 = vmatmul.f32.gmra.mxu0 %v1525
    %v3326 = vpop.f32.mrf.mxu0
    %v3327 = vadd.f32 %v3190, %v3326
    %3328 = vmatmul.f32.gmra.mxu0 %v1527
    %v3329 = vpop.f32.mrf.mxu0
    %v3330 = vadd.f32 %v3193, %v3329
    %3331 = vmatmul.f32.gmra.mxu0 %v1529
    %v3332 = vpop.f32.mrf.mxu0
    %v3333 = vadd.f32 %v3196, %v3332
    %3334 = vmatmul.f32.gmra.mxu0 %v1531
    %v3335 = vpop.f32.mrf.mxu0
    %v3336 = vadd.f32 %v3199, %v3335
    %3337 = vmatmul.f32.gmra.mxu0 %v1533
    %v3338 = vpop.f32.mrf.mxu0
    %v3339 = vadd.f32 %v3202, %v3338
    %3340 = vmatmul.f32.gmra.mxu0 %v1535
    %v3341 = vpop.f32.mrf.mxu0
    %v3342 = vadd.f32 %v3205, %v3341
    %3343 = vmatmul.f32.gmra.mxu0 %v1537
    %v3344 = vpop.f32.mrf.mxu0
    %v3345 = vadd.f32 %v3208, %v3344
    %3346 = vmatmul.f32.gmra.mxu0 %v1539
    %v3347 = vpop.f32.mrf.mxu0
    %v3348 = vadd.f32 %v3211, %v3347
    %3349 = vmatmul.f32.gmra.mxu0 %v1541
    %v3350 = vpop.f32.mrf.mxu0
    %v3351 = vadd.f32 %v3214, %v3350
    %3352 = vmatmul.f32.gmra.mxu0 %v1543
    %v3353 = vpop.f32.mrf.mxu0
    %v3354 = vadd.f32 %v3217, %v3353
    %3355 = vmatmul.f32.gmra.mxu0 %v1545
    %v3356 = vpop.f32.mrf.mxu0
    %v3357 = vadd.f32 %v3220, %v3356
    %3358 = vmatmul.f32.gmra.mxu0 %v1547
    %v3359 = vpop.f32.mrf.mxu0
    %v3360 = vadd.f32 %v3223, %v3359
    %3361 = vmatmul.f32.gmra.mxu0 %v1549
    %v3362 = vpop.f32.mrf.mxu0
    %v3363 = vadd.f32 %v3226, %v3362
    %3364 = vmatmul.f32.gmra.mxu0 %v1551
    %v3365 = vpop.f32.mrf.mxu0
    %v3366 = vadd.f32 %v3229, %v3365
    %3367 = vmatmul.f32.gmra.mxu0 %v1553
    %v3368 = vpop.f32.mrf.mxu0
    %v3369 = vadd.f32 %v3232, %v3368
    %3370 = vmatmul.f32.gmra.mxu0 %v1555
    %v3371 = vpop.f32.mrf.mxu0
    %v3372 = vadd.f32 %v3235, %v3371
    %3373 = vmatmul.f32.gmra.mxu0 %v1557
    %v3374 = vpop.f32.mrf.mxu0
    %v3375 = vadd.f32 %v3238, %v3374
    %3376 = vmatmul.f32.gmra.mxu0 %v1559
    %v3377 = vpop.f32.mrf.mxu0
    %v3378 = vadd.f32 %v3241, %v3377
    %3379 = vmatmul.f32.gmra.mxu0 %v1561
    %v3380 = vpop.f32.mrf.mxu0
    %v3381 = vadd.f32 %v3244, %v3380
    %3382 = vmatmul.f32.gmra.mxu0 %v1563
    %v3383 = vpop.f32.mrf.mxu0
    %v3384 = vadd.f32 %v3247, %v3383
    %3385 = vmatmul.f32.gmra.mxu0 %v1565
    %v3386 = vpop.f32.mrf.mxu0
    %v3387 = vadd.f32 %v3250, %v3386
    %3388 = vmatmul.f32.gmra.mxu0 %v1567
    %v3389 = vpop.f32.mrf.mxu0
    %v3390 = vadd.f32 %v3253, %v3389
    %3391 = vmatmul.f32.gmra.mxu0 %v1569
    %v3392 = vpop.f32.mrf.mxu0
    %v3393 = vadd.f32 %v3256, %v3392
    %3394 = vmatmul.f32.gmra.mxu0 %v1571
    %v3395 = vpop.f32.mrf.mxu0
    %v3396 = vadd.f32 %v3259, %v3395
    %3397 = vmatmul.f32.gmra.mxu0 %v1573
    %v3398 = vpop.f32.mrf.mxu0
    %v3399 = vadd.f32 %v3262, %v3398
    %3400 = vmatmul.f32.gmra.mxu0 %v1575
    %v3401 = vpop.f32.mrf.mxu0
    %v3402 = vadd.f32 %v3265, %v3401
    %3403 = vmatmul.f32.gmra.mxu0 %v1577
    %v3404 = vpop.f32.mrf.mxu0
    %v3405 = vadd.f32 %v3268, %v3404
    %3406 = vmatmul.f32.gmra.mxu0 %v1579
    %v3407 = vpop.f32.mrf.mxu0
    %v3408 = vadd.f32 %v3271, %v3407
    %3409 = vmatmul.f32.gmra.mxu0 %v1581
    %v3410 = vpop.f32.mrf.mxu0
    %v3411 = vadd.f32 %v3274, %v3410
    %3412 = vmatmul.f32.gmra.mxu0 %v1583
    %v3413 = vpop.f32.mrf.mxu0
    %v3414 = vadd.f32 %v3277, %v3413
    %3415 = vmatmul.f32.gmra.mxu0 %v1585
    %v3416 = vpop.f32.mrf.mxu0
    %v3417 = vadd.f32 %v3280, %v3416
    %3418 = vmatmul.f32.gmra.mxu0 %v1587
    %v3419 = vpop.f32.mrf.mxu0
    %v3420 = vadd.f32 %v3283, %v3419
    %3421 = vmatmul.f32.gmra.mxu0 %v1589
    %v3422 = vpop.f32.mrf.mxu0
    %v3423 = vadd.f32 %v3286, %v3422
    %3424 = vmatmul.f32.gmra.mxu0 0.0
    %v3425 = vpop.f32.mrf.mxu0
    %v3426 = vadd.f32 %v3289, %v3425
    %3427 = vdwg.mxu0
    %v3428 = vadd.f32 %v2487, %v3035
    %v3429 = vadd.f32 %v2761, %v3309
    %v3430 = vadd.f32 %v2490, %v3038
    %v3431 = vadd.f32 %v2764, %v3312
    %v3432 = vadd.f32 %v2493, %v3041
    %v3433 = vadd.f32 %v2767, %v3315
    %v3434 = vadd.f32 %v2496, %v3044
    %v3435 = vadd.f32 %v2770, %v3318
    %v3436 = vadd.f32 %v2499, %v3047
    %v3437 = vadd.f32 %v2773, %v3321
    %v3438 = vadd.f32 %v2502, %v3050
    %v3439 = vadd.f32 %v2776, %v3324
    %v3440 = vadd.f32 %v2505, %v3053
    %v3441 = vadd.f32 %v2779, %v3327
    %v3442 = vadd.f32 %v2508, %v3056
    %v3443 = vadd.f32 %v2782, %v3330
    %v3444 = vadd.f32 %v2511, %v3059
    %v3445 = vadd.f32 %v2785, %v3333
    %v3446 = vadd.f32 %v2514, %v3062
    %v3447 = vadd.f32 %v2788, %v3336
    %v3448 = vadd.f32 %v2517, %v3065
    %v3449 = vadd.f32 %v2791, %v3339
    %v3450 = vadd.f32 %v2520, %v3068
    %v3451 = vadd.f32 %v2794, %v3342
    %v3452 = vadd.f32 %v2523, %v3071
    %v3453 = vadd.f32 %v2797, %v3345
    %v3454 = vadd.f32 %v2526, %v3074
    %v3455 = vadd.f32 %v2800, %v3348
    %v3456 = vadd.f32 %v2529, %v3077
    %v3457 = vadd.f32 %v2803, %v3351
    %v3458 = vadd.f32 %v2532, %v3080
    %v3459 = vadd.f32 %v2806, %v3354
    %v3460 = vadd.f32 %v2535, %v3083
    %v3461 = vadd.f32 %v2809, %v3357
    %v3462 = vadd.f32 %v2538, %v3086
    %v3463 = vadd.f32 %v2812, %v3360
    %v3464 = vadd.f32 %v2541, %v3089
    %v3465 = vadd.f32 %v2815, %v3363
    %v3466 = vadd.f32 %v2544, %v3092
    %v3467 = vadd.f32 %v2818, %v3366
    %v3468 = vadd.f32 %v2547, %v3095
    %v3469 = vadd.f32 %v2821, %v3369
    %v3470 = vadd.f32 %v2550, %v3098
    %v3471 = vadd.f32 %v2824, %v3372
    %v3472 = vadd.f32 %v2553, %v3101
    %v3473 = vadd.f32 %v2827, %v3375
    %v3474 = vadd.f32 %v2556, %v3104
    %v3475 = vadd.f32 %v2830, %v3378
    %v3476 = vadd.f32 %v2559, %v3107
    %v3477 = vadd.f32 %v2833, %v3381
    %v3478 = vadd.f32 %v2562, %v3110
    %v3479 = vadd.f32 %v2836, %v3384
    %v3480 = vadd.f32 %v2565, %v3113
    %v3481 = vadd.f32 %v2839, %v3387
    %v3482 = vadd.f32 %v2568, %v3116
    %v3483 = vadd.f32 %v2842, %v3390
    %v3484 = vadd.f32 %v2571, %v3119
    %v3485 = vadd.f32 %v2845, %v3393
    %v3486 = vadd.f32 %v2574, %v3122
    %v3487 = vadd.f32 %v2848, %v3396
    %v3488 = vadd.f32 %v2577, %v3125
    %v3489 = vadd.f32 %v2851, %v3399
    %v3490 = vadd.f32 %v2580, %v3128
    %v3491 = vadd.f32 %v2854, %v3402
    %v3492 = vadd.f32 %v2583, %v3131
    %v3493 = vadd.f32 %v2857, %v3405
    %v3494 = vadd.f32 %v2586, %v3134
    %v3495 = vadd.f32 %v2860, %v3408
    %v3496 = vadd.f32 %v2589, %v3137
    %v3497 = vadd.f32 %v2863, %v3411
    %v3498 = vadd.f32 %v2592, %v3140
    %v3499 = vadd.f32 %v2866, %v3414
    %v3500 = vadd.f32 %v2595, %v3143
    %v3501 = vadd.f32 %v2869, %v3417
    %v3502 = vadd.f32 %v2598, %v3146
    %v3503 = vadd.f32 %v2872, %v3420
    %v3504 = vadd.f32 %v2601, %v3149
    %v3505 = vadd.f32 %v2875, %v3423
    %v3506 = vadd.f32 %v2604, %v3152
    %v3507 = vadd.f32 %v2878, %v3426
    %v3508 = vld [vmem:[#allocation7] sm:$0x3]
    %v3510 = vperm.slane %v3508, 0
    %v3511 = vperm.slane %v3508, 1
    %v3514 = vadd.f32 %v3428, %v3510
    %v3515 = vadd.f32 %v3429, %v3511
    %v3516 = vadd.f32 %v3430, %v3510
    %v3517 = vadd.f32 %v3431, %v3511
    %v3518 = vadd.f32 %v3432, %v3510
    %v3519 = vadd.f32 %v3433, %v3511
    %v3520 = vadd.f32 %v3434, %v3510
    %v3521 = vadd.f32 %v3435, %v3511
    %v3522 = vadd.f32 %v3436, %v3510
    %v3523 = vadd.f32 %v3437, %v3511
    %v3524 = vadd.f32 %v3438, %v3510
    %v3525 = vadd.f32 %v3439, %v3511
    %v3526 = vadd.f32 %v3440, %v3510
    %v3527 = vadd.f32 %v3441, %v3511
    %v3528 = vadd.f32 %v3442, %v3510
    %v3529 = vadd.f32 %v3443, %v3511
    %v3530 = vadd.f32 %v3444, %v3510
    %v3531 = vadd.f32 %v3445, %v3511
    %v3532 = vadd.f32 %v3446, %v3510
    %v3533 = vadd.f32 %v3447, %v3511
    %v3534 = vadd.f32 %v3448, %v3510
    %v3535 = vadd.f32 %v3449, %v3511
    %v3536 = vadd.f32 %v3450, %v3510
    %v3537 = vadd.f32 %v3451, %v3511
    %v3538 = vadd.f32 %v3452, %v3510
    %v3539 = vadd.f32 %v3453, %v3511
    %v3540 = vadd.f32 %v3454, %v3510
    %v3541 = vadd.f32 %v3455, %v3511
    %v3542 = vadd.f32 %v3456, %v3510
    %v3543 = vadd.f32 %v3457, %v3511
    %v3544 = vadd.f32 %v3458, %v3510
    %v3545 = vadd.f32 %v3459, %v3511
    %v3546 = vadd.f32 %v3460, %v3510
    %v3547 = vadd.f32 %v3461, %v3511
    %v3548 = vadd.f32 %v3462, %v3510
    %v3549 = vadd.f32 %v3463, %v3511
    %v3550 = vadd.f32 %v3464, %v3510
    %v3551 = vadd.f32 %v3465, %v3511
    %v3552 = vadd.f32 %v3466, %v3510
    %v3553 = vadd.f32 %v3467, %v3511
    %v3554 = vadd.f32 %v3468, %v3510
    %v3555 = vadd.f32 %v3469, %v3511
    %v3556 = vadd.f32 %v3470, %v3510
    %v3557 = vadd.f32 %v3471, %v3511
    %v3558 = vadd.f32 %v3472, %v3510
    %v3559 = vadd.f32 %v3473, %v3511
    %v3560 = vadd.f32 %v3474, %v3510
    %v3561 = vadd.f32 %v3475, %v3511
    %v3562 = vadd.f32 %v3476, %v3510
    %v3563 = vadd.f32 %v3477, %v3511
    %v3564 = vadd.f32 %v3478, %v3510
    %v3565 = vadd.f32 %v3479, %v3511
    %v3566 = vadd.f32 %v3480, %v3510
    %v3567 = vadd.f32 %v3481, %v3511
    %v3568 = vadd.f32 %v3482, %v3510
    %v3569 = vadd.f32 %v3483, %v3511
    %v3570 = vadd.f32 %v3484, %v3510
    %v3571 = vadd.f32 %v3485, %v3511
    %v3572 = vadd.f32 %v3486, %v3510
    %v3573 = vadd.f32 %v3487, %v3511
    %v3574 = vadd.f32 %v3488, %v3510
    %v3575 = vadd.f32 %v3489, %v3511
    %v3576 = vadd.f32 %v3490, %v3510
    %v3577 = vadd.f32 %v3491, %v3511
    %v3578 = vadd.f32 %v3492, %v3510
    %v3579 = vadd.f32 %v3493, %v3511
    %v3580 = vadd.f32 %v3494, %v3510
    %v3581 = vadd.f32 %v3495, %v3511
    %v3582 = vadd.f32 %v3496, %v3510
    %v3583 = vadd.f32 %v3497, %v3511
    %v3584 = vadd.f32 %v3498, %v3510
    %v3585 = vadd.f32 %v3499, %v3511
    %v3586 = vadd.f32 %v3500, %v3510
    %v3587 = vadd.f32 %v3501, %v3511
    %v3588 = vadd.f32 %v3502, %v3510
    %v3589 = vadd.f32 %v3503, %v3511
    %v3590 = vadd.f32 %v3504, %v3510
    %v3591 = vadd.f32 %v3505, %v3511
    %v3592 = vadd.f32 %v3506, %v3510
    %v3593 = vadd.f32 %v3507, %v3511
    %vm3594 = vcmp.gt.f32.partialorder %v3514, 0.0
    %vm3595 = vcmp.gt.f32.partialorder %v3515, 0.0
    %vm3596 = vcmp.gt.f32.partialorder %v3516, 0.0
    %vm3597 = vcmp.gt.f32.partialorder %v3517, 0.0
    %vm3598 = vcmp.gt.f32.partialorder %v3518, 0.0
    %vm3599 = vcmp.gt.f32.partialorder %v3519, 0.0
    %vm3600 = vcmp.gt.f32.partialorder %v3520, 0.0
    %vm3601 = vcmp.gt.f32.partialorder %v3521, 0.0
    %vm3602 = vcmp.gt.f32.partialorder %v3522, 0.0
    %vm3603 = vcmp.gt.f32.partialorder %v3523, 0.0
    %vm3604 = vcmp.gt.f32.partialorder %v3524, 0.0
    %vm3605 = vcmp.gt.f32.partialorder %v3525, 0.0
    %vm3606 = vcmp.gt.f32.partialorder %v3526, 0.0
    %vm3607 = vcmp.gt.f32.partialorder %v3527, 0.0
    %vm3608 = vcmp.gt.f32.partialorder %v3528, 0.0
    %vm3609 = vcmp.gt.f32.partialorder %v3529, 0.0
    %vm3610 = vcmp.gt.f32.partialorder %v3530, 0.0
    %vm3611 = vcmp.gt.f32.partialorder %v3531, 0.0
    %vm3612 = vcmp.gt.f32.partialorder %v3532, 0.0
    %vm3613 = vcmp.gt.f32.partialorder %v3533, 0.0
    %vm3614 = vcmp.gt.f32.partialorder %v3534, 0.0
    %vm3615 = vcmp.gt.f32.partialorder %v3535, 0.0
    %vm3616 = vcmp.gt.f32.partialorder %v3536, 0.0
    %vm3617 = vcmp.gt.f32.partialorder %v3537, 0.0
    %vm3618 = vcmp.gt.f32.partialorder %v3538, 0.0
    %vm3619 = vcmp.gt.f32.partialorder %v3539, 0.0
    %vm3620 = vcmp.gt.f32.partialorder %v3540, 0.0
    %vm3621 = vcmp.gt.f32.partialorder %v3541, 0.0
    %vm3622 = vcmp.gt.f32.partialorder %v3542, 0.0
    %vm3623 = vcmp.gt.f32.partialorder %v3543, 0.0
    %vm3624 = vcmp.gt.f32.partialorder %v3544, 0.0
    %vm3625 = vcmp.gt.f32.partialorder %v3545, 0.0
    %vm3626 = vcmp.gt.f32.partialorder %v3546, 0.0
    %vm3627 = vcmp.gt.f32.partialorder %v3547, 0.0
    %vm3628 = vcmp.gt.f32.partialorder %v3548, 0.0
    %vm3629 = vcmp.gt.f32.partialorder %v3549, 0.0
    %vm3630 = vcmp.gt.f32.partialorder %v3550, 0.0
    %vm3631 = vcmp.gt.f32.partialorder %v3551, 0.0
    %vm3632 = vcmp.gt.f32.partialorder %v3552, 0.0
    %vm3633 = vcmp.gt.f32.partialorder %v3553, 0.0
    %vm3634 = vcmp.gt.f32.partialorder %v3554, 0.0
    %vm3635 = vcmp.gt.f32.partialorder %v3555, 0.0
    %vm3636 = vcmp.gt.f32.partialorder %v3556, 0.0
    %vm3637 = vcmp.gt.f32.partialorder %v3557, 0.0
    %vm3638 = vcmp.gt.f32.partialorder %v3558, 0.0
    %vm3639 = vcmp.gt.f32.partialorder %v3559, 0.0
    %vm3640 = vcmp.gt.f32.partialorder %v3560, 0.0
    %vm3641 = vcmp.gt.f32.partialorder %v3561, 0.0
    %vm3642 = vcmp.gt.f32.partialorder %v3562, 0.0
    %vm3643 = vcmp.gt.f32.partialorder %v3563, 0.0
    %vm3644 = vcmp.gt.f32.partialorder %v3564, 0.0
    %vm3645 = vcmp.gt.f32.partialorder %v3565, 0.0
    %vm3646 = vcmp.gt.f32.partialorder %v3566, 0.0
    %vm3647 = vcmp.gt.f32.partialorder %v3567, 0.0
    %vm3648 = vcmp.gt.f32.partialorder %v3568, 0.0
    %vm3649 = vcmp.gt.f32.partialorder %v3569, 0.0
    %vm3650 = vcmp.gt.f32.partialorder %v3570, 0.0
    %vm3651 = vcmp.gt.f32.partialorder %v3571, 0.0
    %vm3652 = vcmp.gt.f32.partialorder %v3572, 0.0
    %vm3653 = vcmp.gt.f32.partialorder %v3573, 0.0
    %vm3654 = vcmp.gt.f32.partialorder %v3574, 0.0
    %vm3655 = vcmp.gt.f32.partialorder %v3575, 0.0
    %vm3656 = vcmp.gt.f32.partialorder %v3576, 0.0
    %vm3657 = vcmp.gt.f32.partialorder %v3577, 0.0
    %vm3658 = vcmp.gt.f32.partialorder %v3578, 0.0
    %vm3659 = vcmp.gt.f32.partialorder %v3579, 0.0
    %vm3660 = vcmp.gt.f32.partialorder %v3580, 0.0
    %vm3661 = vcmp.gt.f32.partialorder %v3581, 0.0
    %vm3662 = vcmp.gt.f32.partialorder %v3582, 0.0
    %vm3663 = vcmp.gt.f32.partialorder %v3583, 0.0
    %vm3664 = vcmp.gt.f32.partialorder %v3584, 0.0
    %vm3665 = vcmp.gt.f32.partialorder %v3585, 0.0
    %vm3666 = vcmp.gt.f32.partialorder %v3586, 0.0
    %vm3667 = vcmp.gt.f32.partialorder %v3587, 0.0
    %vm3668 = vcmp.gt.f32.partialorder %v3588, 0.0
    %vm3669 = vcmp.gt.f32.partialorder %v3589, 0.0
    %vm3670 = vcmp.gt.f32.partialorder %v3590, 0.0
    %vm3671 = vcmp.gt.f32.partialorder %v3591, 0.0
    %vm3672 = vcmp.gt.f32.partialorder %v3592, 0.0
    %vm3673 = vcmp.gt.f32.partialorder %v3593, 0.0
    %v3674 = vmul.f32 %v3514, 0.01
    %v3675 = vmul.f32 %v3515, 0.01
    %v3676 = vmul.f32 %v3516, 0.01
    %v3677 = vmul.f32 %v3517, 0.01
    %v3678 = vmul.f32 %v3518, 0.01
    %v3679 = vmul.f32 %v3519, 0.01
    %v3680 = vmul.f32 %v3520, 0.01
    %v3681 = vmul.f32 %v3521, 0.01
    %v3682 = vmul.f32 %v3522, 0.01
    %v3683 = vmul.f32 %v3523, 0.01
    %v3684 = vmul.f32 %v3524, 0.01
    %v3685 = vmul.f32 %v3525, 0.01
    %v3686 = vmul.f32 %v3526, 0.01
    %v3687 = vmul.f32 %v3527, 0.01
    %v3688 = vmul.f32 %v3528, 0.01
    %v3689 = vmul.f32 %v3529, 0.01
    %v3690 = vmul.f32 %v3530, 0.01
    %v3691 = vmul.f32 %v3531, 0.01
    %v3692 = vmul.f32 %v3532, 0.01
    %v3693 = vmul.f32 %v3533, 0.01
    %v3694 = vmul.f32 %v3534, 0.01
    %v3695 = vmul.f32 %v3535, 0.01
    %v3696 = vmul.f32 %v3536, 0.01
    %v3697 = vmul.f32 %v3537, 0.01
    %v3698 = vmul.f32 %v3538, 0.01
    %v3699 = vmul.f32 %v3539, 0.01
    %v3700 = vmul.f32 %v3540, 0.01
    %v3701 = vmul.f32 %v3541, 0.01
    %v3702 = vmul.f32 %v3542, 0.01
    %v3703 = vmul.f32 %v3543, 0.01
    %v3704 = vmul.f32 %v3544, 0.01
    %v3705 = vmul.f32 %v3545, 0.01
    %v3706 = vmul.f32 %v3546, 0.01
    %v3707 = vmul.f32 %v3547, 0.01
    %v3708 = vmul.f32 %v3548, 0.01
    %v3709 = vmul.f32 %v3549, 0.01
    %v3710 = vmul.f32 %v3550, 0.01
    %v3711 = vmul.f32 %v3551, 0.01
    %v3712 = vmul.f32 %v3552, 0.01
    %v3713 = vmul.f32 %v3553, 0.01
    %v3714 = vmul.f32 %v3554, 0.01
    %v3715 = vmul.f32 %v3555, 0.01
    %v3716 = vmul.f32 %v3556, 0.01
    %v3717 = vmul.f32 %v3557, 0.01
    %v3718 = vmul.f32 %v3558, 0.01
    %v3719 = vmul.f32 %v3559, 0.01
    %v3720 = vmul.f32 %v3560, 0.01
    %v3721 = vmul.f32 %v3561, 0.01
    %v3722 = vmul.f32 %v3562, 0.01
    %v3723 = vmul.f32 %v3563, 0.01
    %v3724 = vmul.f32 %v3564, 0.01
    %v3725 = vmul.f32 %v3565, 0.01
    %v3726 = vmul.f32 %v3566, 0.01
    %v3727 = vmul.f32 %v3567, 0.01
    %v3728 = vmul.f32 %v3568, 0.01
    %v3729 = vmul.f32 %v3569, 0.01
    %v3730 = vmul.f32 %v3570, 0.01
    %v3731 = vmul.f32 %v3571, 0.01
    %v3732 = vmul.f32 %v3572, 0.01
    %v3733 = vmul.f32 %v3573, 0.01
    %v3734 = vmul.f32 %v3574, 0.01
    %v3735 = vmul.f32 %v3575, 0.01
    %v3736 = vmul.f32 %v3576, 0.01
    %v3737 = vmul.f32 %v3577, 0.01
    %v3738 = vmul.f32 %v3578, 0.01
    %v3739 = vmul.f32 %v3579, 0.01
    %v3740 = vmul.f32 %v3580, 0.01
    %v3741 = vmul.f32 %v3581, 0.01
    %v3742 = vmul.f32 %v3582, 0.01
    %v3743 = vmul.f32 %v3583, 0.01
    %v3744 = vmul.f32 %v3584, 0.01
    %v3745 = vmul.f32 %v3585, 0.01
    %v3746 = vmul.f32 %v3586, 0.01
    %v3747 = vmul.f32 %v3587, 0.01
    %v3748 = vmul.f32 %v3588, 0.01
    %v3749 = vmul.f32 %v3589, 0.01
    %v3750 = vmul.f32 %v3590, 0.01
    %v3751 = vmul.f32 %v3591, 0.01
    %v3752 = vmul.f32 %v3592, 0.01
    %v3753 = vmul.f32 %v3593, 0.01
    %v3754 = vsel %vm3594, %v3514, %v3674
    %v3755 = vsel %vm3595, %v3515, %v3675
    %v3756 = vsel %vm3596, %v3516, %v3676
    %v3757 = vsel %vm3597, %v3517, %v3677
    %v3758 = vsel %vm3598, %v3518, %v3678
    %v3759 = vsel %vm3599, %v3519, %v3679
    %v3760 = vsel %vm3600, %v3520, %v3680
    %v3761 = vsel %vm3601, %v3521, %v3681
    %v3762 = vsel %vm3602, %v3522, %v3682
    %v3763 = vsel %vm3603, %v3523, %v3683
    %v3764 = vsel %vm3604, %v3524, %v3684
    %v3765 = vsel %vm3605, %v3525, %v3685
    %v3766 = vsel %vm3606, %v3526, %v3686
    %v3767 = vsel %vm3607, %v3527, %v3687
    %v3768 = vsel %vm3608, %v3528, %v3688
    %v3769 = vsel %vm3609, %v3529, %v3689
    %v3770 = vsel %vm3610, %v3530, %v3690
    %v3771 = vsel %vm3611, %v3531, %v3691
    %v3772 = vsel %vm3612, %v3532, %v3692
    %v3773 = vsel %vm3613, %v3533, %v3693
    %v3774 = vsel %vm3614, %v3534, %v3694
    %v3775 = vsel %vm3615, %v3535, %v3695
    %v3776 = vsel %vm3616, %v3536, %v3696
    %v3777 = vsel %vm3617, %v3537, %v3697
    %v3778 = vsel %vm3618, %v3538, %v3698
    %v3779 = vsel %vm3619, %v3539, %v3699
    %v3780 = vsel %vm3620, %v3540, %v3700
    %v3781 = vsel %vm3621, %v3541, %v3701
    %v3782 = vsel %vm3622, %v3542, %v3702
    %v3783 = vsel %vm3623, %v3543, %v3703
    %v3784 = vsel %vm3624, %v3544, %v3704
    %v3785 = vsel %vm3625, %v3545, %v3705
    %v3786 = vsel %vm3626, %v3546, %v3706
    %v3787 = vsel %vm3627, %v3547, %v3707
    %v3788 = vsel %vm3628, %v3548, %v3708
    %v3789 = vsel %vm3629, %v3549, %v3709
    %v3790 = vsel %vm3630, %v3550, %v3710
    %v3791 = vsel %vm3631, %v3551, %v3711
    %v3792 = vsel %vm3632, %v3552, %v3712
    %v3793 = vsel %vm3633, %v3553, %v3713
    %v3794 = vsel %vm3634, %v3554, %v3714
    %v3795 = vsel %vm3635, %v3555, %v3715
    %v3796 = vsel %vm3636, %v3556, %v3716
    %v3797 = vsel %vm3637, %v3557, %v3717
    %v3798 = vsel %vm3638, %v3558, %v3718
    %v3799 = vsel %vm3639, %v3559, %v3719
    %v3800 = vsel %vm3640, %v3560, %v3720
    %v3801 = vsel %vm3641, %v3561, %v3721
    %v3802 = vsel %vm3642, %v3562, %v3722
    %v3803 = vsel %vm3643, %v3563, %v3723
    %v3804 = vsel %vm3644, %v3564, %v3724
    %v3805 = vsel %vm3645, %v3565, %v3725
    %v3806 = vsel %vm3646, %v3566, %v3726
    %v3807 = vsel %vm3647, %v3567, %v3727
    %v3808 = vsel %vm3648, %v3568, %v3728
    %v3809 = vsel %vm3649, %v3569, %v3729
    %v3810 = vsel %vm3650, %v3570, %v3730
    %v3811 = vsel %vm3651, %v3571, %v3731
    %v3812 = vsel %vm3652, %v3572, %v3732
    %v3813 = vsel %vm3653, %v3573, %v3733
    %v3814 = vsel %vm3654, %v3574, %v3734
    %v3815 = vsel %vm3655, %v3575, %v3735
    %v3816 = vsel %vm3656, %v3576, %v3736
    %v3817 = vsel %vm3657, %v3577, %v3737
    %v3818 = vsel %vm3658, %v3578, %v3738
    %v3819 = vsel %vm3659, %v3579, %v3739
    %v3820 = vsel %vm3660, %v3580, %v3740
    %v3821 = vsel %vm3661, %v3581, %v3741
    %v3822 = vsel %vm3662, %v3582, %v3742
    %v3823 = vsel %vm3663, %v3583, %v3743
    %v3824 = vsel %vm3664, %v3584, %v3744
    %v3825 = vsel %vm3665, %v3585, %v3745
    %v3826 = vsel %vm3666, %v3586, %v3746
    %v3827 = vsel %vm3667, %v3587, %v3747
    %v3828 = vsel %vm3668, %v3588, %v3748
    %v3829 = vsel %vm3669, %v3589, %v3749
    %v3830 = vsel %vm3670, %v3590, %v3750
    %v3831 = vsel %vm3671, %v3591, %v3751
    %v3832 = vsel %vm3672, %v3592, %v3752
    %v3833 = vsel %vm3673, %v3593, %v3753
    %v3834 = vmax.f32 %v3754, %v3755
    %v3835 = vmax.f32 %v3756, %v3757
    %v3836 = vmax.f32 %v3758, %v3759
    %v3837 = vmax.f32 %v3760, %v3761
    %v3838 = vmax.f32 %v3762, %v3763
    %v3839 = vmax.f32 %v3764, %v3765
    %v3840 = vmax.f32 %v3766, %v3767
    %v3841 = vmax.f32 %v3768, %v3769
    %v3842 = vmax.f32 %v3770, %v3771
    %v3843 = vmax.f32 %v3772, %v3773
    %v3844 = vmax.f32 %v3774, %v3775
    %v3845 = vmax.f32 %v3776, %v3777
    %v3846 = vmax.f32 %v3778, %v3779
    %v3847 = vmax.f32 %v3780, %v3781
    %v3848 = vmax.f32 %v3782, %v3783
    %v3849 = vmax.f32 %v3784, %v3785
    %v3850 = vmax.f32 %v3786, %v3787
    %v3851 = vmax.f32 %v3788, %v3789
    %v3852 = vmax.f32 %v3790, %v3791
    %v3853 = vmax.f32 %v3792, %v3793
    %v3854 = vmax.f32 %v3794, %v3795
    %v3855 = vmax.f32 %v3796, %v3797
    %v3856 = vmax.f32 %v3798, %v3799
    %v3857 = vmax.f32 %v3800, %v3801
    %v3858 = vmax.f32 %v3802, %v3803
    %v3859 = vmax.f32 %v3804, %v3805
    %v3860 = vmax.f32 %v3806, %v3807
    %v3861 = vmax.f32 %v3808, %v3809
    %v3862 = vmax.f32 %v3810, %v3811
    %v3863 = vmax.f32 %v3812, %v3813
    %v3864 = vmax.f32 %v3814, %v3815
    %v3865 = vmax.f32 %v3816, %v3817
    %v3866 = vmax.f32 %v3818, %v3819
    %v3867 = vmax.f32 %v3820, %v3821
    %v3868 = vmax.f32 %v3822, %v3823
    %v3869 = vmax.f32 %v3824, %v3825
    %v3870 = vmax.f32 %v3826, %v3827
    %v3871 = vmax.f32 %v3828, %v3829
    %v3872 = vmax.f32 %v3830, %v3831
    %v3873 = vmax.f32 %v3832, %v3833
    %v3874 = vld [vmem:[#allocation9] sm:$0xff]
    %v3875 = vld [vmem:[#allocation9 + $0x8] sm:$0xff]
    %v3876 = vld [vmem:[#allocation9 + $0x10] sm:$0xff]
    %v3877 = vld [vmem:[#allocation9 + $0x18] sm:$0xff]
    %v3878 = vld [vmem:[#allocation9 + $0x20] sm:$0xff]
    %v3879 = vld [vmem:[#allocation9 + $0x28] sm:$0xff]
    %v3880 = vld [vmem:[#allocation9 + $0x30] sm:$0xff]
    %v3881 = vld [vmem:[#allocation9 + $0x38] sm:$0xff]
    %v3882 = vld [vmem:[#allocation9 + $0x40] sm:$0xff]
    %v3883 = vld [vmem:[#allocation9 + $0x48] sm:$0xff]
    %v3884 = vld [vmem:[#allocation9 + $0x50] sm:$0xff]
    %v3885 = vld [vmem:[#allocation9 + $0x58] sm:$0xff]
    %v3886 = vld [vmem:[#allocation9 + $0x60] sm:$0xff]
    %v3887 = vld [vmem:[#allocation9 + $0x68] sm:$0xff]
    %v3888 = vld [vmem:[#allocation9 + $0x70] sm:$0xff]
    %v3889 = vld [vmem:[#allocation9 + $0x78] sm:$0xff]
    %v3890 = vld [vmem:[#allocation9 + $0x80] sm:$0xff]
    %v3891 = vld [vmem:[#allocation9 + $0x88] sm:$0xff]
    %v3892 = vld [vmem:[#allocation9 + $0x90] sm:$0xff]
    %v3893 = vld [vmem:[#allocation9 + $0x98] sm:$0xff]
    %v3894 = vld [vmem:[#allocation9 + $0xa0] sm:$0xff]
    %v3895 = vld [vmem:[#allocation9 + $0xa8] sm:$0xff]
    %v3896 = vld [vmem:[#allocation9 + $0xb0] sm:$0xff]
    %v3897 = vld [vmem:[#allocation9 + $0xb8] sm:$0xff]
    %v3898 = vld [vmem:[#allocation9 + $0xc0] sm:$0xff]
    %v3899 = vld [vmem:[#allocation9 + $0xc8] sm:$0xff]
    %v3900 = vld [vmem:[#allocation9 + $0xd0] sm:$0xff]
    %v3901 = vld [vmem:[#allocation9 + $0xd8] sm:$0xff]
    %v3902 = vld [vmem:[#allocation9 + $0xe0] sm:$0xff]
    %v3903 = vld [vmem:[#allocation9 + $0xe8] sm:$0xff]
    %v3904 = vld [vmem:[#allocation9 + $0xf0] sm:$0xff]
    %v3905 = vld [vmem:[#allocation9 + $0xf8] sm:$0xff]
    %s3906 = scalar_lea.vmem [#allocation9], 256
    %v3907 = vld [vmem:[%s3906] sm:$0xff]
    %v3908 = vld [vmem:[%s3906 + $0x8] sm:$0xff]
    %v3909 = vld [vmem:[%s3906 + $0x10] sm:$0xff]
    %v3910 = vld [vmem:[%s3906 + $0x18] sm:$0xff]
    %v3911 = vld [vmem:[%s3906 + $0x20] sm:$0xff]
    %v3912 = vld [vmem:[%s3906 + $0x28] sm:$0xff]
    %v3913 = vld [vmem:[%s3906 + $0x30] sm:$0xff]
    %v3914 = vld [vmem:[%s3906 + $0x38] sm:$0xff]
    %v3915 = vld [vmem:[%s3906 + $0x40] sm:$0xff]
    %v3916 = vld [vmem:[%s3906 + $0x48] sm:$0xff]
    %v3917 = vld [vmem:[%s3906 + $0x50] sm:$0xff]
    %v3918 = vld [vmem:[%s3906 + $0x58] sm:$0xff]
    %v3919 = vld [vmem:[%s3906 + $0x60] sm:$0xff]
    %v3920 = vld [vmem:[%s3906 + $0x68] sm:$0xff]
    %v3921 = vld [vmem:[%s3906 + $0x70] sm:$0xff]
    %v3922 = vld [vmem:[%s3906 + $0x78] sm:$0xff]
    %v3923 = vld [vmem:[%s3906 + $0x80] sm:$0xff]
    %v3924 = vld [vmem:[%s3906 + $0x88] sm:$0xff]
    %v3925 = vld [vmem:[%s3906 + $0x90] sm:$0xff]
    %v3926 = vld [vmem:[%s3906 + $0x98] sm:$0xff]
    %v3927 = vld [vmem:[%s3906 + $0xa0] sm:$0xff]
    %v3928 = vld [vmem:[%s3906 + $0xa8] sm:$0xff]
    %v3929 = vld [vmem:[%s3906 + $0xb0] sm:$0xff]
    %v3930 = vld [vmem:[%s3906 + $0xb8] sm:$0xff]
    %v3931 = vld [vmem:[%s3906 + $0xc0] sm:$0xff]
    %v3932 = vld [vmem:[%s3906 + $0xc8] sm:$0xff]
    %v3933 = vld [vmem:[%s3906 + $0xd0] sm:$0xff]
    %v3934 = vld [vmem:[%s3906 + $0xd8] sm:$0xff]
    %v3935 = vld [vmem:[%s3906 + $0xe0] sm:$0xff]
    %v3936 = vld [vmem:[%s3906 + $0xe8] sm:$0xff]
    %v3937 = vld [vmem:[%s3906 + $0xf0] sm:$0xff]
    %v3938 = vld [vmem:[%s3906 + $0xf8] sm:$0xff]
    %s3939 = scalar_lea.vmem [#allocation9], 512
    %v3940 = vld [vmem:[%s3939] sm:$0xff]
    %v3941 = vld [vmem:[%s3939 + $0x8] sm:$0xff]
    %v3942 = vld [vmem:[%s3939 + $0x10] sm:$0xff]
    %v3943 = vld [vmem:[%s3939 + $0x18] sm:$0xff]
    %v3944 = vld [vmem:[%s3939 + $0x20] sm:$0xff]
    %v3945 = vld [vmem:[%s3939 + $0x28] sm:$0xff]
    %v3946 = vld [vmem:[%s3939 + $0x30] sm:$0xff]
    %v3947 = vld [vmem:[%s3939 + $0x38] sm:$0xff]
    %v3948 = vld [vmem:[%s3939 + $0x40] sm:$0xff]
    %v3949 = vld [vmem:[%s3939 + $0x48] sm:$0xff]
    %v3950 = vld [vmem:[%s3939 + $0x50] sm:$0xff]
    %v3951 = vld [vmem:[%s3939 + $0x58] sm:$0xff]
    %v3952 = vld [vmem:[%s3939 + $0x60] sm:$0xff]
    %v3953 = vld [vmem:[%s3939 + $0x68] sm:$0xff]
    %v3954 = vld [vmem:[%s3939 + $0x70] sm:$0xff]
    %v3955 = vld [vmem:[%s3939 + $0x78] sm:$0xff]
    %v3956 = vld [vmem:[%s3939 + $0x80] sm:$0xff]
    %v3957 = vld [vmem:[%s3939 + $0x88] sm:$0xff]
    %v3958 = vld [vmem:[%s3939 + $0x90] sm:$0xff]
    %v3959 = vld [vmem:[%s3939 + $0x98] sm:$0xff]
    %v3960 = vld [vmem:[%s3939 + $0xa0] sm:$0xff]
    %v3961 = vld [vmem:[%s3939 + $0xa8] sm:$0xff]
    %v3962 = vld [vmem:[%s3939 + $0xb0] sm:$0xff]
    %v3963 = vld [vmem:[%s3939 + $0xb8] sm:$0xff]
    %v3964 = vld [vmem:[%s3939 + $0xc0] sm:$0xff]
    %v3965 = vld [vmem:[%s3939 + $0xc8] sm:$0xff]
    %v3966 = vld [vmem:[%s3939 + $0xd0] sm:$0xff]
    %v3967 = vld [vmem:[%s3939 + $0xd8] sm:$0xff]
    %v3968 = vld [vmem:[%s3939 + $0xe0] sm:$0xff]
    %v3969 = vld [vmem:[%s3939 + $0xe8] sm:$0xff]
    %v3970 = vld [vmem:[%s3939 + $0xf0] sm:$0xff]
    %v3971 = vld [vmem:[%s3939 + $0xf8] sm:$0xff]
    %3972 = vmatpush.msra.mxu0 %v3904
    %3973 = vmatpush.msra.mxu0 %v3902
    %3974 = vmatpush.msra.mxu0 %v3900
    %3975 = vmatpush.msra.mxu0 %v3898
    %3976 = vmatpush.msra.mxu0 %v3896
    %3977 = vmatpush.msra.mxu0 %v3894
    %3978 = vmatpush.msra.mxu0 %v3892
    %3979 = vmatpush.msra.mxu0 %v3890
    %3980 = vmatpush.msra.mxu0 %v3888
    %3981 = vmatpush.msra.mxu0 %v3886
    %3982 = vmatpush.msra.mxu0 %v3884
    %3983 = vmatpush.msra.mxu0 %v3882
    %3984 = vmatpush.msra.mxu0 %v3880
    %3985 = vmatpush.msra.mxu0 %v3878
    %3986 = vmatpush.msra.mxu0 %v3876
    %3987 = vmatpush.msra.mxu0 %v3874
    %3988 = vmatmul.f32.gmra.mxu0 0.0
    %v3989 = vpop.f32.mrf.mxu0
    %v3990 = vadd.f32 0.0, %v3989
    %3991 = vmatmul.f32.gmra.mxu0 %v3834
    %v3992 = vpop.f32.mrf.mxu0
    %v3993 = vadd.f32 0.0, %v3992
    %3994 = vmatmul.f32.gmra.mxu0 %v3835
    %v3995 = vpop.f32.mrf.mxu0
    %v3996 = vadd.f32 0.0, %v3995
    %3997 = vmatmul.f32.gmra.mxu0 %v3836
    %v3998 = vpop.f32.mrf.mxu0
    %v3999 = vadd.f32 0.0, %v3998
    %4000 = vmatmul.f32.gmra.mxu0 %v3837
    %v4001 = vpop.f32.mrf.mxu0
    %v4002 = vadd.f32 0.0, %v4001
    %4003 = vmatmul.f32.gmra.mxu0 %v3838
    %v4004 = vpop.f32.mrf.mxu0
    %v4005 = vadd.f32 0.0, %v4004
    %4006 = vmatmul.f32.gmra.mxu0 %v3839
    %v4007 = vpop.f32.mrf.mxu0
    %v4008 = vadd.f32 0.0, %v4007
    %4009 = vmatmul.f32.gmra.mxu0 %v3840
    %v4010 = vpop.f32.mrf.mxu0
    %v4011 = vadd.f32 0.0, %v4010
    %4012 = vmatmul.f32.gmra.mxu0 %v3841
    %v4013 = vpop.f32.mrf.mxu0
    %v4014 = vadd.f32 0.0, %v4013
    %4015 = vmatmul.f32.gmra.mxu0 %v3842
    %v4016 = vpop.f32.mrf.mxu0
    %v4017 = vadd.f32 0.0, %v4016
    %4018 = vmatmul.f32.gmra.mxu0 %v3843
    %v4019 = vpop.f32.mrf.mxu0
    %v4020 = vadd.f32 0.0, %v4019
    %4021 = vmatmul.f32.gmra.mxu0 %v3844
    %v4022 = vpop.f32.mrf.mxu0
    %v4023 = vadd.f32 0.0, %v4022
    %4024 = vmatmul.f32.gmra.mxu0 %v3845
    %v4025 = vpop.f32.mrf.mxu0
    %v4026 = vadd.f32 0.0, %v4025
    %4027 = vmatmul.f32.gmra.mxu0 %v3846
    %v4028 = vpop.f32.mrf.mxu0
    %v4029 = vadd.f32 0.0, %v4028
    %4030 = vmatmul.f32.gmra.mxu0 %v3847
    %v4031 = vpop.f32.mrf.mxu0
    %v4032 = vadd.f32 0.0, %v4031
    %4033 = vmatmul.f32.gmra.mxu0 %v3848
    %v4034 = vpop.f32.mrf.mxu0
    %v4035 = vadd.f32 0.0, %v4034
    %4036 = vmatmul.f32.gmra.mxu0 %v3849
    %v4037 = vpop.f32.mrf.mxu0
    %v4038 = vadd.f32 0.0, %v4037
    %4039 = vmatmul.f32.gmra.mxu0 %v3850
    %v4040 = vpop.f32.mrf.mxu0
    %v4041 = vadd.f32 0.0, %v4040
    %4042 = vmatmul.f32.gmra.mxu0 %v3851
    %v4043 = vpop.f32.mrf.mxu0
    %v4044 = vadd.f32 0.0, %v4043
    %4045 = vmatmul.f32.gmra.mxu0 %v3852
    %v4046 = vpop.f32.mrf.mxu0
    %v4047 = vadd.f32 0.0, %v4046
    %4048 = vmatmul.f32.gmra.mxu0 %v3853
    %v4049 = vpop.f32.mrf.mxu0
    %v4050 = vadd.f32 0.0, %v4049
    %4051 = vmatmul.f32.gmra.mxu0 %v3854
    %v4052 = vpop.f32.mrf.mxu0
    %v4053 = vadd.f32 0.0, %v4052
    %4054 = vmatmul.f32.gmra.mxu0 %v3855
    %v4055 = vpop.f32.mrf.mxu0
    %v4056 = vadd.f32 0.0, %v4055
    %4057 = vmatmul.f32.gmra.mxu0 %v3856
    %v4058 = vpop.f32.mrf.mxu0
    %v4059 = vadd.f32 0.0, %v4058
    %4060 = vmatmul.f32.gmra.mxu0 %v3857
    %v4061 = vpop.f32.mrf.mxu0
    %v4062 = vadd.f32 0.0, %v4061
    %4063 = vmatmul.f32.gmra.mxu0 %v3858
    %v4064 = vpop.f32.mrf.mxu0
    %v4065 = vadd.f32 0.0, %v4064
    %4066 = vmatmul.f32.gmra.mxu0 %v3859
    %v4067 = vpop.f32.mrf.mxu0
    %v4068 = vadd.f32 0.0, %v4067
    %4069 = vmatmul.f32.gmra.mxu0 %v3860
    %v4070 = vpop.f32.mrf.mxu0
    %v4071 = vadd.f32 0.0, %v4070
    %4072 = vmatmul.f32.gmra.mxu0 %v3861
    %v4073 = vpop.f32.mrf.mxu0
    %v4074 = vadd.f32 0.0, %v4073
    %4075 = vmatmul.f32.gmra.mxu0 %v3862
    %v4076 = vpop.f32.mrf.mxu0
    %v4077 = vadd.f32 0.0, %v4076
    %4078 = vmatmul.f32.gmra.mxu0 %v3863
    %v4079 = vpop.f32.mrf.mxu0
    %v4080 = vadd.f32 0.0, %v4079
    %4081 = vmatmul.f32.gmra.mxu0 %v3864
    %v4082 = vpop.f32.mrf.mxu0
    %v4083 = vadd.f32 0.0, %v4082
    %4084 = vmatmul.f32.gmra.mxu0 %v3865
    %v4085 = vpop.f32.mrf.mxu0
    %v4086 = vadd.f32 0.0, %v4085
    %4087 = vmatmul.f32.gmra.mxu0 %v3866
    %v4088 = vpop.f32.mrf.mxu0
    %v4089 = vadd.f32 0.0, %v4088
    %4090 = vmatmul.f32.gmra.mxu0 %v3867
    %v4091 = vpop.f32.mrf.mxu0
    %v4092 = vadd.f32 0.0, %v4091
    %4093 = vmatmul.f32.gmra.mxu0 %v3868
    %v4094 = vpop.f32.mrf.mxu0
    %v4095 = vadd.f32 0.0, %v4094
    %4096 = vmatmul.f32.gmra.mxu0 %v3869
    %v4097 = vpop.f32.mrf.mxu0
    %v4098 = vadd.f32 0.0, %v4097
    %4099 = vmatmul.f32.gmra.mxu0 %v3870
    %v4100 = vpop.f32.mrf.mxu0
    %v4101 = vadd.f32 0.0, %v4100
    %4102 = vmatmul.f32.gmra.mxu0 %v3871
    %v4103 = vpop.f32.mrf.mxu0
    %v4104 = vadd.f32 0.0, %v4103
    %4105 = vmatmul.f32.gmra.mxu0 %v3872
    %v4106 = vpop.f32.mrf.mxu0
    %v4107 = vadd.f32 0.0, %v4106
    %4108 = vdwg.mxu0
    %4109 = vmatpush.msra.mxu0 %v3905
    %4110 = vmatpush.msra.mxu0 %v3903
    %4111 = vmatpush.msra.mxu0 %v3901
    %4112 = vmatpush.msra.mxu0 %v3899
    %4113 = vmatpush.msra.mxu0 %v3897
    %4114 = vmatpush.msra.mxu0 %v3895
    %4115 = vmatpush.msra.mxu0 %v3893
    %4116 = vmatpush.msra.mxu0 %v3891
    %4117 = vmatpush.msra.mxu0 %v3889
    %4118 = vmatpush.msra.mxu0 %v3887
    %4119 = vmatpush.msra.mxu0 %v3885
    %4120 = vmatpush.msra.mxu0 %v3883
    %4121 = vmatpush.msra.mxu0 %v3881
    %4122 = vmatpush.msra.mxu0 %v3879
    %4123 = vmatpush.msra.mxu0 %v3877
    %4124 = vmatpush.msra.mxu0 %v3875
    %4125 = vmatmul.f32.gmra.mxu0 0.0
    %v4126 = vpop.f32.mrf.mxu0
    %v4127 = vadd.f32 0.0, %v4126
    %4128 = vmatmul.f32.gmra.mxu0 %v3834
    %v4129 = vpop.f32.mrf.mxu0
    %v4130 = vadd.f32 0.0, %v4129
    %4131 = vmatmul.f32.gmra.mxu0 %v3835
    %v4132 = vpop.f32.mrf.mxu0
    %v4133 = vadd.f32 0.0, %v4132
    %4134 = vmatmul.f32.gmra.mxu0 %v3836
    %v4135 = vpop.f32.mrf.mxu0
    %v4136 = vadd.f32 0.0, %v4135
    %4137 = vmatmul.f32.gmra.mxu0 %v3837
    %v4138 = vpop.f32.mrf.mxu0
    %v4139 = vadd.f32 0.0, %v4138
    %4140 = vmatmul.f32.gmra.mxu0 %v3838
    %v4141 = vpop.f32.mrf.mxu0
    %v4142 = vadd.f32 0.0, %v4141
    %4143 = vmatmul.f32.gmra.mxu0 %v3839
    %v4144 = vpop.f32.mrf.mxu0
    %v4145 = vadd.f32 0.0, %v4144
    %4146 = vmatmul.f32.gmra.mxu0 %v3840
    %v4147 = vpop.f32.mrf.mxu0
    %v4148 = vadd.f32 0.0, %v4147
    %4149 = vmatmul.f32.gmra.mxu0 %v3841
    %v4150 = vpop.f32.mrf.mxu0
    %v4151 = vadd.f32 0.0, %v4150
    %4152 = vmatmul.f32.gmra.mxu0 %v3842
    %v4153 = vpop.f32.mrf.mxu0
    %v4154 = vadd.f32 0.0, %v4153
    %4155 = vmatmul.f32.gmra.mxu0 %v3843
    %v4156 = vpop.f32.mrf.mxu0
    %v4157 = vadd.f32 0.0, %v4156
    %4158 = vmatmul.f32.gmra.mxu0 %v3844
    %v4159 = vpop.f32.mrf.mxu0
    %v4160 = vadd.f32 0.0, %v4159
    %4161 = vmatmul.f32.gmra.mxu0 %v3845
    %v4162 = vpop.f32.mrf.mxu0
    %v4163 = vadd.f32 0.0, %v4162
    %4164 = vmatmul.f32.gmra.mxu0 %v3846
    %v4165 = vpop.f32.mrf.mxu0
    %v4166 = vadd.f32 0.0, %v4165
    %4167 = vmatmul.f32.gmra.mxu0 %v3847
    %v4168 = vpop.f32.mrf.mxu0
    %v4169 = vadd.f32 0.0, %v4168
    %4170 = vmatmul.f32.gmra.mxu0 %v3848
    %v4171 = vpop.f32.mrf.mxu0
    %v4172 = vadd.f32 0.0, %v4171
    %4173 = vmatmul.f32.gmra.mxu0 %v3849
    %v4174 = vpop.f32.mrf.mxu0
    %v4175 = vadd.f32 0.0, %v4174
    %4176 = vmatmul.f32.gmra.mxu0 %v3850
    %v4177 = vpop.f32.mrf.mxu0
    %v4178 = vadd.f32 0.0, %v4177
    %4179 = vmatmul.f32.gmra.mxu0 %v3851
    %v4180 = vpop.f32.mrf.mxu0
    %v4181 = vadd.f32 0.0, %v4180
    %4182 = vmatmul.f32.gmra.mxu0 %v3852
    %v4183 = vpop.f32.mrf.mxu0
    %v4184 = vadd.f32 0.0, %v4183
    %4185 = vmatmul.f32.gmra.mxu0 %v3853
    %v4186 = vpop.f32.mrf.mxu0
    %v4187 = vadd.f32 0.0, %v4186
    %4188 = vmatmul.f32.gmra.mxu0 %v3854
    %v4189 = vpop.f32.mrf.mxu0
    %v4190 = vadd.f32 0.0, %v4189
    %4191 = vmatmul.f32.gmra.mxu0 %v3855
    %v4192 = vpop.f32.mrf.mxu0
    %v4193 = vadd.f32 0.0, %v4192
    %4194 = vmatmul.f32.gmra.mxu0 %v3856
    %v4195 = vpop.f32.mrf.mxu0
    %v4196 = vadd.f32 0.0, %v4195
    %4197 = vmatmul.f32.gmra.mxu0 %v3857
    %v4198 = vpop.f32.mrf.mxu0
    %v4199 = vadd.f32 0.0, %v4198
    %4200 = vmatmul.f32.gmra.mxu0 %v3858
    %v4201 = vpop.f32.mrf.mxu0
    %v4202 = vadd.f32 0.0, %v4201
    %4203 = vmatmul.f32.gmra.mxu0 %v3859
    %v4204 = vpop.f32.mrf.mxu0
    %v4205 = vadd.f32 0.0, %v4204
    %4206 = vmatmul.f32.gmra.mxu0 %v3860
    %v4207 = vpop.f32.mrf.mxu0
    %v4208 = vadd.f32 0.0, %v4207
    %4209 = vmatmul.f32.gmra.mxu0 %v3861
    %v4210 = vpop.f32.mrf.mxu0
    %v4211 = vadd.f32 0.0, %v4210
    %4212 = vmatmul.f32.gmra.mxu0 %v3862
    %v4213 = vpop.f32.mrf.mxu0
    %v4214 = vadd.f32 0.0, %v4213
    %4215 = vmatmul.f32.gmra.mxu0 %v3863
    %v4216 = vpop.f32.mrf.mxu0
    %v4217 = vadd.f32 0.0, %v4216
    %4218 = vmatmul.f32.gmra.mxu0 %v3864
    %v4219 = vpop.f32.mrf.mxu0
    %v4220 = vadd.f32 0.0, %v4219
    %4221 = vmatmul.f32.gmra.mxu0 %v3865
    %v4222 = vpop.f32.mrf.mxu0
    %v4223 = vadd.f32 0.0, %v4222
    %4224 = vmatmul.f32.gmra.mxu0 %v3866
    %v4225 = vpop.f32.mrf.mxu0
    %v4226 = vadd.f32 0.0, %v4225
    %4227 = vmatmul.f32.gmra.mxu0 %v3867
    %v4228 = vpop.f32.mrf.mxu0
    %v4229 = vadd.f32 0.0, %v4228
    %4230 = vmatmul.f32.gmra.mxu0 %v3868
    %v4231 = vpop.f32.mrf.mxu0
    %v4232 = vadd.f32 0.0, %v4231
    %4233 = vmatmul.f32.gmra.mxu0 %v3869
    %v4234 = vpop.f32.mrf.mxu0
    %v4235 = vadd.f32 0.0, %v4234
    %4236 = vmatmul.f32.gmra.mxu0 %v3870
    %v4237 = vpop.f32.mrf.mxu0
    %v4238 = vadd.f32 0.0, %v4237
    %4239 = vmatmul.f32.gmra.mxu0 %v3871
    %v4240 = vpop.f32.mrf.mxu0
    %v4241 = vadd.f32 0.0, %v4240
    %4242 = vmatmul.f32.gmra.mxu0 %v3872
    %v4243 = vpop.f32.mrf.mxu0
    %v4244 = vadd.f32 0.0, %v4243
    %4245 = vdwg.mxu0
    %4246 = vmatpush.msra.mxu0 %v3937
    %4247 = vmatpush.msra.mxu0 %v3935
    %4248 = vmatpush.msra.mxu0 %v3933
    %4249 = vmatpush.msra.mxu0 %v3931
    %4250 = vmatpush.msra.mxu0 %v3929
    %4251 = vmatpush.msra.mxu0 %v3927
    %4252 = vmatpush.msra.mxu0 %v3925
    %4253 = vmatpush.msra.mxu0 %v3923
    %4254 = vmatpush.msra.mxu0 %v3921
    %4255 = vmatpush.msra.mxu0 %v3919
    %4256 = vmatpush.msra.mxu0 %v3917
    %4257 = vmatpush.msra.mxu0 %v3915
    %4258 = vmatpush.msra.mxu0 %v3913
    %4259 = vmatpush.msra.mxu0 %v3911
    %4260 = vmatpush.msra.mxu0 %v3909
    %4261 = vmatpush.msra.mxu0 %v3907
    %4262 = vmatmul.f32.gmra.mxu0 %v3834
    %v4263 = vpop.f32.mrf.mxu0
    %v4264 = vadd.f32 %v3990, %v4263
    %4265 = vmatmul.f32.gmra.mxu0 %v3835
    %v4266 = vpop.f32.mrf.mxu0
    %v4267 = vadd.f32 %v3993, %v4266
    %4268 = vmatmul.f32.gmra.mxu0 %v3836
    %v4269 = vpop.f32.mrf.mxu0
    %v4270 = vadd.f32 %v3996, %v4269
    %4271 = vmatmul.f32.gmra.mxu0 %v3837
    %v4272 = vpop.f32.mrf.mxu0
    %v4273 = vadd.f32 %v3999, %v4272
    %4274 = vmatmul.f32.gmra.mxu0 %v3838
    %v4275 = vpop.f32.mrf.mxu0
    %v4276 = vadd.f32 %v4002, %v4275
    %4277 = vmatmul.f32.gmra.mxu0 %v3839
    %v4278 = vpop.f32.mrf.mxu0
    %v4279 = vadd.f32 %v4005, %v4278
    %4280 = vmatmul.f32.gmra.mxu0 %v3840
    %v4281 = vpop.f32.mrf.mxu0
    %v4282 = vadd.f32 %v4008, %v4281
    %4283 = vmatmul.f32.gmra.mxu0 %v3841
    %v4284 = vpop.f32.mrf.mxu0
    %v4285 = vadd.f32 %v4011, %v4284
    %4286 = vmatmul.f32.gmra.mxu0 %v3842
    %v4287 = vpop.f32.mrf.mxu0
    %v4288 = vadd.f32 %v4014, %v4287
    %4289 = vmatmul.f32.gmra.mxu0 %v3843
    %v4290 = vpop.f32.mrf.mxu0
    %v4291 = vadd.f32 %v4017, %v4290
    %4292 = vmatmul.f32.gmra.mxu0 %v3844
    %v4293 = vpop.f32.mrf.mxu0
    %v4294 = vadd.f32 %v4020, %v4293
    %4295 = vmatmul.f32.gmra.mxu0 %v3845
    %v4296 = vpop.f32.mrf.mxu0
    %v4297 = vadd.f32 %v4023, %v4296
    %4298 = vmatmul.f32.gmra.mxu0 %v3846
    %v4299 = vpop.f32.mrf.mxu0
    %v4300 = vadd.f32 %v4026, %v4299
    %4301 = vmatmul.f32.gmra.mxu0 %v3847
    %v4302 = vpop.f32.mrf.mxu0
    %v4303 = vadd.f32 %v4029, %v4302
    %4304 = vmatmul.f32.gmra.mxu0 %v3848
    %v4305 = vpop.f32.mrf.mxu0
    %v4306 = vadd.f32 %v4032, %v4305
    %4307 = vmatmul.f32.gmra.mxu0 %v3849
    %v4308 = vpop.f32.mrf.mxu0
    %v4309 = vadd.f32 %v4035, %v4308
    %4310 = vmatmul.f32.gmra.mxu0 %v3850
    %v4311 = vpop.f32.mrf.mxu0
    %v4312 = vadd.f32 %v4038, %v4311
    %4313 = vmatmul.f32.gmra.mxu0 %v3851
    %v4314 = vpop.f32.mrf.mxu0
    %v4315 = vadd.f32 %v4041, %v4314
    %4316 = vmatmul.f32.gmra.mxu0 %v3852
    %v4317 = vpop.f32.mrf.mxu0
    %v4318 = vadd.f32 %v4044, %v4317
    %4319 = vmatmul.f32.gmra.mxu0 %v3853
    %v4320 = vpop.f32.mrf.mxu0
    %v4321 = vadd.f32 %v4047, %v4320
    %4322 = vmatmul.f32.gmra.mxu0 %v3854
    %v4323 = vpop.f32.mrf.mxu0
    %v4324 = vadd.f32 %v4050, %v4323
    %4325 = vmatmul.f32.gmra.mxu0 %v3855
    %v4326 = vpop.f32.mrf.mxu0
    %v4327 = vadd.f32 %v4053, %v4326
    %4328 = vmatmul.f32.gmra.mxu0 %v3856
    %v4329 = vpop.f32.mrf.mxu0
    %v4330 = vadd.f32 %v4056, %v4329
    %4331 = vmatmul.f32.gmra.mxu0 %v3857
    %v4332 = vpop.f32.mrf.mxu0
    %v4333 = vadd.f32 %v4059, %v4332
    %4334 = vmatmul.f32.gmra.mxu0 %v3858
    %v4335 = vpop.f32.mrf.mxu0
    %v4336 = vadd.f32 %v4062, %v4335
    %4337 = vmatmul.f32.gmra.mxu0 %v3859
    %v4338 = vpop.f32.mrf.mxu0
    %v4339 = vadd.f32 %v4065, %v4338
    %4340 = vmatmul.f32.gmra.mxu0 %v3860
    %v4341 = vpop.f32.mrf.mxu0
    %v4342 = vadd.f32 %v4068, %v4341
    %4343 = vmatmul.f32.gmra.mxu0 %v3861
    %v4344 = vpop.f32.mrf.mxu0
    %v4345 = vadd.f32 %v4071, %v4344
    %4346 = vmatmul.f32.gmra.mxu0 %v3862
    %v4347 = vpop.f32.mrf.mxu0
    %v4348 = vadd.f32 %v4074, %v4347
    %4349 = vmatmul.f32.gmra.mxu0 %v3863
    %v4350 = vpop.f32.mrf.mxu0
    %v4351 = vadd.f32 %v4077, %v4350
    %4352 = vmatmul.f32.gmra.mxu0 %v3864
    %v4353 = vpop.f32.mrf.mxu0
    %v4354 = vadd.f32 %v4080, %v4353
    %4355 = vmatmul.f32.gmra.mxu0 %v3865
    %v4356 = vpop.f32.mrf.mxu0
    %v4357 = vadd.f32 %v4083, %v4356
    %4358 = vmatmul.f32.gmra.mxu0 %v3866
    %v4359 = vpop.f32.mrf.mxu0
    %v4360 = vadd.f32 %v4086, %v4359
    %4361 = vmatmul.f32.gmra.mxu0 %v3867
    %v4362 = vpop.f32.mrf.mxu0
    %v4363 = vadd.f32 %v4089, %v4362
    %4364 = vmatmul.f32.gmra.mxu0 %v3868
    %v4365 = vpop.f32.mrf.mxu0
    %v4366 = vadd.f32 %v4092, %v4365
    %4367 = vmatmul.f32.gmra.mxu0 %v3869
    %v4368 = vpop.f32.mrf.mxu0
    %v4369 = vadd.f32 %v4095, %v4368
    %4370 = vmatmul.f32.gmra.mxu0 %v3870
    %v4371 = vpop.f32.mrf.mxu0
    %v4372 = vadd.f32 %v4098, %v4371
    %4373 = vmatmul.f32.gmra.mxu0 %v3871
    %v4374 = vpop.f32.mrf.mxu0
    %v4375 = vadd.f32 %v4101, %v4374
    %4376 = vmatmul.f32.gmra.mxu0 %v3872
    %v4377 = vpop.f32.mrf.mxu0
    %v4378 = vadd.f32 %v4104, %v4377
    %4379 = vmatmul.f32.gmra.mxu0 %v3873
    %v4380 = vpop.f32.mrf.mxu0
    %v4381 = vadd.f32 %v4107, %v4380
    %4382 = vdwg.mxu0
    %4383 = vmatpush.msra.mxu0 %v3938
    %4384 = vmatpush.msra.mxu0 %v3936
    %4385 = vmatpush.msra.mxu0 %v3934
    %4386 = vmatpush.msra.mxu0 %v3932
    %4387 = vmatpush.msra.mxu0 %v3930
    %4388 = vmatpush.msra.mxu0 %v3928
    %4389 = vmatpush.msra.mxu0 %v3926
    %4390 = vmatpush.msra.mxu0 %v3924
    %4391 = vmatpush.msra.mxu0 %v3922
    %4392 = vmatpush.msra.mxu0 %v3920
    %4393 = vmatpush.msra.mxu0 %v3918
    %4394 = vmatpush.msra.mxu0 %v3916
    %4395 = vmatpush.msra.mxu0 %v3914
    %4396 = vmatpush.msra.mxu0 %v3912
    %4397 = vmatpush.msra.mxu0 %v3910
    %4398 = vmatpush.msra.mxu0 %v3908
    %4399 = vmatmul.f32.gmra.mxu0 %v3834
    %v4400 = vpop.f32.mrf.mxu0
    %v4401 = vadd.f32 %v4127, %v4400
    %4402 = vmatmul.f32.gmra.mxu0 %v3835
    %v4403 = vpop.f32.mrf.mxu0
    %v4404 = vadd.f32 %v4130, %v4403
    %4405 = vmatmul.f32.gmra.mxu0 %v3836
    %v4406 = vpop.f32.mrf.mxu0
    %v4407 = vadd.f32 %v4133, %v4406
    %4408 = vmatmul.f32.gmra.mxu0 %v3837
    %v4409 = vpop.f32.mrf.mxu0
    %v4410 = vadd.f32 %v4136, %v4409
    %4411 = vmatmul.f32.gmra.mxu0 %v3838
    %v4412 = vpop.f32.mrf.mxu0
    %v4413 = vadd.f32 %v4139, %v4412
    %4414 = vmatmul.f32.gmra.mxu0 %v3839
    %v4415 = vpop.f32.mrf.mxu0
    %v4416 = vadd.f32 %v4142, %v4415
    %4417 = vmatmul.f32.gmra.mxu0 %v3840
    %v4418 = vpop.f32.mrf.mxu0
    %v4419 = vadd.f32 %v4145, %v4418
    %4420 = vmatmul.f32.gmra.mxu0 %v3841
    %v4421 = vpop.f32.mrf.mxu0
    %v4422 = vadd.f32 %v4148, %v4421
    %4423 = vmatmul.f32.gmra.mxu0 %v3842
    %v4424 = vpop.f32.mrf.mxu0
    %v4425 = vadd.f32 %v4151, %v4424
    %4426 = vmatmul.f32.gmra.mxu0 %v3843
    %v4427 = vpop.f32.mrf.mxu0
    %v4428 = vadd.f32 %v4154, %v4427
    %4429 = vmatmul.f32.gmra.mxu0 %v3844
    %v4430 = vpop.f32.mrf.mxu0
    %v4431 = vadd.f32 %v4157, %v4430
    %4432 = vmatmul.f32.gmra.mxu0 %v3845
    %v4433 = vpop.f32.mrf.mxu0
    %v4434 = vadd.f32 %v4160, %v4433
    %4435 = vmatmul.f32.gmra.mxu0 %v3846
    %v4436 = vpop.f32.mrf.mxu0
    %v4437 = vadd.f32 %v4163, %v4436
    %4438 = vmatmul.f32.gmra.mxu0 %v3847
    %v4439 = vpop.f32.mrf.mxu0
    %v4440 = vadd.f32 %v4166, %v4439
    %4441 = vmatmul.f32.gmra.mxu0 %v3848
    %v4442 = vpop.f32.mrf.mxu0
    %v4443 = vadd.f32 %v4169, %v4442
    %4444 = vmatmul.f32.gmra.mxu0 %v3849
    %v4445 = vpop.f32.mrf.mxu0
    %v4446 = vadd.f32 %v4172, %v4445
    %4447 = vmatmul.f32.gmra.mxu0 %v3850
    %v4448 = vpop.f32.mrf.mxu0
    %v4449 = vadd.f32 %v4175, %v4448
    %4450 = vmatmul.f32.gmra.mxu0 %v3851
    %v4451 = vpop.f32.mrf.mxu0
    %v4452 = vadd.f32 %v4178, %v4451
    %4453 = vmatmul.f32.gmra.mxu0 %v3852
    %v4454 = vpop.f32.mrf.mxu0
    %v4455 = vadd.f32 %v4181, %v4454
    %4456 = vmatmul.f32.gmra.mxu0 %v3853
    %v4457 = vpop.f32.mrf.mxu0
    %v4458 = vadd.f32 %v4184, %v4457
    %4459 = vmatmul.f32.gmra.mxu0 %v3854
    %v4460 = vpop.f32.mrf.mxu0
    %v4461 = vadd.f32 %v4187, %v4460
    %4462 = vmatmul.f32.gmra.mxu0 %v3855
    %v4463 = vpop.f32.mrf.mxu0
    %v4464 = vadd.f32 %v4190, %v4463
    %4465 = vmatmul.f32.gmra.mxu0 %v3856
    %v4466 = vpop.f32.mrf.mxu0
    %v4467 = vadd.f32 %v4193, %v4466
    %4468 = vmatmul.f32.gmra.mxu0 %v3857
    %v4469 = vpop.f32.mrf.mxu0
    %v4470 = vadd.f32 %v4196, %v4469
    %4471 = vmatmul.f32.gmra.mxu0 %v3858
    %v4472 = vpop.f32.mrf.mxu0
    %v4473 = vadd.f32 %v4199, %v4472
    %4474 = vmatmul.f32.gmra.mxu0 %v3859
    %v4475 = vpop.f32.mrf.mxu0
    %v4476 = vadd.f32 %v4202, %v4475
    %4477 = vmatmul.f32.gmra.mxu0 %v3860
    %v4478 = vpop.f32.mrf.mxu0
    %v4479 = vadd.f32 %v4205, %v4478
    %4480 = vmatmul.f32.gmra.mxu0 %v3861
    %v4481 = vpop.f32.mrf.mxu0
    %v4482 = vadd.f32 %v4208, %v4481
    %4483 = vmatmul.f32.gmra.mxu0 %v3862
    %v4484 = vpop.f32.mrf.mxu0
    %v4485 = vadd.f32 %v4211, %v4484
    %4486 = vmatmul.f32.gmra.mxu0 %v3863
    %v4487 = vpop.f32.mrf.mxu0
    %v4488 = vadd.f32 %v4214, %v4487
    %4489 = vmatmul.f32.gmra.mxu0 %v3864
    %v4490 = vpop.f32.mrf.mxu0
    %v4491 = vadd.f32 %v4217, %v4490
    %4492 = vmatmul.f32.gmra.mxu0 %v3865
    %v4493 = vpop.f32.mrf.mxu0
    %v4494 = vadd.f32 %v4220, %v4493
    %4495 = vmatmul.f32.gmra.mxu0 %v3866
    %v4496 = vpop.f32.mrf.mxu0
    %v4497 = vadd.f32 %v4223, %v4496
    %4498 = vmatmul.f32.gmra.mxu0 %v3867
    %v4499 = vpop.f32.mrf.mxu0
    %v4500 = vadd.f32 %v4226, %v4499
    %4501 = vmatmul.f32.gmra.mxu0 %v3868
    %v4502 = vpop.f32.mrf.mxu0
    %v4503 = vadd.f32 %v4229, %v4502
    %4504 = vmatmul.f32.gmra.mxu0 %v3869
    %v4505 = vpop.f32.mrf.mxu0
    %v4506 = vadd.f32 %v4232, %v4505
    %4507 = vmatmul.f32.gmra.mxu0 %v3870
    %v4508 = vpop.f32.mrf.mxu0
    %v4509 = vadd.f32 %v4235, %v4508
    %4510 = vmatmul.f32.gmra.mxu0 %v3871
    %v4511 = vpop.f32.mrf.mxu0
    %v4512 = vadd.f32 %v4238, %v4511
    %4513 = vmatmul.f32.gmra.mxu0 %v3872
    %v4514 = vpop.f32.mrf.mxu0
    %v4515 = vadd.f32 %v4241, %v4514
    %4516 = vmatmul.f32.gmra.mxu0 %v3873
    %v4517 = vpop.f32.mrf.mxu0
    %v4518 = vadd.f32 %v4244, %v4517
    %4519 = vdwg.mxu0
    %4520 = vmatpush.msra.mxu0 %v3970
    %4521 = vmatpush.msra.mxu0 %v3968
    %4522 = vmatpush.msra.mxu0 %v3966
    %4523 = vmatpush.msra.mxu0 %v3964
    %4524 = vmatpush.msra.mxu0 %v3962
    %4525 = vmatpush.msra.mxu0 %v3960
    %4526 = vmatpush.msra.mxu0 %v3958
    %4527 = vmatpush.msra.mxu0 %v3956
    %4528 = vmatpush.msra.mxu0 %v3954
    %4529 = vmatpush.msra.mxu0 %v3952
    %4530 = vmatpush.msra.mxu0 %v3950
    %4531 = vmatpush.msra.mxu0 %v3948
    %4532 = vmatpush.msra.mxu0 %v3946
    %4533 = vmatpush.msra.mxu0 %v3944
    %4534 = vmatpush.msra.mxu0 %v3942
    %4535 = vmatpush.msra.mxu0 %v3940
    %4536 = vmatmul.f32.gmra.mxu0 %v3835
    %v4537 = vpop.f32.mrf.mxu0
    %v4538 = vadd.f32 0.0, %v4537
    %4539 = vmatmul.f32.gmra.mxu0 %v3836
    %v4540 = vpop.f32.mrf.mxu0
    %v4541 = vadd.f32 0.0, %v4540
    %4542 = vmatmul.f32.gmra.mxu0 %v3837
    %v4543 = vpop.f32.mrf.mxu0
    %v4544 = vadd.f32 0.0, %v4543
    %4545 = vmatmul.f32.gmra.mxu0 %v3838
    %v4546 = vpop.f32.mrf.mxu0
    %v4547 = vadd.f32 0.0, %v4546
    %4548 = vmatmul.f32.gmra.mxu0 %v3839
    %v4549 = vpop.f32.mrf.mxu0
    %v4550 = vadd.f32 0.0, %v4549
    %4551 = vmatmul.f32.gmra.mxu0 %v3840
    %v4552 = vpop.f32.mrf.mxu0
    %v4553 = vadd.f32 0.0, %v4552
    %4554 = vmatmul.f32.gmra.mxu0 %v3841
    %v4555 = vpop.f32.mrf.mxu0
    %v4556 = vadd.f32 0.0, %v4555
    %4557 = vmatmul.f32.gmra.mxu0 %v3842
    %v4558 = vpop.f32.mrf.mxu0
    %v4559 = vadd.f32 0.0, %v4558
    %4560 = vmatmul.f32.gmra.mxu0 %v3843
    %v4561 = vpop.f32.mrf.mxu0
    %v4562 = vadd.f32 0.0, %v4561
    %4563 = vmatmul.f32.gmra.mxu0 %v3844
    %v4564 = vpop.f32.mrf.mxu0
    %v4565 = vadd.f32 0.0, %v4564
    %4566 = vmatmul.f32.gmra.mxu0 %v3845
    %v4567 = vpop.f32.mrf.mxu0
    %v4568 = vadd.f32 0.0, %v4567
    %4569 = vmatmul.f32.gmra.mxu0 %v3846
    %v4570 = vpop.f32.mrf.mxu0
    %v4571 = vadd.f32 0.0, %v4570
    %4572 = vmatmul.f32.gmra.mxu0 %v3847
    %v4573 = vpop.f32.mrf.mxu0
    %v4574 = vadd.f32 0.0, %v4573
    %4575 = vmatmul.f32.gmra.mxu0 %v3848
    %v4576 = vpop.f32.mrf.mxu0
    %v4577 = vadd.f32 0.0, %v4576
    %4578 = vmatmul.f32.gmra.mxu0 %v3849
    %v4579 = vpop.f32.mrf.mxu0
    %v4580 = vadd.f32 0.0, %v4579
    %4581 = vmatmul.f32.gmra.mxu0 %v3850
    %v4582 = vpop.f32.mrf.mxu0
    %v4583 = vadd.f32 0.0, %v4582
    %4584 = vmatmul.f32.gmra.mxu0 %v3851
    %v4585 = vpop.f32.mrf.mxu0
    %v4586 = vadd.f32 0.0, %v4585
    %4587 = vmatmul.f32.gmra.mxu0 %v3852
    %v4588 = vpop.f32.mrf.mxu0
    %v4589 = vadd.f32 0.0, %v4588
    %4590 = vmatmul.f32.gmra.mxu0 %v3853
    %v4591 = vpop.f32.mrf.mxu0
    %v4592 = vadd.f32 0.0, %v4591
    %4593 = vmatmul.f32.gmra.mxu0 %v3854
    %v4594 = vpop.f32.mrf.mxu0
    %v4595 = vadd.f32 0.0, %v4594
    %4596 = vmatmul.f32.gmra.mxu0 %v3855
    %v4597 = vpop.f32.mrf.mxu0
    %v4598 = vadd.f32 0.0, %v4597
    %4599 = vmatmul.f32.gmra.mxu0 %v3856
    %v4600 = vpop.f32.mrf.mxu0
    %v4601 = vadd.f32 0.0, %v4600
    %4602 = vmatmul.f32.gmra.mxu0 %v3857
    %v4603 = vpop.f32.mrf.mxu0
    %v4604 = vadd.f32 0.0, %v4603
    %4605 = vmatmul.f32.gmra.mxu0 %v3858
    %v4606 = vpop.f32.mrf.mxu0
    %v4607 = vadd.f32 0.0, %v4606
    %4608 = vmatmul.f32.gmra.mxu0 %v3859
    %v4609 = vpop.f32.mrf.mxu0
    %v4610 = vadd.f32 0.0, %v4609
    %4611 = vmatmul.f32.gmra.mxu0 %v3860
    %v4612 = vpop.f32.mrf.mxu0
    %v4613 = vadd.f32 0.0, %v4612
    %4614 = vmatmul.f32.gmra.mxu0 %v3861
    %v4615 = vpop.f32.mrf.mxu0
    %v4616 = vadd.f32 0.0, %v4615
    %4617 = vmatmul.f32.gmra.mxu0 %v3862
    %v4618 = vpop.f32.mrf.mxu0
    %v4619 = vadd.f32 0.0, %v4618
    %4620 = vmatmul.f32.gmra.mxu0 %v3863
    %v4621 = vpop.f32.mrf.mxu0
    %v4622 = vadd.f32 0.0, %v4621
    %4623 = vmatmul.f32.gmra.mxu0 %v3864
    %v4624 = vpop.f32.mrf.mxu0
    %v4625 = vadd.f32 0.0, %v4624
    %4626 = vmatmul.f32.gmra.mxu0 %v3865
    %v4627 = vpop.f32.mrf.mxu0
    %v4628 = vadd.f32 0.0, %v4627
    %4629 = vmatmul.f32.gmra.mxu0 %v3866
    %v4630 = vpop.f32.mrf.mxu0
    %v4631 = vadd.f32 0.0, %v4630
    %4632 = vmatmul.f32.gmra.mxu0 %v3867
    %v4633 = vpop.f32.mrf.mxu0
    %v4634 = vadd.f32 0.0, %v4633
    %4635 = vmatmul.f32.gmra.mxu0 %v3868
    %v4636 = vpop.f32.mrf.mxu0
    %v4637 = vadd.f32 0.0, %v4636
    %4638 = vmatmul.f32.gmra.mxu0 %v3869
    %v4639 = vpop.f32.mrf.mxu0
    %v4640 = vadd.f32 0.0, %v4639
    %4641 = vmatmul.f32.gmra.mxu0 %v3870
    %v4642 = vpop.f32.mrf.mxu0
    %v4643 = vadd.f32 0.0, %v4642
    %4644 = vmatmul.f32.gmra.mxu0 %v3871
    %v4645 = vpop.f32.mrf.mxu0
    %v4646 = vadd.f32 0.0, %v4645
    %4647 = vmatmul.f32.gmra.mxu0 %v3872
    %v4648 = vpop.f32.mrf.mxu0
    %v4649 = vadd.f32 0.0, %v4648
    %4650 = vmatmul.f32.gmra.mxu0 %v3873
    %v4651 = vpop.f32.mrf.mxu0
    %v4652 = vadd.f32 0.0, %v4651
    %4653 = vmatmul.f32.gmra.mxu0 0.0
    %v4654 = vpop.f32.mrf.mxu0
    %v4655 = vadd.f32 0.0, %v4654
    %4656 = vdwg.mxu0
    %4657 = vmatpush.msra.mxu0 %v3971
    %4658 = vmatpush.msra.mxu0 %v3969
    %4659 = vmatpush.msra.mxu0 %v3967
    %4660 = vmatpush.msra.mxu0 %v3965
    %4661 = vmatpush.msra.mxu0 %v3963
    %4662 = vmatpush.msra.mxu0 %v3961
    %4663 = vmatpush.msra.mxu0 %v3959
    %4664 = vmatpush.msra.mxu0 %v3957
    %4665 = vmatpush.msra.mxu0 %v3955
    %4666 = vmatpush.msra.mxu0 %v3953
    %4667 = vmatpush.msra.mxu0 %v3951
    %4668 = vmatpush.msra.mxu0 %v3949
    %4669 = vmatpush.msra.mxu0 %v3947
    %4670 = vmatpush.msra.mxu0 %v3945
    %4671 = vmatpush.msra.mxu0 %v3943
    %4672 = vmatpush.msra.mxu0 %v3941
    %4673 = vmatmul.f32.gmra.mxu0 %v3835
    %v4674 = vpop.f32.mrf.mxu0
    %v4675 = vadd.f32 0.0, %v4674
    %4676 = vmatmul.f32.gmra.mxu0 %v3836
    %v4677 = vpop.f32.mrf.mxu0
    %v4678 = vadd.f32 0.0, %v4677
    %4679 = vmatmul.f32.gmra.mxu0 %v3837
    %v4680 = vpop.f32.mrf.mxu0
    %v4681 = vadd.f32 0.0, %v4680
    %4682 = vmatmul.f32.gmra.mxu0 %v3838
    %v4683 = vpop.f32.mrf.mxu0
    %v4684 = vadd.f32 0.0, %v4683
    %4685 = vmatmul.f32.gmra.mxu0 %v3839
    %v4686 = vpop.f32.mrf.mxu0
    %v4687 = vadd.f32 0.0, %v4686
    %4688 = vmatmul.f32.gmra.mxu0 %v3840
    %v4689 = vpop.f32.mrf.mxu0
    %v4690 = vadd.f32 0.0, %v4689
    %4691 = vmatmul.f32.gmra.mxu0 %v3841
    %v4692 = vpop.f32.mrf.mxu0
    %v4693 = vadd.f32 0.0, %v4692
    %4694 = vmatmul.f32.gmra.mxu0 %v3842
    %v4695 = vpop.f32.mrf.mxu0
    %v4696 = vadd.f32 0.0, %v4695
    %4697 = vmatmul.f32.gmra.mxu0 %v3843
    %v4698 = vpop.f32.mrf.mxu0
    %v4699 = vadd.f32 0.0, %v4698
    %4700 = vmatmul.f32.gmra.mxu0 %v3844
    %v4701 = vpop.f32.mrf.mxu0
    %v4702 = vadd.f32 0.0, %v4701
    %4703 = vmatmul.f32.gmra.mxu0 %v3845
    %v4704 = vpop.f32.mrf.mxu0
    %v4705 = vadd.f32 0.0, %v4704
    %4706 = vmatmul.f32.gmra.mxu0 %v3846
    %v4707 = vpop.f32.mrf.mxu0
    %v4708 = vadd.f32 0.0, %v4707
    %4709 = vmatmul.f32.gmra.mxu0 %v3847
    %v4710 = vpop.f32.mrf.mxu0
    %v4711 = vadd.f32 0.0, %v4710
    %4712 = vmatmul.f32.gmra.mxu0 %v3848
    %v4713 = vpop.f32.mrf.mxu0
    %v4714 = vadd.f32 0.0, %v4713
    %4715 = vmatmul.f32.gmra.mxu0 %v3849
    %v4716 = vpop.f32.mrf.mxu0
    %v4717 = vadd.f32 0.0, %v4716
    %4718 = vmatmul.f32.gmra.mxu0 %v3850
    %v4719 = vpop.f32.mrf.mxu0
    %v4720 = vadd.f32 0.0, %v4719
    %4721 = vmatmul.f32.gmra.mxu0 %v3851
    %v4722 = vpop.f32.mrf.mxu0
    %v4723 = vadd.f32 0.0, %v4722
    %4724 = vmatmul.f32.gmra.mxu0 %v3852
    %v4725 = vpop.f32.mrf.mxu0
    %v4726 = vadd.f32 0.0, %v4725
    %4727 = vmatmul.f32.gmra.mxu0 %v3853
    %v4728 = vpop.f32.mrf.mxu0
    %v4729 = vadd.f32 0.0, %v4728
    %4730 = vmatmul.f32.gmra.mxu0 %v3854
    %v4731 = vpop.f32.mrf.mxu0
    %v4732 = vadd.f32 0.0, %v4731
    %4733 = vmatmul.f32.gmra.mxu0 %v3855
    %v4734 = vpop.f32.mrf.mxu0
    %v4735 = vadd.f32 0.0, %v4734
    %4736 = vmatmul.f32.gmra.mxu0 %v3856
    %v4737 = vpop.f32.mrf.mxu0
    %v4738 = vadd.f32 0.0, %v4737
    %4739 = vmatmul.f32.gmra.mxu0 %v3857
    %v4740 = vpop.f32.mrf.mxu0
    %v4741 = vadd.f32 0.0, %v4740
    %4742 = vmatmul.f32.gmra.mxu0 %v3858
    %v4743 = vpop.f32.mrf.mxu0
    %v4744 = vadd.f32 0.0, %v4743
    %4745 = vmatmul.f32.gmra.mxu0 %v3859
    %v4746 = vpop.f32.mrf.mxu0
    %v4747 = vadd.f32 0.0, %v4746
    %4748 = vmatmul.f32.gmra.mxu0 %v3860
    %v4749 = vpop.f32.mrf.mxu0
    %v4750 = vadd.f32 0.0, %v4749
    %4751 = vmatmul.f32.gmra.mxu0 %v3861
    %v4752 = vpop.f32.mrf.mxu0
    %v4753 = vadd.f32 0.0, %v4752
    %4754 = vmatmul.f32.gmra.mxu0 %v3862
    %v4755 = vpop.f32.mrf.mxu0
    %v4756 = vadd.f32 0.0, %v4755
    %4757 = vmatmul.f32.gmra.mxu0 %v3863
    %v4758 = vpop.f32.mrf.mxu0
    %v4759 = vadd.f32 0.0, %v4758
    %4760 = vmatmul.f32.gmra.mxu0 %v3864
    %v4761 = vpop.f32.mrf.mxu0
    %v4762 = vadd.f32 0.0, %v4761
    %4763 = vmatmul.f32.gmra.mxu0 %v3865
    %v4764 = vpop.f32.mrf.mxu0
    %v4765 = vadd.f32 0.0, %v4764
    %4766 = vmatmul.f32.gmra.mxu0 %v3866
    %v4767 = vpop.f32.mrf.mxu0
    %v4768 = vadd.f32 0.0, %v4767
    %4769 = vmatmul.f32.gmra.mxu0 %v3867
    %v4770 = vpop.f32.mrf.mxu0
    %v4771 = vadd.f32 0.0, %v4770
    %4772 = vmatmul.f32.gmra.mxu0 %v3868
    %v4773 = vpop.f32.mrf.mxu0
    %v4774 = vadd.f32 0.0, %v4773
    %4775 = vmatmul.f32.gmra.mxu0 %v3869
    %v4776 = vpop.f32.mrf.mxu0
    %v4777 = vadd.f32 0.0, %v4776
    %4778 = vmatmul.f32.gmra.mxu0 %v3870
    %v4779 = vpop.f32.mrf.mxu0
    %v4780 = vadd.f32 0.0, %v4779
    %4781 = vmatmul.f32.gmra.mxu0 %v3871
    %v4782 = vpop.f32.mrf.mxu0
    %v4783 = vadd.f32 0.0, %v4782
    %4784 = vmatmul.f32.gmra.mxu0 %v3872
    %v4785 = vpop.f32.mrf.mxu0
    %v4786 = vadd.f32 0.0, %v4785
    %4787 = vmatmul.f32.gmra.mxu0 %v3873
    %v4788 = vpop.f32.mrf.mxu0
    %v4789 = vadd.f32 0.0, %v4788
    %4790 = vmatmul.f32.gmra.mxu0 0.0
    %v4791 = vpop.f32.mrf.mxu0
    %v4792 = vadd.f32 0.0, %v4791
    %4793 = vdwg.mxu0
    %v4794 = vadd.f32 %v4264, %v4538
    %v4795 = vadd.f32 %v4401, %v4675
    %v4796 = vadd.f32 %v4267, %v4541
    %v4797 = vadd.f32 %v4404, %v4678
    %v4798 = vadd.f32 %v4270, %v4544
    %v4799 = vadd.f32 %v4407, %v4681
    %v4800 = vadd.f32 %v4273, %v4547
    %v4801 = vadd.f32 %v4410, %v4684
    %v4802 = vadd.f32 %v4276, %v4550
    %v4803 = vadd.f32 %v4413, %v4687
    %v4804 = vadd.f32 %v4279, %v4553
    %v4805 = vadd.f32 %v4416, %v4690
    %v4806 = vadd.f32 %v4282, %v4556
    %v4807 = vadd.f32 %v4419, %v4693
    %v4808 = vadd.f32 %v4285, %v4559
    %v4809 = vadd.f32 %v4422, %v4696
    %v4810 = vadd.f32 %v4288, %v4562
    %v4811 = vadd.f32 %v4425, %v4699
    %v4812 = vadd.f32 %v4291, %v4565
    %v4813 = vadd.f32 %v4428, %v4702
    %v4814 = vadd.f32 %v4294, %v4568
    %v4815 = vadd.f32 %v4431, %v4705
    %v4816 = vadd.f32 %v4297, %v4571
    %v4817 = vadd.f32 %v4434, %v4708
    %v4818 = vadd.f32 %v4300, %v4574
    %v4819 = vadd.f32 %v4437, %v4711
    %v4820 = vadd.f32 %v4303, %v4577
    %v4821 = vadd.f32 %v4440, %v4714
    %v4822 = vadd.f32 %v4306, %v4580
    %v4823 = vadd.f32 %v4443, %v4717
    %v4824 = vadd.f32 %v4309, %v4583
    %v4825 = vadd.f32 %v4446, %v4720
    %v4826 = vadd.f32 %v4312, %v4586
    %v4827 = vadd.f32 %v4449, %v4723
    %v4828 = vadd.f32 %v4315, %v4589
    %v4829 = vadd.f32 %v4452, %v4726
    %v4830 = vadd.f32 %v4318, %v4592
    %v4831 = vadd.f32 %v4455, %v4729
    %v4832 = vadd.f32 %v4321, %v4595
    %v4833 = vadd.f32 %v4458, %v4732
    %v4834 = vadd.f32 %v4324, %v4598
    %v4835 = vadd.f32 %v4461, %v4735
    %v4836 = vadd.f32 %v4327, %v4601
    %v4837 = vadd.f32 %v4464, %v4738
    %v4838 = vadd.f32 %v4330, %v4604
    %v4839 = vadd.f32 %v4467, %v4741
    %v4840 = vadd.f32 %v4333, %v4607
    %v4841 = vadd.f32 %v4470, %v4744
    %v4842 = vadd.f32 %v4336, %v4610
    %v4843 = vadd.f32 %v4473, %v4747
    %v4844 = vadd.f32 %v4339, %v4613
    %v4845 = vadd.f32 %v4476, %v4750
    %v4846 = vadd.f32 %v4342, %v4616
    %v4847 = vadd.f32 %v4479, %v4753
    %v4848 = vadd.f32 %v4345, %v4619
    %v4849 = vadd.f32 %v4482, %v4756
    %v4850 = vadd.f32 %v4348, %v4622
    %v4851 = vadd.f32 %v4485, %v4759
    %v4852 = vadd.f32 %v4351, %v4625
    %v4853 = vadd.f32 %v4488, %v4762
    %v4854 = vadd.f32 %v4354, %v4628
    %v4855 = vadd.f32 %v4491, %v4765
    %v4856 = vadd.f32 %v4357, %v4631
    %v4857 = vadd.f32 %v4494, %v4768
    %v4858 = vadd.f32 %v4360, %v4634
    %v4859 = vadd.f32 %v4497, %v4771
    %v4860 = vadd.f32 %v4363, %v4637
    %v4861 = vadd.f32 %v4500, %v4774
    %v4862 = vadd.f32 %v4366, %v4640
    %v4863 = vadd.f32 %v4503, %v4777
    %v4864 = vadd.f32 %v4369, %v4643
    %v4865 = vadd.f32 %v4506, %v4780
    %v4866 = vadd.f32 %v4372, %v4646
    %v4867 = vadd.f32 %v4509, %v4783
    %v4868 = vadd.f32 %v4375, %v4649
    %v4869 = vadd.f32 %v4512, %v4786
    %v4870 = vadd.f32 %v4378, %v4652
    %v4871 = vadd.f32 %v4515, %v4789
    %v4872 = vadd.f32 %v4381, %v4655
    %v4873 = vadd.f32 %v4518, %v4792
    %v4874 = vld [vmem:[#allocation10] sm:$0x3]
    %v4876 = vperm.slane %v4874, 0
    %v4877 = vperm.slane %v4874, 1
    %v4880 = vadd.f32 %v4794, %v4876
    %v4881 = vadd.f32 %v4795, %v4877
    %v4882 = vadd.f32 %v4796, %v4876
    %v4883 = vadd.f32 %v4797, %v4877
    %v4884 = vadd.f32 %v4798, %v4876
    %v4885 = vadd.f32 %v4799, %v4877
    %v4886 = vadd.f32 %v4800, %v4876
    %v4887 = vadd.f32 %v4801, %v4877
    %v4888 = vadd.f32 %v4802, %v4876
    %v4889 = vadd.f32 %v4803, %v4877
    %v4890 = vadd.f32 %v4804, %v4876
    %v4891 = vadd.f32 %v4805, %v4877
    %v4892 = vadd.f32 %v4806, %v4876
    %v4893 = vadd.f32 %v4807, %v4877
    %v4894 = vadd.f32 %v4808, %v4876
    %v4895 = vadd.f32 %v4809, %v4877
    %v4896 = vadd.f32 %v4810, %v4876
    %v4897 = vadd.f32 %v4811, %v4877
    %v4898 = vadd.f32 %v4812, %v4876
    %v4899 = vadd.f32 %v4813, %v4877
    %v4900 = vadd.f32 %v4814, %v4876
    %v4901 = vadd.f32 %v4815, %v4877
    %v4902 = vadd.f32 %v4816, %v4876
    %v4903 = vadd.f32 %v4817, %v4877
    %v4904 = vadd.f32 %v4818, %v4876
    %v4905 = vadd.f32 %v4819, %v4877
    %v4906 = vadd.f32 %v4820, %v4876
    %v4907 = vadd.f32 %v4821, %v4877
    %v4908 = vadd.f32 %v4822, %v4876
    %v4909 = vadd.f32 %v4823, %v4877
    %v4910 = vadd.f32 %v4824, %v4876
    %v4911 = vadd.f32 %v4825, %v4877
    %v4912 = vadd.f32 %v4826, %v4876
    %v4913 = vadd.f32 %v4827, %v4877
    %v4914 = vadd.f32 %v4828, %v4876
    %v4915 = vadd.f32 %v4829, %v4877
    %v4916 = vadd.f32 %v4830, %v4876
    %v4917 = vadd.f32 %v4831, %v4877
    %v4918 = vadd.f32 %v4832, %v4876
    %v4919 = vadd.f32 %v4833, %v4877
    %v4920 = vadd.f32 %v4834, %v4876
    %v4921 = vadd.f32 %v4835, %v4877
    %v4922 = vadd.f32 %v4836, %v4876
    %v4923 = vadd.f32 %v4837, %v4877
    %v4924 = vadd.f32 %v4838, %v4876
    %v4925 = vadd.f32 %v4839, %v4877
    %v4926 = vadd.f32 %v4840, %v4876
    %v4927 = vadd.f32 %v4841, %v4877
    %v4928 = vadd.f32 %v4842, %v4876
    %v4929 = vadd.f32 %v4843, %v4877
    %v4930 = vadd.f32 %v4844, %v4876
    %v4931 = vadd.f32 %v4845, %v4877
    %v4932 = vadd.f32 %v4846, %v4876
    %v4933 = vadd.f32 %v4847, %v4877
    %v4934 = vadd.f32 %v4848, %v4876
    %v4935 = vadd.f32 %v4849, %v4877
    %v4936 = vadd.f32 %v4850, %v4876
    %v4937 = vadd.f32 %v4851, %v4877
    %v4938 = vadd.f32 %v4852, %v4876
    %v4939 = vadd.f32 %v4853, %v4877
    %v4940 = vadd.f32 %v4854, %v4876
    %v4941 = vadd.f32 %v4855, %v4877
    %v4942 = vadd.f32 %v4856, %v4876
    %v4943 = vadd.f32 %v4857, %v4877
    %v4944 = vadd.f32 %v4858, %v4876
    %v4945 = vadd.f32 %v4859, %v4877
    %v4946 = vadd.f32 %v4860, %v4876
    %v4947 = vadd.f32 %v4861, %v4877
    %v4948 = vadd.f32 %v4862, %v4876
    %v4949 = vadd.f32 %v4863, %v4877
    %v4950 = vadd.f32 %v4864, %v4876
    %v4951 = vadd.f32 %v4865, %v4877
    %v4952 = vadd.f32 %v4866, %v4876
    %v4953 = vadd.f32 %v4867, %v4877
    %v4954 = vadd.f32 %v4868, %v4876
    %v4955 = vadd.f32 %v4869, %v4877
    %v4956 = vadd.f32 %v4870, %v4876
    %v4957 = vadd.f32 %v4871, %v4877
    %v4958 = vadd.f32 %v4872, %v4876
    %v4959 = vadd.f32 %v4873, %v4877
    %vm4960 = vcmp.gt.f32.partialorder %v4880, 0.0
    %vm4961 = vcmp.gt.f32.partialorder %v4881, 0.0
    %vm4962 = vcmp.gt.f32.partialorder %v4882, 0.0
    %vm4963 = vcmp.gt.f32.partialorder %v4883, 0.0
    %vm4964 = vcmp.gt.f32.partialorder %v4884, 0.0
    %vm4965 = vcmp.gt.f32.partialorder %v4885, 0.0
    %vm4966 = vcmp.gt.f32.partialorder %v4886, 0.0
    %vm4967 = vcmp.gt.f32.partialorder %v4887, 0.0
    %vm4968 = vcmp.gt.f32.partialorder %v4888, 0.0
    %vm4969 = vcmp.gt.f32.partialorder %v4889, 0.0
    %vm4970 = vcmp.gt.f32.partialorder %v4890, 0.0
    %vm4971 = vcmp.gt.f32.partialorder %v4891, 0.0
    %vm4972 = vcmp.gt.f32.partialorder %v4892, 0.0
    %vm4973 = vcmp.gt.f32.partialorder %v4893, 0.0
    %vm4974 = vcmp.gt.f32.partialorder %v4894, 0.0
    %vm4975 = vcmp.gt.f32.partialorder %v4895, 0.0
    %vm4976 = vcmp.gt.f32.partialorder %v4896, 0.0
    %vm4977 = vcmp.gt.f32.partialorder %v4897, 0.0
    %vm4978 = vcmp.gt.f32.partialorder %v4898, 0.0
    %vm4979 = vcmp.gt.f32.partialorder %v4899, 0.0
    %vm4980 = vcmp.gt.f32.partialorder %v4900, 0.0
    %vm4981 = vcmp.gt.f32.partialorder %v4901, 0.0
    %vm4982 = vcmp.gt.f32.partialorder %v4902, 0.0
    %vm4983 = vcmp.gt.f32.partialorder %v4903, 0.0
    %vm4984 = vcmp.gt.f32.partialorder %v4904, 0.0
    %vm4985 = vcmp.gt.f32.partialorder %v4905, 0.0
    %vm4986 = vcmp.gt.f32.partialorder %v4906, 0.0
    %vm4987 = vcmp.gt.f32.partialorder %v4907, 0.0
    %vm4988 = vcmp.gt.f32.partialorder %v4908, 0.0
    %vm4989 = vcmp.gt.f32.partialorder %v4909, 0.0
    %vm4990 = vcmp.gt.f32.partialorder %v4910, 0.0
    %vm4991 = vcmp.gt.f32.partialorder %v4911, 0.0
    %vm4992 = vcmp.gt.f32.partialorder %v4912, 0.0
    %vm4993 = vcmp.gt.f32.partialorder %v4913, 0.0
    %vm4994 = vcmp.gt.f32.partialorder %v4914, 0.0
    %vm4995 = vcmp.gt.f32.partialorder %v4915, 0.0
    %vm4996 = vcmp.gt.f32.partialorder %v4916, 0.0
    %vm4997 = vcmp.gt.f32.partialorder %v4917, 0.0
    %vm4998 = vcmp.gt.f32.partialorder %v4918, 0.0
    %vm4999 = vcmp.gt.f32.partialorder %v4919, 0.0
    %vm5000 = vcmp.gt.f32.partialorder %v4920, 0.0
    %vm5001 = vcmp.gt.f32.partialorder %v4921, 0.0
    %vm5002 = vcmp.gt.f32.partialorder %v4922, 0.0
    %vm5003 = vcmp.gt.f32.partialorder %v4923, 0.0
    %vm5004 = vcmp.gt.f32.partialorder %v4924, 0.0
    %vm5005 = vcmp.gt.f32.partialorder %v4925, 0.0
    %vm5006 = vcmp.gt.f32.partialorder %v4926, 0.0
    %vm5007 = vcmp.gt.f32.partialorder %v4927, 0.0
    %vm5008 = vcmp.gt.f32.partialorder %v4928, 0.0
    %vm5009 = vcmp.gt.f32.partialorder %v4929, 0.0
    %vm5010 = vcmp.gt.f32.partialorder %v4930, 0.0
    %vm5011 = vcmp.gt.f32.partialorder %v4931, 0.0
    %vm5012 = vcmp.gt.f32.partialorder %v4932, 0.0
    %vm5013 = vcmp.gt.f32.partialorder %v4933, 0.0
    %vm5014 = vcmp.gt.f32.partialorder %v4934, 0.0
    %vm5015 = vcmp.gt.f32.partialorder %v4935, 0.0
    %vm5016 = vcmp.gt.f32.partialorder %v4936, 0.0
    %vm5017 = vcmp.gt.f32.partialorder %v4937, 0.0
    %vm5018 = vcmp.gt.f32.partialorder %v4938, 0.0
    %vm5019 = vcmp.gt.f32.partialorder %v4939, 0.0
    %vm5020 = vcmp.gt.f32.partialorder %v4940, 0.0
    %vm5021 = vcmp.gt.f32.partialorder %v4941, 0.0
    %vm5022 = vcmp.gt.f32.partialorder %v4942, 0.0
    %vm5023 = vcmp.gt.f32.partialorder %v4943, 0.0
    %vm5024 = vcmp.gt.f32.partialorder %v4944, 0.0
    %vm5025 = vcmp.gt.f32.partialorder %v4945, 0.0
    %vm5026 = vcmp.gt.f32.partialorder %v4946, 0.0
    %vm5027 = vcmp.gt.f32.partialorder %v4947, 0.0
    %vm5028 = vcmp.gt.f32.partialorder %v4948, 0.0
    %vm5029 = vcmp.gt.f32.partialorder %v4949, 0.0
    %vm5030 = vcmp.gt.f32.partialorder %v4950, 0.0
    %vm5031 = vcmp.gt.f32.partialorder %v4951, 0.0
    %vm5032 = vcmp.gt.f32.partialorder %v4952, 0.0
    %vm5033 = vcmp.gt.f32.partialorder %v4953, 0.0
    %vm5034 = vcmp.gt.f32.partialorder %v4954, 0.0
    %vm5035 = vcmp.gt.f32.partialorder %v4955, 0.0
    %vm5036 = vcmp.gt.f32.partialorder %v4956, 0.0
    %vm5037 = vcmp.gt.f32.partialorder %v4957, 0.0
    %vm5038 = vcmp.gt.f32.partialorder %v4958, 0.0
    %vm5039 = vcmp.gt.f32.partialorder %v4959, 0.0
    %v5040 = vmul.f32 %v4880, 0.01
    %v5041 = vmul.f32 %v4881, 0.01
    %v5042 = vmul.f32 %v4882, 0.01
    %v5043 = vmul.f32 %v4883, 0.01
    %v5044 = vmul.f32 %v4884, 0.01
    %v5045 = vmul.f32 %v4885, 0.01
    %v5046 = vmul.f32 %v4886, 0.01
    %v5047 = vmul.f32 %v4887, 0.01
    %v5048 = vmul.f32 %v4888, 0.01
    %v5049 = vmul.f32 %v4889, 0.01
    %v5050 = vmul.f32 %v4890, 0.01
    %v5051 = vmul.f32 %v4891, 0.01
    %v5052 = vmul.f32 %v4892, 0.01
    %v5053 = vmul.f32 %v4893, 0.01
    %v5054 = vmul.f32 %v4894, 0.01
    %v5055 = vmul.f32 %v4895, 0.01
    %v5056 = vmul.f32 %v4896, 0.01
    %v5057 = vmul.f32 %v4897, 0.01
    %v5058 = vmul.f32 %v4898, 0.01
    %v5059 = vmul.f32 %v4899, 0.01
    %v5060 = vmul.f32 %v4900, 0.01
    %v5061 = vmul.f32 %v4901, 0.01
    %v5062 = vmul.f32 %v4902, 0.01
    %v5063 = vmul.f32 %v4903, 0.01
    %v5064 = vmul.f32 %v4904, 0.01
    %v5065 = vmul.f32 %v4905, 0.01
    %v5066 = vmul.f32 %v4906, 0.01
    %v5067 = vmul.f32 %v4907, 0.01
    %v5068 = vmul.f32 %v4908, 0.01
    %v5069 = vmul.f32 %v4909, 0.01
    %v5070 = vmul.f32 %v4910, 0.01
    %v5071 = vmul.f32 %v4911, 0.01
    %v5072 = vmul.f32 %v4912, 0.01
    %v5073 = vmul.f32 %v4913, 0.01
    %v5074 = vmul.f32 %v4914, 0.01
    %v5075 = vmul.f32 %v4915, 0.01
    %v5076 = vmul.f32 %v4916, 0.01
    %v5077 = vmul.f32 %v4917, 0.01
    %v5078 = vmul.f32 %v4918, 0.01
    %v5079 = vmul.f32 %v4919, 0.01
    %v5080 = vmul.f32 %v4920, 0.01
    %v5081 = vmul.f32 %v4921, 0.01
    %v5082 = vmul.f32 %v4922, 0.01
    %v5083 = vmul.f32 %v4923, 0.01
    %v5084 = vmul.f32 %v4924, 0.01
    %v5085 = vmul.f32 %v4925, 0.01
    %v5086 = vmul.f32 %v4926, 0.01
    %v5087 = vmul.f32 %v4927, 0.01
    %v5088 = vmul.f32 %v4928, 0.01
    %v5089 = vmul.f32 %v4929, 0.01
    %v5090 = vmul.f32 %v4930, 0.01
    %v5091 = vmul.f32 %v4931, 0.01
    %v5092 = vmul.f32 %v4932, 0.01
    %v5093 = vmul.f32 %v4933, 0.01
    %v5094 = vmul.f32 %v4934, 0.01
    %v5095 = vmul.f32 %v4935, 0.01
    %v5096 = vmul.f32 %v4936, 0.01
    %v5097 = vmul.f32 %v4937, 0.01
    %v5098 = vmul.f32 %v4938, 0.01
    %v5099 = vmul.f32 %v4939, 0.01
    %v5100 = vmul.f32 %v4940, 0.01
    %v5101 = vmul.f32 %v4941, 0.01
    %v5102 = vmul.f32 %v4942, 0.01
    %v5103 = vmul.f32 %v4943, 0.01
    %v5104 = vmul.f32 %v4944, 0.01
    %v5105 = vmul.f32 %v4945, 0.01
    %v5106 = vmul.f32 %v4946, 0.01
    %v5107 = vmul.f32 %v4947, 0.01
    %v5108 = vmul.f32 %v4948, 0.01
    %v5109 = vmul.f32 %v4949, 0.01
    %v5110 = vmul.f32 %v4950, 0.01
    %v5111 = vmul.f32 %v4951, 0.01
    %v5112 = vmul.f32 %v4952, 0.01
    %v5113 = vmul.f32 %v4953, 0.01
    %v5114 = vmul.f32 %v4954, 0.01
    %v5115 = vmul.f32 %v4955, 0.01
    %v5116 = vmul.f32 %v4956, 0.01
    %v5117 = vmul.f32 %v4957, 0.01
    %v5118 = vmul.f32 %v4958, 0.01
    %v5119 = vmul.f32 %v4959, 0.01
    %v5120 = vsel %vm4960, %v4880, %v5040
    %v5121 = vsel %vm4961, %v4881, %v5041
    %v5122 = vsel %vm4962, %v4882, %v5042
    %v5123 = vsel %vm4963, %v4883, %v5043
    %v5124 = vsel %vm4964, %v4884, %v5044
    %v5125 = vsel %vm4965, %v4885, %v5045
    %v5126 = vsel %vm4966, %v4886, %v5046
    %v5127 = vsel %vm4967, %v4887, %v5047
    %v5128 = vsel %vm4968, %v4888, %v5048
    %v5129 = vsel %vm4969, %v4889, %v5049
    %v5130 = vsel %vm4970, %v4890, %v5050
    %v5131 = vsel %vm4971, %v4891, %v5051
    %v5132 = vsel %vm4972, %v4892, %v5052
    %v5133 = vsel %vm4973, %v4893, %v5053
    %v5134 = vsel %vm4974, %v4894, %v5054
    %v5135 = vsel %vm4975, %v4895, %v5055
    %v5136 = vsel %vm4976, %v4896, %v5056
    %v5137 = vsel %vm4977, %v4897, %v5057
    %v5138 = vsel %vm4978, %v4898, %v5058
    %v5139 = vsel %vm4979, %v4899, %v5059
    %v5140 = vsel %vm4980, %v4900, %v5060
    %v5141 = vsel %vm4981, %v4901, %v5061
    %v5142 = vsel %vm4982, %v4902, %v5062
    %v5143 = vsel %vm4983, %v4903, %v5063
    %v5144 = vsel %vm4984, %v4904, %v5064
    %v5145 = vsel %vm4985, %v4905, %v5065
    %v5146 = vsel %vm4986, %v4906, %v5066
    %v5147 = vsel %vm4987, %v4907, %v5067
    %v5148 = vsel %vm4988, %v4908, %v5068
    %v5149 = vsel %vm4989, %v4909, %v5069
    %v5150 = vsel %vm4990, %v4910, %v5070
    %v5151 = vsel %vm4991, %v4911, %v5071
    %v5152 = vsel %vm4992, %v4912, %v5072
    %v5153 = vsel %vm4993, %v4913, %v5073
    %v5154 = vsel %vm4994, %v4914, %v5074
    %v5155 = vsel %vm4995, %v4915, %v5075
    %v5156 = vsel %vm4996, %v4916, %v5076
    %v5157 = vsel %vm4997, %v4917, %v5077
    %v5158 = vsel %vm4998, %v4918, %v5078
    %v5159 = vsel %vm4999, %v4919, %v5079
    %v5160 = vsel %vm5000, %v4920, %v5080
    %v5161 = vsel %vm5001, %v4921, %v5081
    %v5162 = vsel %vm5002, %v4922, %v5082
    %v5163 = vsel %vm5003, %v4923, %v5083
    %v5164 = vsel %vm5004, %v4924, %v5084
    %v5165 = vsel %vm5005, %v4925, %v5085
    %v5166 = vsel %vm5006, %v4926, %v5086
    %v5167 = vsel %vm5007, %v4927, %v5087
    %v5168 = vsel %vm5008, %v4928, %v5088
    %v5169 = vsel %vm5009, %v4929, %v5089
    %v5170 = vsel %vm5010, %v4930, %v5090
    %v5171 = vsel %vm5011, %v4931, %v5091
    %v5172 = vsel %vm5012, %v4932, %v5092
    %v5173 = vsel %vm5013, %v4933, %v5093
    %v5174 = vsel %vm5014, %v4934, %v5094
    %v5175 = vsel %vm5015, %v4935, %v5095
    %v5176 = vsel %vm5016, %v4936, %v5096
    %v5177 = vsel %vm5017, %v4937, %v5097
    %v5178 = vsel %vm5018, %v4938, %v5098
    %v5179 = vsel %vm5019, %v4939, %v5099
    %v5180 = vsel %vm5020, %v4940, %v5100
    %v5181 = vsel %vm5021, %v4941, %v5101
    %v5182 = vsel %vm5022, %v4942, %v5102
    %v5183 = vsel %vm5023, %v4943, %v5103
    %v5184 = vsel %vm5024, %v4944, %v5104
    %v5185 = vsel %vm5025, %v4945, %v5105
    %v5186 = vsel %vm5026, %v4946, %v5106
    %v5187 = vsel %vm5027, %v4947, %v5107
    %v5188 = vsel %vm5028, %v4948, %v5108
    %v5189 = vsel %vm5029, %v4949, %v5109
    %v5190 = vsel %vm5030, %v4950, %v5110
    %v5191 = vsel %vm5031, %v4951, %v5111
    %v5192 = vsel %vm5032, %v4952, %v5112
    %v5193 = vsel %vm5033, %v4953, %v5113
    %v5194 = vsel %vm5034, %v4954, %v5114
    %v5195 = vsel %vm5035, %v4955, %v5115
    %v5196 = vsel %vm5036, %v4956, %v5116
    %v5197 = vsel %vm5037, %v4957, %v5117
    %v5198 = vsel %vm5038, %v4958, %v5118
    %v5199 = vsel %vm5039, %v4959, %v5119
    %v5200 = vld [vmem:[#allocation12] sm:$0xff]
    %v5201 = vld [vmem:[#allocation12 + $0x8] sm:$0xff]
    %v5202 = vld [vmem:[#allocation12 + $0x10] sm:$0xff]
    %v5203 = vld [vmem:[#allocation12 + $0x18] sm:$0xff]
    %v5204 = vld [vmem:[#allocation12 + $0x20] sm:$0xff]
    %v5205 = vld [vmem:[#allocation12 + $0x28] sm:$0xff]
    %v5206 = vld [vmem:[#allocation12 + $0x30] sm:$0xff]
    %v5207 = vld [vmem:[#allocation12 + $0x38] sm:$0xff]
    %v5208 = vld [vmem:[#allocation12 + $0x40] sm:$0xff]
    %v5209 = vld [vmem:[#allocation12 + $0x48] sm:$0xff]
    %v5210 = vld [vmem:[#allocation12 + $0x50] sm:$0xff]
    %v5211 = vld [vmem:[#allocation12 + $0x58] sm:$0xff]
    %v5212 = vld [vmem:[#allocation12 + $0x60] sm:$0xff]
    %v5213 = vld [vmem:[#allocation12 + $0x68] sm:$0xff]
    %v5214 = vld [vmem:[#allocation12 + $0x70] sm:$0xff]
    %v5215 = vld [vmem:[#allocation12 + $0x78] sm:$0xff]
    %v5216 = vld [vmem:[#allocation12 + $0x80] sm:$0xff]
    %v5217 = vld [vmem:[#allocation12 + $0x88] sm:$0xff]
    %v5218 = vld [vmem:[#allocation12 + $0x90] sm:$0xff]
    %v5219 = vld [vmem:[#allocation12 + $0x98] sm:$0xff]
    %v5220 = vld [vmem:[#allocation12 + $0xa0] sm:$0xff]
    %v5221 = vld [vmem:[#allocation12 + $0xa8] sm:$0xff]
    %v5222 = vld [vmem:[#allocation12 + $0xb0] sm:$0xff]
    %v5223 = vld [vmem:[#allocation12 + $0xb8] sm:$0xff]
    %v5224 = vld [vmem:[#allocation12 + $0xc0] sm:$0xff]
    %v5225 = vld [vmem:[#allocation12 + $0xc8] sm:$0xff]
    %v5226 = vld [vmem:[#allocation12 + $0xd0] sm:$0xff]
    %v5227 = vld [vmem:[#allocation12 + $0xd8] sm:$0xff]
    %v5228 = vld [vmem:[#allocation12 + $0xe0] sm:$0xff]
    %v5229 = vld [vmem:[#allocation12 + $0xe8] sm:$0xff]
    %v5230 = vld [vmem:[#allocation12 + $0xf0] sm:$0xff]
    %v5231 = vld [vmem:[#allocation12 + $0xf8] sm:$0xff]
    %v5232 = vld [vmem:[#allocation12 + $0x100] sm:$0xff]
    %v5233 = vld [vmem:[#allocation12 + $0x108] sm:$0xff]
    %v5234 = vld [vmem:[#allocation12 + $0x110] sm:$0xff]
    %v5235 = vld [vmem:[#allocation12 + $0x118] sm:$0xff]
    %v5236 = vld [vmem:[#allocation12 + $0x120] sm:$0xff]
    %v5237 = vld [vmem:[#allocation12 + $0x128] sm:$0xff]
    %v5238 = vld [vmem:[#allocation12 + $0x130] sm:$0xff]
    %v5239 = vld [vmem:[#allocation12 + $0x138] sm:$0xff]
    %v5240 = vld [vmem:[#allocation12 + $0x140] sm:$0xff]
    %v5241 = vld [vmem:[#allocation12 + $0x148] sm:$0xff]
    %v5242 = vld [vmem:[#allocation12 + $0x150] sm:$0xff]
    %v5243 = vld [vmem:[#allocation12 + $0x158] sm:$0xff]
    %v5244 = vld [vmem:[#allocation12 + $0x160] sm:$0xff]
    %v5245 = vld [vmem:[#allocation12 + $0x168] sm:$0xff]
    %v5246 = vld [vmem:[#allocation12 + $0x170] sm:$0xff]
    %v5247 = vld [vmem:[#allocation12 + $0x178] sm:$0xff]
    %v5248 = vld [vmem:[#allocation12 + $0x180] sm:$0xff]
    %v5249 = vld [vmem:[#allocation12 + $0x188] sm:$0xff]
    %v5250 = vld [vmem:[#allocation12 + $0x190] sm:$0xff]
    %v5251 = vld [vmem:[#allocation12 + $0x198] sm:$0xff]
    %v5252 = vld [vmem:[#allocation12 + $0x1a0] sm:$0xff]
    %v5253 = vld [vmem:[#allocation12 + $0x1a8] sm:$0xff]
    %v5254 = vld [vmem:[#allocation12 + $0x1b0] sm:$0xff]
    %v5255 = vld [vmem:[#allocation12 + $0x1b8] sm:$0xff]
    %v5256 = vld [vmem:[#allocation12 + $0x1c0] sm:$0xff]
    %v5257 = vld [vmem:[#allocation12 + $0x1c8] sm:$0xff]
    %v5258 = vld [vmem:[#allocation12 + $0x1d0] sm:$0xff]
    %v5259 = vld [vmem:[#allocation12 + $0x1d8] sm:$0xff]
    %v5260 = vld [vmem:[#allocation12 + $0x1e0] sm:$0xff]
    %v5261 = vld [vmem:[#allocation12 + $0x1e8] sm:$0xff]
    %v5262 = vld [vmem:[#allocation12 + $0x1f0] sm:$0xff]
    %v5263 = vld [vmem:[#allocation12 + $0x1f8] sm:$0xff]
    %s5264 = scalar_lea.vmem [#allocation12], 512
    %v5265 = vld [vmem:[%s5264] sm:$0xff]
    %v5266 = vld [vmem:[%s5264 + $0x8] sm:$0xff]
    %v5267 = vld [vmem:[%s5264 + $0x10] sm:$0xff]
    %v5268 = vld [vmem:[%s5264 + $0x18] sm:$0xff]
    %v5269 = vld [vmem:[%s5264 + $0x20] sm:$0xff]
    %v5270 = vld [vmem:[%s5264 + $0x28] sm:$0xff]
    %v5271 = vld [vmem:[%s5264 + $0x30] sm:$0xff]
    %v5272 = vld [vmem:[%s5264 + $0x38] sm:$0xff]
    %v5273 = vld [vmem:[%s5264 + $0x40] sm:$0xff]
    %v5274 = vld [vmem:[%s5264 + $0x48] sm:$0xff]
    %v5275 = vld [vmem:[%s5264 + $0x50] sm:$0xff]
    %v5276 = vld [vmem:[%s5264 + $0x58] sm:$0xff]
    %v5277 = vld [vmem:[%s5264 + $0x60] sm:$0xff]
    %v5278 = vld [vmem:[%s5264 + $0x68] sm:$0xff]
    %v5279 = vld [vmem:[%s5264 + $0x70] sm:$0xff]
    %v5280 = vld [vmem:[%s5264 + $0x78] sm:$0xff]
    %v5281 = vld [vmem:[%s5264 + $0x80] sm:$0xff]
    %v5282 = vld [vmem:[%s5264 + $0x88] sm:$0xff]
    %v5283 = vld [vmem:[%s5264 + $0x90] sm:$0xff]
    %v5284 = vld [vmem:[%s5264 + $0x98] sm:$0xff]
    %v5285 = vld [vmem:[%s5264 + $0xa0] sm:$0xff]
    %v5286 = vld [vmem:[%s5264 + $0xa8] sm:$0xff]
    %v5287 = vld [vmem:[%s5264 + $0xb0] sm:$0xff]
    %v5288 = vld [vmem:[%s5264 + $0xb8] sm:$0xff]
    %v5289 = vld [vmem:[%s5264 + $0xc0] sm:$0xff]
    %v5290 = vld [vmem:[%s5264 + $0xc8] sm:$0xff]
    %v5291 = vld [vmem:[%s5264 + $0xd0] sm:$0xff]
    %v5292 = vld [vmem:[%s5264 + $0xd8] sm:$0xff]
    %v5293 = vld [vmem:[%s5264 + $0xe0] sm:$0xff]
    %v5294 = vld [vmem:[%s5264 + $0xe8] sm:$0xff]
    %v5295 = vld [vmem:[%s5264 + $0xf0] sm:$0xff]
    %v5296 = vld [vmem:[%s5264 + $0xf8] sm:$0xff]
    %v5297 = vld [vmem:[%s5264 + $0x100] sm:$0xff]
    %v5298 = vld [vmem:[%s5264 + $0x108] sm:$0xff]
    %v5299 = vld [vmem:[%s5264 + $0x110] sm:$0xff]
    %v5300 = vld [vmem:[%s5264 + $0x118] sm:$0xff]
    %v5301 = vld [vmem:[%s5264 + $0x120] sm:$0xff]
    %v5302 = vld [vmem:[%s5264 + $0x128] sm:$0xff]
    %v5303 = vld [vmem:[%s5264 + $0x130] sm:$0xff]
    %v5304 = vld [vmem:[%s5264 + $0x138] sm:$0xff]
    %v5305 = vld [vmem:[%s5264 + $0x140] sm:$0xff]
    %v5306 = vld [vmem:[%s5264 + $0x148] sm:$0xff]
    %v5307 = vld [vmem:[%s5264 + $0x150] sm:$0xff]
    %v5308 = vld [vmem:[%s5264 + $0x158] sm:$0xff]
    %v5309 = vld [vmem:[%s5264 + $0x160] sm:$0xff]
    %v5310 = vld [vmem:[%s5264 + $0x168] sm:$0xff]
    %v5311 = vld [vmem:[%s5264 + $0x170] sm:$0xff]
    %v5312 = vld [vmem:[%s5264 + $0x178] sm:$0xff]
    %v5313 = vld [vmem:[%s5264 + $0x180] sm:$0xff]
    %v5314 = vld [vmem:[%s5264 + $0x188] sm:$0xff]
    %v5315 = vld [vmem:[%s5264 + $0x190] sm:$0xff]
    %v5316 = vld [vmem:[%s5264 + $0x198] sm:$0xff]
    %v5317 = vld [vmem:[%s5264 + $0x1a0] sm:$0xff]
    %v5318 = vld [vmem:[%s5264 + $0x1a8] sm:$0xff]
    %v5319 = vld [vmem:[%s5264 + $0x1b0] sm:$0xff]
    %v5320 = vld [vmem:[%s5264 + $0x1b8] sm:$0xff]
    %v5321 = vld [vmem:[%s5264 + $0x1c0] sm:$0xff]
    %v5322 = vld [vmem:[%s5264 + $0x1c8] sm:$0xff]
    %v5323 = vld [vmem:[%s5264 + $0x1d0] sm:$0xff]
    %v5324 = vld [vmem:[%s5264 + $0x1d8] sm:$0xff]
    %v5325 = vld [vmem:[%s5264 + $0x1e0] sm:$0xff]
    %v5326 = vld [vmem:[%s5264 + $0x1e8] sm:$0xff]
    %v5327 = vld [vmem:[%s5264 + $0x1f0] sm:$0xff]
    %v5328 = vld [vmem:[%s5264 + $0x1f8] sm:$0xff]
    %s5329 = scalar_lea.vmem [#allocation12], 1024
    %v5330 = vld [vmem:[%s5329] sm:$0xff]
    %v5331 = vld [vmem:[%s5329 + $0x8] sm:$0xff]
    %v5332 = vld [vmem:[%s5329 + $0x10] sm:$0xff]
    %v5333 = vld [vmem:[%s5329 + $0x18] sm:$0xff]
    %v5334 = vld [vmem:[%s5329 + $0x20] sm:$0xff]
    %v5335 = vld [vmem:[%s5329 + $0x28] sm:$0xff]
    %v5336 = vld [vmem:[%s5329 + $0x30] sm:$0xff]
    %v5337 = vld [vmem:[%s5329 + $0x38] sm:$0xff]
    %v5338 = vld [vmem:[%s5329 + $0x40] sm:$0xff]
    %v5339 = vld [vmem:[%s5329 + $0x48] sm:$0xff]
    %v5340 = vld [vmem:[%s5329 + $0x50] sm:$0xff]
    %v5341 = vld [vmem:[%s5329 + $0x58] sm:$0xff]
    %v5342 = vld [vmem:[%s5329 + $0x60] sm:$0xff]
    %v5343 = vld [vmem:[%s5329 + $0x68] sm:$0xff]
    %v5344 = vld [vmem:[%s5329 + $0x70] sm:$0xff]
    %v5345 = vld [vmem:[%s5329 + $0x78] sm:$0xff]
    %v5346 = vld [vmem:[%s5329 + $0x80] sm:$0xff]
    %v5347 = vld [vmem:[%s5329 + $0x88] sm:$0xff]
    %v5348 = vld [vmem:[%s5329 + $0x90] sm:$0xff]
    %v5349 = vld [vmem:[%s5329 + $0x98] sm:$0xff]
    %v5350 = vld [vmem:[%s5329 + $0xa0] sm:$0xff]
    %v5351 = vld [vmem:[%s5329 + $0xa8] sm:$0xff]
    %v5352 = vld [vmem:[%s5329 + $0xb0] sm:$0xff]
    %v5353 = vld [vmem:[%s5329 + $0xb8] sm:$0xff]
    %v5354 = vld [vmem:[%s5329 + $0xc0] sm:$0xff]
    %v5355 = vld [vmem:[%s5329 + $0xc8] sm:$0xff]
    %v5356 = vld [vmem:[%s5329 + $0xd0] sm:$0xff]
    %v5357 = vld [vmem:[%s5329 + $0xd8] sm:$0xff]
    %v5358 = vld [vmem:[%s5329 + $0xe0] sm:$0xff]
    %v5359 = vld [vmem:[%s5329 + $0xe8] sm:$0xff]
    %v5360 = vld [vmem:[%s5329 + $0xf0] sm:$0xff]
    %v5361 = vld [vmem:[%s5329 + $0xf8] sm:$0xff]
    %v5362 = vld [vmem:[%s5329 + $0x100] sm:$0xff]
    %v5363 = vld [vmem:[%s5329 + $0x108] sm:$0xff]
    %v5364 = vld [vmem:[%s5329 + $0x110] sm:$0xff]
    %v5365 = vld [vmem:[%s5329 + $0x118] sm:$0xff]
    %v5366 = vld [vmem:[%s5329 + $0x120] sm:$0xff]
    %v5367 = vld [vmem:[%s5329 + $0x128] sm:$0xff]
    %v5368 = vld [vmem:[%s5329 + $0x130] sm:$0xff]
    %v5369 = vld [vmem:[%s5329 + $0x138] sm:$0xff]
    %v5370 = vld [vmem:[%s5329 + $0x140] sm:$0xff]
    %v5371 = vld [vmem:[%s5329 + $0x148] sm:$0xff]
    %v5372 = vld [vmem:[%s5329 + $0x150] sm:$0xff]
    %v5373 = vld [vmem:[%s5329 + $0x158] sm:$0xff]
    %v5374 = vld [vmem:[%s5329 + $0x160] sm:$0xff]
    %v5375 = vld [vmem:[%s5329 + $0x168] sm:$0xff]
    %v5376 = vld [vmem:[%s5329 + $0x170] sm:$0xff]
    %v5377 = vld [vmem:[%s5329 + $0x178] sm:$0xff]
    %v5378 = vld [vmem:[%s5329 + $0x180] sm:$0xff]
    %v5379 = vld [vmem:[%s5329 + $0x188] sm:$0xff]
    %v5380 = vld [vmem:[%s5329 + $0x190] sm:$0xff]
    %v5381 = vld [vmem:[%s5329 + $0x198] sm:$0xff]
    %v5382 = vld [vmem:[%s5329 + $0x1a0] sm:$0xff]
    %v5383 = vld [vmem:[%s5329 + $0x1a8] sm:$0xff]
    %v5384 = vld [vmem:[%s5329 + $0x1b0] sm:$0xff]
    %v5385 = vld [vmem:[%s5329 + $0x1b8] sm:$0xff]
    %v5386 = vld [vmem:[%s5329 + $0x1c0] sm:$0xff]
    %v5387 = vld [vmem:[%s5329 + $0x1c8] sm:$0xff]
    %v5388 = vld [vmem:[%s5329 + $0x1d0] sm:$0xff]
    %v5389 = vld [vmem:[%s5329 + $0x1d8] sm:$0xff]
    %v5390 = vld [vmem:[%s5329 + $0x1e0] sm:$0xff]
    %v5391 = vld [vmem:[%s5329 + $0x1e8] sm:$0xff]
    %v5392 = vld [vmem:[%s5329 + $0x1f0] sm:$0xff]
    %v5393 = vld [vmem:[%s5329 + $0x1f8] sm:$0xff]
    %5394 = vmatpush.msra.mxu0 %v5230
    %5395 = vmatpush.msra.mxu0 %v5228
    %5396 = vmatpush.msra.mxu0 %v5226
    %5397 = vmatpush.msra.mxu0 %v5224
    %5398 = vmatpush.msra.mxu0 %v5222
    %5399 = vmatpush.msra.mxu0 %v5220
    %5400 = vmatpush.msra.mxu0 %v5218
    %5401 = vmatpush.msra.mxu0 %v5216
    %5402 = vmatpush.msra.mxu0 %v5214
    %5403 = vmatpush.msra.mxu0 %v5212
    %5404 = vmatpush.msra.mxu0 %v5210
    %5405 = vmatpush.msra.mxu0 %v5208
    %5406 = vmatpush.msra.mxu0 %v5206
    %5407 = vmatpush.msra.mxu0 %v5204
    %5408 = vmatpush.msra.mxu0 %v5202
    %5409 = vmatpush.msra.mxu0 %v5200
    %5410 = vmatmul.f32.gmra.mxu0 0.0
    %v5411 = vpop.f32.mrf.mxu0
    %v5412 = vadd.f32 0.0, %v5411
    %5413 = vmatmul.f32.gmra.mxu0 %v5120
    %v5414 = vpop.f32.mrf.mxu0
    %v5415 = vadd.f32 0.0, %v5414
    %5416 = vmatmul.f32.gmra.mxu0 %v5122
    %v5417 = vpop.f32.mrf.mxu0
    %v5418 = vadd.f32 0.0, %v5417
    %5419 = vmatmul.f32.gmra.mxu0 %v5124
    %v5420 = vpop.f32.mrf.mxu0
    %v5421 = vadd.f32 0.0, %v5420
    %5422 = vmatmul.f32.gmra.mxu0 %v5126
    %v5423 = vpop.f32.mrf.mxu0
    %v5424 = vadd.f32 0.0, %v5423
    %5425 = vmatmul.f32.gmra.mxu0 %v5128
    %v5426 = vpop.f32.mrf.mxu0
    %v5427 = vadd.f32 0.0, %v5426
    %5428 = vmatmul.f32.gmra.mxu0 %v5130
    %v5429 = vpop.f32.mrf.mxu0
    %v5430 = vadd.f32 0.0, %v5429
    %5431 = vmatmul.f32.gmra.mxu0 %v5132
    %v5432 = vpop.f32.mrf.mxu0
    %v5433 = vadd.f32 0.0, %v5432
    %5434 = vmatmul.f32.gmra.mxu0 %v5134
    %v5435 = vpop.f32.mrf.mxu0
    %v5436 = vadd.f32 0.0, %v5435
    %5437 = vmatmul.f32.gmra.mxu0 %v5136
    %v5438 = vpop.f32.mrf.mxu0
    %v5439 = vadd.f32 0.0, %v5438
    %5440 = vmatmul.f32.gmra.mxu0 %v5138
    %v5441 = vpop.f32.mrf.mxu0
    %v5442 = vadd.f32 0.0, %v5441
    %5443 = vmatmul.f32.gmra.mxu0 %v5140
    %v5444 = vpop.f32.mrf.mxu0
    %v5445 = vadd.f32 0.0, %v5444
    %5446 = vmatmul.f32.gmra.mxu0 %v5142
    %v5447 = vpop.f32.mrf.mxu0
    %v5448 = vadd.f32 0.0, %v5447
    %5449 = vmatmul.f32.gmra.mxu0 %v5144
    %v5450 = vpop.f32.mrf.mxu0
    %v5451 = vadd.f32 0.0, %v5450
    %5452 = vmatmul.f32.gmra.mxu0 %v5146
    %v5453 = vpop.f32.mrf.mxu0
    %v5454 = vadd.f32 0.0, %v5453
    %5455 = vmatmul.f32.gmra.mxu0 %v5148
    %v5456 = vpop.f32.mrf.mxu0
    %v5457 = vadd.f32 0.0, %v5456
    %5458 = vmatmul.f32.gmra.mxu0 %v5150
    %v5459 = vpop.f32.mrf.mxu0
    %v5460 = vadd.f32 0.0, %v5459
    %5461 = vmatmul.f32.gmra.mxu0 %v5152
    %v5462 = vpop.f32.mrf.mxu0
    %v5463 = vadd.f32 0.0, %v5462
    %5464 = vmatmul.f32.gmra.mxu0 %v5154
    %v5465 = vpop.f32.mrf.mxu0
    %v5466 = vadd.f32 0.0, %v5465
    %5467 = vmatmul.f32.gmra.mxu0 %v5156
    %v5468 = vpop.f32.mrf.mxu0
    %v5469 = vadd.f32 0.0, %v5468
    %5470 = vmatmul.f32.gmra.mxu0 %v5158
    %v5471 = vpop.f32.mrf.mxu0
    %v5472 = vadd.f32 0.0, %v5471
    %5473 = vmatmul.f32.gmra.mxu0 %v5160
    %v5474 = vpop.f32.mrf.mxu0
    %v5475 = vadd.f32 0.0, %v5474
    %5476 = vmatmul.f32.gmra.mxu0 %v5162
    %v5477 = vpop.f32.mrf.mxu0
    %v5478 = vadd.f32 0.0, %v5477
    %5479 = vmatmul.f32.gmra.mxu0 %v5164
    %v5480 = vpop.f32.mrf.mxu0
    %v5481 = vadd.f32 0.0, %v5480
    %5482 = vmatmul.f32.gmra.mxu0 %v5166
    %v5483 = vpop.f32.mrf.mxu0
    %v5484 = vadd.f32 0.0, %v5483
    %5485 = vmatmul.f32.gmra.mxu0 %v5168
    %v5486 = vpop.f32.mrf.mxu0
    %v5487 = vadd.f32 0.0, %v5486
    %5488 = vmatmul.f32.gmra.mxu0 %v5170
    %v5489 = vpop.f32.mrf.mxu0
    %v5490 = vadd.f32 0.0, %v5489
    %5491 = vmatmul.f32.gmra.mxu0 %v5172
    %v5492 = vpop.f32.mrf.mxu0
    %v5493 = vadd.f32 0.0, %v5492
    %5494 = vmatmul.f32.gmra.mxu0 %v5174
    %v5495 = vpop.f32.mrf.mxu0
    %v5496 = vadd.f32 0.0, %v5495
    %5497 = vmatmul.f32.gmra.mxu0 %v5176
    %v5498 = vpop.f32.mrf.mxu0
    %v5499 = vadd.f32 0.0, %v5498
    %5500 = vmatmul.f32.gmra.mxu0 %v5178
    %v5501 = vpop.f32.mrf.mxu0
    %v5502 = vadd.f32 0.0, %v5501
    %5503 = vmatmul.f32.gmra.mxu0 %v5180
    %v5504 = vpop.f32.mrf.mxu0
    %v5505 = vadd.f32 0.0, %v5504
    %5506 = vmatmul.f32.gmra.mxu0 %v5182
    %v5507 = vpop.f32.mrf.mxu0
    %v5508 = vadd.f32 0.0, %v5507
    %5509 = vmatmul.f32.gmra.mxu0 %v5184
    %v5510 = vpop.f32.mrf.mxu0
    %v5511 = vadd.f32 0.0, %v5510
    %5512 = vmatmul.f32.gmra.mxu0 %v5186
    %v5513 = vpop.f32.mrf.mxu0
    %v5514 = vadd.f32 0.0, %v5513
    %5515 = vmatmul.f32.gmra.mxu0 %v5188
    %v5516 = vpop.f32.mrf.mxu0
    %v5517 = vadd.f32 0.0, %v5516
    %5518 = vmatmul.f32.gmra.mxu0 %v5190
    %v5519 = vpop.f32.mrf.mxu0
    %v5520 = vadd.f32 0.0, %v5519
    %5521 = vmatmul.f32.gmra.mxu0 %v5192
    %v5522 = vpop.f32.mrf.mxu0
    %v5523 = vadd.f32 0.0, %v5522
    %5524 = vmatmul.f32.gmra.mxu0 %v5194
    %v5525 = vpop.f32.mrf.mxu0
    %v5526 = vadd.f32 0.0, %v5525
    %5527 = vmatmul.f32.gmra.mxu0 %v5196
    %v5528 = vpop.f32.mrf.mxu0
    %v5529 = vadd.f32 0.0, %v5528
    %5530 = vdwg.mxu0
    %5531 = vmatpush.msra.mxu0 %v5262
    %5532 = vmatpush.msra.mxu0 %v5260
    %5533 = vmatpush.msra.mxu0 %v5258
    %5534 = vmatpush.msra.mxu0 %v5256
    %5535 = vmatpush.msra.mxu0 %v5254
    %5536 = vmatpush.msra.mxu0 %v5252
    %5537 = vmatpush.msra.mxu0 %v5250
    %5538 = vmatpush.msra.mxu0 %v5248
    %5539 = vmatpush.msra.mxu0 %v5246
    %5540 = vmatpush.msra.mxu0 %v5244
    %5541 = vmatpush.msra.mxu0 %v5242
    %5542 = vmatpush.msra.mxu0 %v5240
    %5543 = vmatpush.msra.mxu0 %v5238
    %5544 = vmatpush.msra.mxu0 %v5236
    %5545 = vmatpush.msra.mxu0 %v5234
    %5546 = vmatpush.msra.mxu0 %v5232
    %5547 = vmatmul.f32.gmra.mxu0 0.0
    %v5548 = vpop.f32.mrf.mxu0
    %v5549 = vadd.f32 %v5412, %v5548
    %5550 = vmatmul.f32.gmra.mxu0 %v5121
    %v5551 = vpop.f32.mrf.mxu0
    %v5552 = vadd.f32 %v5415, %v5551
    %5553 = vmatmul.f32.gmra.mxu0 %v5123
    %v5554 = vpop.f32.mrf.mxu0
    %v5555 = vadd.f32 %v5418, %v5554
    %5556 = vmatmul.f32.gmra.mxu0 %v5125
    %v5557 = vpop.f32.mrf.mxu0
    %v5558 = vadd.f32 %v5421, %v5557
    %5559 = vmatmul.f32.gmra.mxu0 %v5127
    %v5560 = vpop.f32.mrf.mxu0
    %v5561 = vadd.f32 %v5424, %v5560
    %5562 = vmatmul.f32.gmra.mxu0 %v5129
    %v5563 = vpop.f32.mrf.mxu0
    %v5564 = vadd.f32 %v5427, %v5563
    %5565 = vmatmul.f32.gmra.mxu0 %v5131
    %v5566 = vpop.f32.mrf.mxu0
    %v5567 = vadd.f32 %v5430, %v5566
    %5568 = vmatmul.f32.gmra.mxu0 %v5133
    %v5569 = vpop.f32.mrf.mxu0
    %v5570 = vadd.f32 %v5433, %v5569
    %5571 = vmatmul.f32.gmra.mxu0 %v5135
    %v5572 = vpop.f32.mrf.mxu0
    %v5573 = vadd.f32 %v5436, %v5572
    %5574 = vmatmul.f32.gmra.mxu0 %v5137
    %v5575 = vpop.f32.mrf.mxu0
    %v5576 = vadd.f32 %v5439, %v5575
    %5577 = vmatmul.f32.gmra.mxu0 %v5139
    %v5578 = vpop.f32.mrf.mxu0
    %v5579 = vadd.f32 %v5442, %v5578
    %5580 = vmatmul.f32.gmra.mxu0 %v5141
    %v5581 = vpop.f32.mrf.mxu0
    %v5582 = vadd.f32 %v5445, %v5581
    %5583 = vmatmul.f32.gmra.mxu0 %v5143
    %v5584 = vpop.f32.mrf.mxu0
    %v5585 = vadd.f32 %v5448, %v5584
    %5586 = vmatmul.f32.gmra.mxu0 %v5145
    %v5587 = vpop.f32.mrf.mxu0
    %v5588 = vadd.f32 %v5451, %v5587
    %5589 = vmatmul.f32.gmra.mxu0 %v5147
    %v5590 = vpop.f32.mrf.mxu0
    %v5591 = vadd.f32 %v5454, %v5590
    %5592 = vmatmul.f32.gmra.mxu0 %v5149
    %v5593 = vpop.f32.mrf.mxu0
    %v5594 = vadd.f32 %v5457, %v5593
    %5595 = vmatmul.f32.gmra.mxu0 %v5151
    %v5596 = vpop.f32.mrf.mxu0
    %v5597 = vadd.f32 %v5460, %v5596
    %5598 = vmatmul.f32.gmra.mxu0 %v5153
    %v5599 = vpop.f32.mrf.mxu0
    %v5600 = vadd.f32 %v5463, %v5599
    %5601 = vmatmul.f32.gmra.mxu0 %v5155
    %v5602 = vpop.f32.mrf.mxu0
    %v5603 = vadd.f32 %v5466, %v5602
    %5604 = vmatmul.f32.gmra.mxu0 %v5157
    %v5605 = vpop.f32.mrf.mxu0
    %v5606 = vadd.f32 %v5469, %v5605
    %5607 = vmatmul.f32.gmra.mxu0 %v5159
    %v5608 = vpop.f32.mrf.mxu0
    %v5609 = vadd.f32 %v5472, %v5608
    %5610 = vmatmul.f32.gmra.mxu0 %v5161
    %v5611 = vpop.f32.mrf.mxu0
    %v5612 = vadd.f32 %v5475, %v5611
    %5613 = vmatmul.f32.gmra.mxu0 %v5163
    %v5614 = vpop.f32.mrf.mxu0
    %v5615 = vadd.f32 %v5478, %v5614
    %5616 = vmatmul.f32.gmra.mxu0 %v5165
    %v5617 = vpop.f32.mrf.mxu0
    %v5618 = vadd.f32 %v5481, %v5617
    %5619 = vmatmul.f32.gmra.mxu0 %v5167
    %v5620 = vpop.f32.mrf.mxu0
    %v5621 = vadd.f32 %v5484, %v5620
    %5622 = vmatmul.f32.gmra.mxu0 %v5169
    %v5623 = vpop.f32.mrf.mxu0
    %v5624 = vadd.f32 %v5487, %v5623
    %5625 = vmatmul.f32.gmra.mxu0 %v5171
    %v5626 = vpop.f32.mrf.mxu0
    %v5627 = vadd.f32 %v5490, %v5626
    %5628 = vmatmul.f32.gmra.mxu0 %v5173
    %v5629 = vpop.f32.mrf.mxu0
    %v5630 = vadd.f32 %v5493, %v5629
    %5631 = vmatmul.f32.gmra.mxu0 %v5175
    %v5632 = vpop.f32.mrf.mxu0
    %v5633 = vadd.f32 %v5496, %v5632
    %5634 = vmatmul.f32.gmra.mxu0 %v5177
    %v5635 = vpop.f32.mrf.mxu0
    %v5636 = vadd.f32 %v5499, %v5635
    %5637 = vmatmul.f32.gmra.mxu0 %v5179
    %v5638 = vpop.f32.mrf.mxu0
    %v5639 = vadd.f32 %v5502, %v5638
    %5640 = vmatmul.f32.gmra.mxu0 %v5181
    %v5641 = vpop.f32.mrf.mxu0
    %v5642 = vadd.f32 %v5505, %v5641
    %5643 = vmatmul.f32.gmra.mxu0 %v5183
    %v5644 = vpop.f32.mrf.mxu0
    %v5645 = vadd.f32 %v5508, %v5644
    %5646 = vmatmul.f32.gmra.mxu0 %v5185
    %v5647 = vpop.f32.mrf.mxu0
    %v5648 = vadd.f32 %v5511, %v5647
    %5649 = vmatmul.f32.gmra.mxu0 %v5187
    %v5650 = vpop.f32.mrf.mxu0
    %v5651 = vadd.f32 %v5514, %v5650
    %5652 = vmatmul.f32.gmra.mxu0 %v5189
    %v5653 = vpop.f32.mrf.mxu0
    %v5654 = vadd.f32 %v5517, %v5653
    %5655 = vmatmul.f32.gmra.mxu0 %v5191
    %v5656 = vpop.f32.mrf.mxu0
    %v5657 = vadd.f32 %v5520, %v5656
    %5658 = vmatmul.f32.gmra.mxu0 %v5193
    %v5659 = vpop.f32.mrf.mxu0
    %v5660 = vadd.f32 %v5523, %v5659
    %5661 = vmatmul.f32.gmra.mxu0 %v5195
    %v5662 = vpop.f32.mrf.mxu0
    %v5663 = vadd.f32 %v5526, %v5662
    %5664 = vmatmul.f32.gmra.mxu0 %v5197
    %v5665 = vpop.f32.mrf.mxu0
    %v5666 = vadd.f32 %v5529, %v5665
    %5667 = vdwg.mxu0
    %5668 = vmatpush.msra.mxu0 %v5231
    %5669 = vmatpush.msra.mxu0 %v5229
    %5670 = vmatpush.msra.mxu0 %v5227
    %5671 = vmatpush.msra.mxu0 %v5225
    %5672 = vmatpush.msra.mxu0 %v5223
    %5673 = vmatpush.msra.mxu0 %v5221
    %5674 = vmatpush.msra.mxu0 %v5219
    %5675 = vmatpush.msra.mxu0 %v5217
    %5676 = vmatpush.msra.mxu0 %v5215
    %5677 = vmatpush.msra.mxu0 %v5213
    %5678 = vmatpush.msra.mxu0 %v5211
    %5679 = vmatpush.msra.mxu0 %v5209
    %5680 = vmatpush.msra.mxu0 %v5207
    %5681 = vmatpush.msra.mxu0 %v5205
    %5682 = vmatpush.msra.mxu0 %v5203
    %5683 = vmatpush.msra.mxu0 %v5201
    %5684 = vmatmul.f32.gmra.mxu0 0.0
    %v5685 = vpop.f32.mrf.mxu0
    %v5686 = vadd.f32 0.0, %v5685
    %5687 = vmatmul.f32.gmra.mxu0 %v5120
    %v5688 = vpop.f32.mrf.mxu0
    %v5689 = vadd.f32 0.0, %v5688
    %5690 = vmatmul.f32.gmra.mxu0 %v5122
    %v5691 = vpop.f32.mrf.mxu0
    %v5692 = vadd.f32 0.0, %v5691
    %5693 = vmatmul.f32.gmra.mxu0 %v5124
    %v5694 = vpop.f32.mrf.mxu0
    %v5695 = vadd.f32 0.0, %v5694
    %5696 = vmatmul.f32.gmra.mxu0 %v5126
    %v5697 = vpop.f32.mrf.mxu0
    %v5698 = vadd.f32 0.0, %v5697
    %5699 = vmatmul.f32.gmra.mxu0 %v5128
    %v5700 = vpop.f32.mrf.mxu0
    %v5701 = vadd.f32 0.0, %v5700
    %5702 = vmatmul.f32.gmra.mxu0 %v5130
    %v5703 = vpop.f32.mrf.mxu0
    %v5704 = vadd.f32 0.0, %v5703
    %5705 = vmatmul.f32.gmra.mxu0 %v5132
    %v5706 = vpop.f32.mrf.mxu0
    %v5707 = vadd.f32 0.0, %v5706
    %5708 = vmatmul.f32.gmra.mxu0 %v5134
    %v5709 = vpop.f32.mrf.mxu0
    %v5710 = vadd.f32 0.0, %v5709
    %5711 = vmatmul.f32.gmra.mxu0 %v5136
    %v5712 = vpop.f32.mrf.mxu0
    %v5713 = vadd.f32 0.0, %v5712
    %5714 = vmatmul.f32.gmra.mxu0 %v5138
    %v5715 = vpop.f32.mrf.mxu0
    %v5716 = vadd.f32 0.0, %v5715
    %5717 = vmatmul.f32.gmra.mxu0 %v5140
    %v5718 = vpop.f32.mrf.mxu0
    %v5719 = vadd.f32 0.0, %v5718
    %5720 = vmatmul.f32.gmra.mxu0 %v5142
    %v5721 = vpop.f32.mrf.mxu0
    %v5722 = vadd.f32 0.0, %v5721
    %5723 = vmatmul.f32.gmra.mxu0 %v5144
    %v5724 = vpop.f32.mrf.mxu0
    %v5725 = vadd.f32 0.0, %v5724
    %5726 = vmatmul.f32.gmra.mxu0 %v5146
    %v5727 = vpop.f32.mrf.mxu0
    %v5728 = vadd.f32 0.0, %v5727
    %5729 = vmatmul.f32.gmra.mxu0 %v5148
    %v5730 = vpop.f32.mrf.mxu0
    %v5731 = vadd.f32 0.0, %v5730
    %5732 = vmatmul.f32.gmra.mxu0 %v5150
    %v5733 = vpop.f32.mrf.mxu0
    %v5734 = vadd.f32 0.0, %v5733
    %5735 = vmatmul.f32.gmra.mxu0 %v5152
    %v5736 = vpop.f32.mrf.mxu0
    %v5737 = vadd.f32 0.0, %v5736
    %5738 = vmatmul.f32.gmra.mxu0 %v5154
    %v5739 = vpop.f32.mrf.mxu0
    %v5740 = vadd.f32 0.0, %v5739
    %5741 = vmatmul.f32.gmra.mxu0 %v5156
    %v5742 = vpop.f32.mrf.mxu0
    %v5743 = vadd.f32 0.0, %v5742
    %5744 = vmatmul.f32.gmra.mxu0 %v5158
    %v5745 = vpop.f32.mrf.mxu0
    %v5746 = vadd.f32 0.0, %v5745
    %5747 = vmatmul.f32.gmra.mxu0 %v5160
    %v5748 = vpop.f32.mrf.mxu0
    %v5749 = vadd.f32 0.0, %v5748
    %5750 = vmatmul.f32.gmra.mxu0 %v5162
    %v5751 = vpop.f32.mrf.mxu0
    %v5752 = vadd.f32 0.0, %v5751
    %5753 = vmatmul.f32.gmra.mxu0 %v5164
    %v5754 = vpop.f32.mrf.mxu0
    %v5755 = vadd.f32 0.0, %v5754
    %5756 = vmatmul.f32.gmra.mxu0 %v5166
    %v5757 = vpop.f32.mrf.mxu0
    %v5758 = vadd.f32 0.0, %v5757
    %5759 = vmatmul.f32.gmra.mxu0 %v5168
    %v5760 = vpop.f32.mrf.mxu0
    %v5761 = vadd.f32 0.0, %v5760
    %5762 = vmatmul.f32.gmra.mxu0 %v5170
    %v5763 = vpop.f32.mrf.mxu0
    %v5764 = vadd.f32 0.0, %v5763
    %5765 = vmatmul.f32.gmra.mxu0 %v5172
    %v5766 = vpop.f32.mrf.mxu0
    %v5767 = vadd.f32 0.0, %v5766
    %5768 = vmatmul.f32.gmra.mxu0 %v5174
    %v5769 = vpop.f32.mrf.mxu0
    %v5770 = vadd.f32 0.0, %v5769
    %5771 = vmatmul.f32.gmra.mxu0 %v5176
    %v5772 = vpop.f32.mrf.mxu0
    %v5773 = vadd.f32 0.0, %v5772
    %5774 = vmatmul.f32.gmra.mxu0 %v5178
    %v5775 = vpop.f32.mrf.mxu0
    %v5776 = vadd.f32 0.0, %v5775
    %5777 = vmatmul.f32.gmra.mxu0 %v5180
    %v5778 = vpop.f32.mrf.mxu0
    %v5779 = vadd.f32 0.0, %v5778
    %5780 = vmatmul.f32.gmra.mxu0 %v5182
    %v5781 = vpop.f32.mrf.mxu0
    %v5782 = vadd.f32 0.0, %v5781
    %5783 = vmatmul.f32.gmra.mxu0 %v5184
    %v5784 = vpop.f32.mrf.mxu0
    %v5785 = vadd.f32 0.0, %v5784
    %5786 = vmatmul.f32.gmra.mxu0 %v5186
    %v5787 = vpop.f32.mrf.mxu0
    %v5788 = vadd.f32 0.0, %v5787
    %5789 = vmatmul.f32.gmra.mxu0 %v5188
    %v5790 = vpop.f32.mrf.mxu0
    %v5791 = vadd.f32 0.0, %v5790
    %5792 = vmatmul.f32.gmra.mxu0 %v5190
    %v5793 = vpop.f32.mrf.mxu0
    %v5794 = vadd.f32 0.0, %v5793
    %5795 = vmatmul.f32.gmra.mxu0 %v5192
    %v5796 = vpop.f32.mrf.mxu0
    %v5797 = vadd.f32 0.0, %v5796
    %5798 = vmatmul.f32.gmra.mxu0 %v5194
    %v5799 = vpop.f32.mrf.mxu0
    %v5800 = vadd.f32 0.0, %v5799
    %5801 = vmatmul.f32.gmra.mxu0 %v5196
    %v5802 = vpop.f32.mrf.mxu0
    %v5803 = vadd.f32 0.0, %v5802
    %5804 = vdwg.mxu0
    %5805 = vmatpush.msra.mxu0 %v5263
    %5806 = vmatpush.msra.mxu0 %v5261
    %5807 = vmatpush.msra.mxu0 %v5259
    %5808 = vmatpush.msra.mxu0 %v5257
    %5809 = vmatpush.msra.mxu0 %v5255
    %5810 = vmatpush.msra.mxu0 %v5253
    %5811 = vmatpush.msra.mxu0 %v5251
    %5812 = vmatpush.msra.mxu0 %v5249
    %5813 = vmatpush.msra.mxu0 %v5247
    %5814 = vmatpush.msra.mxu0 %v5245
    %5815 = vmatpush.msra.mxu0 %v5243
    %5816 = vmatpush.msra.mxu0 %v5241
    %5817 = vmatpush.msra.mxu0 %v5239
    %5818 = vmatpush.msra.mxu0 %v5237
    %5819 = vmatpush.msra.mxu0 %v5235
    %5820 = vmatpush.msra.mxu0 %v5233
    %5821 = vmatmul.f32.gmra.mxu0 0.0
    %v5822 = vpop.f32.mrf.mxu0
    %v5823 = vadd.f32 %v5686, %v5822
    %5824 = vmatmul.f32.gmra.mxu0 %v5121
    %v5825 = vpop.f32.mrf.mxu0
    %v5826 = vadd.f32 %v5689, %v5825
    %5827 = vmatmul.f32.gmra.mxu0 %v5123
    %v5828 = vpop.f32.mrf.mxu0
    %v5829 = vadd.f32 %v5692, %v5828
    %5830 = vmatmul.f32.gmra.mxu0 %v5125
    %v5831 = vpop.f32.mrf.mxu0
    %v5832 = vadd.f32 %v5695, %v5831
    %5833 = vmatmul.f32.gmra.mxu0 %v5127
    %v5834 = vpop.f32.mrf.mxu0
    %v5835 = vadd.f32 %v5698, %v5834
    %5836 = vmatmul.f32.gmra.mxu0 %v5129
    %v5837 = vpop.f32.mrf.mxu0
    %v5838 = vadd.f32 %v5701, %v5837
    %5839 = vmatmul.f32.gmra.mxu0 %v5131
    %v5840 = vpop.f32.mrf.mxu0
    %v5841 = vadd.f32 %v5704, %v5840
    %5842 = vmatmul.f32.gmra.mxu0 %v5133
    %v5843 = vpop.f32.mrf.mxu0
    %v5844 = vadd.f32 %v5707, %v5843
    %5845 = vmatmul.f32.gmra.mxu0 %v5135
    %v5846 = vpop.f32.mrf.mxu0
    %v5847 = vadd.f32 %v5710, %v5846
    %5848 = vmatmul.f32.gmra.mxu0 %v5137
    %v5849 = vpop.f32.mrf.mxu0
    %v5850 = vadd.f32 %v5713, %v5849
    %5851 = vmatmul.f32.gmra.mxu0 %v5139
    %v5852 = vpop.f32.mrf.mxu0
    %v5853 = vadd.f32 %v5716, %v5852
    %5854 = vmatmul.f32.gmra.mxu0 %v5141
    %v5855 = vpop.f32.mrf.mxu0
    %v5856 = vadd.f32 %v5719, %v5855
    %5857 = vmatmul.f32.gmra.mxu0 %v5143
    %v5858 = vpop.f32.mrf.mxu0
    %v5859 = vadd.f32 %v5722, %v5858
    %5860 = vmatmul.f32.gmra.mxu0 %v5145
    %v5861 = vpop.f32.mrf.mxu0
    %v5862 = vadd.f32 %v5725, %v5861
    %5863 = vmatmul.f32.gmra.mxu0 %v5147
    %v5864 = vpop.f32.mrf.mxu0
    %v5865 = vadd.f32 %v5728, %v5864
    %5866 = vmatmul.f32.gmra.mxu0 %v5149
    %v5867 = vpop.f32.mrf.mxu0
    %v5868 = vadd.f32 %v5731, %v5867
    %5869 = vmatmul.f32.gmra.mxu0 %v5151
    %v5870 = vpop.f32.mrf.mxu0
    %v5871 = vadd.f32 %v5734, %v5870
    %5872 = vmatmul.f32.gmra.mxu0 %v5153
    %v5873 = vpop.f32.mrf.mxu0
    %v5874 = vadd.f32 %v5737, %v5873
    %5875 = vmatmul.f32.gmra.mxu0 %v5155
    %v5876 = vpop.f32.mrf.mxu0
    %v5877 = vadd.f32 %v5740, %v5876
    %5878 = vmatmul.f32.gmra.mxu0 %v5157
    %v5879 = vpop.f32.mrf.mxu0
    %v5880 = vadd.f32 %v5743, %v5879
    %5881 = vmatmul.f32.gmra.mxu0 %v5159
    %v5882 = vpop.f32.mrf.mxu0
    %v5883 = vadd.f32 %v5746, %v5882
    %5884 = vmatmul.f32.gmra.mxu0 %v5161
    %v5885 = vpop.f32.mrf.mxu0
    %v5886 = vadd.f32 %v5749, %v5885
    %5887 = vmatmul.f32.gmra.mxu0 %v5163
    %v5888 = vpop.f32.mrf.mxu0
    %v5889 = vadd.f32 %v5752, %v5888
    %5890 = vmatmul.f32.gmra.mxu0 %v5165
    %v5891 = vpop.f32.mrf.mxu0
    %v5892 = vadd.f32 %v5755, %v5891
    %5893 = vmatmul.f32.gmra.mxu0 %v5167
    %v5894 = vpop.f32.mrf.mxu0
    %v5895 = vadd.f32 %v5758, %v5894
    %5896 = vmatmul.f32.gmra.mxu0 %v5169
    %v5897 = vpop.f32.mrf.mxu0
    %v5898 = vadd.f32 %v5761, %v5897
    %5899 = vmatmul.f32.gmra.mxu0 %v5171
    %v5900 = vpop.f32.mrf.mxu0
    %v5901 = vadd.f32 %v5764, %v5900
    %5902 = vmatmul.f32.gmra.mxu0 %v5173
    %v5903 = vpop.f32.mrf.mxu0
    %v5904 = vadd.f32 %v5767, %v5903
    %5905 = vmatmul.f32.gmra.mxu0 %v5175
    %v5906 = vpop.f32.mrf.mxu0
    %v5907 = vadd.f32 %v5770, %v5906
    %5908 = vmatmul.f32.gmra.mxu0 %v5177
    %v5909 = vpop.f32.mrf.mxu0
    %v5910 = vadd.f32 %v5773, %v5909
    %5911 = vmatmul.f32.gmra.mxu0 %v5179
    %v5912 = vpop.f32.mrf.mxu0
    %v5913 = vadd.f32 %v5776, %v5912
    %5914 = vmatmul.f32.gmra.mxu0 %v5181
    %v5915 = vpop.f32.mrf.mxu0
    %v5916 = vadd.f32 %v5779, %v5915
    %5917 = vmatmul.f32.gmra.mxu0 %v5183
    %v5918 = vpop.f32.mrf.mxu0
    %v5919 = vadd.f32 %v5782, %v5918
    %5920 = vmatmul.f32.gmra.mxu0 %v5185
    %v5921 = vpop.f32.mrf.mxu0
    %v5922 = vadd.f32 %v5785, %v5921
    %5923 = vmatmul.f32.gmra.mxu0 %v5187
    %v5924 = vpop.f32.mrf.mxu0
    %v5925 = vadd.f32 %v5788, %v5924
    %5926 = vmatmul.f32.gmra.mxu0 %v5189
    %v5927 = vpop.f32.mrf.mxu0
    %v5928 = vadd.f32 %v5791, %v5927
    %5929 = vmatmul.f32.gmra.mxu0 %v5191
    %v5930 = vpop.f32.mrf.mxu0
    %v5931 = vadd.f32 %v5794, %v5930
    %5932 = vmatmul.f32.gmra.mxu0 %v5193
    %v5933 = vpop.f32.mrf.mxu0
    %v5934 = vadd.f32 %v5797, %v5933
    %5935 = vmatmul.f32.gmra.mxu0 %v5195
    %v5936 = vpop.f32.mrf.mxu0
    %v5937 = vadd.f32 %v5800, %v5936
    %5938 = vmatmul.f32.gmra.mxu0 %v5197
    %v5939 = vpop.f32.mrf.mxu0
    %v5940 = vadd.f32 %v5803, %v5939
    %5941 = vdwg.mxu0
    %5942 = vmatpush.msra.mxu0 %v5295
    %5943 = vmatpush.msra.mxu0 %v5293
    %5944 = vmatpush.msra.mxu0 %v5291
    %5945 = vmatpush.msra.mxu0 %v5289
    %5946 = vmatpush.msra.mxu0 %v5287
    %5947 = vmatpush.msra.mxu0 %v5285
    %5948 = vmatpush.msra.mxu0 %v5283
    %5949 = vmatpush.msra.mxu0 %v5281
    %5950 = vmatpush.msra.mxu0 %v5279
    %5951 = vmatpush.msra.mxu0 %v5277
    %5952 = vmatpush.msra.mxu0 %v5275
    %5953 = vmatpush.msra.mxu0 %v5273
    %5954 = vmatpush.msra.mxu0 %v5271
    %5955 = vmatpush.msra.mxu0 %v5269
    %5956 = vmatpush.msra.mxu0 %v5267
    %5957 = vmatpush.msra.mxu0 %v5265
    %5958 = vmatmul.f32.gmra.mxu0 %v5120
    %v5959 = vpop.f32.mrf.mxu0
    %v5960 = vadd.f32 %v5549, %v5959
    %5961 = vmatmul.f32.gmra.mxu0 %v5122
    %v5962 = vpop.f32.mrf.mxu0
    %v5963 = vadd.f32 %v5552, %v5962
    %5964 = vmatmul.f32.gmra.mxu0 %v5124
    %v5965 = vpop.f32.mrf.mxu0
    %v5966 = vadd.f32 %v5555, %v5965
    %5967 = vmatmul.f32.gmra.mxu0 %v5126
    %v5968 = vpop.f32.mrf.mxu0
    %v5969 = vadd.f32 %v5558, %v5968
    %5970 = vmatmul.f32.gmra.mxu0 %v5128
    %v5971 = vpop.f32.mrf.mxu0
    %v5972 = vadd.f32 %v5561, %v5971
    %5973 = vmatmul.f32.gmra.mxu0 %v5130
    %v5974 = vpop.f32.mrf.mxu0
    %v5975 = vadd.f32 %v5564, %v5974
    %5976 = vmatmul.f32.gmra.mxu0 %v5132
    %v5977 = vpop.f32.mrf.mxu0
    %v5978 = vadd.f32 %v5567, %v5977
    %5979 = vmatmul.f32.gmra.mxu0 %v5134
    %v5980 = vpop.f32.mrf.mxu0
    %v5981 = vadd.f32 %v5570, %v5980
    %5982 = vmatmul.f32.gmra.mxu0 %v5136
    %v5983 = vpop.f32.mrf.mxu0
    %v5984 = vadd.f32 %v5573, %v5983
    %5985 = vmatmul.f32.gmra.mxu0 %v5138
    %v5986 = vpop.f32.mrf.mxu0
    %v5987 = vadd.f32 %v5576, %v5986
    %5988 = vmatmul.f32.gmra.mxu0 %v5140
    %v5989 = vpop.f32.mrf.mxu0
    %v5990 = vadd.f32 %v5579, %v5989
    %5991 = vmatmul.f32.gmra.mxu0 %v5142
    %v5992 = vpop.f32.mrf.mxu0
    %v5993 = vadd.f32 %v5582, %v5992
    %5994 = vmatmul.f32.gmra.mxu0 %v5144
    %v5995 = vpop.f32.mrf.mxu0
    %v5996 = vadd.f32 %v5585, %v5995
    %5997 = vmatmul.f32.gmra.mxu0 %v5146
    %v5998 = vpop.f32.mrf.mxu0
    %v5999 = vadd.f32 %v5588, %v5998
    %6000 = vmatmul.f32.gmra.mxu0 %v5148
    %v6001 = vpop.f32.mrf.mxu0
    %v6002 = vadd.f32 %v5591, %v6001
    %6003 = vmatmul.f32.gmra.mxu0 %v5150
    %v6004 = vpop.f32.mrf.mxu0
    %v6005 = vadd.f32 %v5594, %v6004
    %6006 = vmatmul.f32.gmra.mxu0 %v5152
    %v6007 = vpop.f32.mrf.mxu0
    %v6008 = vadd.f32 %v5597, %v6007
    %6009 = vmatmul.f32.gmra.mxu0 %v5154
    %v6010 = vpop.f32.mrf.mxu0
    %v6011 = vadd.f32 %v5600, %v6010
    %6012 = vmatmul.f32.gmra.mxu0 %v5156
    %v6013 = vpop.f32.mrf.mxu0
    %v6014 = vadd.f32 %v5603, %v6013
    %6015 = vmatmul.f32.gmra.mxu0 %v5158
    %v6016 = vpop.f32.mrf.mxu0
    %v6017 = vadd.f32 %v5606, %v6016
    %6018 = vmatmul.f32.gmra.mxu0 %v5160
    %v6019 = vpop.f32.mrf.mxu0
    %v6020 = vadd.f32 %v5609, %v6019
    %6021 = vmatmul.f32.gmra.mxu0 %v5162
    %v6022 = vpop.f32.mrf.mxu0
    %v6023 = vadd.f32 %v5612, %v6022
    %6024 = vmatmul.f32.gmra.mxu0 %v5164
    %v6025 = vpop.f32.mrf.mxu0
    %v6026 = vadd.f32 %v5615, %v6025
    %6027 = vmatmul.f32.gmra.mxu0 %v5166
    %v6028 = vpop.f32.mrf.mxu0
    %v6029 = vadd.f32 %v5618, %v6028
    %6030 = vmatmul.f32.gmra.mxu0 %v5168
    %v6031 = vpop.f32.mrf.mxu0
    %v6032 = vadd.f32 %v5621, %v6031
    %6033 = vmatmul.f32.gmra.mxu0 %v5170
    %v6034 = vpop.f32.mrf.mxu0
    %v6035 = vadd.f32 %v5624, %v6034
    %6036 = vmatmul.f32.gmra.mxu0 %v5172
    %v6037 = vpop.f32.mrf.mxu0
    %v6038 = vadd.f32 %v5627, %v6037
    %6039 = vmatmul.f32.gmra.mxu0 %v5174
    %v6040 = vpop.f32.mrf.mxu0
    %v6041 = vadd.f32 %v5630, %v6040
    %6042 = vmatmul.f32.gmra.mxu0 %v5176
    %v6043 = vpop.f32.mrf.mxu0
    %v6044 = vadd.f32 %v5633, %v6043
    %6045 = vmatmul.f32.gmra.mxu0 %v5178
    %v6046 = vpop.f32.mrf.mxu0
    %v6047 = vadd.f32 %v5636, %v6046
    %6048 = vmatmul.f32.gmra.mxu0 %v5180
    %v6049 = vpop.f32.mrf.mxu0
    %v6050 = vadd.f32 %v5639, %v6049
    %6051 = vmatmul.f32.gmra.mxu0 %v5182
    %v6052 = vpop.f32.mrf.mxu0
    %v6053 = vadd.f32 %v5642, %v6052
    %6054 = vmatmul.f32.gmra.mxu0 %v5184
    %v6055 = vpop.f32.mrf.mxu0
    %v6056 = vadd.f32 %v5645, %v6055
    %6057 = vmatmul.f32.gmra.mxu0 %v5186
    %v6058 = vpop.f32.mrf.mxu0
    %v6059 = vadd.f32 %v5648, %v6058
    %6060 = vmatmul.f32.gmra.mxu0 %v5188
    %v6061 = vpop.f32.mrf.mxu0
    %v6062 = vadd.f32 %v5651, %v6061
    %6063 = vmatmul.f32.gmra.mxu0 %v5190
    %v6064 = vpop.f32.mrf.mxu0
    %v6065 = vadd.f32 %v5654, %v6064
    %6066 = vmatmul.f32.gmra.mxu0 %v5192
    %v6067 = vpop.f32.mrf.mxu0
    %v6068 = vadd.f32 %v5657, %v6067
    %6069 = vmatmul.f32.gmra.mxu0 %v5194
    %v6070 = vpop.f32.mrf.mxu0
    %v6071 = vadd.f32 %v5660, %v6070
    %6072 = vmatmul.f32.gmra.mxu0 %v5196
    %v6073 = vpop.f32.mrf.mxu0
    %v6074 = vadd.f32 %v5663, %v6073
    %6075 = vmatmul.f32.gmra.mxu0 %v5198
    %v6076 = vpop.f32.mrf.mxu0
    %v6077 = vadd.f32 %v5666, %v6076
    %6078 = vdwg.mxu0
    %6079 = vmatpush.msra.mxu0 %v5327
    %6080 = vmatpush.msra.mxu0 %v5325
    %6081 = vmatpush.msra.mxu0 %v5323
    %6082 = vmatpush.msra.mxu0 %v5321
    %6083 = vmatpush.msra.mxu0 %v5319
    %6084 = vmatpush.msra.mxu0 %v5317
    %6085 = vmatpush.msra.mxu0 %v5315
    %6086 = vmatpush.msra.mxu0 %v5313
    %6087 = vmatpush.msra.mxu0 %v5311
    %6088 = vmatpush.msra.mxu0 %v5309
    %6089 = vmatpush.msra.mxu0 %v5307
    %6090 = vmatpush.msra.mxu0 %v5305
    %6091 = vmatpush.msra.mxu0 %v5303
    %6092 = vmatpush.msra.mxu0 %v5301
    %6093 = vmatpush.msra.mxu0 %v5299
    %6094 = vmatpush.msra.mxu0 %v5297
    %6095 = vmatmul.f32.gmra.mxu0 %v5121
    %v6096 = vpop.f32.mrf.mxu0
    %v6097 = vadd.f32 %v5960, %v6096
    %6098 = vmatmul.f32.gmra.mxu0 %v5123
    %v6099 = vpop.f32.mrf.mxu0
    %v6100 = vadd.f32 %v5963, %v6099
    %6101 = vmatmul.f32.gmra.mxu0 %v5125
    %v6102 = vpop.f32.mrf.mxu0
    %v6103 = vadd.f32 %v5966, %v6102
    %6104 = vmatmul.f32.gmra.mxu0 %v5127
    %v6105 = vpop.f32.mrf.mxu0
    %v6106 = vadd.f32 %v5969, %v6105
    %6107 = vmatmul.f32.gmra.mxu0 %v5129
    %v6108 = vpop.f32.mrf.mxu0
    %v6109 = vadd.f32 %v5972, %v6108
    %6110 = vmatmul.f32.gmra.mxu0 %v5131
    %v6111 = vpop.f32.mrf.mxu0
    %v6112 = vadd.f32 %v5975, %v6111
    %6113 = vmatmul.f32.gmra.mxu0 %v5133
    %v6114 = vpop.f32.mrf.mxu0
    %v6115 = vadd.f32 %v5978, %v6114
    %6116 = vmatmul.f32.gmra.mxu0 %v5135
    %v6117 = vpop.f32.mrf.mxu0
    %v6118 = vadd.f32 %v5981, %v6117
    %6119 = vmatmul.f32.gmra.mxu0 %v5137
    %v6120 = vpop.f32.mrf.mxu0
    %v6121 = vadd.f32 %v5984, %v6120
    %6122 = vmatmul.f32.gmra.mxu0 %v5139
    %v6123 = vpop.f32.mrf.mxu0
    %v6124 = vadd.f32 %v5987, %v6123
    %6125 = vmatmul.f32.gmra.mxu0 %v5141
    %v6126 = vpop.f32.mrf.mxu0
    %v6127 = vadd.f32 %v5990, %v6126
    %6128 = vmatmul.f32.gmra.mxu0 %v5143
    %v6129 = vpop.f32.mrf.mxu0
    %v6130 = vadd.f32 %v5993, %v6129
    %6131 = vmatmul.f32.gmra.mxu0 %v5145
    %v6132 = vpop.f32.mrf.mxu0
    %v6133 = vadd.f32 %v5996, %v6132
    %6134 = vmatmul.f32.gmra.mxu0 %v5147
    %v6135 = vpop.f32.mrf.mxu0
    %v6136 = vadd.f32 %v5999, %v6135
    %6137 = vmatmul.f32.gmra.mxu0 %v5149
    %v6138 = vpop.f32.mrf.mxu0
    %v6139 = vadd.f32 %v6002, %v6138
    %6140 = vmatmul.f32.gmra.mxu0 %v5151
    %v6141 = vpop.f32.mrf.mxu0
    %v6142 = vadd.f32 %v6005, %v6141
    %6143 = vmatmul.f32.gmra.mxu0 %v5153
    %v6144 = vpop.f32.mrf.mxu0
    %v6145 = vadd.f32 %v6008, %v6144
    %6146 = vmatmul.f32.gmra.mxu0 %v5155
    %v6147 = vpop.f32.mrf.mxu0
    %v6148 = vadd.f32 %v6011, %v6147
    %6149 = vmatmul.f32.gmra.mxu0 %v5157
    %v6150 = vpop.f32.mrf.mxu0
    %v6151 = vadd.f32 %v6014, %v6150
    %6152 = vmatmul.f32.gmra.mxu0 %v5159
    %v6153 = vpop.f32.mrf.mxu0
    %v6154 = vadd.f32 %v6017, %v6153
    %6155 = vmatmul.f32.gmra.mxu0 %v5161
    %v6156 = vpop.f32.mrf.mxu0
    %v6157 = vadd.f32 %v6020, %v6156
    %6158 = vmatmul.f32.gmra.mxu0 %v5163
    %v6159 = vpop.f32.mrf.mxu0
    %v6160 = vadd.f32 %v6023, %v6159
    %6161 = vmatmul.f32.gmra.mxu0 %v5165
    %v6162 = vpop.f32.mrf.mxu0
    %v6163 = vadd.f32 %v6026, %v6162
    %6164 = vmatmul.f32.gmra.mxu0 %v5167
    %v6165 = vpop.f32.mrf.mxu0
    %v6166 = vadd.f32 %v6029, %v6165
    %6167 = vmatmul.f32.gmra.mxu0 %v5169
    %v6168 = vpop.f32.mrf.mxu0
    %v6169 = vadd.f32 %v6032, %v6168
    %6170 = vmatmul.f32.gmra.mxu0 %v5171
    %v6171 = vpop.f32.mrf.mxu0
    %v6172 = vadd.f32 %v6035, %v6171
    %6173 = vmatmul.f32.gmra.mxu0 %v5173
    %v6174 = vpop.f32.mrf.mxu0
    %v6175 = vadd.f32 %v6038, %v6174
    %6176 = vmatmul.f32.gmra.mxu0 %v5175
    %v6177 = vpop.f32.mrf.mxu0
    %v6178 = vadd.f32 %v6041, %v6177
    %6179 = vmatmul.f32.gmra.mxu0 %v5177
    %v6180 = vpop.f32.mrf.mxu0
    %v6181 = vadd.f32 %v6044, %v6180
    %6182 = vmatmul.f32.gmra.mxu0 %v5179
    %v6183 = vpop.f32.mrf.mxu0
    %v6184 = vadd.f32 %v6047, %v6183
    %6185 = vmatmul.f32.gmra.mxu0 %v5181
    %v6186 = vpop.f32.mrf.mxu0
    %v6187 = vadd.f32 %v6050, %v6186
    %6188 = vmatmul.f32.gmra.mxu0 %v5183
    %v6189 = vpop.f32.mrf.mxu0
    %v6190 = vadd.f32 %v6053, %v6189
    %6191 = vmatmul.f32.gmra.mxu0 %v5185
    %v6192 = vpop.f32.mrf.mxu0
    %v6193 = vadd.f32 %v6056, %v6192
    %6194 = vmatmul.f32.gmra.mxu0 %v5187
    %v6195 = vpop.f32.mrf.mxu0
    %v6196 = vadd.f32 %v6059, %v6195
    %6197 = vmatmul.f32.gmra.mxu0 %v5189
    %v6198 = vpop.f32.mrf.mxu0
    %v6199 = vadd.f32 %v6062, %v6198
    %6200 = vmatmul.f32.gmra.mxu0 %v5191
    %v6201 = vpop.f32.mrf.mxu0
    %v6202 = vadd.f32 %v6065, %v6201
    %6203 = vmatmul.f32.gmra.mxu0 %v5193
    %v6204 = vpop.f32.mrf.mxu0
    %v6205 = vadd.f32 %v6068, %v6204
    %6206 = vmatmul.f32.gmra.mxu0 %v5195
    %v6207 = vpop.f32.mrf.mxu0
    %v6208 = vadd.f32 %v6071, %v6207
    %6209 = vmatmul.f32.gmra.mxu0 %v5197
    %v6210 = vpop.f32.mrf.mxu0
    %v6211 = vadd.f32 %v6074, %v6210
    %6212 = vmatmul.f32.gmra.mxu0 %v5199
    %v6213 = vpop.f32.mrf.mxu0
    %v6214 = vadd.f32 %v6077, %v6213
    %6215 = vdwg.mxu0
    %6216 = vmatpush.msra.mxu0 %v5296
    %6217 = vmatpush.msra.mxu0 %v5294
    %6218 = vmatpush.msra.mxu0 %v5292
    %6219 = vmatpush.msra.mxu0 %v5290
    %6220 = vmatpush.msra.mxu0 %v5288
    %6221 = vmatpush.msra.mxu0 %v5286
    %6222 = vmatpush.msra.mxu0 %v5284
    %6223 = vmatpush.msra.mxu0 %v5282
    %6224 = vmatpush.msra.mxu0 %v5280
    %6225 = vmatpush.msra.mxu0 %v5278
    %6226 = vmatpush.msra.mxu0 %v5276
    %6227 = vmatpush.msra.mxu0 %v5274
    %6228 = vmatpush.msra.mxu0 %v5272
    %6229 = vmatpush.msra.mxu0 %v5270
    %6230 = vmatpush.msra.mxu0 %v5268
    %6231 = vmatpush.msra.mxu0 %v5266
    %6232 = vmatmul.f32.gmra.mxu0 %v5120
    %v6233 = vpop.f32.mrf.mxu0
    %v6234 = vadd.f32 %v5823, %v6233
    %6235 = vmatmul.f32.gmra.mxu0 %v5122
    %v6236 = vpop.f32.mrf.mxu0
    %v6237 = vadd.f32 %v5826, %v6236
    %6238 = vmatmul.f32.gmra.mxu0 %v5124
    %v6239 = vpop.f32.mrf.mxu0
    %v6240 = vadd.f32 %v5829, %v6239
    %6241 = vmatmul.f32.gmra.mxu0 %v5126
    %v6242 = vpop.f32.mrf.mxu0
    %v6243 = vadd.f32 %v5832, %v6242
    %6244 = vmatmul.f32.gmra.mxu0 %v5128
    %v6245 = vpop.f32.mrf.mxu0
    %v6246 = vadd.f32 %v5835, %v6245
    %6247 = vmatmul.f32.gmra.mxu0 %v5130
    %v6248 = vpop.f32.mrf.mxu0
    %v6249 = vadd.f32 %v5838, %v6248
    %6250 = vmatmul.f32.gmra.mxu0 %v5132
    %v6251 = vpop.f32.mrf.mxu0
    %v6252 = vadd.f32 %v5841, %v6251
    %6253 = vmatmul.f32.gmra.mxu0 %v5134
    %v6254 = vpop.f32.mrf.mxu0
    %v6255 = vadd.f32 %v5844, %v6254
    %6256 = vmatmul.f32.gmra.mxu0 %v5136
    %v6257 = vpop.f32.mrf.mxu0
    %v6258 = vadd.f32 %v5847, %v6257
    %6259 = vmatmul.f32.gmra.mxu0 %v5138
    %v6260 = vpop.f32.mrf.mxu0
    %v6261 = vadd.f32 %v5850, %v6260
    %6262 = vmatmul.f32.gmra.mxu0 %v5140
    %v6263 = vpop.f32.mrf.mxu0
    %v6264 = vadd.f32 %v5853, %v6263
    %6265 = vmatmul.f32.gmra.mxu0 %v5142
    %v6266 = vpop.f32.mrf.mxu0
    %v6267 = vadd.f32 %v5856, %v6266
    %6268 = vmatmul.f32.gmra.mxu0 %v5144
    %v6269 = vpop.f32.mrf.mxu0
    %v6270 = vadd.f32 %v5859, %v6269
    %6271 = vmatmul.f32.gmra.mxu0 %v5146
    %v6272 = vpop.f32.mrf.mxu0
    %v6273 = vadd.f32 %v5862, %v6272
    %6274 = vmatmul.f32.gmra.mxu0 %v5148
    %v6275 = vpop.f32.mrf.mxu0
    %v6276 = vadd.f32 %v5865, %v6275
    %6277 = vmatmul.f32.gmra.mxu0 %v5150
    %v6278 = vpop.f32.mrf.mxu0
    %v6279 = vadd.f32 %v5868, %v6278
    %6280 = vmatmul.f32.gmra.mxu0 %v5152
    %v6281 = vpop.f32.mrf.mxu0
    %v6282 = vadd.f32 %v5871, %v6281
    %6283 = vmatmul.f32.gmra.mxu0 %v5154
    %v6284 = vpop.f32.mrf.mxu0
    %v6285 = vadd.f32 %v5874, %v6284
    %6286 = vmatmul.f32.gmra.mxu0 %v5156
    %v6287 = vpop.f32.mrf.mxu0
    %v6288 = vadd.f32 %v5877, %v6287
    %6289 = vmatmul.f32.gmra.mxu0 %v5158
    %v6290 = vpop.f32.mrf.mxu0
    %v6291 = vadd.f32 %v5880, %v6290
    %6292 = vmatmul.f32.gmra.mxu0 %v5160
    %v6293 = vpop.f32.mrf.mxu0
    %v6294 = vadd.f32 %v5883, %v6293
    %6295 = vmatmul.f32.gmra.mxu0 %v5162
    %v6296 = vpop.f32.mrf.mxu0
    %v6297 = vadd.f32 %v5886, %v6296
    %6298 = vmatmul.f32.gmra.mxu0 %v5164
    %v6299 = vpop.f32.mrf.mxu0
    %v6300 = vadd.f32 %v5889, %v6299
    %6301 = vmatmul.f32.gmra.mxu0 %v5166
    %v6302 = vpop.f32.mrf.mxu0
    %v6303 = vadd.f32 %v5892, %v6302
    %6304 = vmatmul.f32.gmra.mxu0 %v5168
    %v6305 = vpop.f32.mrf.mxu0
    %v6306 = vadd.f32 %v5895, %v6305
    %6307 = vmatmul.f32.gmra.mxu0 %v5170
    %v6308 = vpop.f32.mrf.mxu0
    %v6309 = vadd.f32 %v5898, %v6308
    %6310 = vmatmul.f32.gmra.mxu0 %v5172
    %v6311 = vpop.f32.mrf.mxu0
    %v6312 = vadd.f32 %v5901, %v6311
    %6313 = vmatmul.f32.gmra.mxu0 %v5174
    %v6314 = vpop.f32.mrf.mxu0
    %v6315 = vadd.f32 %v5904, %v6314
    %6316 = vmatmul.f32.gmra.mxu0 %v5176
    %v6317 = vpop.f32.mrf.mxu0
    %v6318 = vadd.f32 %v5907, %v6317
    %6319 = vmatmul.f32.gmra.mxu0 %v5178
    %v6320 = vpop.f32.mrf.mxu0
    %v6321 = vadd.f32 %v5910, %v6320
    %6322 = vmatmul.f32.gmra.mxu0 %v5180
    %v6323 = vpop.f32.mrf.mxu0
    %v6324 = vadd.f32 %v5913, %v6323
    %6325 = vmatmul.f32.gmra.mxu0 %v5182
    %v6326 = vpop.f32.mrf.mxu0
    %v6327 = vadd.f32 %v5916, %v6326
    %6328 = vmatmul.f32.gmra.mxu0 %v5184
    %v6329 = vpop.f32.mrf.mxu0
    %v6330 = vadd.f32 %v5919, %v6329
    %6331 = vmatmul.f32.gmra.mxu0 %v5186
    %v6332 = vpop.f32.mrf.mxu0
    %v6333 = vadd.f32 %v5922, %v6332
    %6334 = vmatmul.f32.gmra.mxu0 %v5188
    %v6335 = vpop.f32.mrf.mxu0
    %v6336 = vadd.f32 %v5925, %v6335
    %6337 = vmatmul.f32.gmra.mxu0 %v5190
    %v6338 = vpop.f32.mrf.mxu0
    %v6339 = vadd.f32 %v5928, %v6338
    %6340 = vmatmul.f32.gmra.mxu0 %v5192
    %v6341 = vpop.f32.mrf.mxu0
    %v6342 = vadd.f32 %v5931, %v6341
    %6343 = vmatmul.f32.gmra.mxu0 %v5194
    %v6344 = vpop.f32.mrf.mxu0
    %v6345 = vadd.f32 %v5934, %v6344
    %6346 = vmatmul.f32.gmra.mxu0 %v5196
    %v6347 = vpop.f32.mrf.mxu0
    %v6348 = vadd.f32 %v5937, %v6347
    %6349 = vmatmul.f32.gmra.mxu0 %v5198
    %v6350 = vpop.f32.mrf.mxu0
    %v6351 = vadd.f32 %v5940, %v6350
    %6352 = vdwg.mxu0
    %6353 = vmatpush.msra.mxu0 %v5328
    %6354 = vmatpush.msra.mxu0 %v5326
    %6355 = vmatpush.msra.mxu0 %v5324
    %6356 = vmatpush.msra.mxu0 %v5322
    %6357 = vmatpush.msra.mxu0 %v5320
    %6358 = vmatpush.msra.mxu0 %v5318
    %6359 = vmatpush.msra.mxu0 %v5316
    %6360 = vmatpush.msra.mxu0 %v5314
    %6361 = vmatpush.msra.mxu0 %v5312
    %6362 = vmatpush.msra.mxu0 %v5310
    %6363 = vmatpush.msra.mxu0 %v5308
    %6364 = vmatpush.msra.mxu0 %v5306
    %6365 = vmatpush.msra.mxu0 %v5304
    %6366 = vmatpush.msra.mxu0 %v5302
    %6367 = vmatpush.msra.mxu0 %v5300
    %6368 = vmatpush.msra.mxu0 %v5298
    %6369 = vmatmul.f32.gmra.mxu0 %v5121
    %v6370 = vpop.f32.mrf.mxu0
    %v6371 = vadd.f32 %v6234, %v6370
    %6372 = vmatmul.f32.gmra.mxu0 %v5123
    %v6373 = vpop.f32.mrf.mxu0
    %v6374 = vadd.f32 %v6237, %v6373
    %6375 = vmatmul.f32.gmra.mxu0 %v5125
    %v6376 = vpop.f32.mrf.mxu0
    %v6377 = vadd.f32 %v6240, %v6376
    %6378 = vmatmul.f32.gmra.mxu0 %v5127
    %v6379 = vpop.f32.mrf.mxu0
    %v6380 = vadd.f32 %v6243, %v6379
    %6381 = vmatmul.f32.gmra.mxu0 %v5129
    %v6382 = vpop.f32.mrf.mxu0
    %v6383 = vadd.f32 %v6246, %v6382
    %6384 = vmatmul.f32.gmra.mxu0 %v5131
    %v6385 = vpop.f32.mrf.mxu0
    %v6386 = vadd.f32 %v6249, %v6385
    %6387 = vmatmul.f32.gmra.mxu0 %v5133
    %v6388 = vpop.f32.mrf.mxu0
    %v6389 = vadd.f32 %v6252, %v6388
    %6390 = vmatmul.f32.gmra.mxu0 %v5135
    %v6391 = vpop.f32.mrf.mxu0
    %v6392 = vadd.f32 %v6255, %v6391
    %6393 = vmatmul.f32.gmra.mxu0 %v5137
    %v6394 = vpop.f32.mrf.mxu0
    %v6395 = vadd.f32 %v6258, %v6394
    %6396 = vmatmul.f32.gmra.mxu0 %v5139
    %v6397 = vpop.f32.mrf.mxu0
    %v6398 = vadd.f32 %v6261, %v6397
    %6399 = vmatmul.f32.gmra.mxu0 %v5141
    %v6400 = vpop.f32.mrf.mxu0
    %v6401 = vadd.f32 %v6264, %v6400
    %6402 = vmatmul.f32.gmra.mxu0 %v5143
    %v6403 = vpop.f32.mrf.mxu0
    %v6404 = vadd.f32 %v6267, %v6403
    %6405 = vmatmul.f32.gmra.mxu0 %v5145
    %v6406 = vpop.f32.mrf.mxu0
    %v6407 = vadd.f32 %v6270, %v6406
    %6408 = vmatmul.f32.gmra.mxu0 %v5147
    %v6409 = vpop.f32.mrf.mxu0
    %v6410 = vadd.f32 %v6273, %v6409
    %6411 = vmatmul.f32.gmra.mxu0 %v5149
    %v6412 = vpop.f32.mrf.mxu0
    %v6413 = vadd.f32 %v6276, %v6412
    %6414 = vmatmul.f32.gmra.mxu0 %v5151
    %v6415 = vpop.f32.mrf.mxu0
    %v6416 = vadd.f32 %v6279, %v6415
    %6417 = vmatmul.f32.gmra.mxu0 %v5153
    %v6418 = vpop.f32.mrf.mxu0
    %v6419 = vadd.f32 %v6282, %v6418
    %6420 = vmatmul.f32.gmra.mxu0 %v5155
    %v6421 = vpop.f32.mrf.mxu0
    %v6422 = vadd.f32 %v6285, %v6421
    %6423 = vmatmul.f32.gmra.mxu0 %v5157
    %v6424 = vpop.f32.mrf.mxu0
    %v6425 = vadd.f32 %v6288, %v6424
    %6426 = vmatmul.f32.gmra.mxu0 %v5159
    %v6427 = vpop.f32.mrf.mxu0
    %v6428 = vadd.f32 %v6291, %v6427
    %6429 = vmatmul.f32.gmra.mxu0 %v5161
    %v6430 = vpop.f32.mrf.mxu0
    %v6431 = vadd.f32 %v6294, %v6430
    %6432 = vmatmul.f32.gmra.mxu0 %v5163
    %v6433 = vpop.f32.mrf.mxu0
    %v6434 = vadd.f32 %v6297, %v6433
    %6435 = vmatmul.f32.gmra.mxu0 %v5165
    %v6436 = vpop.f32.mrf.mxu0
    %v6437 = vadd.f32 %v6300, %v6436
    %6438 = vmatmul.f32.gmra.mxu0 %v5167
    %v6439 = vpop.f32.mrf.mxu0
    %v6440 = vadd.f32 %v6303, %v6439
    %6441 = vmatmul.f32.gmra.mxu0 %v5169
    %v6442 = vpop.f32.mrf.mxu0
    %v6443 = vadd.f32 %v6306, %v6442
    %6444 = vmatmul.f32.gmra.mxu0 %v5171
    %v6445 = vpop.f32.mrf.mxu0
    %v6446 = vadd.f32 %v6309, %v6445
    %6447 = vmatmul.f32.gmra.mxu0 %v5173
    %v6448 = vpop.f32.mrf.mxu0
    %v6449 = vadd.f32 %v6312, %v6448
    %6450 = vmatmul.f32.gmra.mxu0 %v5175
    %v6451 = vpop.f32.mrf.mxu0
    %v6452 = vadd.f32 %v6315, %v6451
    %6453 = vmatmul.f32.gmra.mxu0 %v5177
    %v6454 = vpop.f32.mrf.mxu0
    %v6455 = vadd.f32 %v6318, %v6454
    %6456 = vmatmul.f32.gmra.mxu0 %v5179
    %v6457 = vpop.f32.mrf.mxu0
    %v6458 = vadd.f32 %v6321, %v6457
    %6459 = vmatmul.f32.gmra.mxu0 %v5181
    %v6460 = vpop.f32.mrf.mxu0
    %v6461 = vadd.f32 %v6324, %v6460
    %6462 = vmatmul.f32.gmra.mxu0 %v5183
    %v6463 = vpop.f32.mrf.mxu0
    %v6464 = vadd.f32 %v6327, %v6463
    %6465 = vmatmul.f32.gmra.mxu0 %v5185
    %v6466 = vpop.f32.mrf.mxu0
    %v6467 = vadd.f32 %v6330, %v6466
    %6468 = vmatmul.f32.gmra.mxu0 %v5187
    %v6469 = vpop.f32.mrf.mxu0
    %v6470 = vadd.f32 %v6333, %v6469
    %6471 = vmatmul.f32.gmra.mxu0 %v5189
    %v6472 = vpop.f32.mrf.mxu0
    %v6473 = vadd.f32 %v6336, %v6472
    %6474 = vmatmul.f32.gmra.mxu0 %v5191
    %v6475 = vpop.f32.mrf.mxu0
    %v6476 = vadd.f32 %v6339, %v6475
    %6477 = vmatmul.f32.gmra.mxu0 %v5193
    %v6478 = vpop.f32.mrf.mxu0
    %v6479 = vadd.f32 %v6342, %v6478
    %6480 = vmatmul.f32.gmra.mxu0 %v5195
    %v6481 = vpop.f32.mrf.mxu0
    %v6482 = vadd.f32 %v6345, %v6481
    %6483 = vmatmul.f32.gmra.mxu0 %v5197
    %v6484 = vpop.f32.mrf.mxu0
    %v6485 = vadd.f32 %v6348, %v6484
    %6486 = vmatmul.f32.gmra.mxu0 %v5199
    %v6487 = vpop.f32.mrf.mxu0
    %v6488 = vadd.f32 %v6351, %v6487
    %6489 = vdwg.mxu0
    %6490 = vmatpush.msra.mxu0 %v5360
    %6491 = vmatpush.msra.mxu0 %v5358
    %6492 = vmatpush.msra.mxu0 %v5356
    %6493 = vmatpush.msra.mxu0 %v5354
    %6494 = vmatpush.msra.mxu0 %v5352
    %6495 = vmatpush.msra.mxu0 %v5350
    %6496 = vmatpush.msra.mxu0 %v5348
    %6497 = vmatpush.msra.mxu0 %v5346
    %6498 = vmatpush.msra.mxu0 %v5344
    %6499 = vmatpush.msra.mxu0 %v5342
    %6500 = vmatpush.msra.mxu0 %v5340
    %6501 = vmatpush.msra.mxu0 %v5338
    %6502 = vmatpush.msra.mxu0 %v5336
    %6503 = vmatpush.msra.mxu0 %v5334
    %6504 = vmatpush.msra.mxu0 %v5332
    %6505 = vmatpush.msra.mxu0 %v5330
    %6506 = vmatmul.f32.gmra.mxu0 %v5122
    %v6507 = vpop.f32.mrf.mxu0
    %v6508 = vadd.f32 0.0, %v6507
    %6509 = vmatmul.f32.gmra.mxu0 %v5124
    %v6510 = vpop.f32.mrf.mxu0
    %v6511 = vadd.f32 0.0, %v6510
    %6512 = vmatmul.f32.gmra.mxu0 %v5126
    %v6513 = vpop.f32.mrf.mxu0
    %v6514 = vadd.f32 0.0, %v6513
    %6515 = vmatmul.f32.gmra.mxu0 %v5128
    %v6516 = vpop.f32.mrf.mxu0
    %v6517 = vadd.f32 0.0, %v6516
    %6518 = vmatmul.f32.gmra.mxu0 %v5130
    %v6519 = vpop.f32.mrf.mxu0
    %v6520 = vadd.f32 0.0, %v6519
    %6521 = vmatmul.f32.gmra.mxu0 %v5132
    %v6522 = vpop.f32.mrf.mxu0
    %v6523 = vadd.f32 0.0, %v6522
    %6524 = vmatmul.f32.gmra.mxu0 %v5134
    %v6525 = vpop.f32.mrf.mxu0
    %v6526 = vadd.f32 0.0, %v6525
    %6527 = vmatmul.f32.gmra.mxu0 %v5136
    %v6528 = vpop.f32.mrf.mxu0
    %v6529 = vadd.f32 0.0, %v6528
    %6530 = vmatmul.f32.gmra.mxu0 %v5138
    %v6531 = vpop.f32.mrf.mxu0
    %v6532 = vadd.f32 0.0, %v6531
    %6533 = vmatmul.f32.gmra.mxu0 %v5140
    %v6534 = vpop.f32.mrf.mxu0
    %v6535 = vadd.f32 0.0, %v6534
    %6536 = vmatmul.f32.gmra.mxu0 %v5142
    %v6537 = vpop.f32.mrf.mxu0
    %v6538 = vadd.f32 0.0, %v6537
    %6539 = vmatmul.f32.gmra.mxu0 %v5144
    %v6540 = vpop.f32.mrf.mxu0
    %v6541 = vadd.f32 0.0, %v6540
    %6542 = vmatmul.f32.gmra.mxu0 %v5146
    %v6543 = vpop.f32.mrf.mxu0
    %v6544 = vadd.f32 0.0, %v6543
    %6545 = vmatmul.f32.gmra.mxu0 %v5148
    %v6546 = vpop.f32.mrf.mxu0
    %v6547 = vadd.f32 0.0, %v6546
    %6548 = vmatmul.f32.gmra.mxu0 %v5150
    %v6549 = vpop.f32.mrf.mxu0
    %v6550 = vadd.f32 0.0, %v6549
    %6551 = vmatmul.f32.gmra.mxu0 %v5152
    %v6552 = vpop.f32.mrf.mxu0
    %v6553 = vadd.f32 0.0, %v6552
    %6554 = vmatmul.f32.gmra.mxu0 %v5154
    %v6555 = vpop.f32.mrf.mxu0
    %v6556 = vadd.f32 0.0, %v6555
    %6557 = vmatmul.f32.gmra.mxu0 %v5156
    %v6558 = vpop.f32.mrf.mxu0
    %v6559 = vadd.f32 0.0, %v6558
    %6560 = vmatmul.f32.gmra.mxu0 %v5158
    %v6561 = vpop.f32.mrf.mxu0
    %v6562 = vadd.f32 0.0, %v6561
    %6563 = vmatmul.f32.gmra.mxu0 %v5160
    %v6564 = vpop.f32.mrf.mxu0
    %v6565 = vadd.f32 0.0, %v6564
    %6566 = vmatmul.f32.gmra.mxu0 %v5162
    %v6567 = vpop.f32.mrf.mxu0
    %v6568 = vadd.f32 0.0, %v6567
    %6569 = vmatmul.f32.gmra.mxu0 %v5164
    %v6570 = vpop.f32.mrf.mxu0
    %v6571 = vadd.f32 0.0, %v6570
    %6572 = vmatmul.f32.gmra.mxu0 %v5166
    %v6573 = vpop.f32.mrf.mxu0
    %v6574 = vadd.f32 0.0, %v6573
    %6575 = vmatmul.f32.gmra.mxu0 %v5168
    %v6576 = vpop.f32.mrf.mxu0
    %v6577 = vadd.f32 0.0, %v6576
    %6578 = vmatmul.f32.gmra.mxu0 %v5170
    %v6579 = vpop.f32.mrf.mxu0
    %v6580 = vadd.f32 0.0, %v6579
    %6581 = vmatmul.f32.gmra.mxu0 %v5172
    %v6582 = vpop.f32.mrf.mxu0
    %v6583 = vadd.f32 0.0, %v6582
    %6584 = vmatmul.f32.gmra.mxu0 %v5174
    %v6585 = vpop.f32.mrf.mxu0
    %v6586 = vadd.f32 0.0, %v6585
    %6587 = vmatmul.f32.gmra.mxu0 %v5176
    %v6588 = vpop.f32.mrf.mxu0
    %v6589 = vadd.f32 0.0, %v6588
    %6590 = vmatmul.f32.gmra.mxu0 %v5178
    %v6591 = vpop.f32.mrf.mxu0
    %v6592 = vadd.f32 0.0, %v6591
    %6593 = vmatmul.f32.gmra.mxu0 %v5180
    %v6594 = vpop.f32.mrf.mxu0
    %v6595 = vadd.f32 0.0, %v6594
    %6596 = vmatmul.f32.gmra.mxu0 %v5182
    %v6597 = vpop.f32.mrf.mxu0
    %v6598 = vadd.f32 0.0, %v6597
    %6599 = vmatmul.f32.gmra.mxu0 %v5184
    %v6600 = vpop.f32.mrf.mxu0
    %v6601 = vadd.f32 0.0, %v6600
    %6602 = vmatmul.f32.gmra.mxu0 %v5186
    %v6603 = vpop.f32.mrf.mxu0
    %v6604 = vadd.f32 0.0, %v6603
    %6605 = vmatmul.f32.gmra.mxu0 %v5188
    %v6606 = vpop.f32.mrf.mxu0
    %v6607 = vadd.f32 0.0, %v6606
    %6608 = vmatmul.f32.gmra.mxu0 %v5190
    %v6609 = vpop.f32.mrf.mxu0
    %v6610 = vadd.f32 0.0, %v6609
    %6611 = vmatmul.f32.gmra.mxu0 %v5192
    %v6612 = vpop.f32.mrf.mxu0
    %v6613 = vadd.f32 0.0, %v6612
    %6614 = vmatmul.f32.gmra.mxu0 %v5194
    %v6615 = vpop.f32.mrf.mxu0
    %v6616 = vadd.f32 0.0, %v6615
    %6617 = vmatmul.f32.gmra.mxu0 %v5196
    %v6618 = vpop.f32.mrf.mxu0
    %v6619 = vadd.f32 0.0, %v6618
    %6620 = vmatmul.f32.gmra.mxu0 %v5198
    %v6621 = vpop.f32.mrf.mxu0
    %v6622 = vadd.f32 0.0, %v6621
    %6623 = vmatmul.f32.gmra.mxu0 0.0
    %v6624 = vpop.f32.mrf.mxu0
    %v6625 = vadd.f32 0.0, %v6624
    %6626 = vdwg.mxu0
    %6627 = vmatpush.msra.mxu0 %v5392
    %6628 = vmatpush.msra.mxu0 %v5390
    %6629 = vmatpush.msra.mxu0 %v5388
    %6630 = vmatpush.msra.mxu0 %v5386
    %6631 = vmatpush.msra.mxu0 %v5384
    %6632 = vmatpush.msra.mxu0 %v5382
    %6633 = vmatpush.msra.mxu0 %v5380
    %6634 = vmatpush.msra.mxu0 %v5378
    %6635 = vmatpush.msra.mxu0 %v5376
    %6636 = vmatpush.msra.mxu0 %v5374
    %6637 = vmatpush.msra.mxu0 %v5372
    %6638 = vmatpush.msra.mxu0 %v5370
    %6639 = vmatpush.msra.mxu0 %v5368
    %6640 = vmatpush.msra.mxu0 %v5366
    %6641 = vmatpush.msra.mxu0 %v5364
    %6642 = vmatpush.msra.mxu0 %v5362
    %6643 = vmatmul.f32.gmra.mxu0 %v5123
    %v6644 = vpop.f32.mrf.mxu0
    %v6645 = vadd.f32 %v6508, %v6644
    %6646 = vmatmul.f32.gmra.mxu0 %v5125
    %v6647 = vpop.f32.mrf.mxu0
    %v6648 = vadd.f32 %v6511, %v6647
    %6649 = vmatmul.f32.gmra.mxu0 %v5127
    %v6650 = vpop.f32.mrf.mxu0
    %v6651 = vadd.f32 %v6514, %v6650
    %6652 = vmatmul.f32.gmra.mxu0 %v5129
    %v6653 = vpop.f32.mrf.mxu0
    %v6654 = vadd.f32 %v6517, %v6653
    %6655 = vmatmul.f32.gmra.mxu0 %v5131
    %v6656 = vpop.f32.mrf.mxu0
    %v6657 = vadd.f32 %v6520, %v6656
    %6658 = vmatmul.f32.gmra.mxu0 %v5133
    %v6659 = vpop.f32.mrf.mxu0
    %v6660 = vadd.f32 %v6523, %v6659
    %6661 = vmatmul.f32.gmra.mxu0 %v5135
    %v6662 = vpop.f32.mrf.mxu0
    %v6663 = vadd.f32 %v6526, %v6662
    %6664 = vmatmul.f32.gmra.mxu0 %v5137
    %v6665 = vpop.f32.mrf.mxu0
    %v6666 = vadd.f32 %v6529, %v6665
    %6667 = vmatmul.f32.gmra.mxu0 %v5139
    %v6668 = vpop.f32.mrf.mxu0
    %v6669 = vadd.f32 %v6532, %v6668
    %6670 = vmatmul.f32.gmra.mxu0 %v5141
    %v6671 = vpop.f32.mrf.mxu0
    %v6672 = vadd.f32 %v6535, %v6671
    %6673 = vmatmul.f32.gmra.mxu0 %v5143
    %v6674 = vpop.f32.mrf.mxu0
    %v6675 = vadd.f32 %v6538, %v6674
    %6676 = vmatmul.f32.gmra.mxu0 %v5145
    %v6677 = vpop.f32.mrf.mxu0
    %v6678 = vadd.f32 %v6541, %v6677
    %6679 = vmatmul.f32.gmra.mxu0 %v5147
    %v6680 = vpop.f32.mrf.mxu0
    %v6681 = vadd.f32 %v6544, %v6680
    %6682 = vmatmul.f32.gmra.mxu0 %v5149
    %v6683 = vpop.f32.mrf.mxu0
    %v6684 = vadd.f32 %v6547, %v6683
    %6685 = vmatmul.f32.gmra.mxu0 %v5151
    %v6686 = vpop.f32.mrf.mxu0
    %v6687 = vadd.f32 %v6550, %v6686
    %6688 = vmatmul.f32.gmra.mxu0 %v5153
    %v6689 = vpop.f32.mrf.mxu0
    %v6690 = vadd.f32 %v6553, %v6689
    %6691 = vmatmul.f32.gmra.mxu0 %v5155
    %v6692 = vpop.f32.mrf.mxu0
    %v6693 = vadd.f32 %v6556, %v6692
    %6694 = vmatmul.f32.gmra.mxu0 %v5157
    %v6695 = vpop.f32.mrf.mxu0
    %v6696 = vadd.f32 %v6559, %v6695
    %6697 = vmatmul.f32.gmra.mxu0 %v5159
    %v6698 = vpop.f32.mrf.mxu0
    %v6699 = vadd.f32 %v6562, %v6698
    %6700 = vmatmul.f32.gmra.mxu0 %v5161
    %v6701 = vpop.f32.mrf.mxu0
    %v6702 = vadd.f32 %v6565, %v6701
    %6703 = vmatmul.f32.gmra.mxu0 %v5163
    %v6704 = vpop.f32.mrf.mxu0
    %v6705 = vadd.f32 %v6568, %v6704
    %6706 = vmatmul.f32.gmra.mxu0 %v5165
    %v6707 = vpop.f32.mrf.mxu0
    %v6708 = vadd.f32 %v6571, %v6707
    %6709 = vmatmul.f32.gmra.mxu0 %v5167
    %v6710 = vpop.f32.mrf.mxu0
    %v6711 = vadd.f32 %v6574, %v6710
    %6712 = vmatmul.f32.gmra.mxu0 %v5169
    %v6713 = vpop.f32.mrf.mxu0
    %v6714 = vadd.f32 %v6577, %v6713
    %6715 = vmatmul.f32.gmra.mxu0 %v5171
    %v6716 = vpop.f32.mrf.mxu0
    %v6717 = vadd.f32 %v6580, %v6716
    %6718 = vmatmul.f32.gmra.mxu0 %v5173
    %v6719 = vpop.f32.mrf.mxu0
    %v6720 = vadd.f32 %v6583, %v6719
    %6721 = vmatmul.f32.gmra.mxu0 %v5175
    %v6722 = vpop.f32.mrf.mxu0
    %v6723 = vadd.f32 %v6586, %v6722
    %6724 = vmatmul.f32.gmra.mxu0 %v5177
    %v6725 = vpop.f32.mrf.mxu0
    %v6726 = vadd.f32 %v6589, %v6725
    %6727 = vmatmul.f32.gmra.mxu0 %v5179
    %v6728 = vpop.f32.mrf.mxu0
    %v6729 = vadd.f32 %v6592, %v6728
    %6730 = vmatmul.f32.gmra.mxu0 %v5181
    %v6731 = vpop.f32.mrf.mxu0
    %v6732 = vadd.f32 %v6595, %v6731
    %6733 = vmatmul.f32.gmra.mxu0 %v5183
    %v6734 = vpop.f32.mrf.mxu0
    %v6735 = vadd.f32 %v6598, %v6734
    %6736 = vmatmul.f32.gmra.mxu0 %v5185
    %v6737 = vpop.f32.mrf.mxu0
    %v6738 = vadd.f32 %v6601, %v6737
    %6739 = vmatmul.f32.gmra.mxu0 %v5187
    %v6740 = vpop.f32.mrf.mxu0
    %v6741 = vadd.f32 %v6604, %v6740
    %6742 = vmatmul.f32.gmra.mxu0 %v5189
    %v6743 = vpop.f32.mrf.mxu0
    %v6744 = vadd.f32 %v6607, %v6743
    %6745 = vmatmul.f32.gmra.mxu0 %v5191
    %v6746 = vpop.f32.mrf.mxu0
    %v6747 = vadd.f32 %v6610, %v6746
    %6748 = vmatmul.f32.gmra.mxu0 %v5193
    %v6749 = vpop.f32.mrf.mxu0
    %v6750 = vadd.f32 %v6613, %v6749
    %6751 = vmatmul.f32.gmra.mxu0 %v5195
    %v6752 = vpop.f32.mrf.mxu0
    %v6753 = vadd.f32 %v6616, %v6752
    %6754 = vmatmul.f32.gmra.mxu0 %v5197
    %v6755 = vpop.f32.mrf.mxu0
    %v6756 = vadd.f32 %v6619, %v6755
    %6757 = vmatmul.f32.gmra.mxu0 %v5199
    %v6758 = vpop.f32.mrf.mxu0
    %v6759 = vadd.f32 %v6622, %v6758
    %6760 = vmatmul.f32.gmra.mxu0 0.0
    %v6761 = vpop.f32.mrf.mxu0
    %v6762 = vadd.f32 %v6625, %v6761
    %6763 = vdwg.mxu0
    %6764 = vmatpush.msra.mxu0 %v5361
    %6765 = vmatpush.msra.mxu0 %v5359
    %6766 = vmatpush.msra.mxu0 %v5357
    %6767 = vmatpush.msra.mxu0 %v5355
    %6768 = vmatpush.msra.mxu0 %v5353
    %6769 = vmatpush.msra.mxu0 %v5351
    %6770 = vmatpush.msra.mxu0 %v5349
    %6771 = vmatpush.msra.mxu0 %v5347
    %6772 = vmatpush.msra.mxu0 %v5345
    %6773 = vmatpush.msra.mxu0 %v5343
    %6774 = vmatpush.msra.mxu0 %v5341
    %6775 = vmatpush.msra.mxu0 %v5339
    %6776 = vmatpush.msra.mxu0 %v5337
    %6777 = vmatpush.msra.mxu0 %v5335
    %6778 = vmatpush.msra.mxu0 %v5333
    %6779 = vmatpush.msra.mxu0 %v5331
    %6780 = vmatmul.f32.gmra.mxu0 %v5122
    %v6781 = vpop.f32.mrf.mxu0
    %v6782 = vadd.f32 0.0, %v6781
    %6783 = vmatmul.f32.gmra.mxu0 %v5124
    %v6784 = vpop.f32.mrf.mxu0
    %v6785 = vadd.f32 0.0, %v6784
    %6786 = vmatmul.f32.gmra.mxu0 %v5126
    %v6787 = vpop.f32.mrf.mxu0
    %v6788 = vadd.f32 0.0, %v6787
    %6789 = vmatmul.f32.gmra.mxu0 %v5128
    %v6790 = vpop.f32.mrf.mxu0
    %v6791 = vadd.f32 0.0, %v6790
    %6792 = vmatmul.f32.gmra.mxu0 %v5130
    %v6793 = vpop.f32.mrf.mxu0
    %v6794 = vadd.f32 0.0, %v6793
    %6795 = vmatmul.f32.gmra.mxu0 %v5132
    %v6796 = vpop.f32.mrf.mxu0
    %v6797 = vadd.f32 0.0, %v6796
    %6798 = vmatmul.f32.gmra.mxu0 %v5134
    %v6799 = vpop.f32.mrf.mxu0
    %v6800 = vadd.f32 0.0, %v6799
    %6801 = vmatmul.f32.gmra.mxu0 %v5136
    %v6802 = vpop.f32.mrf.mxu0
    %v6803 = vadd.f32 0.0, %v6802
    %6804 = vmatmul.f32.gmra.mxu0 %v5138
    %v6805 = vpop.f32.mrf.mxu0
    %v6806 = vadd.f32 0.0, %v6805
    %6807 = vmatmul.f32.gmra.mxu0 %v5140
    %v6808 = vpop.f32.mrf.mxu0
    %v6809 = vadd.f32 0.0, %v6808
    %6810 = vmatmul.f32.gmra.mxu0 %v5142
    %v6811 = vpop.f32.mrf.mxu0
    %v6812 = vadd.f32 0.0, %v6811
    %6813 = vmatmul.f32.gmra.mxu0 %v5144
    %v6814 = vpop.f32.mrf.mxu0
    %v6815 = vadd.f32 0.0, %v6814
    %6816 = vmatmul.f32.gmra.mxu0 %v5146
    %v6817 = vpop.f32.mrf.mxu0
    %v6818 = vadd.f32 0.0, %v6817
    %6819 = vmatmul.f32.gmra.mxu0 %v5148
    %v6820 = vpop.f32.mrf.mxu0
    %v6821 = vadd.f32 0.0, %v6820
    %6822 = vmatmul.f32.gmra.mxu0 %v5150
    %v6823 = vpop.f32.mrf.mxu0
    %v6824 = vadd.f32 0.0, %v6823
    %6825 = vmatmul.f32.gmra.mxu0 %v5152
    %v6826 = vpop.f32.mrf.mxu0
    %v6827 = vadd.f32 0.0, %v6826
    %6828 = vmatmul.f32.gmra.mxu0 %v5154
    %v6829 = vpop.f32.mrf.mxu0
    %v6830 = vadd.f32 0.0, %v6829
    %6831 = vmatmul.f32.gmra.mxu0 %v5156
    %v6832 = vpop.f32.mrf.mxu0
    %v6833 = vadd.f32 0.0, %v6832
    %6834 = vmatmul.f32.gmra.mxu0 %v5158
    %v6835 = vpop.f32.mrf.mxu0
    %v6836 = vadd.f32 0.0, %v6835
    %6837 = vmatmul.f32.gmra.mxu0 %v5160
    %v6838 = vpop.f32.mrf.mxu0
    %v6839 = vadd.f32 0.0, %v6838
    %6840 = vmatmul.f32.gmra.mxu0 %v5162
    %v6841 = vpop.f32.mrf.mxu0
    %v6842 = vadd.f32 0.0, %v6841
    %6843 = vmatmul.f32.gmra.mxu0 %v5164
    %v6844 = vpop.f32.mrf.mxu0
    %v6845 = vadd.f32 0.0, %v6844
    %6846 = vmatmul.f32.gmra.mxu0 %v5166
    %v6847 = vpop.f32.mrf.mxu0
    %v6848 = vadd.f32 0.0, %v6847
    %6849 = vmatmul.f32.gmra.mxu0 %v5168
    %v6850 = vpop.f32.mrf.mxu0
    %v6851 = vadd.f32 0.0, %v6850
    %6852 = vmatmul.f32.gmra.mxu0 %v5170
    %v6853 = vpop.f32.mrf.mxu0
    %v6854 = vadd.f32 0.0, %v6853
    %6855 = vmatmul.f32.gmra.mxu0 %v5172
    %v6856 = vpop.f32.mrf.mxu0
    %v6857 = vadd.f32 0.0, %v6856
    %6858 = vmatmul.f32.gmra.mxu0 %v5174
    %v6859 = vpop.f32.mrf.mxu0
    %v6860 = vadd.f32 0.0, %v6859
    %6861 = vmatmul.f32.gmra.mxu0 %v5176
    %v6862 = vpop.f32.mrf.mxu0
    %v6863 = vadd.f32 0.0, %v6862
    %6864 = vmatmul.f32.gmra.mxu0 %v5178
    %v6865 = vpop.f32.mrf.mxu0
    %v6866 = vadd.f32 0.0, %v6865
    %6867 = vmatmul.f32.gmra.mxu0 %v5180
    %v6868 = vpop.f32.mrf.mxu0
    %v6869 = vadd.f32 0.0, %v6868
    %6870 = vmatmul.f32.gmra.mxu0 %v5182
    %v6871 = vpop.f32.mrf.mxu0
    %v6872 = vadd.f32 0.0, %v6871
    %6873 = vmatmul.f32.gmra.mxu0 %v5184
    %v6874 = vpop.f32.mrf.mxu0
    %v6875 = vadd.f32 0.0, %v6874
    %6876 = vmatmul.f32.gmra.mxu0 %v5186
    %v6877 = vpop.f32.mrf.mxu0
    %v6878 = vadd.f32 0.0, %v6877
    %6879 = vmatmul.f32.gmra.mxu0 %v5188
    %v6880 = vpop.f32.mrf.mxu0
    %v6881 = vadd.f32 0.0, %v6880
    %6882 = vmatmul.f32.gmra.mxu0 %v5190
    %v6883 = vpop.f32.mrf.mxu0
    %v6884 = vadd.f32 0.0, %v6883
    %6885 = vmatmul.f32.gmra.mxu0 %v5192
    %v6886 = vpop.f32.mrf.mxu0
    %v6887 = vadd.f32 0.0, %v6886
    %6888 = vmatmul.f32.gmra.mxu0 %v5194
    %v6889 = vpop.f32.mrf.mxu0
    %v6890 = vadd.f32 0.0, %v6889
    %6891 = vmatmul.f32.gmra.mxu0 %v5196
    %v6892 = vpop.f32.mrf.mxu0
    %v6893 = vadd.f32 0.0, %v6892
    %6894 = vmatmul.f32.gmra.mxu0 %v5198
    %v6895 = vpop.f32.mrf.mxu0
    %v6896 = vadd.f32 0.0, %v6895
    %6897 = vmatmul.f32.gmra.mxu0 0.0
    %v6898 = vpop.f32.mrf.mxu0
    %v6899 = vadd.f32 0.0, %v6898
    %6900 = vdwg.mxu0
    %6901 = vmatpush.msra.mxu0 %v5393
    %6902 = vmatpush.msra.mxu0 %v5391
    %6903 = vmatpush.msra.mxu0 %v5389
    %6904 = vmatpush.msra.mxu0 %v5387
    %6905 = vmatpush.msra.mxu0 %v5385
    %6906 = vmatpush.msra.mxu0 %v5383
    %6907 = vmatpush.msra.mxu0 %v5381
    %6908 = vmatpush.msra.mxu0 %v5379
    %6909 = vmatpush.msra.mxu0 %v5377
    %6910 = vmatpush.msra.mxu0 %v5375
    %6911 = vmatpush.msra.mxu0 %v5373
    %6912 = vmatpush.msra.mxu0 %v5371
    %6913 = vmatpush.msra.mxu0 %v5369
    %6914 = vmatpush.msra.mxu0 %v5367
    %6915 = vmatpush.msra.mxu0 %v5365
    %6916 = vmatpush.msra.mxu0 %v5363
    %6917 = vmatmul.f32.gmra.mxu0 %v5123
    %v6918 = vpop.f32.mrf.mxu0
    %v6919 = vadd.f32 %v6782, %v6918
    %6920 = vmatmul.f32.gmra.mxu0 %v5125
    %v6921 = vpop.f32.mrf.mxu0
    %v6922 = vadd.f32 %v6785, %v6921
    %6923 = vmatmul.f32.gmra.mxu0 %v5127
    %v6924 = vpop.f32.mrf.mxu0
    %v6925 = vadd.f32 %v6788, %v6924
    %6926 = vmatmul.f32.gmra.mxu0 %v5129
    %v6927 = vpop.f32.mrf.mxu0
    %v6928 = vadd.f32 %v6791, %v6927
    %6929 = vmatmul.f32.gmra.mxu0 %v5131
    %v6930 = vpop.f32.mrf.mxu0
    %v6931 = vadd.f32 %v6794, %v6930
    %6932 = vmatmul.f32.gmra.mxu0 %v5133
    %v6933 = vpop.f32.mrf.mxu0
    %v6934 = vadd.f32 %v6797, %v6933
    %6935 = vmatmul.f32.gmra.mxu0 %v5135
    %v6936 = vpop.f32.mrf.mxu0
    %v6937 = vadd.f32 %v6800, %v6936
    %6938 = vmatmul.f32.gmra.mxu0 %v5137
    %v6939 = vpop.f32.mrf.mxu0
    %v6940 = vadd.f32 %v6803, %v6939
    %6941 = vmatmul.f32.gmra.mxu0 %v5139
    %v6942 = vpop.f32.mrf.mxu0
    %v6943 = vadd.f32 %v6806, %v6942
    %6944 = vmatmul.f32.gmra.mxu0 %v5141
    %v6945 = vpop.f32.mrf.mxu0
    %v6946 = vadd.f32 %v6809, %v6945
    %6947 = vmatmul.f32.gmra.mxu0 %v5143
    %v6948 = vpop.f32.mrf.mxu0
    %v6949 = vadd.f32 %v6812, %v6948
    %6950 = vmatmul.f32.gmra.mxu0 %v5145
    %v6951 = vpop.f32.mrf.mxu0
    %v6952 = vadd.f32 %v6815, %v6951
    %6953 = vmatmul.f32.gmra.mxu0 %v5147
    %v6954 = vpop.f32.mrf.mxu0
    %v6955 = vadd.f32 %v6818, %v6954
    %6956 = vmatmul.f32.gmra.mxu0 %v5149
    %v6957 = vpop.f32.mrf.mxu0
    %v6958 = vadd.f32 %v6821, %v6957
    %6959 = vmatmul.f32.gmra.mxu0 %v5151
    %v6960 = vpop.f32.mrf.mxu0
    %v6961 = vadd.f32 %v6824, %v6960
    %6962 = vmatmul.f32.gmra.mxu0 %v5153
    %v6963 = vpop.f32.mrf.mxu0
    %v6964 = vadd.f32 %v6827, %v6963
    %6965 = vmatmul.f32.gmra.mxu0 %v5155
    %v6966 = vpop.f32.mrf.mxu0
    %v6967 = vadd.f32 %v6830, %v6966
    %6968 = vmatmul.f32.gmra.mxu0 %v5157
    %v6969 = vpop.f32.mrf.mxu0
    %v6970 = vadd.f32 %v6833, %v6969
    %6971 = vmatmul.f32.gmra.mxu0 %v5159
    %v6972 = vpop.f32.mrf.mxu0
    %v6973 = vadd.f32 %v6836, %v6972
    %6974 = vmatmul.f32.gmra.mxu0 %v5161
    %v6975 = vpop.f32.mrf.mxu0
    %v6976 = vadd.f32 %v6839, %v6975
    %6977 = vmatmul.f32.gmra.mxu0 %v5163
    %v6978 = vpop.f32.mrf.mxu0
    %v6979 = vadd.f32 %v6842, %v6978
    %6980 = vmatmul.f32.gmra.mxu0 %v5165
    %v6981 = vpop.f32.mrf.mxu0
    %v6982 = vadd.f32 %v6845, %v6981
    %6983 = vmatmul.f32.gmra.mxu0 %v5167
    %v6984 = vpop.f32.mrf.mxu0
    %v6985 = vadd.f32 %v6848, %v6984
    %6986 = vmatmul.f32.gmra.mxu0 %v5169
    %v6987 = vpop.f32.mrf.mxu0
    %v6988 = vadd.f32 %v6851, %v6987
    %6989 = vmatmul.f32.gmra.mxu0 %v5171
    %v6990 = vpop.f32.mrf.mxu0
    %v6991 = vadd.f32 %v6854, %v6990
    %6992 = vmatmul.f32.gmra.mxu0 %v5173
    %v6993 = vpop.f32.mrf.mxu0
    %v6994 = vadd.f32 %v6857, %v6993
    %6995 = vmatmul.f32.gmra.mxu0 %v5175
    %v6996 = vpop.f32.mrf.mxu0
    %v6997 = vadd.f32 %v6860, %v6996
    %6998 = vmatmul.f32.gmra.mxu0 %v5177
    %v6999 = vpop.f32.mrf.mxu0
    %v7000 = vadd.f32 %v6863, %v6999
    %7001 = vmatmul.f32.gmra.mxu0 %v5179
    %v7002 = vpop.f32.mrf.mxu0
    %v7003 = vadd.f32 %v6866, %v7002
    %7004 = vmatmul.f32.gmra.mxu0 %v5181
    %v7005 = vpop.f32.mrf.mxu0
    %v7006 = vadd.f32 %v6869, %v7005
    %7007 = vmatmul.f32.gmra.mxu0 %v5183
    %v7008 = vpop.f32.mrf.mxu0
    %v7009 = vadd.f32 %v6872, %v7008
    %7010 = vmatmul.f32.gmra.mxu0 %v5185
    %v7011 = vpop.f32.mrf.mxu0
    %v7012 = vadd.f32 %v6875, %v7011
    %7013 = vmatmul.f32.gmra.mxu0 %v5187
    %v7014 = vpop.f32.mrf.mxu0
    %v7015 = vadd.f32 %v6878, %v7014
    %7016 = vmatmul.f32.gmra.mxu0 %v5189
    %v7017 = vpop.f32.mrf.mxu0
    %v7018 = vadd.f32 %v6881, %v7017
    %7019 = vmatmul.f32.gmra.mxu0 %v5191
    %v7020 = vpop.f32.mrf.mxu0
    %v7021 = vadd.f32 %v6884, %v7020
    %7022 = vmatmul.f32.gmra.mxu0 %v5193
    %v7023 = vpop.f32.mrf.mxu0
    %v7024 = vadd.f32 %v6887, %v7023
    %7025 = vmatmul.f32.gmra.mxu0 %v5195
    %v7026 = vpop.f32.mrf.mxu0
    %v7027 = vadd.f32 %v6890, %v7026
    %7028 = vmatmul.f32.gmra.mxu0 %v5197
    %v7029 = vpop.f32.mrf.mxu0
    %v7030 = vadd.f32 %v6893, %v7029
    %7031 = vmatmul.f32.gmra.mxu0 %v5199
    %v7032 = vpop.f32.mrf.mxu0
    %v7033 = vadd.f32 %v6896, %v7032
    %7034 = vmatmul.f32.gmra.mxu0 0.0
    %v7035 = vpop.f32.mrf.mxu0
    %v7036 = vadd.f32 %v6899, %v7035
    %7037 = vdwg.mxu0
    %v7038 = vadd.f32 %v6097, %v6645
    %v7039 = vadd.f32 %v6371, %v6919
    %v7040 = vadd.f32 %v6100, %v6648
    %v7041 = vadd.f32 %v6374, %v6922
    %v7042 = vadd.f32 %v6103, %v6651
    %v7043 = vadd.f32 %v6377, %v6925
    %v7044 = vadd.f32 %v6106, %v6654
    %v7045 = vadd.f32 %v6380, %v6928
    %v7046 = vadd.f32 %v6109, %v6657
    %v7047 = vadd.f32 %v6383, %v6931
    %v7048 = vadd.f32 %v6112, %v6660
    %v7049 = vadd.f32 %v6386, %v6934
    %v7050 = vadd.f32 %v6115, %v6663
    %v7051 = vadd.f32 %v6389, %v6937
    %v7052 = vadd.f32 %v6118, %v6666
    %v7053 = vadd.f32 %v6392, %v6940
    %v7054 = vadd.f32 %v6121, %v6669
    %v7055 = vadd.f32 %v6395, %v6943
    %v7056 = vadd.f32 %v6124, %v6672
    %v7057 = vadd.f32 %v6398, %v6946
    %v7058 = vadd.f32 %v6127, %v6675
    %v7059 = vadd.f32 %v6401, %v6949
    %v7060 = vadd.f32 %v6130, %v6678
    %v7061 = vadd.f32 %v6404, %v6952
    %v7062 = vadd.f32 %v6133, %v6681
    %v7063 = vadd.f32 %v6407, %v6955
    %v7064 = vadd.f32 %v6136, %v6684
    %v7065 = vadd.f32 %v6410, %v6958
    %v7066 = vadd.f32 %v6139, %v6687
    %v7067 = vadd.f32 %v6413, %v6961
    %v7068 = vadd.f32 %v6142, %v6690
    %v7069 = vadd.f32 %v6416, %v6964
    %v7070 = vadd.f32 %v6145, %v6693
    %v7071 = vadd.f32 %v6419, %v6967
    %v7072 = vadd.f32 %v6148, %v6696
    %v7073 = vadd.f32 %v6422, %v6970
    %v7074 = vadd.f32 %v6151, %v6699
    %v7075 = vadd.f32 %v6425, %v6973
    %v7076 = vadd.f32 %v6154, %v6702
    %v7077 = vadd.f32 %v6428, %v6976
    %v7078 = vadd.f32 %v6157, %v6705
    %v7079 = vadd.f32 %v6431, %v6979
    %v7080 = vadd.f32 %v6160, %v6708
    %v7081 = vadd.f32 %v6434, %v6982
    %v7082 = vadd.f32 %v6163, %v6711
    %v7083 = vadd.f32 %v6437, %v6985
    %v7084 = vadd.f32 %v6166, %v6714
    %v7085 = vadd.f32 %v6440, %v6988
    %v7086 = vadd.f32 %v6169, %v6717
    %v7087 = vadd.f32 %v6443, %v6991
    %v7088 = vadd.f32 %v6172, %v6720
    %v7089 = vadd.f32 %v6446, %v6994
    %v7090 = vadd.f32 %v6175, %v6723
    %v7091 = vadd.f32 %v6449, %v6997
    %v7092 = vadd.f32 %v6178, %v6726
    %v7093 = vadd.f32 %v6452, %v7000
    %v7094 = vadd.f32 %v6181, %v6729
    %v7095 = vadd.f32 %v6455, %v7003
    %v7096 = vadd.f32 %v6184, %v6732
    %v7097 = vadd.f32 %v6458, %v7006
    %v7098 = vadd.f32 %v6187, %v6735
    %v7099 = vadd.f32 %v6461, %v7009
    %v7100 = vadd.f32 %v6190, %v6738
    %v7101 = vadd.f32 %v6464, %v7012
    %v7102 = vadd.f32 %v6193, %v6741
    %v7103 = vadd.f32 %v6467, %v7015
    %v7104 = vadd.f32 %v6196, %v6744
    %v7105 = vadd.f32 %v6470, %v7018
    %v7106 = vadd.f32 %v6199, %v6747
    %v7107 = vadd.f32 %v6473, %v7021
    %v7108 = vadd.f32 %v6202, %v6750
    %v7109 = vadd.f32 %v6476, %v7024
    %v7110 = vadd.f32 %v6205, %v6753
    %v7111 = vadd.f32 %v6479, %v7027
    %v7112 = vadd.f32 %v6208, %v6756
    %v7113 = vadd.f32 %v6482, %v7030
    %v7114 = vadd.f32 %v6211, %v6759
    %v7115 = vadd.f32 %v6485, %v7033
    %v7116 = vadd.f32 %v6214, %v6762
    %v7117 = vadd.f32 %v6488, %v7036
    %v7118 = vld [vmem:[#allocation13] sm:$0x3]
    %v7120 = vperm.slane %v7118, 0
    %v7121 = vperm.slane %v7118, 1
    %v7124 = vadd.f32 %v7038, %v7120
    %v7125 = vadd.f32 %v7039, %v7121
    %v7126 = vadd.f32 %v7040, %v7120
    %v7127 = vadd.f32 %v7041, %v7121
    %v7128 = vadd.f32 %v7042, %v7120
    %v7129 = vadd.f32 %v7043, %v7121
    %v7130 = vadd.f32 %v7044, %v7120
    %v7131 = vadd.f32 %v7045, %v7121
    %v7132 = vadd.f32 %v7046, %v7120
    %v7133 = vadd.f32 %v7047, %v7121
    %v7134 = vadd.f32 %v7048, %v7120
    %v7135 = vadd.f32 %v7049, %v7121
    %v7136 = vadd.f32 %v7050, %v7120
    %v7137 = vadd.f32 %v7051, %v7121
    %v7138 = vadd.f32 %v7052, %v7120
    %v7139 = vadd.f32 %v7053, %v7121
    %v7140 = vadd.f32 %v7054, %v7120
    %v7141 = vadd.f32 %v7055, %v7121
    %v7142 = vadd.f32 %v7056, %v7120
    %v7143 = vadd.f32 %v7057, %v7121
    %v7144 = vadd.f32 %v7058, %v7120
    %v7145 = vadd.f32 %v7059, %v7121
    %v7146 = vadd.f32 %v7060, %v7120
    %v7147 = vadd.f32 %v7061, %v7121
    %v7148 = vadd.f32 %v7062, %v7120
    %v7149 = vadd.f32 %v7063, %v7121
    %v7150 = vadd.f32 %v7064, %v7120
    %v7151 = vadd.f32 %v7065, %v7121
    %v7152 = vadd.f32 %v7066, %v7120
    %v7153 = vadd.f32 %v7067, %v7121
    %v7154 = vadd.f32 %v7068, %v7120
    %v7155 = vadd.f32 %v7069, %v7121
    %v7156 = vadd.f32 %v7070, %v7120
    %v7157 = vadd.f32 %v7071, %v7121
    %v7158 = vadd.f32 %v7072, %v7120
    %v7159 = vadd.f32 %v7073, %v7121
    %v7160 = vadd.f32 %v7074, %v7120
    %v7161 = vadd.f32 %v7075, %v7121
    %v7162 = vadd.f32 %v7076, %v7120
    %v7163 = vadd.f32 %v7077, %v7121
    %v7164 = vadd.f32 %v7078, %v7120
    %v7165 = vadd.f32 %v7079, %v7121
    %v7166 = vadd.f32 %v7080, %v7120
    %v7167 = vadd.f32 %v7081, %v7121
    %v7168 = vadd.f32 %v7082, %v7120
    %v7169 = vadd.f32 %v7083, %v7121
    %v7170 = vadd.f32 %v7084, %v7120
    %v7171 = vadd.f32 %v7085, %v7121
    %v7172 = vadd.f32 %v7086, %v7120
    %v7173 = vadd.f32 %v7087, %v7121
    %v7174 = vadd.f32 %v7088, %v7120
    %v7175 = vadd.f32 %v7089, %v7121
    %v7176 = vadd.f32 %v7090, %v7120
    %v7177 = vadd.f32 %v7091, %v7121
    %v7178 = vadd.f32 %v7092, %v7120
    %v7179 = vadd.f32 %v7093, %v7121
    %v7180 = vadd.f32 %v7094, %v7120
    %v7181 = vadd.f32 %v7095, %v7121
    %v7182 = vadd.f32 %v7096, %v7120
    %v7183 = vadd.f32 %v7097, %v7121
    %v7184 = vadd.f32 %v7098, %v7120
    %v7185 = vadd.f32 %v7099, %v7121
    %v7186 = vadd.f32 %v7100, %v7120
    %v7187 = vadd.f32 %v7101, %v7121
    %v7188 = vadd.f32 %v7102, %v7120
    %v7189 = vadd.f32 %v7103, %v7121
    %v7190 = vadd.f32 %v7104, %v7120
    %v7191 = vadd.f32 %v7105, %v7121
    %v7192 = vadd.f32 %v7106, %v7120
    %v7193 = vadd.f32 %v7107, %v7121
    %v7194 = vadd.f32 %v7108, %v7120
    %v7195 = vadd.f32 %v7109, %v7121
    %v7196 = vadd.f32 %v7110, %v7120
    %v7197 = vadd.f32 %v7111, %v7121
    %v7198 = vadd.f32 %v7112, %v7120
    %v7199 = vadd.f32 %v7113, %v7121
    %v7200 = vadd.f32 %v7114, %v7120
    %v7201 = vadd.f32 %v7115, %v7121
    %v7202 = vadd.f32 %v7116, %v7120
    %v7203 = vadd.f32 %v7117, %v7121
    %vm7204 = vcmp.gt.f32.partialorder %v7124, 0.0
    %vm7205 = vcmp.gt.f32.partialorder %v7125, 0.0
    %vm7206 = vcmp.gt.f32.partialorder %v7126, 0.0
    %vm7207 = vcmp.gt.f32.partialorder %v7127, 0.0
    %vm7208 = vcmp.gt.f32.partialorder %v7128, 0.0
    %vm7209 = vcmp.gt.f32.partialorder %v7129, 0.0
    %vm7210 = vcmp.gt.f32.partialorder %v7130, 0.0
    %vm7211 = vcmp.gt.f32.partialorder %v7131, 0.0
    %vm7212 = vcmp.gt.f32.partialorder %v7132, 0.0
    %vm7213 = vcmp.gt.f32.partialorder %v7133, 0.0
    %vm7214 = vcmp.gt.f32.partialorder %v7134, 0.0
    %vm7215 = vcmp.gt.f32.partialorder %v7135, 0.0
    %vm7216 = vcmp.gt.f32.partialorder %v7136, 0.0
    %vm7217 = vcmp.gt.f32.partialorder %v7137, 0.0
    %vm7218 = vcmp.gt.f32.partialorder %v7138, 0.0
    %vm7219 = vcmp.gt.f32.partialorder %v7139, 0.0
    %vm7220 = vcmp.gt.f32.partialorder %v7140, 0.0
    %vm7221 = vcmp.gt.f32.partialorder %v7141, 0.0
    %vm7222 = vcmp.gt.f32.partialorder %v7142, 0.0
    %vm7223 = vcmp.gt.f32.partialorder %v7143, 0.0
    %vm7224 = vcmp.gt.f32.partialorder %v7144, 0.0
    %vm7225 = vcmp.gt.f32.partialorder %v7145, 0.0
    %vm7226 = vcmp.gt.f32.partialorder %v7146, 0.0
    %vm7227 = vcmp.gt.f32.partialorder %v7147, 0.0
    %vm7228 = vcmp.gt.f32.partialorder %v7148, 0.0
    %vm7229 = vcmp.gt.f32.partialorder %v7149, 0.0
    %vm7230 = vcmp.gt.f32.partialorder %v7150, 0.0
    %vm7231 = vcmp.gt.f32.partialorder %v7151, 0.0
    %vm7232 = vcmp.gt.f32.partialorder %v7152, 0.0
    %vm7233 = vcmp.gt.f32.partialorder %v7153, 0.0
    %vm7234 = vcmp.gt.f32.partialorder %v7154, 0.0
    %vm7235 = vcmp.gt.f32.partialorder %v7155, 0.0
    %vm7236 = vcmp.gt.f32.partialorder %v7156, 0.0
    %vm7237 = vcmp.gt.f32.partialorder %v7157, 0.0
    %vm7238 = vcmp.gt.f32.partialorder %v7158, 0.0
    %vm7239 = vcmp.gt.f32.partialorder %v7159, 0.0
    %vm7240 = vcmp.gt.f32.partialorder %v7160, 0.0
    %vm7241 = vcmp.gt.f32.partialorder %v7161, 0.0
    %vm7242 = vcmp.gt.f32.partialorder %v7162, 0.0
    %vm7243 = vcmp.gt.f32.partialorder %v7163, 0.0
    %vm7244 = vcmp.gt.f32.partialorder %v7164, 0.0
    %vm7245 = vcmp.gt.f32.partialorder %v7165, 0.0
    %vm7246 = vcmp.gt.f32.partialorder %v7166, 0.0
    %vm7247 = vcmp.gt.f32.partialorder %v7167, 0.0
    %vm7248 = vcmp.gt.f32.partialorder %v7168, 0.0
    %vm7249 = vcmp.gt.f32.partialorder %v7169, 0.0
    %vm7250 = vcmp.gt.f32.partialorder %v7170, 0.0
    %vm7251 = vcmp.gt.f32.partialorder %v7171, 0.0
    %vm7252 = vcmp.gt.f32.partialorder %v7172, 0.0
    %vm7253 = vcmp.gt.f32.partialorder %v7173, 0.0
    %vm7254 = vcmp.gt.f32.partialorder %v7174, 0.0
    %vm7255 = vcmp.gt.f32.partialorder %v7175, 0.0
    %vm7256 = vcmp.gt.f32.partialorder %v7176, 0.0
    %vm7257 = vcmp.gt.f32.partialorder %v7177, 0.0
    %vm7258 = vcmp.gt.f32.partialorder %v7178, 0.0
    %vm7259 = vcmp.gt.f32.partialorder %v7179, 0.0
    %vm7260 = vcmp.gt.f32.partialorder %v7180, 0.0
    %vm7261 = vcmp.gt.f32.partialorder %v7181, 0.0
    %vm7262 = vcmp.gt.f32.partialorder %v7182, 0.0
    %vm7263 = vcmp.gt.f32.partialorder %v7183, 0.0
    %vm7264 = vcmp.gt.f32.partialorder %v7184, 0.0
    %vm7265 = vcmp.gt.f32.partialorder %v7185, 0.0
    %vm7266 = vcmp.gt.f32.partialorder %v7186, 0.0
    %vm7267 = vcmp.gt.f32.partialorder %v7187, 0.0
    %vm7268 = vcmp.gt.f32.partialorder %v7188, 0.0
    %vm7269 = vcmp.gt.f32.partialorder %v7189, 0.0
    %vm7270 = vcmp.gt.f32.partialorder %v7190, 0.0
    %vm7271 = vcmp.gt.f32.partialorder %v7191, 0.0
    %vm7272 = vcmp.gt.f32.partialorder %v7192, 0.0
    %vm7273 = vcmp.gt.f32.partialorder %v7193, 0.0
    %vm7274 = vcmp.gt.f32.partialorder %v7194, 0.0
    %vm7275 = vcmp.gt.f32.partialorder %v7195, 0.0
    %vm7276 = vcmp.gt.f32.partialorder %v7196, 0.0
    %vm7277 = vcmp.gt.f32.partialorder %v7197, 0.0
    %vm7278 = vcmp.gt.f32.partialorder %v7198, 0.0
    %vm7279 = vcmp.gt.f32.partialorder %v7199, 0.0
    %vm7280 = vcmp.gt.f32.partialorder %v7200, 0.0
    %vm7281 = vcmp.gt.f32.partialorder %v7201, 0.0
    %vm7282 = vcmp.gt.f32.partialorder %v7202, 0.0
    %vm7283 = vcmp.gt.f32.partialorder %v7203, 0.0
    %v7284 = vmul.f32 %v7124, 0.01
    %v7285 = vmul.f32 %v7125, 0.01
    %v7286 = vmul.f32 %v7126, 0.01
    %v7287 = vmul.f32 %v7127, 0.01
    %v7288 = vmul.f32 %v7128, 0.01
    %v7289 = vmul.f32 %v7129, 0.01
    %v7290 = vmul.f32 %v7130, 0.01
    %v7291 = vmul.f32 %v7131, 0.01
    %v7292 = vmul.f32 %v7132, 0.01
    %v7293 = vmul.f32 %v7133, 0.01
    %v7294 = vmul.f32 %v7134, 0.01
    %v7295 = vmul.f32 %v7135, 0.01
    %v7296 = vmul.f32 %v7136, 0.01
    %v7297 = vmul.f32 %v7137, 0.01
    %v7298 = vmul.f32 %v7138, 0.01
    %v7299 = vmul.f32 %v7139, 0.01
    %v7300 = vmul.f32 %v7140, 0.01
    %v7301 = vmul.f32 %v7141, 0.01
    %v7302 = vmul.f32 %v7142, 0.01
    %v7303 = vmul.f32 %v7143, 0.01
    %v7304 = vmul.f32 %v7144, 0.01
    %v7305 = vmul.f32 %v7145, 0.01
    %v7306 = vmul.f32 %v7146, 0.01
    %v7307 = vmul.f32 %v7147, 0.01
    %v7308 = vmul.f32 %v7148, 0.01
    %v7309 = vmul.f32 %v7149, 0.01
    %v7310 = vmul.f32 %v7150, 0.01
    %v7311 = vmul.f32 %v7151, 0.01
    %v7312 = vmul.f32 %v7152, 0.01
    %v7313 = vmul.f32 %v7153, 0.01
    %v7314 = vmul.f32 %v7154, 0.01
    %v7315 = vmul.f32 %v7155, 0.01
    %v7316 = vmul.f32 %v7156, 0.01
    %v7317 = vmul.f32 %v7157, 0.01
    %v7318 = vmul.f32 %v7158, 0.01
    %v7319 = vmul.f32 %v7159, 0.01
    %v7320 = vmul.f32 %v7160, 0.01
    %v7321 = vmul.f32 %v7161, 0.01
    %v7322 = vmul.f32 %v7162, 0.01
    %v7323 = vmul.f32 %v7163, 0.01
    %v7324 = vmul.f32 %v7164, 0.01
    %v7325 = vmul.f32 %v7165, 0.01
    %v7326 = vmul.f32 %v7166, 0.01
    %v7327 = vmul.f32 %v7167, 0.01
    %v7328 = vmul.f32 %v7168, 0.01
    %v7329 = vmul.f32 %v7169, 0.01
    %v7330 = vmul.f32 %v7170, 0.01
    %v7331 = vmul.f32 %v7171, 0.01
    %v7332 = vmul.f32 %v7172, 0.01
    %v7333 = vmul.f32 %v7173, 0.01
    %v7334 = vmul.f32 %v7174, 0.01
    %v7335 = vmul.f32 %v7175, 0.01
    %v7336 = vmul.f32 %v7176, 0.01
    %v7337 = vmul.f32 %v7177, 0.01
    %v7338 = vmul.f32 %v7178, 0.01
    %v7339 = vmul.f32 %v7179, 0.01
    %v7340 = vmul.f32 %v7180, 0.01
    %v7341 = vmul.f32 %v7181, 0.01
    %v7342 = vmul.f32 %v7182, 0.01
    %v7343 = vmul.f32 %v7183, 0.01
    %v7344 = vmul.f32 %v7184, 0.01
    %v7345 = vmul.f32 %v7185, 0.01
    %v7346 = vmul.f32 %v7186, 0.01
    %v7347 = vmul.f32 %v7187, 0.01
    %v7348 = vmul.f32 %v7188, 0.01
    %v7349 = vmul.f32 %v7189, 0.01
    %v7350 = vmul.f32 %v7190, 0.01
    %v7351 = vmul.f32 %v7191, 0.01
    %v7352 = vmul.f32 %v7192, 0.01
    %v7353 = vmul.f32 %v7193, 0.01
    %v7354 = vmul.f32 %v7194, 0.01
    %v7355 = vmul.f32 %v7195, 0.01
    %v7356 = vmul.f32 %v7196, 0.01
    %v7357 = vmul.f32 %v7197, 0.01
    %v7358 = vmul.f32 %v7198, 0.01
    %v7359 = vmul.f32 %v7199, 0.01
    %v7360 = vmul.f32 %v7200, 0.01
    %v7361 = vmul.f32 %v7201, 0.01
    %v7362 = vmul.f32 %v7202, 0.01
    %v7363 = vmul.f32 %v7203, 0.01
    %v7364 = vsel %vm7204, %v7124, %v7284
    %v7365 = vsel %vm7205, %v7125, %v7285
    %v7366 = vsel %vm7206, %v7126, %v7286
    %v7367 = vsel %vm7207, %v7127, %v7287
    %v7368 = vsel %vm7208, %v7128, %v7288
    %v7369 = vsel %vm7209, %v7129, %v7289
    %v7370 = vsel %vm7210, %v7130, %v7290
    %v7371 = vsel %vm7211, %v7131, %v7291
    %v7372 = vsel %vm7212, %v7132, %v7292
    %v7373 = vsel %vm7213, %v7133, %v7293
    %v7374 = vsel %vm7214, %v7134, %v7294
    %v7375 = vsel %vm7215, %v7135, %v7295
    %v7376 = vsel %vm7216, %v7136, %v7296
    %v7377 = vsel %vm7217, %v7137, %v7297
    %v7378 = vsel %vm7218, %v7138, %v7298
    %v7379 = vsel %vm7219, %v7139, %v7299
    %v7380 = vsel %vm7220, %v7140, %v7300
    %v7381 = vsel %vm7221, %v7141, %v7301
    %v7382 = vsel %vm7222, %v7142, %v7302
    %v7383 = vsel %vm7223, %v7143, %v7303
    %v7384 = vsel %vm7224, %v7144, %v7304
    %v7385 = vsel %vm7225, %v7145, %v7305
    %v7386 = vsel %vm7226, %v7146, %v7306
    %v7387 = vsel %vm7227, %v7147, %v7307
    %v7388 = vsel %vm7228, %v7148, %v7308
    %v7389 = vsel %vm7229, %v7149, %v7309
    %v7390 = vsel %vm7230, %v7150, %v7310
    %v7391 = vsel %vm7231, %v7151, %v7311
    %v7392 = vsel %vm7232, %v7152, %v7312
    %v7393 = vsel %vm7233, %v7153, %v7313
    %v7394 = vsel %vm7234, %v7154, %v7314
    %v7395 = vsel %vm7235, %v7155, %v7315
    %v7396 = vsel %vm7236, %v7156, %v7316
    %v7397 = vsel %vm7237, %v7157, %v7317
    %v7398 = vsel %vm7238, %v7158, %v7318
    %v7399 = vsel %vm7239, %v7159, %v7319
    %v7400 = vsel %vm7240, %v7160, %v7320
    %v7401 = vsel %vm7241, %v7161, %v7321
    %v7402 = vsel %vm7242, %v7162, %v7322
    %v7403 = vsel %vm7243, %v7163, %v7323
    %v7404 = vsel %vm7244, %v7164, %v7324
    %v7405 = vsel %vm7245, %v7165, %v7325
    %v7406 = vsel %vm7246, %v7166, %v7326
    %v7407 = vsel %vm7247, %v7167, %v7327
    %v7408 = vsel %vm7248, %v7168, %v7328
    %v7409 = vsel %vm7249, %v7169, %v7329
    %v7410 = vsel %vm7250, %v7170, %v7330
    %v7411 = vsel %vm7251, %v7171, %v7331
    %v7412 = vsel %vm7252, %v7172, %v7332
    %v7413 = vsel %vm7253, %v7173, %v7333
    %v7414 = vsel %vm7254, %v7174, %v7334
    %v7415 = vsel %vm7255, %v7175, %v7335
    %v7416 = vsel %vm7256, %v7176, %v7336
    %v7417 = vsel %vm7257, %v7177, %v7337
    %v7418 = vsel %vm7258, %v7178, %v7338
    %v7419 = vsel %vm7259, %v7179, %v7339
    %v7420 = vsel %vm7260, %v7180, %v7340
    %v7421 = vsel %vm7261, %v7181, %v7341
    %v7422 = vsel %vm7262, %v7182, %v7342
    %v7423 = vsel %vm7263, %v7183, %v7343
    %v7424 = vsel %vm7264, %v7184, %v7344
    %v7425 = vsel %vm7265, %v7185, %v7345
    %v7426 = vsel %vm7266, %v7186, %v7346
    %v7427 = vsel %vm7267, %v7187, %v7347
    %v7428 = vsel %vm7268, %v7188, %v7348
    %v7429 = vsel %vm7269, %v7189, %v7349
    %v7430 = vsel %vm7270, %v7190, %v7350
    %v7431 = vsel %vm7271, %v7191, %v7351
    %v7432 = vsel %vm7272, %v7192, %v7352
    %v7433 = vsel %vm7273, %v7193, %v7353
    %v7434 = vsel %vm7274, %v7194, %v7354
    %v7435 = vsel %vm7275, %v7195, %v7355
    %v7436 = vsel %vm7276, %v7196, %v7356
    %v7437 = vsel %vm7277, %v7197, %v7357
    %v7438 = vsel %vm7278, %v7198, %v7358
    %v7439 = vsel %vm7279, %v7199, %v7359
    %v7440 = vsel %vm7280, %v7200, %v7360
    %v7441 = vsel %vm7281, %v7201, %v7361
    %v7442 = vsel %vm7282, %v7202, %v7362
    %v7443 = vsel %vm7283, %v7203, %v7363
    %v7444 = vmax.f32 %v7364, %v7365
    %v7445 = vmax.f32 %v7366, %v7367
    %v7446 = vmax.f32 %v7368, %v7369
    %v7447 = vmax.f32 %v7370, %v7371
    %v7448 = vmax.f32 %v7372, %v7373
    %v7449 = vmax.f32 %v7374, %v7375
    %v7450 = vmax.f32 %v7376, %v7377
    %v7451 = vmax.f32 %v7378, %v7379
    %v7452 = vmax.f32 %v7380, %v7381
    %v7453 = vmax.f32 %v7382, %v7383
    %v7454 = vmax.f32 %v7384, %v7385
    %v7455 = vmax.f32 %v7386, %v7387
    %v7456 = vmax.f32 %v7388, %v7389
    %v7457 = vmax.f32 %v7390, %v7391
    %v7458 = vmax.f32 %v7392, %v7393
    %v7459 = vmax.f32 %v7394, %v7395
    %v7460 = vmax.f32 %v7396, %v7397
    %v7461 = vmax.f32 %v7398, %v7399
    %v7462 = vmax.f32 %v7400, %v7401
    %v7463 = vmax.f32 %v7402, %v7403
    %v7464 = vmax.f32 %v7404, %v7405
    %v7465 = vmax.f32 %v7406, %v7407
    %v7466 = vmax.f32 %v7408, %v7409
    %v7467 = vmax.f32 %v7410, %v7411
    %v7468 = vmax.f32 %v7412, %v7413
    %v7469 = vmax.f32 %v7414, %v7415
    %v7470 = vmax.f32 %v7416, %v7417
    %v7471 = vmax.f32 %v7418, %v7419
    %v7472 = vmax.f32 %v7420, %v7421
    %v7473 = vmax.f32 %v7422, %v7423
    %v7474 = vmax.f32 %v7424, %v7425
    %v7475 = vmax.f32 %v7426, %v7427
    %v7476 = vmax.f32 %v7428, %v7429
    %v7477 = vmax.f32 %v7430, %v7431
    %v7478 = vmax.f32 %v7432, %v7433
    %v7479 = vmax.f32 %v7434, %v7435
    %v7480 = vmax.f32 %v7436, %v7437
    %v7481 = vmax.f32 %v7438, %v7439
    %v7482 = vmax.f32 %v7440, %v7441
    %v7483 = vmax.f32 %v7442, %v7443
    %v7484 = vld [vmem:[#allocation15] sm:$0xff]
    %v7485 = vld [vmem:[#allocation15 + $0x8] sm:$0xff]
    %v7486 = vld [vmem:[#allocation15 + $0x10] sm:$0xff]
    %v7487 = vld [vmem:[#allocation15 + $0x18] sm:$0xff]
    %v7488 = vld [vmem:[#allocation15 + $0x20] sm:$0xff]
    %v7489 = vld [vmem:[#allocation15 + $0x28] sm:$0xff]
    %v7490 = vld [vmem:[#allocation15 + $0x30] sm:$0xff]
    %v7491 = vld [vmem:[#allocation15 + $0x38] sm:$0xff]
    %v7492 = vld [vmem:[#allocation15 + $0x40] sm:$0xff]
    %v7493 = vld [vmem:[#allocation15 + $0x48] sm:$0xff]
    %v7494 = vld [vmem:[#allocation15 + $0x50] sm:$0xff]
    %v7495 = vld [vmem:[#allocation15 + $0x58] sm:$0xff]
    %v7496 = vld [vmem:[#allocation15 + $0x60] sm:$0xff]
    %v7497 = vld [vmem:[#allocation15 + $0x68] sm:$0xff]
    %v7498 = vld [vmem:[#allocation15 + $0x70] sm:$0xff]
    %v7499 = vld [vmem:[#allocation15 + $0x78] sm:$0xff]
    %v7500 = vld [vmem:[#allocation15 + $0x80] sm:$0xff]
    %v7501 = vld [vmem:[#allocation15 + $0x88] sm:$0xff]
    %v7502 = vld [vmem:[#allocation15 + $0x90] sm:$0xff]
    %v7503 = vld [vmem:[#allocation15 + $0x98] sm:$0xff]
    %v7504 = vld [vmem:[#allocation15 + $0xa0] sm:$0xff]
    %v7505 = vld [vmem:[#allocation15 + $0xa8] sm:$0xff]
    %v7506 = vld [vmem:[#allocation15 + $0xb0] sm:$0xff]
    %v7507 = vld [vmem:[#allocation15 + $0xb8] sm:$0xff]
    %v7508 = vld [vmem:[#allocation15 + $0xc0] sm:$0xff]
    %v7509 = vld [vmem:[#allocation15 + $0xc8] sm:$0xff]
    %v7510 = vld [vmem:[#allocation15 + $0xd0] sm:$0xff]
    %v7511 = vld [vmem:[#allocation15 + $0xd8] sm:$0xff]
    %v7512 = vld [vmem:[#allocation15 + $0xe0] sm:$0xff]
    %v7513 = vld [vmem:[#allocation15 + $0xe8] sm:$0xff]
    %v7514 = vld [vmem:[#allocation15 + $0xf0] sm:$0xff]
    %v7515 = vld [vmem:[#allocation15 + $0xf8] sm:$0xff]
    %v7516 = vld [vmem:[#allocation15 + $0x100] sm:$0xff]
    %v7517 = vld [vmem:[#allocation15 + $0x108] sm:$0xff]
    %v7518 = vld [vmem:[#allocation15 + $0x110] sm:$0xff]
    %v7519 = vld [vmem:[#allocation15 + $0x118] sm:$0xff]
    %v7520 = vld [vmem:[#allocation15 + $0x120] sm:$0xff]
    %v7521 = vld [vmem:[#allocation15 + $0x128] sm:$0xff]
    %v7522 = vld [vmem:[#allocation15 + $0x130] sm:$0xff]
    %v7523 = vld [vmem:[#allocation15 + $0x138] sm:$0xff]
    %v7524 = vld [vmem:[#allocation15 + $0x140] sm:$0xff]
    %v7525 = vld [vmem:[#allocation15 + $0x148] sm:$0xff]
    %v7526 = vld [vmem:[#allocation15 + $0x150] sm:$0xff]
    %v7527 = vld [vmem:[#allocation15 + $0x158] sm:$0xff]
    %v7528 = vld [vmem:[#allocation15 + $0x160] sm:$0xff]
    %v7529 = vld [vmem:[#allocation15 + $0x168] sm:$0xff]
    %v7530 = vld [vmem:[#allocation15 + $0x170] sm:$0xff]
    %v7531 = vld [vmem:[#allocation15 + $0x178] sm:$0xff]
    %v7532 = vld [vmem:[#allocation15 + $0x180] sm:$0xff]
    %v7533 = vld [vmem:[#allocation15 + $0x188] sm:$0xff]
    %v7534 = vld [vmem:[#allocation15 + $0x190] sm:$0xff]
    %v7535 = vld [vmem:[#allocation15 + $0x198] sm:$0xff]
    %v7536 = vld [vmem:[#allocation15 + $0x1a0] sm:$0xff]
    %v7537 = vld [vmem:[#allocation15 + $0x1a8] sm:$0xff]
    %v7538 = vld [vmem:[#allocation15 + $0x1b0] sm:$0xff]
    %v7539 = vld [vmem:[#allocation15 + $0x1b8] sm:$0xff]
    %v7540 = vld [vmem:[#allocation15 + $0x1c0] sm:$0xff]
    %v7541 = vld [vmem:[#allocation15 + $0x1c8] sm:$0xff]
    %v7542 = vld [vmem:[#allocation15 + $0x1d0] sm:$0xff]
    %v7543 = vld [vmem:[#allocation15 + $0x1d8] sm:$0xff]
    %v7544 = vld [vmem:[#allocation15 + $0x1e0] sm:$0xff]
    %v7545 = vld [vmem:[#allocation15 + $0x1e8] sm:$0xff]
    %v7546 = vld [vmem:[#allocation15 + $0x1f0] sm:$0xff]
    %v7547 = vld [vmem:[#allocation15 + $0x1f8] sm:$0xff]
    %v7548 = vld [vmem:[#allocation15 + $0x200] sm:$0xff]
    %v7549 = vld [vmem:[#allocation15 + $0x208] sm:$0xff]
    %v7550 = vld [vmem:[#allocation15 + $0x210] sm:$0xff]
    %v7551 = vld [vmem:[#allocation15 + $0x218] sm:$0xff]
    %v7552 = vld [vmem:[#allocation15 + $0x220] sm:$0xff]
    %v7553 = vld [vmem:[#allocation15 + $0x228] sm:$0xff]
    %v7554 = vld [vmem:[#allocation15 + $0x230] sm:$0xff]
    %v7555 = vld [vmem:[#allocation15 + $0x238] sm:$0xff]
    %v7556 = vld [vmem:[#allocation15 + $0x240] sm:$0xff]
    %v7557 = vld [vmem:[#allocation15 + $0x248] sm:$0xff]
    %v7558 = vld [vmem:[#allocation15 + $0x250] sm:$0xff]
    %v7559 = vld [vmem:[#allocation15 + $0x258] sm:$0xff]
    %v7560 = vld [vmem:[#allocation15 + $0x260] sm:$0xff]
    %v7561 = vld [vmem:[#allocation15 + $0x268] sm:$0xff]
    %v7562 = vld [vmem:[#allocation15 + $0x270] sm:$0xff]
    %v7563 = vld [vmem:[#allocation15 + $0x278] sm:$0xff]
    %v7564 = vld [vmem:[#allocation15 + $0x280] sm:$0xff]
    %v7565 = vld [vmem:[#allocation15 + $0x288] sm:$0xff]
    %v7566 = vld [vmem:[#allocation15 + $0x290] sm:$0xff]
    %v7567 = vld [vmem:[#allocation15 + $0x298] sm:$0xff]
    %v7568 = vld [vmem:[#allocation15 + $0x2a0] sm:$0xff]
    %v7569 = vld [vmem:[#allocation15 + $0x2a8] sm:$0xff]
    %v7570 = vld [vmem:[#allocation15 + $0x2b0] sm:$0xff]
    %v7571 = vld [vmem:[#allocation15 + $0x2b8] sm:$0xff]
    %v7572 = vld [vmem:[#allocation15 + $0x2c0] sm:$0xff]
    %v7573 = vld [vmem:[#allocation15 + $0x2c8] sm:$0xff]
    %v7574 = vld [vmem:[#allocation15 + $0x2d0] sm:$0xff]
    %v7575 = vld [vmem:[#allocation15 + $0x2d8] sm:$0xff]
    %v7576 = vld [vmem:[#allocation15 + $0x2e0] sm:$0xff]
    %v7577 = vld [vmem:[#allocation15 + $0x2e8] sm:$0xff]
    %v7578 = vld [vmem:[#allocation15 + $0x2f0] sm:$0xff]
    %v7579 = vld [vmem:[#allocation15 + $0x2f8] sm:$0xff]
    %v7580 = vld [vmem:[#allocation15 + $0x300] sm:$0xff]
    %v7581 = vld [vmem:[#allocation15 + $0x308] sm:$0xff]
    %v7582 = vld [vmem:[#allocation15 + $0x310] sm:$0xff]
    %v7583 = vld [vmem:[#allocation15 + $0x318] sm:$0xff]
    %v7584 = vld [vmem:[#allocation15 + $0x320] sm:$0xff]
    %v7585 = vld [vmem:[#allocation15 + $0x328] sm:$0xff]
    %v7586 = vld [vmem:[#allocation15 + $0x330] sm:$0xff]
    %v7587 = vld [vmem:[#allocation15 + $0x338] sm:$0xff]
    %v7588 = vld [vmem:[#allocation15 + $0x340] sm:$0xff]
    %v7589 = vld [vmem:[#allocation15 + $0x348] sm:$0xff]
    %v7590 = vld [vmem:[#allocation15 + $0x350] sm:$0xff]
    %v7591 = vld [vmem:[#allocation15 + $0x358] sm:$0xff]
    %v7592 = vld [vmem:[#allocation15 + $0x360] sm:$0xff]
    %v7593 = vld [vmem:[#allocation15 + $0x368] sm:$0xff]
    %v7594 = vld [vmem:[#allocation15 + $0x370] sm:$0xff]
    %v7595 = vld [vmem:[#allocation15 + $0x378] sm:$0xff]
    %v7596 = vld [vmem:[#allocation15 + $0x380] sm:$0xff]
    %v7597 = vld [vmem:[#allocation15 + $0x388] sm:$0xff]
    %v7598 = vld [vmem:[#allocation15 + $0x390] sm:$0xff]
    %v7599 = vld [vmem:[#allocation15 + $0x398] sm:$0xff]
    %v7600 = vld [vmem:[#allocation15 + $0x3a0] sm:$0xff]
    %v7601 = vld [vmem:[#allocation15 + $0x3a8] sm:$0xff]
    %v7602 = vld [vmem:[#allocation15 + $0x3b0] sm:$0xff]
    %v7603 = vld [vmem:[#allocation15 + $0x3b8] sm:$0xff]
    %v7604 = vld [vmem:[#allocation15 + $0x3c0] sm:$0xff]
    %v7605 = vld [vmem:[#allocation15 + $0x3c8] sm:$0xff]
    %v7606 = vld [vmem:[#allocation15 + $0x3d0] sm:$0xff]
    %v7607 = vld [vmem:[#allocation15 + $0x3d8] sm:$0xff]
    %v7608 = vld [vmem:[#allocation15 + $0x3e0] sm:$0xff]
    %v7609 = vld [vmem:[#allocation15 + $0x3e8] sm:$0xff]
    %v7610 = vld [vmem:[#allocation15 + $0x3f0] sm:$0xff]
    %v7611 = vld [vmem:[#allocation15 + $0x3f8] sm:$0xff]
    %v7612 = vld [vmem:[#allocation15 + $0x400] sm:$0xff]
    %v7613 = vld [vmem:[#allocation15 + $0x408] sm:$0xff]
    %v7614 = vld [vmem:[#allocation15 + $0x410] sm:$0xff]
    %v7615 = vld [vmem:[#allocation15 + $0x418] sm:$0xff]
    %v7616 = vld [vmem:[#allocation15 + $0x420] sm:$0xff]
    %v7617 = vld [vmem:[#allocation15 + $0x428] sm:$0xff]
    %v7618 = vld [vmem:[#allocation15 + $0x430] sm:$0xff]
    %v7619 = vld [vmem:[#allocation15 + $0x438] sm:$0xff]
    %v7620 = vld [vmem:[#allocation15 + $0x440] sm:$0xff]
    %v7621 = vld [vmem:[#allocation15 + $0x448] sm:$0xff]
    %v7622 = vld [vmem:[#allocation15 + $0x450] sm:$0xff]
    %v7623 = vld [vmem:[#allocation15 + $0x458] sm:$0xff]
    %v7624 = vld [vmem:[#allocation15 + $0x460] sm:$0xff]
    %v7625 = vld [vmem:[#allocation15 + $0x468] sm:$0xff]
    %v7626 = vld [vmem:[#allocation15 + $0x470] sm:$0xff]
    %v7627 = vld [vmem:[#allocation15 + $0x478] sm:$0xff]
    %v7628 = vld [vmem:[#allocation15 + $0x480] sm:$0xff]
    %v7629 = vld [vmem:[#allocation15 + $0x488] sm:$0xff]
    %v7630 = vld [vmem:[#allocation15 + $0x490] sm:$0xff]
    %v7631 = vld [vmem:[#allocation15 + $0x498] sm:$0xff]
    %v7632 = vld [vmem:[#allocation15 + $0x4a0] sm:$0xff]
    %v7633 = vld [vmem:[#allocation15 + $0x4a8] sm:$0xff]
    %v7634 = vld [vmem:[#allocation15 + $0x4b0] sm:$0xff]
    %v7635 = vld [vmem:[#allocation15 + $0x4b8] sm:$0xff]
    %v7636 = vld [vmem:[#allocation15 + $0x4c0] sm:$0xff]
    %v7637 = vld [vmem:[#allocation15 + $0x4c8] sm:$0xff]
    %v7638 = vld [vmem:[#allocation15 + $0x4d0] sm:$0xff]
    %v7639 = vld [vmem:[#allocation15 + $0x4d8] sm:$0xff]
    %v7640 = vld [vmem:[#allocation15 + $0x4e0] sm:$0xff]
    %v7641 = vld [vmem:[#allocation15 + $0x4e8] sm:$0xff]
    %v7642 = vld [vmem:[#allocation15 + $0x4f0] sm:$0xff]
    %v7643 = vld [vmem:[#allocation15 + $0x4f8] sm:$0xff]
    %v7644 = vld [vmem:[#allocation15 + $0x500] sm:$0xff]
    %v7645 = vld [vmem:[#allocation15 + $0x508] sm:$0xff]
    %v7646 = vld [vmem:[#allocation15 + $0x510] sm:$0xff]
    %v7647 = vld [vmem:[#allocation15 + $0x518] sm:$0xff]
    %v7648 = vld [vmem:[#allocation15 + $0x520] sm:$0xff]
    %v7649 = vld [vmem:[#allocation15 + $0x528] sm:$0xff]
    %v7650 = vld [vmem:[#allocation15 + $0x530] sm:$0xff]
    %v7651 = vld [vmem:[#allocation15 + $0x538] sm:$0xff]
    %v7652 = vld [vmem:[#allocation15 + $0x540] sm:$0xff]
    %v7653 = vld [vmem:[#allocation15 + $0x548] sm:$0xff]
    %v7654 = vld [vmem:[#allocation15 + $0x550] sm:$0xff]
    %v7655 = vld [vmem:[#allocation15 + $0x558] sm:$0xff]
    %v7656 = vld [vmem:[#allocation15 + $0x560] sm:$0xff]
    %v7657 = vld [vmem:[#allocation15 + $0x568] sm:$0xff]
    %v7658 = vld [vmem:[#allocation15 + $0x570] sm:$0xff]
    %v7659 = vld [vmem:[#allocation15 + $0x578] sm:$0xff]
    %v7660 = vld [vmem:[#allocation15 + $0x580] sm:$0xff]
    %v7661 = vld [vmem:[#allocation15 + $0x588] sm:$0xff]
    %v7662 = vld [vmem:[#allocation15 + $0x590] sm:$0xff]
    %v7663 = vld [vmem:[#allocation15 + $0x598] sm:$0xff]
    %v7664 = vld [vmem:[#allocation15 + $0x5a0] sm:$0xff]
    %v7665 = vld [vmem:[#allocation15 + $0x5a8] sm:$0xff]
    %v7666 = vld [vmem:[#allocation15 + $0x5b0] sm:$0xff]
    %v7667 = vld [vmem:[#allocation15 + $0x5b8] sm:$0xff]
    %v7668 = vld [vmem:[#allocation15 + $0x5c0] sm:$0xff]
    %v7669 = vld [vmem:[#allocation15 + $0x5c8] sm:$0xff]
    %v7670 = vld [vmem:[#allocation15 + $0x5d0] sm:$0xff]
    %v7671 = vld [vmem:[#allocation15 + $0x5d8] sm:$0xff]
    %v7672 = vld [vmem:[#allocation15 + $0x5e0] sm:$0xff]
    %v7673 = vld [vmem:[#allocation15 + $0x5e8] sm:$0xff]
    %v7674 = vld [vmem:[#allocation15 + $0x5f0] sm:$0xff]
    %v7675 = vld [vmem:[#allocation15 + $0x5f8] sm:$0xff]
    %v7676 = vld [vmem:[#allocation15 + $0x600] sm:$0xff]
    %v7677 = vld [vmem:[#allocation15 + $0x608] sm:$0xff]
    %v7678 = vld [vmem:[#allocation15 + $0x610] sm:$0xff]
    %v7679 = vld [vmem:[#allocation15 + $0x618] sm:$0xff]
    %v7680 = vld [vmem:[#allocation15 + $0x620] sm:$0xff]
    %v7681 = vld [vmem:[#allocation15 + $0x628] sm:$0xff]
    %v7682 = vld [vmem:[#allocation15 + $0x630] sm:$0xff]
    %v7683 = vld [vmem:[#allocation15 + $0x638] sm:$0xff]
    %v7684 = vld [vmem:[#allocation15 + $0x640] sm:$0xff]
    %v7685 = vld [vmem:[#allocation15 + $0x648] sm:$0xff]
    %v7686 = vld [vmem:[#allocation15 + $0x650] sm:$0xff]
    %v7687 = vld [vmem:[#allocation15 + $0x658] sm:$0xff]
    %v7688 = vld [vmem:[#allocation15 + $0x660] sm:$0xff]
    %v7689 = vld [vmem:[#allocation15 + $0x668] sm:$0xff]
    %v7690 = vld [vmem:[#allocation15 + $0x670] sm:$0xff]
    %v7691 = vld [vmem:[#allocation15 + $0x678] sm:$0xff]
    %v7692 = vld [vmem:[#allocation15 + $0x680] sm:$0xff]
    %v7693 = vld [vmem:[#allocation15 + $0x688] sm:$0xff]
    %v7694 = vld [vmem:[#allocation15 + $0x690] sm:$0xff]
    %v7695 = vld [vmem:[#allocation15 + $0x698] sm:$0xff]
    %v7696 = vld [vmem:[#allocation15 + $0x6a0] sm:$0xff]
    %v7697 = vld [vmem:[#allocation15 + $0x6a8] sm:$0xff]
    %v7698 = vld [vmem:[#allocation15 + $0x6b0] sm:$0xff]
    %v7699 = vld [vmem:[#allocation15 + $0x6b8] sm:$0xff]
    %v7700 = vld [vmem:[#allocation15 + $0x6c0] sm:$0xff]
    %v7701 = vld [vmem:[#allocation15 + $0x6c8] sm:$0xff]
    %v7702 = vld [vmem:[#allocation15 + $0x6d0] sm:$0xff]
    %v7703 = vld [vmem:[#allocation15 + $0x6d8] sm:$0xff]
    %v7704 = vld [vmem:[#allocation15 + $0x6e0] sm:$0xff]
    %v7705 = vld [vmem:[#allocation15 + $0x6e8] sm:$0xff]
    %v7706 = vld [vmem:[#allocation15 + $0x6f0] sm:$0xff]
    %v7707 = vld [vmem:[#allocation15 + $0x6f8] sm:$0xff]
    %v7708 = vld [vmem:[#allocation15 + $0x700] sm:$0xff]
    %v7709 = vld [vmem:[#allocation15 + $0x708] sm:$0xff]
    %v7710 = vld [vmem:[#allocation15 + $0x710] sm:$0xff]
    %v7711 = vld [vmem:[#allocation15 + $0x718] sm:$0xff]
    %v7712 = vld [vmem:[#allocation15 + $0x720] sm:$0xff]
    %v7713 = vld [vmem:[#allocation15 + $0x728] sm:$0xff]
    %v7714 = vld [vmem:[#allocation15 + $0x730] sm:$0xff]
    %v7715 = vld [vmem:[#allocation15 + $0x738] sm:$0xff]
    %v7716 = vld [vmem:[#allocation15 + $0x740] sm:$0xff]
    %v7717 = vld [vmem:[#allocation15 + $0x748] sm:$0xff]
    %v7718 = vld [vmem:[#allocation15 + $0x750] sm:$0xff]
    %v7719 = vld [vmem:[#allocation15 + $0x758] sm:$0xff]
    %v7720 = vld [vmem:[#allocation15 + $0x760] sm:$0xff]
    %v7721 = vld [vmem:[#allocation15 + $0x768] sm:$0xff]
    %v7722 = vld [vmem:[#allocation15 + $0x770] sm:$0xff]
    %v7723 = vld [vmem:[#allocation15 + $0x778] sm:$0xff]
    %v7724 = vld [vmem:[#allocation15 + $0x780] sm:$0xff]
    %v7725 = vld [vmem:[#allocation15 + $0x788] sm:$0xff]
    %v7726 = vld [vmem:[#allocation15 + $0x790] sm:$0xff]
    %v7727 = vld [vmem:[#allocation15 + $0x798] sm:$0xff]
    %v7728 = vld [vmem:[#allocation15 + $0x7a0] sm:$0xff]
    %v7729 = vld [vmem:[#allocation15 + $0x7a8] sm:$0xff]
    %v7730 = vld [vmem:[#allocation15 + $0x7b0] sm:$0xff]
    %v7731 = vld [vmem:[#allocation15 + $0x7b8] sm:$0xff]
    %v7732 = vld [vmem:[#allocation15 + $0x7c0] sm:$0xff]
    %v7733 = vld [vmem:[#allocation15 + $0x7c8] sm:$0xff]
    %v7734 = vld [vmem:[#allocation15 + $0x7d0] sm:$0xff]
    %v7735 = vld [vmem:[#allocation15 + $0x7d8] sm:$0xff]
    %v7736 = vld [vmem:[#allocation15 + $0x7e0] sm:$0xff]
    %v7737 = vld [vmem:[#allocation15 + $0x7e8] sm:$0xff]
    %v7738 = vld [vmem:[#allocation15 + $0x7f0] sm:$0xff]
    %v7739 = vld [vmem:[#allocation15 + $0x7f8] sm:$0xff]
    %v7740 = vld [vmem:[#allocation15 + $0x800] sm:$0xff]
    %v7741 = vld [vmem:[#allocation15 + $0x808] sm:$0xff]
    %v7742 = vld [vmem:[#allocation15 + $0x810] sm:$0xff]
    %v7743 = vld [vmem:[#allocation15 + $0x818] sm:$0xff]
    %v7744 = vld [vmem:[#allocation15 + $0x820] sm:$0xff]
    %v7745 = vld [vmem:[#allocation15 + $0x828] sm:$0xff]
    %v7746 = vld [vmem:[#allocation15 + $0x830] sm:$0xff]
    %v7747 = vld [vmem:[#allocation15 + $0x838] sm:$0xff]
    %v7748 = vld [vmem:[#allocation15 + $0x840] sm:$0xff]
    %v7749 = vld [vmem:[#allocation15 + $0x848] sm:$0xff]
    %v7750 = vld [vmem:[#allocation15 + $0x850] sm:$0xff]
    %v7751 = vld [vmem:[#allocation15 + $0x858] sm:$0xff]
    %v7752 = vld [vmem:[#allocation15 + $0x860] sm:$0xff]
    %v7753 = vld [vmem:[#allocation15 + $0x868] sm:$0xff]
    %v7754 = vld [vmem:[#allocation15 + $0x870] sm:$0xff]
    %v7755 = vld [vmem:[#allocation15 + $0x878] sm:$0xff]
    %v7756 = vld [vmem:[#allocation15 + $0x880] sm:$0xff]
    %v7757 = vld [vmem:[#allocation15 + $0x888] sm:$0xff]
    %v7758 = vld [vmem:[#allocation15 + $0x890] sm:$0xff]
    %v7759 = vld [vmem:[#allocation15 + $0x898] sm:$0xff]
    %v7760 = vld [vmem:[#allocation15 + $0x8a0] sm:$0xff]
    %v7761 = vld [vmem:[#allocation15 + $0x8a8] sm:$0xff]
    %v7762 = vld [vmem:[#allocation15 + $0x8b0] sm:$0xff]
    %v7763 = vld [vmem:[#allocation15 + $0x8b8] sm:$0xff]
    %v7764 = vld [vmem:[#allocation15 + $0x8c0] sm:$0xff]
    %v7765 = vld [vmem:[#allocation15 + $0x8c8] sm:$0xff]
    %v7766 = vld [vmem:[#allocation15 + $0x8d0] sm:$0xff]
    %v7767 = vld [vmem:[#allocation15 + $0x8d8] sm:$0xff]
    %v7768 = vld [vmem:[#allocation15 + $0x8e0] sm:$0xff]
    %v7769 = vld [vmem:[#allocation15 + $0x8e8] sm:$0xff]
    %v7770 = vld [vmem:[#allocation15 + $0x8f0] sm:$0xff]
    %v7771 = vld [vmem:[#allocation15 + $0x8f8] sm:$0xff]
    %v7772 = vld [vmem:[#allocation15 + $0x900] sm:$0xff]
    %v7773 = vld [vmem:[#allocation15 + $0x908] sm:$0xff]
    %v7774 = vld [vmem:[#allocation15 + $0x910] sm:$0xff]
    %v7775 = vld [vmem:[#allocation15 + $0x918] sm:$0xff]
    %v7776 = vld [vmem:[#allocation15 + $0x920] sm:$0xff]
    %v7777 = vld [vmem:[#allocation15 + $0x928] sm:$0xff]
    %v7778 = vld [vmem:[#allocation15 + $0x930] sm:$0xff]
    %v7779 = vld [vmem:[#allocation15 + $0x938] sm:$0xff]
    %v7780 = vld [vmem:[#allocation15 + $0x940] sm:$0xff]
    %v7781 = vld [vmem:[#allocation15 + $0x948] sm:$0xff]
    %v7782 = vld [vmem:[#allocation15 + $0x950] sm:$0xff]
    %v7783 = vld [vmem:[#allocation15 + $0x958] sm:$0xff]
    %v7784 = vld [vmem:[#allocation15 + $0x960] sm:$0xff]
    %v7785 = vld [vmem:[#allocation15 + $0x968] sm:$0xff]
    %v7786 = vld [vmem:[#allocation15 + $0x970] sm:$0xff]
    %v7787 = vld [vmem:[#allocation15 + $0x978] sm:$0xff]
    %v7788 = vld [vmem:[#allocation15 + $0x980] sm:$0xff]
    %v7789 = vld [vmem:[#allocation15 + $0x988] sm:$0xff]
    %v7790 = vld [vmem:[#allocation15 + $0x990] sm:$0xff]
    %v7791 = vld [vmem:[#allocation15 + $0x998] sm:$0xff]
    %v7792 = vld [vmem:[#allocation15 + $0x9a0] sm:$0xff]
    %v7793 = vld [vmem:[#allocation15 + $0x9a8] sm:$0xff]
    %v7794 = vld [vmem:[#allocation15 + $0x9b0] sm:$0xff]
    %v7795 = vld [vmem:[#allocation15 + $0x9b8] sm:$0xff]
    %v7796 = vld [vmem:[#allocation15 + $0x9c0] sm:$0xff]
    %v7797 = vld [vmem:[#allocation15 + $0x9c8] sm:$0xff]
    %v7798 = vld [vmem:[#allocation15 + $0x9d0] sm:$0xff]
    %v7799 = vld [vmem:[#allocation15 + $0x9d8] sm:$0xff]
    %v7800 = vld [vmem:[#allocation15 + $0x9e0] sm:$0xff]
    %v7801 = vld [vmem:[#allocation15 + $0x9e8] sm:$0xff]
    %v7802 = vld [vmem:[#allocation15 + $0x9f0] sm:$0xff]
    %v7803 = vld [vmem:[#allocation15 + $0x9f8] sm:$0xff]
    %v7804 = vld [vmem:[#allocation15 + $0xa00] sm:$0xff]
    %v7805 = vld [vmem:[#allocation15 + $0xa08] sm:$0xff]
    %v7806 = vld [vmem:[#allocation15 + $0xa10] sm:$0xff]
    %v7807 = vld [vmem:[#allocation15 + $0xa18] sm:$0xff]
    %v7808 = vld [vmem:[#allocation15 + $0xa20] sm:$0xff]
    %v7809 = vld [vmem:[#allocation15 + $0xa28] sm:$0xff]
    %v7810 = vld [vmem:[#allocation15 + $0xa30] sm:$0xff]
    %v7811 = vld [vmem:[#allocation15 + $0xa38] sm:$0xff]
    %v7812 = vld [vmem:[#allocation15 + $0xa40] sm:$0xff]
    %v7813 = vld [vmem:[#allocation15 + $0xa48] sm:$0xff]
    %v7814 = vld [vmem:[#allocation15 + $0xa50] sm:$0xff]
    %v7815 = vld [vmem:[#allocation15 + $0xa58] sm:$0xff]
    %v7816 = vld [vmem:[#allocation15 + $0xa60] sm:$0xff]
    %v7817 = vld [vmem:[#allocation15 + $0xa68] sm:$0xff]
    %v7818 = vld [vmem:[#allocation15 + $0xa70] sm:$0xff]
    %v7819 = vld [vmem:[#allocation15 + $0xa78] sm:$0xff]
    %v7820 = vld [vmem:[#allocation15 + $0xa80] sm:$0xff]
    %v7821 = vld [vmem:[#allocation15 + $0xa88] sm:$0xff]
    %v7822 = vld [vmem:[#allocation15 + $0xa90] sm:$0xff]
    %v7823 = vld [vmem:[#allocation15 + $0xa98] sm:$0xff]
    %v7824 = vld [vmem:[#allocation15 + $0xaa0] sm:$0xff]
    %v7825 = vld [vmem:[#allocation15 + $0xaa8] sm:$0xff]
    %v7826 = vld [vmem:[#allocation15 + $0xab0] sm:$0xff]
    %v7827 = vld [vmem:[#allocation15 + $0xab8] sm:$0xff]
    %v7828 = vld [vmem:[#allocation15 + $0xac0] sm:$0xff]
    %v7829 = vld [vmem:[#allocation15 + $0xac8] sm:$0xff]
    %v7830 = vld [vmem:[#allocation15 + $0xad0] sm:$0xff]
    %v7831 = vld [vmem:[#allocation15 + $0xad8] sm:$0xff]
    %v7832 = vld [vmem:[#allocation15 + $0xae0] sm:$0xff]
    %v7833 = vld [vmem:[#allocation15 + $0xae8] sm:$0xff]
    %v7834 = vld [vmem:[#allocation15 + $0xaf0] sm:$0xff]
    %v7835 = vld [vmem:[#allocation15 + $0xaf8] sm:$0xff]
    %v7836 = vld [vmem:[#allocation15 + $0xb00] sm:$0xff]
    %v7837 = vld [vmem:[#allocation15 + $0xb08] sm:$0xff]
    %v7838 = vld [vmem:[#allocation15 + $0xb10] sm:$0xff]
    %v7839 = vld [vmem:[#allocation15 + $0xb18] sm:$0xff]
    %v7840 = vld [vmem:[#allocation15 + $0xb20] sm:$0xff]
    %v7841 = vld [vmem:[#allocation15 + $0xb28] sm:$0xff]
    %v7842 = vld [vmem:[#allocation15 + $0xb30] sm:$0xff]
    %v7843 = vld [vmem:[#allocation15 + $0xb38] sm:$0xff]
    %v7844 = vld [vmem:[#allocation15 + $0xb40] sm:$0xff]
    %v7845 = vld [vmem:[#allocation15 + $0xb48] sm:$0xff]
    %v7846 = vld [vmem:[#allocation15 + $0xb50] sm:$0xff]
    %v7847 = vld [vmem:[#allocation15 + $0xb58] sm:$0xff]
    %v7848 = vld [vmem:[#allocation15 + $0xb60] sm:$0xff]
    %v7849 = vld [vmem:[#allocation15 + $0xb68] sm:$0xff]
    %v7850 = vld [vmem:[#allocation15 + $0xb70] sm:$0xff]
    %v7851 = vld [vmem:[#allocation15 + $0xb78] sm:$0xff]
    %v7852 = vld [vmem:[#allocation15 + $0xb80] sm:$0xff]
    %v7853 = vld [vmem:[#allocation15 + $0xb88] sm:$0xff]
    %v7854 = vld [vmem:[#allocation15 + $0xb90] sm:$0xff]
    %v7855 = vld [vmem:[#allocation15 + $0xb98] sm:$0xff]
    %v7856 = vld [vmem:[#allocation15 + $0xba0] sm:$0xff]
    %v7857 = vld [vmem:[#allocation15 + $0xba8] sm:$0xff]
    %v7858 = vld [vmem:[#allocation15 + $0xbb0] sm:$0xff]
    %v7859 = vld [vmem:[#allocation15 + $0xbb8] sm:$0xff]
    %v7860 = vld [vmem:[#allocation15 + $0xbc0] sm:$0xff]
    %v7861 = vld [vmem:[#allocation15 + $0xbc8] sm:$0xff]
    %v7862 = vld [vmem:[#allocation15 + $0xbd0] sm:$0xff]
    %v7863 = vld [vmem:[#allocation15 + $0xbd8] sm:$0xff]
    %v7864 = vld [vmem:[#allocation15 + $0xbe0] sm:$0xff]
    %v7865 = vld [vmem:[#allocation15 + $0xbe8] sm:$0xff]
    %v7866 = vld [vmem:[#allocation15 + $0xbf0] sm:$0xff]
    %v7867 = vld [vmem:[#allocation15 + $0xbf8] sm:$0xff]
    %v7868 = vld [vmem:[#allocation15 + $0xc00] sm:$0xff]
    %v7869 = vld [vmem:[#allocation15 + $0xc08] sm:$0xff]
    %v7870 = vld [vmem:[#allocation15 + $0xc10] sm:$0xff]
    %v7871 = vld [vmem:[#allocation15 + $0xc18] sm:$0xff]
    %v7872 = vld [vmem:[#allocation15 + $0xc20] sm:$0xff]
    %v7873 = vld [vmem:[#allocation15 + $0xc28] sm:$0xff]
    %v7874 = vld [vmem:[#allocation15 + $0xc30] sm:$0xff]
    %v7875 = vld [vmem:[#allocation15 + $0xc38] sm:$0xff]
    %v7876 = vld [vmem:[#allocation15 + $0xc40] sm:$0xff]
    %v7877 = vld [vmem:[#allocation15 + $0xc48] sm:$0xff]
    %v7878 = vld [vmem:[#allocation15 + $0xc50] sm:$0xff]
    %v7879 = vld [vmem:[#allocation15 + $0xc58] sm:$0xff]
    %v7880 = vld [vmem:[#allocation15 + $0xc60] sm:$0xff]
    %v7881 = vld [vmem:[#allocation15 + $0xc68] sm:$0xff]
    %v7882 = vld [vmem:[#allocation15 + $0xc70] sm:$0xff]
    %v7883 = vld [vmem:[#allocation15 + $0xc78] sm:$0xff]
    %v7884 = vld [vmem:[#allocation15 + $0xc80] sm:$0xff]
    %v7885 = vld [vmem:[#allocation15 + $0xc88] sm:$0xff]
    %v7886 = vld [vmem:[#allocation15 + $0xc90] sm:$0xff]
    %v7887 = vld [vmem:[#allocation15 + $0xc98] sm:$0xff]
    %v7888 = vld [vmem:[#allocation15 + $0xca0] sm:$0xff]
    %v7889 = vld [vmem:[#allocation15 + $0xca8] sm:$0xff]
    %v7890 = vld [vmem:[#allocation15 + $0xcb0] sm:$0xff]
    %v7891 = vld [vmem:[#allocation15 + $0xcb8] sm:$0xff]
    %v7892 = vld [vmem:[#allocation15 + $0xcc0] sm:$0xff]
    %v7893 = vld [vmem:[#allocation15 + $0xcc8] sm:$0xff]
    %v7894 = vld [vmem:[#allocation15 + $0xcd0] sm:$0xff]
    %v7895 = vld [vmem:[#allocation15 + $0xcd8] sm:$0xff]
    %v7896 = vld [vmem:[#allocation15 + $0xce0] sm:$0xff]
    %v7897 = vld [vmem:[#allocation15 + $0xce8] sm:$0xff]
    %v7898 = vld [vmem:[#allocation15 + $0xcf0] sm:$0xff]
    %v7899 = vld [vmem:[#allocation15 + $0xcf8] sm:$0xff]
    %v7900 = vld [vmem:[#allocation15 + $0xd00] sm:$0xff]
    %v7901 = vld [vmem:[#allocation15 + $0xd08] sm:$0xff]
    %v7902 = vld [vmem:[#allocation15 + $0xd10] sm:$0xff]
    %v7903 = vld [vmem:[#allocation15 + $0xd18] sm:$0xff]
    %v7904 = vld [vmem:[#allocation15 + $0xd20] sm:$0xff]
    %v7905 = vld [vmem:[#allocation15 + $0xd28] sm:$0xff]
    %v7906 = vld [vmem:[#allocation15 + $0xd30] sm:$0xff]
    %v7907 = vld [vmem:[#allocation15 + $0xd38] sm:$0xff]
    %v7908 = vld [vmem:[#allocation15 + $0xd40] sm:$0xff]
    %v7909 = vld [vmem:[#allocation15 + $0xd48] sm:$0xff]
    %v7910 = vld [vmem:[#allocation15 + $0xd50] sm:$0xff]
    %v7911 = vld [vmem:[#allocation15 + $0xd58] sm:$0xff]
    %v7912 = vld [vmem:[#allocation15 + $0xd60] sm:$0xff]
    %v7913 = vld [vmem:[#allocation15 + $0xd68] sm:$0xff]
    %v7914 = vld [vmem:[#allocation15 + $0xd70] sm:$0xff]
    %v7915 = vld [vmem:[#allocation15 + $0xd78] sm:$0xff]
    %v7916 = vld [vmem:[#allocation15 + $0xd80] sm:$0xff]
    %v7917 = vld [vmem:[#allocation15 + $0xd88] sm:$0xff]
    %v7918 = vld [vmem:[#allocation15 + $0xd90] sm:$0xff]
    %v7919 = vld [vmem:[#allocation15 + $0xd98] sm:$0xff]
    %v7920 = vld [vmem:[#allocation15 + $0xda0] sm:$0xff]
    %v7921 = vld [vmem:[#allocation15 + $0xda8] sm:$0xff]
    %v7922 = vld [vmem:[#allocation15 + $0xdb0] sm:$0xff]
    %v7923 = vld [vmem:[#allocation15 + $0xdb8] sm:$0xff]
    %v7924 = vld [vmem:[#allocation15 + $0xdc0] sm:$0xff]
    %v7925 = vld [vmem:[#allocation15 + $0xdc8] sm:$0xff]
    %v7926 = vld [vmem:[#allocation15 + $0xdd0] sm:$0xff]
    %v7927 = vld [vmem:[#allocation15 + $0xdd8] sm:$0xff]
    %v7928 = vld [vmem:[#allocation15 + $0xde0] sm:$0xff]
    %v7929 = vld [vmem:[#allocation15 + $0xde8] sm:$0xff]
    %v7930 = vld [vmem:[#allocation15 + $0xdf0] sm:$0xff]
    %v7931 = vld [vmem:[#allocation15 + $0xdf8] sm:$0xff]
    %v7932 = vld [vmem:[#allocation15 + $0xe00] sm:$0xff]
    %v7933 = vld [vmem:[#allocation15 + $0xe08] sm:$0xff]
    %v7934 = vld [vmem:[#allocation15 + $0xe10] sm:$0xff]
    %v7935 = vld [vmem:[#allocation15 + $0xe18] sm:$0xff]
    %v7936 = vld [vmem:[#allocation15 + $0xe20] sm:$0xff]
    %v7937 = vld [vmem:[#allocation15 + $0xe28] sm:$0xff]
    %v7938 = vld [vmem:[#allocation15 + $0xe30] sm:$0xff]
    %v7939 = vld [vmem:[#allocation15 + $0xe38] sm:$0xff]
    %v7940 = vld [vmem:[#allocation15 + $0xe40] sm:$0xff]
    %v7941 = vld [vmem:[#allocation15 + $0xe48] sm:$0xff]
    %v7942 = vld [vmem:[#allocation15 + $0xe50] sm:$0xff]
    %v7943 = vld [vmem:[#allocation15 + $0xe58] sm:$0xff]
    %v7944 = vld [vmem:[#allocation15 + $0xe60] sm:$0xff]
    %v7945 = vld [vmem:[#allocation15 + $0xe68] sm:$0xff]
    %v7946 = vld [vmem:[#allocation15 + $0xe70] sm:$0xff]
    %v7947 = vld [vmem:[#allocation15 + $0xe78] sm:$0xff]
    %v7948 = vld [vmem:[#allocation15 + $0xe80] sm:$0xff]
    %v7949 = vld [vmem:[#allocation15 + $0xe88] sm:$0xff]
    %v7950 = vld [vmem:[#allocation15 + $0xe90] sm:$0xff]
    %v7951 = vld [vmem:[#allocation15 + $0xe98] sm:$0xff]
    %v7952 = vld [vmem:[#allocation15 + $0xea0] sm:$0xff]
    %v7953 = vld [vmem:[#allocation15 + $0xea8] sm:$0xff]
    %v7954 = vld [vmem:[#allocation15 + $0xeb0] sm:$0xff]
    %v7955 = vld [vmem:[#allocation15 + $0xeb8] sm:$0xff]
    %v7956 = vld [vmem:[#allocation15 + $0xec0] sm:$0xff]
    %v7957 = vld [vmem:[#allocation15 + $0xec8] sm:$0xff]
    %v7958 = vld [vmem:[#allocation15 + $0xed0] sm:$0xff]
    %v7959 = vld [vmem:[#allocation15 + $0xed8] sm:$0xff]
    %v7960 = vld [vmem:[#allocation15 + $0xee0] sm:$0xff]
    %v7961 = vld [vmem:[#allocation15 + $0xee8] sm:$0xff]
    %v7962 = vld [vmem:[#allocation15 + $0xef0] sm:$0xff]
    %v7963 = vld [vmem:[#allocation15 + $0xef8] sm:$0xff]
    %v7964 = vld [vmem:[#allocation15 + $0xf00] sm:$0xff]
    %v7965 = vld [vmem:[#allocation15 + $0xf08] sm:$0xff]
    %v7966 = vld [vmem:[#allocation15 + $0xf10] sm:$0xff]
    %v7967 = vld [vmem:[#allocation15 + $0xf18] sm:$0xff]
    %v7968 = vld [vmem:[#allocation15 + $0xf20] sm:$0xff]
    %v7969 = vld [vmem:[#allocation15 + $0xf28] sm:$0xff]
    %v7970 = vld [vmem:[#allocation15 + $0xf30] sm:$0xff]
    %v7971 = vld [vmem:[#allocation15 + $0xf38] sm:$0xff]
    %v7972 = vld [vmem:[#allocation15 + $0xf40] sm:$0xff]
    %v7973 = vld [vmem:[#allocation15 + $0xf48] sm:$0xff]
    %v7974 = vld [vmem:[#allocation15 + $0xf50] sm:$0xff]
    %v7975 = vld [vmem:[#allocation15 + $0xf58] sm:$0xff]
    %v7976 = vld [vmem:[#allocation15 + $0xf60] sm:$0xff]
    %v7977 = vld [vmem:[#allocation15 + $0xf68] sm:$0xff]
    %v7978 = vld [vmem:[#allocation15 + $0xf70] sm:$0xff]
    %v7979 = vld [vmem:[#allocation15 + $0xf78] sm:$0xff]
    %v7980 = vld [vmem:[#allocation15 + $0xf80] sm:$0xff]
    %v7981 = vld [vmem:[#allocation15 + $0xf88] sm:$0xff]
    %v7982 = vld [vmem:[#allocation15 + $0xf90] sm:$0xff]
    %v7983 = vld [vmem:[#allocation15 + $0xf98] sm:$0xff]
    %v7984 = vld [vmem:[#allocation15 + $0xfa0] sm:$0xff]
    %v7985 = vld [vmem:[#allocation15 + $0xfa8] sm:$0xff]
    %v7986 = vld [vmem:[#allocation15 + $0xfb0] sm:$0xff]
    %v7987 = vld [vmem:[#allocation15 + $0xfb8] sm:$0xff]
    %v7988 = vld [vmem:[#allocation15 + $0xfc0] sm:$0xff]
    %v7989 = vld [vmem:[#allocation15 + $0xfc8] sm:$0xff]
    %v7990 = vld [vmem:[#allocation15 + $0xfd0] sm:$0xff]
    %v7991 = vld [vmem:[#allocation15 + $0xfd8] sm:$0xff]
    %v7992 = vld [vmem:[#allocation15 + $0xfe0] sm:$0xff]
    %v7993 = vld [vmem:[#allocation15 + $0xfe8] sm:$0xff]
    %v7994 = vld [vmem:[#allocation15 + $0xff0] sm:$0xff]
    %v7995 = vld [vmem:[#allocation15 + $0xff8] sm:$0xff]
    %v7996 = vld [vmem:[#allocation15 + $0x1000] sm:$0xff]
    %v7997 = vld [vmem:[#allocation15 + $0x1008] sm:$0xff]
    %v7998 = vld [vmem:[#allocation15 + $0x1010] sm:$0xff]
    %v7999 = vld [vmem:[#allocation15 + $0x1018] sm:$0xff]
    %v8000 = vld [vmem:[#allocation15 + $0x1020] sm:$0xff]
    %v8001 = vld [vmem:[#allocation15 + $0x1028] sm:$0xff]
    %v8002 = vld [vmem:[#allocation15 + $0x1030] sm:$0xff]
    %v8003 = vld [vmem:[#allocation15 + $0x1038] sm:$0xff]
    %v8004 = vld [vmem:[#allocation15 + $0x1040] sm:$0xff]
    %v8005 = vld [vmem:[#allocation15 + $0x1048] sm:$0xff]
    %v8006 = vld [vmem:[#allocation15 + $0x1050] sm:$0xff]
    %v8007 = vld [vmem:[#allocation15 + $0x1058] sm:$0xff]
    %v8008 = vld [vmem:[#allocation15 + $0x1060] sm:$0xff]
    %v8009 = vld [vmem:[#allocation15 + $0x1068] sm:$0xff]
    %v8010 = vld [vmem:[#allocation15 + $0x1070] sm:$0xff]
    %v8011 = vld [vmem:[#allocation15 + $0x1078] sm:$0xff]
    %v8012 = vld [vmem:[#allocation15 + $0x1080] sm:$0xff]
    %v8013 = vld [vmem:[#allocation15 + $0x1088] sm:$0xff]
    %v8014 = vld [vmem:[#allocation15 + $0x1090] sm:$0xff]
    %v8015 = vld [vmem:[#allocation15 + $0x1098] sm:$0xff]
    %v8016 = vld [vmem:[#allocation15 + $0x10a0] sm:$0xff]
    %v8017 = vld [vmem:[#allocation15 + $0x10a8] sm:$0xff]
    %v8018 = vld [vmem:[#allocation15 + $0x10b0] sm:$0xff]
    %v8019 = vld [vmem:[#allocation15 + $0x10b8] sm:$0xff]
    %v8020 = vld [vmem:[#allocation15 + $0x10c0] sm:$0xff]
    %v8021 = vld [vmem:[#allocation15 + $0x10c8] sm:$0xff]
    %v8022 = vld [vmem:[#allocation15 + $0x10d0] sm:$0xff]
    %v8023 = vld [vmem:[#allocation15 + $0x10d8] sm:$0xff]
    %v8024 = vld [vmem:[#allocation15 + $0x10e0] sm:$0xff]
    %v8025 = vld [vmem:[#allocation15 + $0x10e8] sm:$0xff]
    %v8026 = vld [vmem:[#allocation15 + $0x10f0] sm:$0xff]
    %v8027 = vld [vmem:[#allocation15 + $0x10f8] sm:$0xff]
    %v8028 = vld [vmem:[#allocation15 + $0x1100] sm:$0xff]
    %v8029 = vld [vmem:[#allocation15 + $0x1108] sm:$0xff]
    %v8030 = vld [vmem:[#allocation15 + $0x1110] sm:$0xff]
    %v8031 = vld [vmem:[#allocation15 + $0x1118] sm:$0xff]
    %v8032 = vld [vmem:[#allocation15 + $0x1120] sm:$0xff]
    %v8033 = vld [vmem:[#allocation15 + $0x1128] sm:$0xff]
    %v8034 = vld [vmem:[#allocation15 + $0x1130] sm:$0xff]
    %v8035 = vld [vmem:[#allocation15 + $0x1138] sm:$0xff]
    %v8036 = vld [vmem:[#allocation15 + $0x1140] sm:$0xff]
    %v8037 = vld [vmem:[#allocation15 + $0x1148] sm:$0xff]
    %v8038 = vld [vmem:[#allocation15 + $0x1150] sm:$0xff]
    %v8039 = vld [vmem:[#allocation15 + $0x1158] sm:$0xff]
    %v8040 = vld [vmem:[#allocation15 + $0x1160] sm:$0xff]
    %v8041 = vld [vmem:[#allocation15 + $0x1168] sm:$0xff]
    %v8042 = vld [vmem:[#allocation15 + $0x1170] sm:$0xff]
    %v8043 = vld [vmem:[#allocation15 + $0x1178] sm:$0xff]
    %v8044 = vld [vmem:[#allocation15 + $0x1180] sm:$0xff]
    %v8045 = vld [vmem:[#allocation15 + $0x1188] sm:$0xff]
    %v8046 = vld [vmem:[#allocation15 + $0x1190] sm:$0xff]
    %v8047 = vld [vmem:[#allocation15 + $0x1198] sm:$0xff]
    %v8048 = vld [vmem:[#allocation15 + $0x11a0] sm:$0xff]
    %v8049 = vld [vmem:[#allocation15 + $0x11a8] sm:$0xff]
    %v8050 = vld [vmem:[#allocation15 + $0x11b0] sm:$0xff]
    %v8051 = vld [vmem:[#allocation15 + $0x11b8] sm:$0xff]
    %v8052 = vld [vmem:[#allocation15 + $0x11c0] sm:$0xff]
    %v8053 = vld [vmem:[#allocation15 + $0x11c8] sm:$0xff]
    %v8054 = vld [vmem:[#allocation15 + $0x11d0] sm:$0xff]
    %v8055 = vld [vmem:[#allocation15 + $0x11d8] sm:$0xff]
    %v8056 = vld [vmem:[#allocation15 + $0x11e0] sm:$0xff]
    %v8057 = vld [vmem:[#allocation15 + $0x11e8] sm:$0xff]
    %v8058 = vld [vmem:[#allocation15 + $0x11f0] sm:$0xff]
    %v8059 = vld [vmem:[#allocation15 + $0x11f8] sm:$0xff]
    %v8060 = vld [vmem:[#allocation15 + $0x1200] sm:$0xff]
    %v8061 = vld [vmem:[#allocation15 + $0x1208] sm:$0xff]
    %v8062 = vld [vmem:[#allocation15 + $0x1210] sm:$0xff]
    %v8063 = vld [vmem:[#allocation15 + $0x1218] sm:$0xff]
    %v8064 = vld [vmem:[#allocation15 + $0x1220] sm:$0xff]
    %v8065 = vld [vmem:[#allocation15 + $0x1228] sm:$0xff]
    %v8066 = vld [vmem:[#allocation15 + $0x1230] sm:$0xff]
    %v8067 = vld [vmem:[#allocation15 + $0x1238] sm:$0xff]
    %v8068 = vld [vmem:[#allocation15 + $0x1240] sm:$0xff]
    %v8069 = vld [vmem:[#allocation15 + $0x1248] sm:$0xff]
    %v8070 = vld [vmem:[#allocation15 + $0x1250] sm:$0xff]
    %v8071 = vld [vmem:[#allocation15 + $0x1258] sm:$0xff]
    %v8072 = vld [vmem:[#allocation15 + $0x1260] sm:$0xff]
    %v8073 = vld [vmem:[#allocation15 + $0x1268] sm:$0xff]
    %v8074 = vld [vmem:[#allocation15 + $0x1270] sm:$0xff]
    %v8075 = vld [vmem:[#allocation15 + $0x1278] sm:$0xff]
    %v8076 = vld [vmem:[#allocation15 + $0x1280] sm:$0xff]
    %v8077 = vld [vmem:[#allocation15 + $0x1288] sm:$0xff]
    %v8078 = vld [vmem:[#allocation15 + $0x1290] sm:$0xff]
    %v8079 = vld [vmem:[#allocation15 + $0x1298] sm:$0xff]
    %v8080 = vld [vmem:[#allocation15 + $0x12a0] sm:$0xff]
    %v8081 = vld [vmem:[#allocation15 + $0x12a8] sm:$0xff]
    %v8082 = vld [vmem:[#allocation15 + $0x12b0] sm:$0xff]
    %v8083 = vld [vmem:[#allocation15 + $0x12b8] sm:$0xff]
    %v8084 = vld [vmem:[#allocation15 + $0x12c0] sm:$0xff]
    %v8085 = vld [vmem:[#allocation15 + $0x12c8] sm:$0xff]
    %v8086 = vld [vmem:[#allocation15 + $0x12d0] sm:$0xff]
    %v8087 = vld [vmem:[#allocation15 + $0x12d8] sm:$0xff]
    %v8088 = vld [vmem:[#allocation15 + $0x12e0] sm:$0xff]
    %v8089 = vld [vmem:[#allocation15 + $0x12e8] sm:$0xff]
    %v8090 = vld [vmem:[#allocation15 + $0x12f0] sm:$0xff]
    %v8091 = vld [vmem:[#allocation15 + $0x12f8] sm:$0xff]
    %v8092 = vld [vmem:[#allocation15 + $0x1300] sm:$0xff]
    %v8093 = vld [vmem:[#allocation15 + $0x1308] sm:$0xff]
    %v8094 = vld [vmem:[#allocation15 + $0x1310] sm:$0xff]
    %v8095 = vld [vmem:[#allocation15 + $0x1318] sm:$0xff]
    %v8096 = vld [vmem:[#allocation15 + $0x1320] sm:$0xff]
    %v8097 = vld [vmem:[#allocation15 + $0x1328] sm:$0xff]
    %v8098 = vld [vmem:[#allocation15 + $0x1330] sm:$0xff]
    %v8099 = vld [vmem:[#allocation15 + $0x1338] sm:$0xff]
    %v8100 = vld [vmem:[#allocation15 + $0x1340] sm:$0xff]
    %v8101 = vld [vmem:[#allocation15 + $0x1348] sm:$0xff]
    %v8102 = vld [vmem:[#allocation15 + $0x1350] sm:$0xff]
    %v8103 = vld [vmem:[#allocation15 + $0x1358] sm:$0xff]
    %v8104 = vld [vmem:[#allocation15 + $0x1360] sm:$0xff]
    %v8105 = vld [vmem:[#allocation15 + $0x1368] sm:$0xff]
    %v8106 = vld [vmem:[#allocation15 + $0x1370] sm:$0xff]
    %v8107 = vld [vmem:[#allocation15 + $0x1378] sm:$0xff]
    %v8108 = vld [vmem:[#allocation15 + $0x1380] sm:$0xff]
    %v8109 = vld [vmem:[#allocation15 + $0x1388] sm:$0xff]
    %v8110 = vld [vmem:[#allocation15 + $0x1390] sm:$0xff]
    %v8111 = vld [vmem:[#allocation15 + $0x1398] sm:$0xff]
    %v8112 = vld [vmem:[#allocation15 + $0x13a0] sm:$0xff]
    %v8113 = vld [vmem:[#allocation15 + $0x13a8] sm:$0xff]
    %v8114 = vld [vmem:[#allocation15 + $0x13b0] sm:$0xff]
    %v8115 = vld [vmem:[#allocation15 + $0x13b8] sm:$0xff]
    %v8116 = vld [vmem:[#allocation15 + $0x13c0] sm:$0xff]
    %v8117 = vld [vmem:[#allocation15 + $0x13c8] sm:$0xff]
    %v8118 = vld [vmem:[#allocation15 + $0x13d0] sm:$0xff]
    %v8119 = vld [vmem:[#allocation15 + $0x13d8] sm:$0xff]
    %v8120 = vld [vmem:[#allocation15 + $0x13e0] sm:$0xff]
    %v8121 = vld [vmem:[#allocation15 + $0x13e8] sm:$0xff]
    %v8122 = vld [vmem:[#allocation15 + $0x13f0] sm:$0xff]
    %v8123 = vld [vmem:[#allocation15 + $0x13f8] sm:$0xff]
    %v8124 = vld [vmem:[#allocation16] sm:$0x1]
    %v8126 = vperm.slane %v8124, 0
    %8128 = vmatpush.msra.mxu0 %v7499
    %8129 = vmatpush.msra.mxu0 %v7498
    %8130 = vmatpush.msra.mxu0 %v7497
    %8131 = vmatpush.msra.mxu0 %v7496
    %8132 = vmatpush.msra.mxu0 %v7495
    %8133 = vmatpush.msra.mxu0 %v7494
    %8134 = vmatpush.msra.mxu0 %v7493
    %8135 = vmatpush.msra.mxu0 %v7492
    %8136 = vmatpush.msra.mxu0 %v7491
    %8137 = vmatpush.msra.mxu0 %v7490
    %8138 = vmatpush.msra.mxu0 %v7489
    %8139 = vmatpush.msra.mxu0 %v7488
    %8140 = vmatpush.msra.mxu0 %v7487
    %8141 = vmatpush.msra.mxu0 %v7486
    %8142 = vmatpush.msra.mxu0 %v7485
    %8143 = vmatpush.msra.mxu0 %v7484
    %8144 = vmatmul.f32.gmra.mxu0 %v7444
    %v8145 = vpop.f32.mrf.mxu0
    %v8146 = vadd.f32 %v8126, %v8145
    %8147 = vdwg.mxu0
    %8148 = vmatpush.msra.mxu0 %v7515
    %8149 = vmatpush.msra.mxu0 %v7514
    %8150 = vmatpush.msra.mxu0 %v7513
    %8151 = vmatpush.msra.mxu0 %v7512
    %8152 = vmatpush.msra.mxu0 %v7511
    %8153 = vmatpush.msra.mxu0 %v7510
    %8154 = vmatpush.msra.mxu0 %v7509
    %8155 = vmatpush.msra.mxu0 %v7508
    %8156 = vmatpush.msra.mxu0 %v7507
    %8157 = vmatpush.msra.mxu0 %v7506
    %8158 = vmatpush.msra.mxu0 %v7505
    %8159 = vmatpush.msra.mxu0 %v7504
    %8160 = vmatpush.msra.mxu0 %v7503
    %8161 = vmatpush.msra.mxu0 %v7502
    %8162 = vmatpush.msra.mxu0 %v7501
    %8163 = vmatpush.msra.mxu0 %v7500
    %8164 = vmatmul.f32.gmra.mxu0 %v7445
    %v8165 = vpop.f32.mrf.mxu0
    %v8166 = vadd.f32 %v8146, %v8165
    %8167 = vdwg.mxu0
    %8168 = vmatpush.msra.mxu0 %v7531
    %8169 = vmatpush.msra.mxu0 %v7530
    %8170 = vmatpush.msra.mxu0 %v7529
    %8171 = vmatpush.msra.mxu0 %v7528
    %8172 = vmatpush.msra.mxu0 %v7527
    %8173 = vmatpush.msra.mxu0 %v7526
    %8174 = vmatpush.msra.mxu0 %v7525
    %8175 = vmatpush.msra.mxu0 %v7524
    %8176 = vmatpush.msra.mxu0 %v7523
    %8177 = vmatpush.msra.mxu0 %v7522
    %8178 = vmatpush.msra.mxu0 %v7521
    %8179 = vmatpush.msra.mxu0 %v7520
    %8180 = vmatpush.msra.mxu0 %v7519
    %8181 = vmatpush.msra.mxu0 %v7518
    %8182 = vmatpush.msra.mxu0 %v7517
    %8183 = vmatpush.msra.mxu0 %v7516
    %8184 = vmatmul.f32.gmra.mxu0 %v7446
    %v8185 = vpop.f32.mrf.mxu0
    %v8186 = vadd.f32 %v8166, %v8185
    %8187 = vdwg.mxu0
    %8188 = vmatpush.msra.mxu0 %v7547
    %8189 = vmatpush.msra.mxu0 %v7546
    %8190 = vmatpush.msra.mxu0 %v7545
    %8191 = vmatpush.msra.mxu0 %v7544
    %8192 = vmatpush.msra.mxu0 %v7543
    %8193 = vmatpush.msra.mxu0 %v7542
    %8194 = vmatpush.msra.mxu0 %v7541
    %8195 = vmatpush.msra.mxu0 %v7540
    %8196 = vmatpush.msra.mxu0 %v7539
    %8197 = vmatpush.msra.mxu0 %v7538
    %8198 = vmatpush.msra.mxu0 %v7537
    %8199 = vmatpush.msra.mxu0 %v7536
    %8200 = vmatpush.msra.mxu0 %v7535
    %8201 = vmatpush.msra.mxu0 %v7534
    %8202 = vmatpush.msra.mxu0 %v7533
    %8203 = vmatpush.msra.mxu0 %v7532
    %8204 = vmatmul.f32.gmra.mxu0 %v7447
    %v8205 = vpop.f32.mrf.mxu0
    %v8206 = vadd.f32 %v8186, %v8205
    %8207 = vdwg.mxu0
    %8208 = vmatpush.msra.mxu0 %v7563
    %8209 = vmatpush.msra.mxu0 %v7562
    %8210 = vmatpush.msra.mxu0 %v7561
    %8211 = vmatpush.msra.mxu0 %v7560
    %8212 = vmatpush.msra.mxu0 %v7559
    %8213 = vmatpush.msra.mxu0 %v7558
    %8214 = vmatpush.msra.mxu0 %v7557
    %8215 = vmatpush.msra.mxu0 %v7556
    %8216 = vmatpush.msra.mxu0 %v7555
    %8217 = vmatpush.msra.mxu0 %v7554
    %8218 = vmatpush.msra.mxu0 %v7553
    %8219 = vmatpush.msra.mxu0 %v7552
    %8220 = vmatpush.msra.mxu0 %v7551
    %8221 = vmatpush.msra.mxu0 %v7550
    %8222 = vmatpush.msra.mxu0 %v7549
    %8223 = vmatpush.msra.mxu0 %v7548
    %8224 = vmatmul.f32.gmra.mxu0 %v7448
    %v8225 = vpop.f32.mrf.mxu0
    %v8226 = vadd.f32 %v8206, %v8225
    %8227 = vdwg.mxu0
    %8228 = vmatpush.msra.mxu0 %v7579
    %8229 = vmatpush.msra.mxu0 %v7578
    %8230 = vmatpush.msra.mxu0 %v7577
    %8231 = vmatpush.msra.mxu0 %v7576
    %8232 = vmatpush.msra.mxu0 %v7575
    %8233 = vmatpush.msra.mxu0 %v7574
    %8234 = vmatpush.msra.mxu0 %v7573
    %8235 = vmatpush.msra.mxu0 %v7572
    %8236 = vmatpush.msra.mxu0 %v7571
    %8237 = vmatpush.msra.mxu0 %v7570
    %8238 = vmatpush.msra.mxu0 %v7569
    %8239 = vmatpush.msra.mxu0 %v7568
    %8240 = vmatpush.msra.mxu0 %v7567
    %8241 = vmatpush.msra.mxu0 %v7566
    %8242 = vmatpush.msra.mxu0 %v7565
    %8243 = vmatpush.msra.mxu0 %v7564
    %8244 = vmatmul.f32.gmra.mxu0 %v7449
    %v8245 = vpop.f32.mrf.mxu0
    %v8246 = vadd.f32 %v8226, %v8245
    %8247 = vdwg.mxu0
    %8248 = vmatpush.msra.mxu0 %v7595
    %8249 = vmatpush.msra.mxu0 %v7594
    %8250 = vmatpush.msra.mxu0 %v7593
    %8251 = vmatpush.msra.mxu0 %v7592
    %8252 = vmatpush.msra.mxu0 %v7591
    %8253 = vmatpush.msra.mxu0 %v7590
    %8254 = vmatpush.msra.mxu0 %v7589
    %8255 = vmatpush.msra.mxu0 %v7588
    %8256 = vmatpush.msra.mxu0 %v7587
    %8257 = vmatpush.msra.mxu0 %v7586
    %8258 = vmatpush.msra.mxu0 %v7585
    %8259 = vmatpush.msra.mxu0 %v7584
    %8260 = vmatpush.msra.mxu0 %v7583
    %8261 = vmatpush.msra.mxu0 %v7582
    %8262 = vmatpush.msra.mxu0 %v7581
    %8263 = vmatpush.msra.mxu0 %v7580
    %8264 = vmatmul.f32.gmra.mxu0 %v7450
    %v8265 = vpop.f32.mrf.mxu0
    %v8266 = vadd.f32 %v8246, %v8265
    %8267 = vdwg.mxu0
    %8268 = vmatpush.msra.mxu0 %v7611
    %8269 = vmatpush.msra.mxu0 %v7610
    %8270 = vmatpush.msra.mxu0 %v7609
    %8271 = vmatpush.msra.mxu0 %v7608
    %8272 = vmatpush.msra.mxu0 %v7607
    %8273 = vmatpush.msra.mxu0 %v7606
    %8274 = vmatpush.msra.mxu0 %v7605
    %8275 = vmatpush.msra.mxu0 %v7604
    %8276 = vmatpush.msra.mxu0 %v7603
    %8277 = vmatpush.msra.mxu0 %v7602
    %8278 = vmatpush.msra.mxu0 %v7601
    %8279 = vmatpush.msra.mxu0 %v7600
    %8280 = vmatpush.msra.mxu0 %v7599
    %8281 = vmatpush.msra.mxu0 %v7598
    %8282 = vmatpush.msra.mxu0 %v7597
    %8283 = vmatpush.msra.mxu0 %v7596
    %8284 = vmatmul.f32.gmra.mxu0 %v7451
    %v8285 = vpop.f32.mrf.mxu0
    %v8286 = vadd.f32 %v8266, %v8285
    %8287 = vdwg.mxu0
    %8288 = vmatpush.msra.mxu0 %v7627
    %8289 = vmatpush.msra.mxu0 %v7626
    %8290 = vmatpush.msra.mxu0 %v7625
    %8291 = vmatpush.msra.mxu0 %v7624
    %8292 = vmatpush.msra.mxu0 %v7623
    %8293 = vmatpush.msra.mxu0 %v7622
    %8294 = vmatpush.msra.mxu0 %v7621
    %8295 = vmatpush.msra.mxu0 %v7620
    %8296 = vmatpush.msra.mxu0 %v7619
    %8297 = vmatpush.msra.mxu0 %v7618
    %8298 = vmatpush.msra.mxu0 %v7617
    %8299 = vmatpush.msra.mxu0 %v7616
    %8300 = vmatpush.msra.mxu0 %v7615
    %8301 = vmatpush.msra.mxu0 %v7614
    %8302 = vmatpush.msra.mxu0 %v7613
    %8303 = vmatpush.msra.mxu0 %v7612
    %8304 = vmatmul.f32.gmra.mxu0 %v7452
    %v8305 = vpop.f32.mrf.mxu0
    %v8306 = vadd.f32 %v8286, %v8305
    %8307 = vdwg.mxu0
    %8308 = vmatpush.msra.mxu0 %v7643
    %8309 = vmatpush.msra.mxu0 %v7642
    %8310 = vmatpush.msra.mxu0 %v7641
    %8311 = vmatpush.msra.mxu0 %v7640
    %8312 = vmatpush.msra.mxu0 %v7639
    %8313 = vmatpush.msra.mxu0 %v7638
    %8314 = vmatpush.msra.mxu0 %v7637
    %8315 = vmatpush.msra.mxu0 %v7636
    %8316 = vmatpush.msra.mxu0 %v7635
    %8317 = vmatpush.msra.mxu0 %v7634
    %8318 = vmatpush.msra.mxu0 %v7633
    %8319 = vmatpush.msra.mxu0 %v7632
    %8320 = vmatpush.msra.mxu0 %v7631
    %8321 = vmatpush.msra.mxu0 %v7630
    %8322 = vmatpush.msra.mxu0 %v7629
    %8323 = vmatpush.msra.mxu0 %v7628
    %8324 = vmatmul.f32.gmra.mxu0 %v7453
    %v8325 = vpop.f32.mrf.mxu0
    %v8326 = vadd.f32 %v8306, %v8325
    %8327 = vdwg.mxu0
    %8328 = vmatpush.msra.mxu0 %v7659
    %8329 = vmatpush.msra.mxu0 %v7658
    %8330 = vmatpush.msra.mxu0 %v7657
    %8331 = vmatpush.msra.mxu0 %v7656
    %8332 = vmatpush.msra.mxu0 %v7655
    %8333 = vmatpush.msra.mxu0 %v7654
    %8334 = vmatpush.msra.mxu0 %v7653
    %8335 = vmatpush.msra.mxu0 %v7652
    %8336 = vmatpush.msra.mxu0 %v7651
    %8337 = vmatpush.msra.mxu0 %v7650
    %8338 = vmatpush.msra.mxu0 %v7649
    %8339 = vmatpush.msra.mxu0 %v7648
    %8340 = vmatpush.msra.mxu0 %v7647
    %8341 = vmatpush.msra.mxu0 %v7646
    %8342 = vmatpush.msra.mxu0 %v7645
    %8343 = vmatpush.msra.mxu0 %v7644
    %8344 = vmatmul.f32.gmra.mxu0 %v7454
    %v8345 = vpop.f32.mrf.mxu0
    %v8346 = vadd.f32 %v8326, %v8345
    %8347 = vdwg.mxu0
    %8348 = vmatpush.msra.mxu0 %v7675
    %8349 = vmatpush.msra.mxu0 %v7674
    %8350 = vmatpush.msra.mxu0 %v7673
    %8351 = vmatpush.msra.mxu0 %v7672
    %8352 = vmatpush.msra.mxu0 %v7671
    %8353 = vmatpush.msra.mxu0 %v7670
    %8354 = vmatpush.msra.mxu0 %v7669
    %8355 = vmatpush.msra.mxu0 %v7668
    %8356 = vmatpush.msra.mxu0 %v7667
    %8357 = vmatpush.msra.mxu0 %v7666
    %8358 = vmatpush.msra.mxu0 %v7665
    %8359 = vmatpush.msra.mxu0 %v7664
    %8360 = vmatpush.msra.mxu0 %v7663
    %8361 = vmatpush.msra.mxu0 %v7662
    %8362 = vmatpush.msra.mxu0 %v7661
    %8363 = vmatpush.msra.mxu0 %v7660
    %8364 = vmatmul.f32.gmra.mxu0 %v7455
    %v8365 = vpop.f32.mrf.mxu0
    %v8366 = vadd.f32 %v8346, %v8365
    %8367 = vdwg.mxu0
    %8368 = vmatpush.msra.mxu0 %v7691
    %8369 = vmatpush.msra.mxu0 %v7690
    %8370 = vmatpush.msra.mxu0 %v7689
    %8371 = vmatpush.msra.mxu0 %v7688
    %8372 = vmatpush.msra.mxu0 %v7687
    %8373 = vmatpush.msra.mxu0 %v7686
    %8374 = vmatpush.msra.mxu0 %v7685
    %8375 = vmatpush.msra.mxu0 %v7684
    %8376 = vmatpush.msra.mxu0 %v7683
    %8377 = vmatpush.msra.mxu0 %v7682
    %8378 = vmatpush.msra.mxu0 %v7681
    %8379 = vmatpush.msra.mxu0 %v7680
    %8380 = vmatpush.msra.mxu0 %v7679
    %8381 = vmatpush.msra.mxu0 %v7678
    %8382 = vmatpush.msra.mxu0 %v7677
    %8383 = vmatpush.msra.mxu0 %v7676
    %8384 = vmatmul.f32.gmra.mxu0 %v7456
    %v8385 = vpop.f32.mrf.mxu0
    %v8386 = vadd.f32 %v8366, %v8385
    %8387 = vdwg.mxu0
    %8388 = vmatpush.msra.mxu0 %v7707
    %8389 = vmatpush.msra.mxu0 %v7706
    %8390 = vmatpush.msra.mxu0 %v7705
    %8391 = vmatpush.msra.mxu0 %v7704
    %8392 = vmatpush.msra.mxu0 %v7703
    %8393 = vmatpush.msra.mxu0 %v7702
    %8394 = vmatpush.msra.mxu0 %v7701
    %8395 = vmatpush.msra.mxu0 %v7700
    %8396 = vmatpush.msra.mxu0 %v7699
    %8397 = vmatpush.msra.mxu0 %v7698
    %8398 = vmatpush.msra.mxu0 %v7697
    %8399 = vmatpush.msra.mxu0 %v7696
    %8400 = vmatpush.msra.mxu0 %v7695
    %8401 = vmatpush.msra.mxu0 %v7694
    %8402 = vmatpush.msra.mxu0 %v7693
    %8403 = vmatpush.msra.mxu0 %v7692
    %8404 = vmatmul.f32.gmra.mxu0 %v7457
    %v8405 = vpop.f32.mrf.mxu0
    %v8406 = vadd.f32 %v8386, %v8405
    %8407 = vdwg.mxu0
    %8408 = vmatpush.msra.mxu0 %v7723
    %8409 = vmatpush.msra.mxu0 %v7722
    %8410 = vmatpush.msra.mxu0 %v7721
    %8411 = vmatpush.msra.mxu0 %v7720
    %8412 = vmatpush.msra.mxu0 %v7719
    %8413 = vmatpush.msra.mxu0 %v7718
    %8414 = vmatpush.msra.mxu0 %v7717
    %8415 = vmatpush.msra.mxu0 %v7716
    %8416 = vmatpush.msra.mxu0 %v7715
    %8417 = vmatpush.msra.mxu0 %v7714
    %8418 = vmatpush.msra.mxu0 %v7713
    %8419 = vmatpush.msra.mxu0 %v7712
    %8420 = vmatpush.msra.mxu0 %v7711
    %8421 = vmatpush.msra.mxu0 %v7710
    %8422 = vmatpush.msra.mxu0 %v7709
    %8423 = vmatpush.msra.mxu0 %v7708
    %8424 = vmatmul.f32.gmra.mxu0 %v7458
    %v8425 = vpop.f32.mrf.mxu0
    %v8426 = vadd.f32 %v8406, %v8425
    %8427 = vdwg.mxu0
    %8428 = vmatpush.msra.mxu0 %v7739
    %8429 = vmatpush.msra.mxu0 %v7738
    %8430 = vmatpush.msra.mxu0 %v7737
    %8431 = vmatpush.msra.mxu0 %v7736
    %8432 = vmatpush.msra.mxu0 %v7735
    %8433 = vmatpush.msra.mxu0 %v7734
    %8434 = vmatpush.msra.mxu0 %v7733
    %8435 = vmatpush.msra.mxu0 %v7732
    %8436 = vmatpush.msra.mxu0 %v7731
    %8437 = vmatpush.msra.mxu0 %v7730
    %8438 = vmatpush.msra.mxu0 %v7729
    %8439 = vmatpush.msra.mxu0 %v7728
    %8440 = vmatpush.msra.mxu0 %v7727
    %8441 = vmatpush.msra.mxu0 %v7726
    %8442 = vmatpush.msra.mxu0 %v7725
    %8443 = vmatpush.msra.mxu0 %v7724
    %8444 = vmatmul.f32.gmra.mxu0 %v7459
    %v8445 = vpop.f32.mrf.mxu0
    %v8446 = vadd.f32 %v8426, %v8445
    %8447 = vdwg.mxu0
    %8448 = vmatpush.msra.mxu0 %v7755
    %8449 = vmatpush.msra.mxu0 %v7754
    %8450 = vmatpush.msra.mxu0 %v7753
    %8451 = vmatpush.msra.mxu0 %v7752
    %8452 = vmatpush.msra.mxu0 %v7751
    %8453 = vmatpush.msra.mxu0 %v7750
    %8454 = vmatpush.msra.mxu0 %v7749
    %8455 = vmatpush.msra.mxu0 %v7748
    %8456 = vmatpush.msra.mxu0 %v7747
    %8457 = vmatpush.msra.mxu0 %v7746
    %8458 = vmatpush.msra.mxu0 %v7745
    %8459 = vmatpush.msra.mxu0 %v7744
    %8460 = vmatpush.msra.mxu0 %v7743
    %8461 = vmatpush.msra.mxu0 %v7742
    %8462 = vmatpush.msra.mxu0 %v7741
    %8463 = vmatpush.msra.mxu0 %v7740
    %8464 = vmatmul.f32.gmra.mxu0 %v7460
    %v8465 = vpop.f32.mrf.mxu0
    %v8466 = vadd.f32 %v8446, %v8465
    %8467 = vdwg.mxu0
    %8468 = vmatpush.msra.mxu0 %v7771
    %8469 = vmatpush.msra.mxu0 %v7770
    %8470 = vmatpush.msra.mxu0 %v7769
    %8471 = vmatpush.msra.mxu0 %v7768
    %8472 = vmatpush.msra.mxu0 %v7767
    %8473 = vmatpush.msra.mxu0 %v7766
    %8474 = vmatpush.msra.mxu0 %v7765
    %8475 = vmatpush.msra.mxu0 %v7764
    %8476 = vmatpush.msra.mxu0 %v7763
    %8477 = vmatpush.msra.mxu0 %v7762
    %8478 = vmatpush.msra.mxu0 %v7761
    %8479 = vmatpush.msra.mxu0 %v7760
    %8480 = vmatpush.msra.mxu0 %v7759
    %8481 = vmatpush.msra.mxu0 %v7758
    %8482 = vmatpush.msra.mxu0 %v7757
    %8483 = vmatpush.msra.mxu0 %v7756
    %8484 = vmatmul.f32.gmra.mxu0 %v7461
    %v8485 = vpop.f32.mrf.mxu0
    %v8486 = vadd.f32 %v8466, %v8485
    %8487 = vdwg.mxu0
    %8488 = vmatpush.msra.mxu0 %v7787
    %8489 = vmatpush.msra.mxu0 %v7786
    %8490 = vmatpush.msra.mxu0 %v7785
    %8491 = vmatpush.msra.mxu0 %v7784
    %8492 = vmatpush.msra.mxu0 %v7783
    %8493 = vmatpush.msra.mxu0 %v7782
    %8494 = vmatpush.msra.mxu0 %v7781
    %8495 = vmatpush.msra.mxu0 %v7780
    %8496 = vmatpush.msra.mxu0 %v7779
    %8497 = vmatpush.msra.mxu0 %v7778
    %8498 = vmatpush.msra.mxu0 %v7777
    %8499 = vmatpush.msra.mxu0 %v7776
    %8500 = vmatpush.msra.mxu0 %v7775
    %8501 = vmatpush.msra.mxu0 %v7774
    %8502 = vmatpush.msra.mxu0 %v7773
    %8503 = vmatpush.msra.mxu0 %v7772
    %8504 = vmatmul.f32.gmra.mxu0 %v7462
    %v8505 = vpop.f32.mrf.mxu0
    %v8506 = vadd.f32 %v8486, %v8505
    %8507 = vdwg.mxu0
    %8508 = vmatpush.msra.mxu0 %v7803
    %8509 = vmatpush.msra.mxu0 %v7802
    %8510 = vmatpush.msra.mxu0 %v7801
    %8511 = vmatpush.msra.mxu0 %v7800
    %8512 = vmatpush.msra.mxu0 %v7799
    %8513 = vmatpush.msra.mxu0 %v7798
    %8514 = vmatpush.msra.mxu0 %v7797
    %8515 = vmatpush.msra.mxu0 %v7796
    %8516 = vmatpush.msra.mxu0 %v7795
    %8517 = vmatpush.msra.mxu0 %v7794
    %8518 = vmatpush.msra.mxu0 %v7793
    %8519 = vmatpush.msra.mxu0 %v7792
    %8520 = vmatpush.msra.mxu0 %v7791
    %8521 = vmatpush.msra.mxu0 %v7790
    %8522 = vmatpush.msra.mxu0 %v7789
    %8523 = vmatpush.msra.mxu0 %v7788
    %8524 = vmatmul.f32.gmra.mxu0 %v7463
    %v8525 = vpop.f32.mrf.mxu0
    %v8526 = vadd.f32 %v8506, %v8525
    %8527 = vdwg.mxu0
    %8528 = vmatpush.msra.mxu0 %v7819
    %8529 = vmatpush.msra.mxu0 %v7818
    %8530 = vmatpush.msra.mxu0 %v7817
    %8531 = vmatpush.msra.mxu0 %v7816
    %8532 = vmatpush.msra.mxu0 %v7815
    %8533 = vmatpush.msra.mxu0 %v7814
    %8534 = vmatpush.msra.mxu0 %v7813
    %8535 = vmatpush.msra.mxu0 %v7812
    %8536 = vmatpush.msra.mxu0 %v7811
    %8537 = vmatpush.msra.mxu0 %v7810
    %8538 = vmatpush.msra.mxu0 %v7809
    %8539 = vmatpush.msra.mxu0 %v7808
    %8540 = vmatpush.msra.mxu0 %v7807
    %8541 = vmatpush.msra.mxu0 %v7806
    %8542 = vmatpush.msra.mxu0 %v7805
    %8543 = vmatpush.msra.mxu0 %v7804
    %8544 = vmatmul.f32.gmra.mxu0 %v7464
    %v8545 = vpop.f32.mrf.mxu0
    %v8546 = vadd.f32 %v8526, %v8545
    %8547 = vdwg.mxu0
    %8548 = vmatpush.msra.mxu0 %v7835
    %8549 = vmatpush.msra.mxu0 %v7834
    %8550 = vmatpush.msra.mxu0 %v7833
    %8551 = vmatpush.msra.mxu0 %v7832
    %8552 = vmatpush.msra.mxu0 %v7831
    %8553 = vmatpush.msra.mxu0 %v7830
    %8554 = vmatpush.msra.mxu0 %v7829
    %8555 = vmatpush.msra.mxu0 %v7828
    %8556 = vmatpush.msra.mxu0 %v7827
    %8557 = vmatpush.msra.mxu0 %v7826
    %8558 = vmatpush.msra.mxu0 %v7825
    %8559 = vmatpush.msra.mxu0 %v7824
    %8560 = vmatpush.msra.mxu0 %v7823
    %8561 = vmatpush.msra.mxu0 %v7822
    %8562 = vmatpush.msra.mxu0 %v7821
    %8563 = vmatpush.msra.mxu0 %v7820
    %8564 = vmatmul.f32.gmra.mxu0 %v7465
    %v8565 = vpop.f32.mrf.mxu0
    %v8566 = vadd.f32 %v8546, %v8565
    %8567 = vdwg.mxu0
    %8568 = vmatpush.msra.mxu0 %v7851
    %8569 = vmatpush.msra.mxu0 %v7850
    %8570 = vmatpush.msra.mxu0 %v7849
    %8571 = vmatpush.msra.mxu0 %v7848
    %8572 = vmatpush.msra.mxu0 %v7847
    %8573 = vmatpush.msra.mxu0 %v7846
    %8574 = vmatpush.msra.mxu0 %v7845
    %8575 = vmatpush.msra.mxu0 %v7844
    %8576 = vmatpush.msra.mxu0 %v7843
    %8577 = vmatpush.msra.mxu0 %v7842
    %8578 = vmatpush.msra.mxu0 %v7841
    %8579 = vmatpush.msra.mxu0 %v7840
    %8580 = vmatpush.msra.mxu0 %v7839
    %8581 = vmatpush.msra.mxu0 %v7838
    %8582 = vmatpush.msra.mxu0 %v7837
    %8583 = vmatpush.msra.mxu0 %v7836
    %8584 = vmatmul.f32.gmra.mxu0 %v7466
    %v8585 = vpop.f32.mrf.mxu0
    %v8586 = vadd.f32 %v8566, %v8585
    %8587 = vdwg.mxu0
    %8588 = vmatpush.msra.mxu0 %v7867
    %8589 = vmatpush.msra.mxu0 %v7866
    %8590 = vmatpush.msra.mxu0 %v7865
    %8591 = vmatpush.msra.mxu0 %v7864
    %8592 = vmatpush.msra.mxu0 %v7863
    %8593 = vmatpush.msra.mxu0 %v7862
    %8594 = vmatpush.msra.mxu0 %v7861
    %8595 = vmatpush.msra.mxu0 %v7860
    %8596 = vmatpush.msra.mxu0 %v7859
    %8597 = vmatpush.msra.mxu0 %v7858
    %8598 = vmatpush.msra.mxu0 %v7857
    %8599 = vmatpush.msra.mxu0 %v7856
    %8600 = vmatpush.msra.mxu0 %v7855
    %8601 = vmatpush.msra.mxu0 %v7854
    %8602 = vmatpush.msra.mxu0 %v7853
    %8603 = vmatpush.msra.mxu0 %v7852
    %8604 = vmatmul.f32.gmra.mxu0 %v7467
    %v8605 = vpop.f32.mrf.mxu0
    %v8606 = vadd.f32 %v8586, %v8605
    %8607 = vdwg.mxu0
    %8608 = vmatpush.msra.mxu0 %v7883
    %8609 = vmatpush.msra.mxu0 %v7882
    %8610 = vmatpush.msra.mxu0 %v7881
    %8611 = vmatpush.msra.mxu0 %v7880
    %8612 = vmatpush.msra.mxu0 %v7879
    %8613 = vmatpush.msra.mxu0 %v7878
    %8614 = vmatpush.msra.mxu0 %v7877
    %8615 = vmatpush.msra.mxu0 %v7876
    %8616 = vmatpush.msra.mxu0 %v7875
    %8617 = vmatpush.msra.mxu0 %v7874
    %8618 = vmatpush.msra.mxu0 %v7873
    %8619 = vmatpush.msra.mxu0 %v7872
    %8620 = vmatpush.msra.mxu0 %v7871
    %8621 = vmatpush.msra.mxu0 %v7870
    %8622 = vmatpush.msra.mxu0 %v7869
    %8623 = vmatpush.msra.mxu0 %v7868
    %8624 = vmatmul.f32.gmra.mxu0 %v7468
    %v8625 = vpop.f32.mrf.mxu0
    %v8626 = vadd.f32 %v8606, %v8625
    %8627 = vdwg.mxu0
    %8628 = vmatpush.msra.mxu0 %v7899
    %8629 = vmatpush.msra.mxu0 %v7898
    %8630 = vmatpush.msra.mxu0 %v7897
    %8631 = vmatpush.msra.mxu0 %v7896
    %8632 = vmatpush.msra.mxu0 %v7895
    %8633 = vmatpush.msra.mxu0 %v7894
    %8634 = vmatpush.msra.mxu0 %v7893
    %8635 = vmatpush.msra.mxu0 %v7892
    %8636 = vmatpush.msra.mxu0 %v7891
    %8637 = vmatpush.msra.mxu0 %v7890
    %8638 = vmatpush.msra.mxu0 %v7889
    %8639 = vmatpush.msra.mxu0 %v7888
    %8640 = vmatpush.msra.mxu0 %v7887
    %8641 = vmatpush.msra.mxu0 %v7886
    %8642 = vmatpush.msra.mxu0 %v7885
    %8643 = vmatpush.msra.mxu0 %v7884
    %8644 = vmatmul.f32.gmra.mxu0 %v7469
    %v8645 = vpop.f32.mrf.mxu0
    %v8646 = vadd.f32 %v8626, %v8645
    %8647 = vdwg.mxu0
    %8648 = vmatpush.msra.mxu0 %v7915
    %8649 = vmatpush.msra.mxu0 %v7914
    %8650 = vmatpush.msra.mxu0 %v7913
    %8651 = vmatpush.msra.mxu0 %v7912
    %8652 = vmatpush.msra.mxu0 %v7911
    %8653 = vmatpush.msra.mxu0 %v7910
    %8654 = vmatpush.msra.mxu0 %v7909
    %8655 = vmatpush.msra.mxu0 %v7908
    %8656 = vmatpush.msra.mxu0 %v7907
    %8657 = vmatpush.msra.mxu0 %v7906
    %8658 = vmatpush.msra.mxu0 %v7905
    %8659 = vmatpush.msra.mxu0 %v7904
    %8660 = vmatpush.msra.mxu0 %v7903
    %8661 = vmatpush.msra.mxu0 %v7902
    %8662 = vmatpush.msra.mxu0 %v7901
    %8663 = vmatpush.msra.mxu0 %v7900
    %8664 = vmatmul.f32.gmra.mxu0 %v7470
    %v8665 = vpop.f32.mrf.mxu0
    %v8666 = vadd.f32 %v8646, %v8665
    %8667 = vdwg.mxu0
    %8668 = vmatpush.msra.mxu0 %v7931
    %8669 = vmatpush.msra.mxu0 %v7930
    %8670 = vmatpush.msra.mxu0 %v7929
    %8671 = vmatpush.msra.mxu0 %v7928
    %8672 = vmatpush.msra.mxu0 %v7927
    %8673 = vmatpush.msra.mxu0 %v7926
    %8674 = vmatpush.msra.mxu0 %v7925
    %8675 = vmatpush.msra.mxu0 %v7924
    %8676 = vmatpush.msra.mxu0 %v7923
    %8677 = vmatpush.msra.mxu0 %v7922
    %8678 = vmatpush.msra.mxu0 %v7921
    %8679 = vmatpush.msra.mxu0 %v7920
    %8680 = vmatpush.msra.mxu0 %v7919
    %8681 = vmatpush.msra.mxu0 %v7918
    %8682 = vmatpush.msra.mxu0 %v7917
    %8683 = vmatpush.msra.mxu0 %v7916
    %8684 = vmatmul.f32.gmra.mxu0 %v7471
    %v8685 = vpop.f32.mrf.mxu0
    %v8686 = vadd.f32 %v8666, %v8685
    %8687 = vdwg.mxu0
    %8688 = vmatpush.msra.mxu0 %v7947
    %8689 = vmatpush.msra.mxu0 %v7946
    %8690 = vmatpush.msra.mxu0 %v7945
    %8691 = vmatpush.msra.mxu0 %v7944
    %8692 = vmatpush.msra.mxu0 %v7943
    %8693 = vmatpush.msra.mxu0 %v7942
    %8694 = vmatpush.msra.mxu0 %v7941
    %8695 = vmatpush.msra.mxu0 %v7940
    %8696 = vmatpush.msra.mxu0 %v7939
    %8697 = vmatpush.msra.mxu0 %v7938
    %8698 = vmatpush.msra.mxu0 %v7937
    %8699 = vmatpush.msra.mxu0 %v7936
    %8700 = vmatpush.msra.mxu0 %v7935
    %8701 = vmatpush.msra.mxu0 %v7934
    %8702 = vmatpush.msra.mxu0 %v7933
    %8703 = vmatpush.msra.mxu0 %v7932
    %8704 = vmatmul.f32.gmra.mxu0 %v7472
    %v8705 = vpop.f32.mrf.mxu0
    %v8706 = vadd.f32 %v8686, %v8705
    %8707 = vdwg.mxu0
    %8708 = vmatpush.msra.mxu0 %v7963
    %8709 = vmatpush.msra.mxu0 %v7962
    %8710 = vmatpush.msra.mxu0 %v7961
    %8711 = vmatpush.msra.mxu0 %v7960
    %8712 = vmatpush.msra.mxu0 %v7959
    %8713 = vmatpush.msra.mxu0 %v7958
    %8714 = vmatpush.msra.mxu0 %v7957
    %8715 = vmatpush.msra.mxu0 %v7956
    %8716 = vmatpush.msra.mxu0 %v7955
    %8717 = vmatpush.msra.mxu0 %v7954
    %8718 = vmatpush.msra.mxu0 %v7953
    %8719 = vmatpush.msra.mxu0 %v7952
    %8720 = vmatpush.msra.mxu0 %v7951
    %8721 = vmatpush.msra.mxu0 %v7950
    %8722 = vmatpush.msra.mxu0 %v7949
    %8723 = vmatpush.msra.mxu0 %v7948
    %8724 = vmatmul.f32.gmra.mxu0 %v7473
    %v8725 = vpop.f32.mrf.mxu0
    %v8726 = vadd.f32 %v8706, %v8725
    %8727 = vdwg.mxu0
    %8728 = vmatpush.msra.mxu0 %v7979
    %8729 = vmatpush.msra.mxu0 %v7978
    %8730 = vmatpush.msra.mxu0 %v7977
    %8731 = vmatpush.msra.mxu0 %v7976
    %8732 = vmatpush.msra.mxu0 %v7975
    %8733 = vmatpush.msra.mxu0 %v7974
    %8734 = vmatpush.msra.mxu0 %v7973
    %8735 = vmatpush.msra.mxu0 %v7972
    %8736 = vmatpush.msra.mxu0 %v7971
    %8737 = vmatpush.msra.mxu0 %v7970
    %8738 = vmatpush.msra.mxu0 %v7969
    %8739 = vmatpush.msra.mxu0 %v7968
    %8740 = vmatpush.msra.mxu0 %v7967
    %8741 = vmatpush.msra.mxu0 %v7966
    %8742 = vmatpush.msra.mxu0 %v7965
    %8743 = vmatpush.msra.mxu0 %v7964
    %8744 = vmatmul.f32.gmra.mxu0 %v7474
    %v8745 = vpop.f32.mrf.mxu0
    %v8746 = vadd.f32 %v8726, %v8745
    %8747 = vdwg.mxu0
    %8748 = vmatpush.msra.mxu0 %v7995
    %8749 = vmatpush.msra.mxu0 %v7994
    %8750 = vmatpush.msra.mxu0 %v7993
    %8751 = vmatpush.msra.mxu0 %v7992
    %8752 = vmatpush.msra.mxu0 %v7991
    %8753 = vmatpush.msra.mxu0 %v7990
    %8754 = vmatpush.msra.mxu0 %v7989
    %8755 = vmatpush.msra.mxu0 %v7988
    %8756 = vmatpush.msra.mxu0 %v7987
    %8757 = vmatpush.msra.mxu0 %v7986
    %8758 = vmatpush.msra.mxu0 %v7985
    %8759 = vmatpush.msra.mxu0 %v7984
    %8760 = vmatpush.msra.mxu0 %v7983
    %8761 = vmatpush.msra.mxu0 %v7982
    %8762 = vmatpush.msra.mxu0 %v7981
    %8763 = vmatpush.msra.mxu0 %v7980
    %8764 = vmatmul.f32.gmra.mxu0 %v7475
    %v8765 = vpop.f32.mrf.mxu0
    %v8766 = vadd.f32 %v8746, %v8765
    %8767 = vdwg.mxu0
    %8768 = vmatpush.msra.mxu0 %v8011
    %8769 = vmatpush.msra.mxu0 %v8010
    %8770 = vmatpush.msra.mxu0 %v8009
    %8771 = vmatpush.msra.mxu0 %v8008
    %8772 = vmatpush.msra.mxu0 %v8007
    %8773 = vmatpush.msra.mxu0 %v8006
    %8774 = vmatpush.msra.mxu0 %v8005
    %8775 = vmatpush.msra.mxu0 %v8004
    %8776 = vmatpush.msra.mxu0 %v8003
    %8777 = vmatpush.msra.mxu0 %v8002
    %8778 = vmatpush.msra.mxu0 %v8001
    %8779 = vmatpush.msra.mxu0 %v8000
    %8780 = vmatpush.msra.mxu0 %v7999
    %8781 = vmatpush.msra.mxu0 %v7998
    %8782 = vmatpush.msra.mxu0 %v7997
    %8783 = vmatpush.msra.mxu0 %v7996
    %8784 = vmatmul.f32.gmra.mxu0 %v7476
    %v8785 = vpop.f32.mrf.mxu0
    %v8786 = vadd.f32 %v8766, %v8785
    %8787 = vdwg.mxu0
    %8788 = vmatpush.msra.mxu0 %v8027
    %8789 = vmatpush.msra.mxu0 %v8026
    %8790 = vmatpush.msra.mxu0 %v8025
    %8791 = vmatpush.msra.mxu0 %v8024
    %8792 = vmatpush.msra.mxu0 %v8023
    %8793 = vmatpush.msra.mxu0 %v8022
    %8794 = vmatpush.msra.mxu0 %v8021
    %8795 = vmatpush.msra.mxu0 %v8020
    %8796 = vmatpush.msra.mxu0 %v8019
    %8797 = vmatpush.msra.mxu0 %v8018
    %8798 = vmatpush.msra.mxu0 %v8017
    %8799 = vmatpush.msra.mxu0 %v8016
    %8800 = vmatpush.msra.mxu0 %v8015
    %8801 = vmatpush.msra.mxu0 %v8014
    %8802 = vmatpush.msra.mxu0 %v8013
    %8803 = vmatpush.msra.mxu0 %v8012
    %8804 = vmatmul.f32.gmra.mxu0 %v7477
    %v8805 = vpop.f32.mrf.mxu0
    %v8806 = vadd.f32 %v8786, %v8805
    %8807 = vdwg.mxu0
    %8808 = vmatpush.msra.mxu0 %v8043
    %8809 = vmatpush.msra.mxu0 %v8042
    %8810 = vmatpush.msra.mxu0 %v8041
    %8811 = vmatpush.msra.mxu0 %v8040
    %8812 = vmatpush.msra.mxu0 %v8039
    %8813 = vmatpush.msra.mxu0 %v8038
    %8814 = vmatpush.msra.mxu0 %v8037
    %8815 = vmatpush.msra.mxu0 %v8036
    %8816 = vmatpush.msra.mxu0 %v8035
    %8817 = vmatpush.msra.mxu0 %v8034
    %8818 = vmatpush.msra.mxu0 %v8033
    %8819 = vmatpush.msra.mxu0 %v8032
    %8820 = vmatpush.msra.mxu0 %v8031
    %8821 = vmatpush.msra.mxu0 %v8030
    %8822 = vmatpush.msra.mxu0 %v8029
    %8823 = vmatpush.msra.mxu0 %v8028
    %8824 = vmatmul.f32.gmra.mxu0 %v7478
    %v8825 = vpop.f32.mrf.mxu0
    %v8826 = vadd.f32 %v8806, %v8825
    %8827 = vdwg.mxu0
    %8828 = vmatpush.msra.mxu0 %v8059
    %8829 = vmatpush.msra.mxu0 %v8058
    %8830 = vmatpush.msra.mxu0 %v8057
    %8831 = vmatpush.msra.mxu0 %v8056
    %8832 = vmatpush.msra.mxu0 %v8055
    %8833 = vmatpush.msra.mxu0 %v8054
    %8834 = vmatpush.msra.mxu0 %v8053
    %8835 = vmatpush.msra.mxu0 %v8052
    %8836 = vmatpush.msra.mxu0 %v8051
    %8837 = vmatpush.msra.mxu0 %v8050
    %8838 = vmatpush.msra.mxu0 %v8049
    %8839 = vmatpush.msra.mxu0 %v8048
    %8840 = vmatpush.msra.mxu0 %v8047
    %8841 = vmatpush.msra.mxu0 %v8046
    %8842 = vmatpush.msra.mxu0 %v8045
    %8843 = vmatpush.msra.mxu0 %v8044
    %8844 = vmatmul.f32.gmra.mxu0 %v7479
    %v8845 = vpop.f32.mrf.mxu0
    %v8846 = vadd.f32 %v8826, %v8845
    %8847 = vdwg.mxu0
    %8848 = vmatpush.msra.mxu0 %v8075
    %8849 = vmatpush.msra.mxu0 %v8074
    %8850 = vmatpush.msra.mxu0 %v8073
    %8851 = vmatpush.msra.mxu0 %v8072
    %8852 = vmatpush.msra.mxu0 %v8071
    %8853 = vmatpush.msra.mxu0 %v8070
    %8854 = vmatpush.msra.mxu0 %v8069
    %8855 = vmatpush.msra.mxu0 %v8068
    %8856 = vmatpush.msra.mxu0 %v8067
    %8857 = vmatpush.msra.mxu0 %v8066
    %8858 = vmatpush.msra.mxu0 %v8065
    %8859 = vmatpush.msra.mxu0 %v8064
    %8860 = vmatpush.msra.mxu0 %v8063
    %8861 = vmatpush.msra.mxu0 %v8062
    %8862 = vmatpush.msra.mxu0 %v8061
    %8863 = vmatpush.msra.mxu0 %v8060
    %8864 = vmatmul.f32.gmra.mxu0 %v7480
    %v8865 = vpop.f32.mrf.mxu0
    %v8866 = vadd.f32 %v8846, %v8865
    %8867 = vdwg.mxu0
    %8868 = vmatpush.msra.mxu0 %v8091
    %8869 = vmatpush.msra.mxu0 %v8090
    %8870 = vmatpush.msra.mxu0 %v8089
    %8871 = vmatpush.msra.mxu0 %v8088
    %8872 = vmatpush.msra.mxu0 %v8087
    %8873 = vmatpush.msra.mxu0 %v8086
    %8874 = vmatpush.msra.mxu0 %v8085
    %8875 = vmatpush.msra.mxu0 %v8084
    %8876 = vmatpush.msra.mxu0 %v8083
    %8877 = vmatpush.msra.mxu0 %v8082
    %8878 = vmatpush.msra.mxu0 %v8081
    %8879 = vmatpush.msra.mxu0 %v8080
    %8880 = vmatpush.msra.mxu0 %v8079
    %8881 = vmatpush.msra.mxu0 %v8078
    %8882 = vmatpush.msra.mxu0 %v8077
    %8883 = vmatpush.msra.mxu0 %v8076
    %8884 = vmatmul.f32.gmra.mxu0 %v7481
    %v8885 = vpop.f32.mrf.mxu0
    %v8886 = vadd.f32 %v8866, %v8885
    %8887 = vdwg.mxu0
    %8888 = vmatpush.msra.mxu0 %v8107
    %8889 = vmatpush.msra.mxu0 %v8106
    %8890 = vmatpush.msra.mxu0 %v8105
    %8891 = vmatpush.msra.mxu0 %v8104
    %8892 = vmatpush.msra.mxu0 %v8103
    %8893 = vmatpush.msra.mxu0 %v8102
    %8894 = vmatpush.msra.mxu0 %v8101
    %8895 = vmatpush.msra.mxu0 %v8100
    %8896 = vmatpush.msra.mxu0 %v8099
    %8897 = vmatpush.msra.mxu0 %v8098
    %8898 = vmatpush.msra.mxu0 %v8097
    %8899 = vmatpush.msra.mxu0 %v8096
    %8900 = vmatpush.msra.mxu0 %v8095
    %8901 = vmatpush.msra.mxu0 %v8094
    %8902 = vmatpush.msra.mxu0 %v8093
    %8903 = vmatpush.msra.mxu0 %v8092
    %8904 = vmatmul.f32.gmra.mxu0 %v7482
    %v8905 = vpop.f32.mrf.mxu0
    %v8906 = vadd.f32 %v8886, %v8905
    %8907 = vdwg.mxu0
    %8908 = vmatpush.msra.mxu0 %v8123
    %8909 = vmatpush.msra.mxu0 %v8122
    %8910 = vmatpush.msra.mxu0 %v8121
    %8911 = vmatpush.msra.mxu0 %v8120
    %8912 = vmatpush.msra.mxu0 %v8119
    %8913 = vmatpush.msra.mxu0 %v8118
    %8914 = vmatpush.msra.mxu0 %v8117
    %8915 = vmatpush.msra.mxu0 %v8116
    %8916 = vmatpush.msra.mxu0 %v8115
    %8917 = vmatpush.msra.mxu0 %v8114
    %8918 = vmatpush.msra.mxu0 %v8113
    %8919 = vmatpush.msra.mxu0 %v8112
    %8920 = vmatpush.msra.mxu0 %v8111
    %8921 = vmatpush.msra.mxu0 %v8110
    %8922 = vmatpush.msra.mxu0 %v8109
    %8923 = vmatpush.msra.mxu0 %v8108
    %8924 = vmatmul.f32.gmra.mxu0 %v7483
    %v8925 = vpop.f32.mrf.mxu0
    %v8926 = vadd.f32 %v8906, %v8925
    %8927 = vdwg.mxu0
    %8928 = vst [vmem:[%s11] sm:$0xff] %v8926
    // Predicated region
    $region86: #{deepsense_forward.1} parent=1 // pred_check
      _
    $region87: #{deepsense_forward.1} parent=1 // pred_check_branch
      %8930 = sbr.rel (0) target = $region89
    $region88: #{deepsense_forward.1} parent=1 // pred_region
      _
    $region89: #{deepsense_forward.1} parent=1 // pred_fallthru
      _
    // Predicated region
    $region90: #{deepsense_forward.1} parent=1 // pred_check
      _
    $region91: #{deepsense_forward.1} parent=1 // pred_check_branch
      %8932 = sbr.rel (0) target = $region93
    $region92: #{deepsense_forward.1} parent=1 // pred_region
      _
    $region93: #{deepsense_forward.1} parent=1 // pred_fallthru
      _
    %8933 = vsyncpa [#allocation3], 1
    %8934 = vsyncpa [#allocation5], 1
    %8935 = vsyncpa [#allocation8], 1
    %8936 = vsyncpa [#allocation11], 1
    %8937 = vsyncpa [#allocation14], 1
    %8938 = vsyncpa [#allocation17], 1

</llo_original>
